<compile_context>
chip_gen: v5e
topology: v5e:2x2
jax: 0.10.0
libtpu: 0.0.40
codegen_flags: <defaults>
</compile_context>

<pallas_src>
import numpy as np
import jax
import jax.numpy as jnp
from jax import lax
from jax.experimental import pallas as pl
from jax.experimental.pallas import tpu as pltpu


# (Ci, Co, K, stride, padding, activation) -- matches the PyTorch nn.Sequential.
LAYER_CFG = [
    (26, 128, 4, 1, 0, "relu"),
    (128, 64, 4, 2, 1, "relu"),
    (64, 32, 4, 2, 1, "relu"),
    (32, 3, 4, 2, 1, "relu"),
    (3, 3, 4, 2, 1, "tanh"),
]


def _fused_kernel(z_ref, w1_ref, b1_ref, m2_ref, c2_ref, m3_ref, c3_ref,
                  m4_ref, c4_ref, m5_ref, c5_ref, o_ref, x2, x3, x4, x5):
    bsz = z_ref.shape[0]

    # Only the top/bottom H-padding rows of the staging buffers need zeroing:
    # interiors are fully overwritten every step and W-padding is baked into
    # the expanded weights (its rows are zero there).
    for xp in (x2, x3, x4, x5):
        width = xp.shape[2]
        zero_row = jnp.zeros((bsz, width), jnp.float32)
        xp[:, 0, :] = zero_row
        xp[:, xp.shape[1] - 1, :] = zero_row

    # ---- Layer 1: ConvTranspose2d(26->128, K=4, s=1, p=0) on a 1x1 input is a
    # dense matmul; columns are packed (h, w, co) so 4 row stores fill layer
    # 2's staging buffer interior.
    z = z_ref[:, 0, :]                                              # (B, 26)
    y1 = jnp.dot(z, w1_ref[...], preferred_element_type=jnp.float32)
    y1 = jnp.maximum(y1 + b1_ref[...], 0.0)                         # (B, 2048)
    for h in range(4):
        x2[:, 1 + h, :] = y1[:, h * 512:(h + 1) * 512]

    # ---- Layers 2..5: each stride-2 ConvTranspose = 4 dense matmuls against
    # expanded weights (K = Wi*Ci, N = 2*Wi*Co), one per (row-parity, tap-row).
    def convt(xp, m_ref, c_ref, hi, act):
        rows = []
        for ph in range(2):
            acc = jnp.dot(xp[:, ph:ph + hi, :], m_ref[2 * ph],
                          preferred_element_type=jnp.float32)
            acc = acc + jnp.dot(xp[:, ph + 1:ph + 1 + hi, :], m_ref[2 * ph + 1],
                                preferred_element_type=jnp.float32)
            acc = acc + c_ref[...]
            rows.append(jnp.maximum(acc, 0.0) if act == "relu" else jnp.tanh(acc))
        y = jnp.stack(rows, axis=2)                                 # (B, hi, 2, N)
        return y.reshape(bsz, 2 * hi, y.shape[3])                   # (B, 2*hi, N)

    x3[:, 1:9, :] = convt(x2, m2_ref, c2_ref, 4, "relu")            # (B, 8, 512)
    x4[:, 1:17, :] = convt(x3, m3_ref, c3_ref, 8, "relu")           # (B, 16, 512)
    x5[:, 1:33, :] = convt(x4, m4_ref, c4_ref, 16, "relu")          # (B, 32, 96)
    y5 = convt(x5, m5_ref, c5_ref, 32, "tanh")                      # (B, 64, 192), co-major

    # Layer-5 columns are co-major (co*64 + w), so the NCHW store is 3
    # lane-dense (B, 64, 64) slab writes.
    for co in range(3):
        o_ref[:, co, :, :] = y5[:, :, co * 64:(co + 1) * 64]


def init_params(key):
    """Deterministic synthetic init (PyTorch-style uniform fan-in scaling)."""
    params = []
    for (Ci, Co, K, _s, _p, _a) in LAYER_CFG:
        key, kw, kb = jax.random.split(key, 3)
        bound = 1.0 / np.sqrt(Ci * K * K)
        w = jax.random.uniform(kw, (Ci, Co, K, K), jnp.float32, -bound, bound)
        b = jax.random.uniform(kb, (Co,), jnp.float32, -bound, bound)
        params.append((w, b))
    return params


def prepare_params(params):
    """One-time host-side repack of PyTorch-layout ConvTranspose2d weights.

    Stride-2 layers become 4 expanded matrices M[ph, a] of shape
    (Wi*Ci, 2*Wi*Co): output (2i+ph, 2j+pw, co) = sum_a X[i+ph+a-1] @ M[ph,a],
    with M[iw*Ci+ci, (2j+pw)*Co+co] = w[ci, co, 3-ph-2a, 3-pw-2b], b = iw-j-pw+1.
    The last layer uses co-major columns (co*Wout + ow) for a lane-dense NCHW store.
    """
    np_params = [(np.asarray(w, np.float32), np.asarray(b, np.float32))
                 for (w, b) in params]
    (w1, b1), (w2, b2), (w3, b3), (w4, b4), (w5, b5) = np_params

    # Layer 1 (1x1 input): dense matmul, column layout h*512 + w*128 + co.
    w1p = np.transpose(w1, (0, 2, 3, 1)).reshape(26, 4 * 4 * 128)
    b1p = np.tile(b1, 16).reshape(1, 2048)

    def expand(w, wi, co_major=False):
        ci, co = w.shape[0], w.shape[1]
        wo = 2 * wi
        mats = np.zeros((4, wi * ci, wo * co), np.float32)
        for ph in range(2):
            for a in range(2):
                kh = 3 - ph - 2 * a
                m = mats[2 * ph + a]
                for j in range(wi):
                    for pw in range(2):
                        for b in range(2):
                            iw = j + pw + b - 1
                            if iw < 0 or iw >= wi:
                                continue            # zero-padding contribution
                            kw = 3 - pw - 2 * b
                            ow = 2 * j + pw
                            blk = w[:, :, kh, kw]   # (Ci, Co)
                            if co_major:
                                m[iw * ci:(iw + 1) * ci, ow::wo] = blk
                            else:
                                m[iw * ci:(iw + 1) * ci, ow * co:(ow + 1) * co] = blk
        return mats

    m2 = expand(w2, 4)
    c2 = np.tile(b2, 8).reshape(1, 512)
    m3 = expand(w3, 8)
    c3 = np.tile(b3, 16).reshape(1, 512)
    m4 = expand(w4, 16)
    c4 = np.tile(b4, 32).reshape(1, 96)
    m5 = expand(w5, 32, co_major=True)
    c5 = np.repeat(b5, 64).reshape(1, 192)

    packed = (w1p, b1p, m2, c2, m3, c3, m4, c4, m5, c5)
    return tuple(jnp.asarray(a) for a in packed)


def gen_nn_ske_to_image(z, packed, block_b=None):
    """Forward of GenNNSkeToImage: z (N, 26) -> image (N, 3, 64, 64), NCHW."""
    n = z.shape[0]
    if block_b is None:
        block_b = max(d for d in range(1, min(n, 8) + 1) if n % d == 0)
    assert n % block_b == 0
    z3 = z.reshape(n, 1, 26).astype(jnp.float32)

    def const_spec(a):
        return pl.BlockSpec(a.shape, lambda i, _r=a.ndim: (0,) * _r)

    out = pl.pallas_call(
        _fused_kernel,
        out_shape=jax.ShapeDtypeStruct((n, 3, 64, 64), jnp.float32),
        grid=(n // block_b,),
        in_specs=[pl.BlockSpec((block_b, 1, 26), lambda i: (i, 0, 0))] +
                 [const_spec(a) for a in packed],
        out_specs=pl.BlockSpec((block_b, 3, 64, 64), lambda i: (i, 0, 0, 0)),
        scratch_shapes=[
            pltpu.VMEM((block_b, 6, 512), jnp.float32),    # layer-2 staging (H-padded)
            pltpu.VMEM((block_b, 10, 512), jnp.float32),   # layer-3 staging
            pltpu.VMEM((block_b, 18, 512), jnp.float32),   # layer-4 staging
            pltpu.VMEM((block_b, 34, 96), jnp.float32),    # layer-5 staging
        ],
        compiler_params=pltpu.CompilerParams(
            dimension_semantics=("parallel",),
            vmem_limit_bytes=48 * 1024 * 1024),
    )(z3, *packed)
    return out


def reference_forward(z, params):
    """Pure-JAX reference (XLA conv) with identical PyTorch semantics."""
    N = z.shape[0]
    x = z.reshape(N, 26, 1, 1).astype(jnp.float32)
    for (w, b), (_Ci, _Co, K, s, p, act) in zip(params, LAYER_CFG):
        w_flip = jnp.flip(w, axis=(2, 3)).transpose(1, 0, 2, 3)  # (Co, Ci, K, K)
        edge = K - 1 - p
        x = lax.conv_general_dilated(
            x, w_flip, window_strides=(1, 1),
            padding=[(edge, edge), (edge, edge)],
            lhs_dilation=(s, s),
            dimension_numbers=("NCHW", "OIHW", "NCHW"))
        x = x + b[None, :, None, None]
        x = jnp.maximum(x, 0.0) if act == "relu" else jnp.tanh(x)
    return x


if __name__ == "__main__":
    key = jax.random.PRNGKey(0)
    kz, kp = jax.random.split(key)
    params = init_params(kp)
    packed = prepare_params(params)
    z = jax.random.normal(kz, (2, 26), jnp.float32)   # batch=2, skeleton dim=26

    fwd = jax.jit(gen_nn_ske_to_image)
    out = jax.block_until_ready(fwd(z, packed))
    assert out.shape == (2, 3, 64, 64), out.shape

    ref = jax.block_until_ready(reference_forward(z, params))
    np.testing.assert_allclose(np.asarray(out), np.asarray(ref),
                               rtol=1e-3, atol=1e-3)
    print("KERNEL_OK")
</pallas_src>

<mosaic_0001>
module attributes {stable_mosaic.version = 11 : i64} {
  func.func @_fused_kernel(%arg0: i32, %arg1: memref<2x1x26xf32, #tpu.memory_space<vmem>>, %arg2: memref<26x2048xf32, #tpu.memory_space<vmem>>, %arg3: memref<1x2048xf32, #tpu.memory_space<vmem>>, %arg4: memref<4x512x512xf32, #tpu.memory_space<vmem>>, %arg5: memref<1x512xf32, #tpu.memory_space<vmem>>, %arg6: memref<4x512x512xf32, #tpu.memory_space<vmem>>, %arg7: memref<1x512xf32, #tpu.memory_space<vmem>>, %arg8: memref<4x512x96xf32, #tpu.memory_space<vmem>>, %arg9: memref<1x96xf32, #tpu.memory_space<vmem>>, %arg10: memref<4x96x192xf32, #tpu.memory_space<vmem>>, %arg11: memref<1x192xf32, #tpu.memory_space<vmem>>, %arg12: memref<2x3x64x64xf32, #tpu.memory_space<vmem>>, %arg13: memref<2x6x512xf32, #tpu.memory_space<vmem>>, %arg14: memref<2x10x512xf32, #tpu.memory_space<vmem>>, %arg15: memref<2x18x512xf32, #tpu.memory_space<vmem>>, %arg16: memref<2x34x96xf32, #tpu.memory_space<vmem>>) attributes {dimension_semantics = [#tpu.dimension_semantics<parallel>], iteration_bounds = array<i64: 1>, scalar_prefetch = 0 : i64, scratch_operands = 4 : i64, tpu.core_type = #tpu.core_type<tc>, window_params = [{transform_indices = @transform_0, window_bounds = array<i64: 2, 1, 26>}, {pipeline_mode = #tpu.pipeline_mode<synchronous>, transform_indices = @transform_1, window_bounds = array<i64: 26, 2048>}, {pipeline_mode = #tpu.pipeline_mode<synchronous>, transform_indices = @transform_2, window_bounds = array<i64: 1, 2048>}, {pipeline_mode = #tpu.pipeline_mode<synchronous>, transform_indices = @transform_3, window_bounds = array<i64: 4, 512, 512>}, {pipeline_mode = #tpu.pipeline_mode<synchronous>, transform_indices = @transform_4, window_bounds = array<i64: 1, 512>}, {pipeline_mode = #tpu.pipeline_mode<synchronous>, transform_indices = @transform_5, window_bounds = array<i64: 4, 512, 512>}, {pipeline_mode = #tpu.pipeline_mode<synchronous>, transform_indices = @transform_6, window_bounds = array<i64: 1, 512>}, {pipeline_mode = #tpu.pipeline_mode<synchronous>, transform_indices = @transform_7, window_bounds = array<i64: 4, 512, 96>}, {pipeline_mode = #tpu.pipeline_mode<synchronous>, transform_indices = @transform_8, window_bounds = array<i64: 1, 96>}, {pipeline_mode = #tpu.pipeline_mode<synchronous>, transform_indices = @transform_9, window_bounds = array<i64: 4, 96, 192>}, {pipeline_mode = #tpu.pipeline_mode<synchronous>, transform_indices = @transform_10, window_bounds = array<i64: 1, 192>}, {transform_indices = @transform_11, window_bounds = array<i64: 2, 3, 64, 64>}]} {
    %cst = arith.constant 0.000000e+00 : f32
    %0 = vector.broadcast %cst : f32 to vector<2x512xf32>
    %c0 = arith.constant 0 : index
    %c0_0 = arith.constant 0 : index
    %c0_1 = arith.constant 0 : index
    %1 = vector.load %arg13[%c0, %c0_0, %c0_1] : memref<2x6x512xf32, #tpu.memory_space<vmem>>, vector<2x1x512xf32>
    %2 = vector.shape_cast %1 : vector<2x1x512xf32> to vector<2x512xf32>
    %3 = vector.shape_cast %0 : vector<2x512xf32> to vector<2x1x512xf32>
    tpu.vector_store %arg13[%c0, %c0_0, %c0_1], %3 {strides = array<i32>} : memref<2x6x512xf32, #tpu.memory_space<vmem>>, vector<2x1x512xf32>,
    %c0_2 = arith.constant 0 : index
    %c5 = arith.constant 5 : index
    %c0_3 = arith.constant 0 : index
    %4 = vector.load %arg13[%c0_2, %c5, %c0_3] : memref<2x6x512xf32, #tpu.memory_space<vmem>>, vector<2x1x512xf32>
    %5 = vector.shape_cast %4 : vector<2x1x512xf32> to vector<2x512xf32>
    %6 = vector.shape_cast %0 : vector<2x512xf32> to vector<2x1x512xf32>
    tpu.vector_store %arg13[%c0_2, %c5, %c0_3], %6 {strides = array<i32>} : memref<2x6x512xf32, #tpu.memory_space<vmem>>, vector<2x1x512xf32>,
    %cst_4 = arith.constant 0.000000e+00 : f32
    %7 = vector.broadcast %cst_4 : f32 to vector<2x512xf32>
    %c0_5 = arith.constant 0 : index
    %c0_6 = arith.constant 0 : index
    %c0_7 = arith.constant 0 : index
    %8 = vector.load %arg14[%c0_5, %c0_6, %c0_7] : memref<2x10x512xf32, #tpu.memory_space<vmem>>, vector<2x1x512xf32>
    %9 = vector.shape_cast %8 : vector<2x1x512xf32> to vector<2x512xf32>
    %10 = vector.shape_cast %7 : vector<2x512xf32> to vector<2x1x512xf32>
    tpu.vector_store %arg14[%c0_5, %c0_6, %c0_7], %10 {strides = array<i32>} : memref<2x10x512xf32, #tpu.memory_space<vmem>>, vector<2x1x512xf32>,
    %c0_8 = arith.constant 0 : index
    %c9 = arith.constant 9 : index
    %c0_9 = arith.constant 0 : index
    %11 = vector.load %arg14[%c0_8, %c9, %c0_9] : memref<2x10x512xf32, #tpu.memory_space<vmem>>, vector<2x1x512xf32>
    %12 = vector.shape_cast %11 : vector<2x1x512xf32> to vector<2x512xf32>
    %13 = vector.shape_cast %7 : vector<2x512xf32> to vector<2x1x512xf32>
    tpu.vector_store %arg14[%c0_8, %c9, %c0_9], %13 {strides = array<i32>} : memref<2x10x512xf32, #tpu.memory_space<vmem>>, vector<2x1x512xf32>,
    %cst_10 = arith.constant 0.000000e+00 : f32
    %14 = vector.broadcast %cst_10 : f32 to vector<2x512xf32>
    %c0_11 = arith.constant 0 : index
    %c0_12 = arith.constant 0 : index
    %c0_13 = arith.constant 0 : index
    %15 = vector.load %arg15[%c0_11, %c0_12, %c0_13] : memref<2x18x512xf32, #tpu.memory_space<vmem>>, vector<2x1x512xf32>
    %16 = vector.shape_cast %15 : vector<2x1x512xf32> to vector<2x512xf32>
    %17 = vector.shape_cast %14 : vector<2x512xf32> to vector<2x1x512xf32>
    tpu.vector_store %arg15[%c0_11, %c0_12, %c0_13], %17 {strides = array<i32>} : memref<2x18x512xf32, #tpu.memory_space<vmem>>, vector<2x1x512xf32>,
    %c0_14 = arith.constant 0 : index
    %c17 = arith.constant 17 : index
    %c0_15 = arith.constant 0 : index
    %18 = vector.load %arg15[%c0_14, %c17, %c0_15] : memref<2x18x512xf32, #tpu.memory_space<vmem>>, vector<2x1x512xf32>
    %19 = vector.shape_cast %18 : vector<2x1x512xf32> to vector<2x512xf32>
    %20 = vector.shape_cast %14 : vector<2x512xf32> to vector<2x1x512xf32>
    tpu.vector_store %arg15[%c0_14, %c17, %c0_15], %20 {strides = array<i32>} : memref<2x18x512xf32, #tpu.memory_space<vmem>>, vector<2x1x512xf32>,
    %cst_16 = arith.constant 0.000000e+00 : f32
    %21 = vector.broadcast %cst_16 : f32 to vector<2x96xf32>
    %c0_17 = arith.constant 0 : index
    %c0_18 = arith.constant 0 : index
    %c0_19 = arith.constant 0 : index
    %22 = vector.load %arg16[%c0_17, %c0_18, %c0_19] : memref<2x34x96xf32, #tpu.memory_space<vmem>>, vector<2x1x96xf32>
    %23 = vector.shape_cast %22 : vector<2x1x96xf32> to vector<2x96xf32>
    %24 = vector.shape_cast %21 : vector<2x96xf32> to vector<2x1x96xf32>
    tpu.vector_store %arg16[%c0_17, %c0_18, %c0_19], %24 {strides = array<i32>} : memref<2x34x96xf32, #tpu.memory_space<vmem>>, vector<2x1x96xf32>,
    %c0_20 = arith.constant 0 : index
    %c33 = arith.constant 33 : index
    %c0_21 = arith.constant 0 : index
    %25 = vector.load %arg16[%c0_20, %c33, %c0_21] : memref<2x34x96xf32, #tpu.memory_space<vmem>>, vector<2x1x96xf32>
    %26 = vector.shape_cast %25 : vector<2x1x96xf32> to vector<2x96xf32>
    %27 = vector.shape_cast %21 : vector<2x96xf32> to vector<2x1x96xf32>
    tpu.vector_store %arg16[%c0_20, %c33, %c0_21], %27 {strides = array<i32>} : memref<2x34x96xf32, #tpu.memory_space<vmem>>, vector<2x1x96xf32>,
    %c0_22 = arith.constant 0 : index
    %c0_23 = arith.constant 0 : index
    %c0_24 = arith.constant 0 : index
    %28 = vector.load %arg1[%c0_22, %c0_23, %c0_24] : memref<2x1x26xf32, #tpu.memory_space<vmem>>, vector<2x1x26xf32>
    %29 = vector.shape_cast %28 : vector<2x1x26xf32> to vector<2x26xf32>
    %c0_25 = arith.constant 0 : index
    %c0_26 = arith.constant 0 : index
    %30 = vector.load %arg2[%c0_25, %c0_26] : memref<26x2048xf32, #tpu.memory_space<vmem>>, vector<26x2048xf32>
    %cst_27 = arith.constant dense<0.000000e+00> : vector<2x2048xf32>
    %31 = tpu.matmul %29, %30, %cst_27 {dimension_numbers = #tpu.dot_dimension_numbers<[1], [0], [0], [1], [0, 0, 1, 1], [], []>} : vector<2x26xf32>, vector<26x2048xf32>, vector<2x2048xf32> -> vector<2x2048xf32>
    %c0_28 = arith.constant 0 : index
    %c0_29 = arith.constant 0 : index
    %32 = vector.load %arg3[%c0_28, %c0_29] : memref<1x2048xf32, #tpu.memory_space<vmem>>, vector<1x2048xf32>
    %33 = vector.broadcast %32 : vector<1x2048xf32> to vector<2x2048xf32>
    %34 = arith.addf %31, %33 : vector<2x2048xf32>
    %cst_30 = arith.constant 0.000000e+00 : f32
    %35 = vector.broadcast %cst_30 : f32 to vector<2x2048xf32>
    %36 = arith.maximumf %34, %35 : vector<2x2048xf32>
    %37 = vector.extract_strided_slice %36 {offsets = [0, 0], sizes = [2, 512], strides = [1, 1]} : vector<2x2048xf32> to vector<2x512xf32>
    %c0_31 = arith.constant 0 : index
    %c1 = arith.constant 1 : index
    %c0_32 = arith.constant 0 : index
    %38 = vector.load %arg13[%c0_31, %c1, %c0_32] : memref<2x6x512xf32, #tpu.memory_space<vmem>>, vector<2x1x512xf32>
    %39 = vector.shape_cast %38 : vector<2x1x512xf32> to vector<2x512xf32>
    %40 = vector.shape_cast %37 : vector<2x512xf32> to vector<2x1x512xf32>
    tpu.vector_store %arg13[%c0_31, %c1, %c0_32], %40 {strides = array<i32>} : memref<2x6x512xf32, #tpu.memory_space<vmem>>, vector<2x1x512xf32>,
    %41 = vector.extract_strided_slice %36 {offsets = [0, 512], sizes = [2, 512], strides = [1, 1]} : vector<2x2048xf32> to vector<2x512xf32>
    %c0_33 = arith.constant 0 : index
    %c2 = arith.constant 2 : index
    %c0_34 = arith.constant 0 : index
    %42 = vector.load %arg13[%c0_33, %c2, %c0_34] : memref<2x6x512xf32, #tpu.memory_space<vmem>>, vector<2x1x512xf32>
    %43 = vector.shape_cast %42 : vector<2x1x512xf32> to vector<2x512xf32>
    %44 = vector.shape_cast %41 : vector<2x512xf32> to vector<2x1x512xf32>
    tpu.vector_store %arg13[%c0_33, %c2, %c0_34], %44 {strides = array<i32>} : memref<2x6x512xf32, #tpu.memory_space<vmem>>, vector<2x1x512xf32>,
    %45 = vector.extract_strided_slice %36 {offsets = [0, 1024], sizes = [2, 512], strides = [1, 1]} : vector<2x2048xf32> to vector<2x512xf32>
    %c0_35 = arith.constant 0 : index
    %c3 = arith.constant 3 : index
    %c0_36 = arith.constant 0 : index
    %46 = vector.load %arg13[%c0_35, %c3, %c0_36] : memref<2x6x512xf32, #tpu.memory_space<vmem>>, vector<2x1x512xf32>
    %47 = vector.shape_cast %46 : vector<2x1x512xf32> to vector<2x512xf32>
    %48 = vector.shape_cast %45 : vector<2x512xf32> to vector<2x1x512xf32>
    tpu.vector_store %arg13[%c0_35, %c3, %c0_36], %48 {strides = array<i32>} : memref<2x6x512xf32, #tpu.memory_space<vmem>>, vector<2x1x512xf32>,
    %49 = vector.extract_strided_slice %36 {offsets = [0, 1536], sizes = [2, 512], strides = [1, 1]} : vector<2x2048xf32> to vector<2x512xf32>
    %c0_37 = arith.constant 0 : index
    %c4 = arith.constant 4 : index
    %c0_38 = arith.constant 0 : index
    %50 = vector.load %arg13[%c0_37, %c4, %c0_38] : memref<2x6x512xf32, #tpu.memory_space<vmem>>, vector<2x1x512xf32>
    %51 = vector.shape_cast %50 : vector<2x1x512xf32> to vector<2x512xf32>
    %52 = vector.shape_cast %49 : vector<2x512xf32> to vector<2x1x512xf32>
    tpu.vector_store %arg13[%c0_37, %c4, %c0_38], %52 {strides = array<i32>} : memref<2x6x512xf32, #tpu.memory_space<vmem>>, vector<2x1x512xf32>,
    %c0_39 = arith.constant 0 : index
    %c0_40 = arith.constant 0 : index
    %c0_41 = arith.constant 0 : index
    %53 = vector.load %arg13[%c0_39, %c0_40, %c0_41] : memref<2x6x512xf32, #tpu.memory_space<vmem>>, vector<2x4x512xf32>
    %c0_42 = arith.constant 0 : index
    %c0_43 = arith.constant 0 : index
    %c0_44 = arith.constant 0 : index
    %54 = vector.load %arg4[%c0_42, %c0_43, %c0_44] : memref<4x512x512xf32, #tpu.memory_space<vmem>>, vector<1x512x512xf32>
    %55 = vector.shape_cast %54 : vector<1x512x512xf32> to vector<512x512xf32>
    %cst_45 = arith.constant dense<0.000000e+00> : vector<2x4x512xf32>
    %56 = tpu.matmul %53, %55, %cst_45 {dimension_numbers = #tpu.dot_dimension_numbers<[2], [0], [0, 1], [1], [0, 0, 0, 1, 1, 1], [], []>} : vector<2x4x512xf32>, vector<512x512xf32>, vector<2x4x512xf32> -> vector<2x4x512xf32>
    %c0_46 = arith.constant 0 : index
    %c1_47 = arith.constant 1 : index
    %c0_48 = arith.constant 0 : index
    %57 = vector.load %arg13[%c0_46, %c1_47, %c0_48] : memref<2x6x512xf32, #tpu.memory_space<vmem>>, vector<2x4x512xf32>
    %c1_49 = arith.constant 1 : index
    %c0_50 = arith.constant 0 : index
    %c0_51 = arith.constant 0 : index
    %58 = vector.load %arg4[%c1_49, %c0_50, %c0_51] : memref<4x512x512xf32, #tpu.memory_space<vmem>>, vector<1x512x512xf32>
    %59 = vector.shape_cast %58 : vector<1x512x512xf32> to vector<512x512xf32>
    %cst_52 = arith.constant dense<0.000000e+00> : vector<2x4x512xf32>
    %60 = tpu.matmul %57, %59, %cst_52 {dimension_numbers = #tpu.dot_dimension_numbers<[2], [0], [0, 1], [1], [0, 0, 0, 1, 1, 1], [], []>} : vector<2x4x512xf32>, vector<512x512xf32>, vector<2x4x512xf32> -> vector<2x4x512xf32>
    %61 = arith.addf %56, %60 : vector<2x4x512xf32>
    %c0_53 = arith.constant 0 : index
    %c0_54 = arith.constant 0 : index
    %62 = vector.load %arg5[%c0_53, %c0_54] : memref<1x512xf32, #tpu.memory_space<vmem>>, vector<1x512xf32>
    %63 = vector.shape_cast %62 : vector<1x512xf32> to vector<1x1x512xf32>
    %64 = vector.broadcast %63 : vector<1x1x512xf32> to vector<2x4x512xf32>
    %65 = arith.addf %61, %64 : vector<2x4x512xf32>
    %cst_55 = arith.constant 0.000000e+00 : f32
    %66 = vector.broadcast %cst_55 : f32 to vector<2x4x512xf32>
    %67 = arith.maximumf %65, %66 : vector<2x4x512xf32>
    %c0_56 = arith.constant 0 : index
    %c1_57 = arith.constant 1 : index
    %c0_58 = arith.constant 0 : index
    %68 = vector.load %arg13[%c0_56, %c1_57, %c0_58] : memref<2x6x512xf32, #tpu.memory_space<vmem>>, vector<2x4x512xf32>
    %c2_59 = arith.constant 2 : index
    %c0_60 = arith.constant 0 : index
    %c0_61 = arith.constant 0 : index
    %69 = vector.load %arg4[%c2_59, %c0_60, %c0_61] : memref<4x512x512xf32, #tpu.memory_space<vmem>>, vector<1x512x512xf32>
    %70 = vector.shape_cast %69 : vector<1x512x512xf32> to vector<512x512xf32>
    %cst_62 = arith.constant dense<0.000000e+00> : vector<2x4x512xf32>
    %71 = tpu.matmul %68, %70, %cst_62 {dimension_numbers = #tpu.dot_dimension_numbers<[2], [0], [0, 1], [1], [0, 0, 0, 1, 1, 1], [], []>} : vector<2x4x512xf32>, vector<512x512xf32>, vector<2x4x512xf32> -> vector<2x4x512xf32>
    %c0_63 = arith.constant 0 : index
    %c2_64 = arith.constant 2 : index
    %c0_65 = arith.constant 0 : index
    %72 = vector.load %arg13[%c0_63, %c2_64, %c0_65] : memref<2x6x512xf32, #tpu.memory_space<vmem>>, vector<2x4x512xf32>
    %c3_66 = arith.constant 3 : index
    %c0_67 = arith.constant 0 : index
    %c0_68 = arith.constant 0 : index
    %73 = vector.load %arg4[%c3_66, %c0_67, %c0_68] : memref<4x512x512xf32, #tpu.memory_space<vmem>>, vector<1x512x512xf32>
    %74 = vector.shape_cast %73 : vector<1x512x512xf32> to vector<512x512xf32>
    %cst_69 = arith.constant dense<0.000000e+00> : vector<2x4x512xf32>
    %75 = tpu.matmul %72, %74, %cst_69 {dimension_numbers = #tpu.dot_dimension_numbers<[2], [0], [0, 1], [1], [0, 0, 0, 1, 1, 1], [], []>} : vector<2x4x512xf32>, vector<512x512xf32>, vector<2x4x512xf32> -> vector<2x4x512xf32>
    %76 = arith.addf %71, %75 : vector<2x4x512xf32>
    %c0_70 = arith.constant 0 : index
    %c0_71 = arith.constant 0 : index
    %77 = vector.load %arg5[%c0_70, %c0_71] : memref<1x512xf32, #tpu.memory_space<vmem>>, vector<1x512xf32>
    %78 = vector.shape_cast %77 : vector<1x512xf32> to vector<1x1x512xf32>
    %79 = vector.broadcast %78 : vector<1x1x512xf32> to vector<2x4x512xf32>
    %80 = arith.addf %76, %79 : vector<2x4x512xf32>
    %cst_72 = arith.constant 0.000000e+00 : f32
    %81 = vector.broadcast %cst_72 : f32 to vector<2x4x512xf32>
    %82 = arith.maximumf %80, %81 : vector<2x4x512xf32>
    %83 = vector.shape_cast %67 : vector<2x4x512xf32> to vector<2x4x1x512xf32>
    %84 = vector.shape_cast %82 : vector<2x4x512xf32> to vector<2x4x1x512xf32>
    %85 = tpu.concatenate %83, %84 in 2 : vector<2x4x1x512xf32>, vector<2x4x1x512xf32> -> vector<2x4x2x512xf32>
    %86 = vector.shape_cast %85 : vector<2x4x2x512xf32> to vector<2x8x512xf32>
    %c0_73 = arith.constant 0 : index
    %c1_74 = arith.constant 1 : index
    %c0_75 = arith.constant 0 : index
    %87 = vector.load %arg14[%c0_73, %c1_74, %c0_75] : memref<2x10x512xf32, #tpu.memory_space<vmem>>, vector<2x8x512xf32>
    tpu.vector_store %arg14[%c0_73, %c1_74, %c0_75], %86 {strides = array<i32>} : memref<2x10x512xf32, #tpu.memory_space<vmem>>, vector<2x8x512xf32>,
    %c0_76 = arith.constant 0 : index
    %c0_77 = arith.constant 0 : index
    %c0_78 = arith.constant 0 : index
    %88 = vector.load %arg14[%c0_76, %c0_77, %c0_78] : memref<2x10x512xf32, #tpu.memory_space<vmem>>, vector<2x8x512xf32>
    %c0_79 = arith.constant 0 : index
    %c0_80 = arith.constant 0 : index
    %c0_81 = arith.constant 0 : index
    %89 = vector.load %arg6[%c0_79, %c0_80, %c0_81] : memref<4x512x512xf32, #tpu.memory_space<vmem>>, vector<1x512x512xf32>
    %90 = vector.shape_cast %89 : vector<1x512x512xf32> to vector<512x512xf32>
    %cst_82 = arith.constant dense<0.000000e+00> : vector<2x8x512xf32>
    %91 = tpu.matmul %88, %90, %cst_82 {dimension_numbers = #tpu.dot_dimension_numbers<[2], [0], [0, 1], [1], [0, 0, 0, 1, 1, 1], [], []>} : vector<2x8x512xf32>, vector<512x512xf32>, vector<2x8x512xf32> -> vector<2x8x512xf32>
    %c0_83 = arith.constant 0 : index
    %c1_84 = arith.constant 1 : index
    %c0_85 = arith.constant 0 : index
    %92 = vector.load %arg14[%c0_83, %c1_84, %c0_85] : memref<2x10x512xf32, #tpu.memory_space<vmem>>, vector<2x8x512xf32>
    %c1_86 = arith.constant 1 : index
    %c0_87 = arith.constant 0 : index
    %c0_88 = arith.constant 0 : index
    %93 = vector.load %arg6[%c1_86, %c0_87, %c0_88] : memref<4x512x512xf32, #tpu.memory_space<vmem>>, vector<1x512x512xf32>
    %94 = vector.shape_cast %93 : vector<1x512x512xf32> to vector<512x512xf32>
    %cst_89 = arith.constant dense<0.000000e+00> : vector<2x8x512xf32>
    %95 = tpu.matmul %92, %94, %cst_89 {dimension_numbers = #tpu.dot_dimension_numbers<[2], [0], [0, 1], [1], [0, 0, 0, 1, 1, 1], [], []>} : vector<2x8x512xf32>, vector<512x512xf32>, vector<2x8x512xf32> -> vector<2x8x512xf32>
    %96 = arith.addf %91, %95 : vector<2x8x512xf32>
    %c0_90 = arith.constant 0 : index
    %c0_91 = arith.constant 0 : index
    %97 = vector.load %arg7[%c0_90, %c0_91] : memref<1x512xf32, #tpu.memory_space<vmem>>, vector<1x512xf32>
    %98 = vector.shape_cast %97 : vector<1x512xf32> to vector<1x1x512xf32>
    %99 = vector.broadcast %98 : vector<1x1x512xf32> to vector<2x8x512xf32>
    %100 = arith.addf %96, %99 : vector<2x8x512xf32>
    %cst_92 = arith.constant 0.000000e+00 : f32
    %101 = vector.broadcast %cst_92 : f32 to vector<2x8x512xf32>
    %102 = arith.maximumf %100, %101 : vector<2x8x512xf32>
    %c0_93 = arith.constant 0 : index
    %c1_94 = arith.constant 1 : index
    %c0_95 = arith.constant 0 : index
    %103 = vector.load %arg14[%c0_93, %c1_94, %c0_95] : memref<2x10x512xf32, #tpu.memory_space<vmem>>, vector<2x8x512xf32>
    %c2_96 = arith.constant 2 : index
    %c0_97 = arith.constant 0 : index
    %c0_98 = arith.constant 0 : index
    %104 = vector.load %arg6[%c2_96, %c0_97, %c0_98] : memref<4x512x512xf32, #tpu.memory_space<vmem>>, vector<1x512x512xf32>
    %105 = vector.shape_cast %104 : vector<1x512x512xf32> to vector<512x512xf32>
    %cst_99 = arith.constant dense<0.000000e+00> : vector<2x8x512xf32>
    %106 = tpu.matmul %103, %105, %cst_99 {dimension_numbers = #tpu.dot_dimension_numbers<[2], [0], [0, 1], [1], [0, 0, 0, 1, 1, 1], [], []>} : vector<2x8x512xf32>, vector<512x512xf32>, vector<2x8x512xf32> -> vector<2x8x512xf32>
    %c0_100 = arith.constant 0 : index
    %c2_101 = arith.constant 2 : index
    %c0_102 = arith.constant 0 : index
    %107 = vector.load %arg14[%c0_100, %c2_101, %c0_102] : memref<2x10x512xf32, #tpu.memory_space<vmem>>, vector<2x8x512xf32>
    %c3_103 = arith.constant 3 : index
    %c0_104 = arith.constant 0 : index
    %c0_105 = arith.constant 0 : index
    %108 = vector.load %arg6[%c3_103, %c0_104, %c0_105] : memref<4x512x512xf32, #tpu.memory_space<vmem>>, vector<1x512x512xf32>
    %109 = vector.shape_cast %108 : vector<1x512x512xf32> to vector<512x512xf32>
    %cst_106 = arith.constant dense<0.000000e+00> : vector<2x8x512xf32>
    %110 = tpu.matmul %107, %109, %cst_106 {dimension_numbers = #tpu.dot_dimension_numbers<[2], [0], [0, 1], [1], [0, 0, 0, 1, 1, 1], [], []>} : vector<2x8x512xf32>, vector<512x512xf32>, vector<2x8x512xf32> -> vector<2x8x512xf32>
    %111 = arith.addf %106, %110 : vector<2x8x512xf32>
    %c0_107 = arith.constant 0 : index
    %c0_108 = arith.constant 0 : index
    %112 = vector.load %arg7[%c0_107, %c0_108] : memref<1x512xf32, #tpu.memory_space<vmem>>, vector<1x512xf32>
    %113 = vector.shape_cast %112 : vector<1x512xf32> to vector<1x1x512xf32>
    %114 = vector.broadcast %113 : vector<1x1x512xf32> to vector<2x8x512xf32>
    %115 = arith.addf %111, %114 : vector<2x8x512xf32>
    %cst_109 = arith.constant 0.000000e+00 : f32
    %116 = vector.broadcast %cst_109 : f32 to vector<2x8x512xf32>
    %117 = arith.maximumf %115, %116 : vector<2x8x512xf32>
    %118 = vector.shape_cast %102 : vector<2x8x512xf32> to vector<2x8x1x512xf32>
    %119 = vector.shape_cast %117 : vector<2x8x512xf32> to vector<2x8x1x512xf32>
    %120 = tpu.concatenate %118, %119 in 2 : vector<2x8x1x512xf32>, vector<2x8x1x512xf32> -> vector<2x8x2x512xf32>
    %121 = vector.shape_cast %120 : vector<2x8x2x512xf32> to vector<2x16x512xf32>
    %c0_110 = arith.constant 0 : index
    %c1_111 = arith.constant 1 : index
    %c0_112 = arith.constant 0 : index
    %122 = vector.load %arg15[%c0_110, %c1_111, %c0_112] : memref<2x18x512xf32, #tpu.memory_space<vmem>>, vector<2x16x512xf32>
    tpu.vector_store %arg15[%c0_110, %c1_111, %c0_112], %121 {strides = array<i32>} : memref<2x18x512xf32, #tpu.memory_space<vmem>>, vector<2x16x512xf32>,
    %c0_113 = arith.constant 0 : index
    %c0_114 = arith.constant 0 : index
    %c0_115 = arith.constant 0 : index
    %123 = vector.load %arg15[%c0_113, %c0_114, %c0_115] : memref<2x18x512xf32, #tpu.memory_space<vmem>>, vector<2x16x512xf32>
    %c0_116 = arith.constant 0 : index
    %c0_117 = arith.constant 0 : index
    %c0_118 = arith.constant 0 : index
    %124 = vector.load %arg8[%c0_116, %c0_117, %c0_118] : memref<4x512x96xf32, #tpu.memory_space<vmem>>, vector<1x512x96xf32>
    %125 = vector.shape_cast %124 : vector<1x512x96xf32> to vector<512x96xf32>
    %cst_119 = arith.constant dense<0.000000e+00> : vector<2x16x96xf32>
    %126 = tpu.matmul %123, %125, %cst_119 {dimension_numbers = #tpu.dot_dimension_numbers<[2], [0], [0, 1], [1], [0, 0, 0, 1, 1, 1], [], []>} : vector<2x16x512xf32>, vector<512x96xf32>, vector<2x16x96xf32> -> vector<2x16x96xf32>
    %c0_120 = arith.constant 0 : index
    %c1_121 = arith.constant 1 : index
    %c0_122 = arith.constant 0 : index
    %127 = vector.load %arg15[%c0_120, %c1_121, %c0_122] : memref<2x18x512xf32, #tpu.memory_space<vmem>>, vector<2x16x512xf32>
    %c1_123 = arith.constant 1 : index
    %c0_124 = arith.constant 0 : index
    %c0_125 = arith.constant 0 : index
    %128 = vector.load %arg8[%c1_123, %c0_124, %c0_125] : memref<4x512x96xf32, #tpu.memory_space<vmem>>, vector<1x512x96xf32>
    %129 = vector.shape_cast %128 : vector<1x512x96xf32> to vector<512x96xf32>
    %cst_126 = arith.constant dense<0.000000e+00> : vector<2x16x96xf32>
    %130 = tpu.matmul %127, %129, %cst_126 {dimension_numbers = #tpu.dot_dimension_numbers<[2], [0], [0, 1], [1], [0, 0, 0, 1, 1, 1], [], []>} : vector<2x16x512xf32>, vector<512x96xf32>, vector<2x16x96xf32> -> vector<2x16x96xf32>
    %131 = arith.addf %126, %130 : vector<2x16x96xf32>
    %c0_127 = arith.constant 0 : index
    %c0_128 = arith.constant 0 : index
    %132 = vector.load %arg9[%c0_127, %c0_128] : memref<1x96xf32, #tpu.memory_space<vmem>>, vector<1x96xf32>
    %133 = vector.shape_cast %132 : vector<1x96xf32> to vector<1x1x96xf32>
    %134 = vector.broadcast %133 : vector<1x1x96xf32> to vector<2x16x96xf32>
    %135 = arith.addf %131, %134 : vector<2x16x96xf32>
    %cst_129 = arith.constant 0.000000e+00 : f32
    %136 = vector.broadcast %cst_129 : f32 to vector<2x16x96xf32>
    %137 = arith.maximumf %135, %136 : vector<2x16x96xf32>
    %c0_130 = arith.constant 0 : index
    %c1_131 = arith.constant 1 : index
    %c0_132 = arith.constant 0 : index
    %138 = vector.load %arg15[%c0_130, %c1_131, %c0_132] : memref<2x18x512xf32, #tpu.memory_space<vmem>>, vector<2x16x512xf32>
    %c2_133 = arith.constant 2 : index
    %c0_134 = arith.constant 0 : index
    %c0_135 = arith.constant 0 : index
    %139 = vector.load %arg8[%c2_133, %c0_134, %c0_135] : memref<4x512x96xf32, #tpu.memory_space<vmem>>, vector<1x512x96xf32>
    %140 = vector.shape_cast %139 : vector<1x512x96xf32> to vector<512x96xf32>
    %cst_136 = arith.constant dense<0.000000e+00> : vector<2x16x96xf32>
    %141 = tpu.matmul %138, %140, %cst_136 {dimension_numbers = #tpu.dot_dimension_numbers<[2], [0], [0, 1], [1], [0, 0, 0, 1, 1, 1], [], []>} : vector<2x16x512xf32>, vector<512x96xf32>, vector<2x16x96xf32> -> vector<2x16x96xf32>
    %c0_137 = arith.constant 0 : index
    %c2_138 = arith.constant 2 : index
    %c0_139 = arith.constant 0 : index
    %142 = vector.load %arg15[%c0_137, %c2_138, %c0_139] : memref<2x18x512xf32, #tpu.memory_space<vmem>>, vector<2x16x512xf32>
    %c3_140 = arith.constant 3 : index
    %c0_141 = arith.constant 0 : index
    %c0_142 = arith.constant 0 : index
    %143 = vector.load %arg8[%c3_140, %c0_141, %c0_142] : memref<4x512x96xf32, #tpu.memory_space<vmem>>, vector<1x512x96xf32>
    %144 = vector.shape_cast %143 : vector<1x512x96xf32> to vector<512x96xf32>
    %cst_143 = arith.constant dense<0.000000e+00> : vector<2x16x96xf32>
    %145 = tpu.matmul %142, %144, %cst_143 {dimension_numbers = #tpu.dot_dimension_numbers<[2], [0], [0, 1], [1], [0, 0, 0, 1, 1, 1], [], []>} : vector<2x16x512xf32>, vector<512x96xf32>, vector<2x16x96xf32> -> vector<2x16x96xf32>
    %146 = arith.addf %141, %145 : vector<2x16x96xf32>
    %c0_144 = arith.constant 0 : index
    %c0_145 = arith.constant 0 : index
    %147 = vector.load %arg9[%c0_144, %c0_145] : memref<1x96xf32, #tpu.memory_space<vmem>>, vector<1x96xf32>
    %148 = vector.shape_cast %147 : vector<1x96xf32> to vector<1x1x96xf32>
    %149 = vector.broadcast %148 : vector<1x1x96xf32> to vector<2x16x96xf32>
    %150 = arith.addf %146, %149 : vector<2x16x96xf32>
    %cst_146 = arith.constant 0.000000e+00 : f32
    %151 = vector.broadcast %cst_146 : f32 to vector<2x16x96xf32>
    %152 = arith.maximumf %150, %151 : vector<2x16x96xf32>
    %153 = vector.shape_cast %137 : vector<2x16x96xf32> to vector<2x16x1x96xf32>
    %154 = vector.shape_cast %152 : vector<2x16x96xf32> to vector<2x16x1x96xf32>
    %155 = tpu.concatenate %153, %154 in 2 : vector<2x16x1x96xf32>, vector<2x16x1x96xf32> -> vector<2x16x2x96xf32>
    %156 = vector.shape_cast %155 : vector<2x16x2x96xf32> to vector<2x32x96xf32>
    %c0_147 = arith.constant 0 : index
    %c1_148 = arith.constant 1 : index
    %c0_149 = arith.constant 0 : index
    %157 = vector.load %arg16[%c0_147, %c1_148, %c0_149] : memref<2x34x96xf32, #tpu.memory_space<vmem>>, vector<2x32x96xf32>
    tpu.vector_store %arg16[%c0_147, %c1_148, %c0_149], %156 {strides = array<i32>} : memref<2x34x96xf32, #tpu.memory_space<vmem>>, vector<2x32x96xf32>,
    %c0_150 = arith.constant 0 : index
    %c0_151 = arith.constant 0 : index
    %c0_152 = arith.constant 0 : index
    %158 = vector.load %arg16[%c0_150, %c0_151, %c0_152] : memref<2x34x96xf32, #tpu.memory_space<vmem>>, vector<2x32x96xf32>
    %c0_153 = arith.constant 0 : index
    %c0_154 = arith.constant 0 : index
    %c0_155 = arith.constant 0 : index
    %159 = vector.load %arg10[%c0_153, %c0_154, %c0_155] : memref<4x96x192xf32, #tpu.memory_space<vmem>>, vector<1x96x192xf32>
    %160 = vector.shape_cast %159 : vector<1x96x192xf32> to vector<96x192xf32>
    %cst_156 = arith.constant dense<0.000000e+00> : vector<2x32x192xf32>
    %161 = tpu.matmul %158, %160, %cst_156 {dimension_numbers = #tpu.dot_dimension_numbers<[2], [0], [0, 1], [1], [0, 0, 0, 1, 1, 1], [], []>} : vector<2x32x96xf32>, vector<96x192xf32>, vector<2x32x192xf32> -> vector<2x32x192xf32>
    %c0_157 = arith.constant 0 : index
    %c1_158 = arith.constant 1 : index
    %c0_159 = arith.constant 0 : index
    %162 = vector.load %arg16[%c0_157, %c1_158, %c0_159] : memref<2x34x96xf32, #tpu.memory_space<vmem>>, vector<2x32x96xf32>
    %c1_160 = arith.constant 1 : index
    %c0_161 = arith.constant 0 : index
    %c0_162 = arith.constant 0 : index
    %163 = vector.load %arg10[%c1_160, %c0_161, %c0_162] : memref<4x96x192xf32, #tpu.memory_space<vmem>>, vector<1x96x192xf32>
    %164 = vector.shape_cast %163 : vector<1x96x192xf32> to vector<96x192xf32>
    %cst_163 = arith.constant dense<0.000000e+00> : vector<2x32x192xf32>
    %165 = tpu.matmul %162, %164, %cst_163 {dimension_numbers = #tpu.dot_dimension_numbers<[2], [0], [0, 1], [1], [0, 0, 0, 1, 1, 1], [], []>} : vector<2x32x96xf32>, vector<96x192xf32>, vector<2x32x192xf32> -> vector<2x32x192xf32>
    %166 = arith.addf %161, %165 : vector<2x32x192xf32>
    %c0_164 = arith.constant 0 : index
    %c0_165 = arith.constant 0 : index
    %167 = vector.load %arg11[%c0_164, %c0_165] : memref<1x192xf32, #tpu.memory_space<vmem>>, vector<1x192xf32>
    %168 = vector.shape_cast %167 : vector<1x192xf32> to vector<1x1x192xf32>
    %169 = vector.broadcast %168 : vector<1x1x192xf32> to vector<2x32x192xf32>
    %170 = arith.addf %166, %169 : vector<2x32x192xf32>
    %171 = math.tanh %170 : vector<2x32x192xf32>
    %c0_166 = arith.constant 0 : index
    %c1_167 = arith.constant 1 : index
    %c0_168 = arith.constant 0 : index
    %172 = vector.load %arg16[%c0_166, %c1_167, %c0_168] : memref<2x34x96xf32, #tpu.memory_space<vmem>>, vector<2x32x96xf32>
    %c2_169 = arith.constant 2 : index
    %c0_170 = arith.constant 0 : index
    %c0_171 = arith.constant 0 : index
    %173 = vector.load %arg10[%c2_169, %c0_170, %c0_171] : memref<4x96x192xf32, #tpu.memory_space<vmem>>, vector<1x96x192xf32>
    %174 = vector.shape_cast %173 : vector<1x96x192xf32> to vector<96x192xf32>
    %cst_172 = arith.constant dense<0.000000e+00> : vector<2x32x192xf32>
    %175 = tpu.matmul %172, %174, %cst_172 {dimension_numbers = #tpu.dot_dimension_numbers<[2], [0], [0, 1], [1], [0, 0, 0, 1, 1, 1], [], []>} : vector<2x32x96xf32>, vector<96x192xf32>, vector<2x32x192xf32> -> vector<2x32x192xf32>
    %c0_173 = arith.constant 0 : index
    %c2_174 = arith.constant 2 : index
    %c0_175 = arith.constant 0 : index
    %176 = vector.load %arg16[%c0_173, %c2_174, %c0_175] : memref<2x34x96xf32, #tpu.memory_space<vmem>>, vector<2x32x96xf32>
    %c3_176 = arith.constant 3 : index
    %c0_177 = arith.constant 0 : index
    %c0_178 = arith.constant 0 : index
    %177 = vector.load %arg10[%c3_176, %c0_177, %c0_178] : memref<4x96x192xf32, #tpu.memory_space<vmem>>, vector<1x96x192xf32>
    %178 = vector.shape_cast %177 : vector<1x96x192xf32> to vector<96x192xf32>
    %cst_179 = arith.constant dense<0.000000e+00> : vector<2x32x192xf32>
    %179 = tpu.matmul %176, %178, %cst_179 {dimension_numbers = #tpu.dot_dimension_numbers<[2], [0], [0, 1], [1], [0, 0, 0, 1, 1, 1], [], []>} : vector<2x32x96xf32>, vector<96x192xf32>, vector<2x32x192xf32> -> vector<2x32x192xf32>
    %180 = arith.addf %175, %179 : vector<2x32x192xf32>
    %c0_180 = arith.constant 0 : index
    %c0_181 = arith.constant 0 : index
    %181 = vector.load %arg11[%c0_180, %c0_181] : memref<1x192xf32, #tpu.memory_space<vmem>>, vector<1x192xf32>
    %182 = vector.shape_cast %181 : vector<1x192xf32> to vector<1x1x192xf32>
    %183 = vector.broadcast %182 : vector<1x1x192xf32> to vector<2x32x192xf32>
    %184 = arith.addf %180, %183 : vector<2x32x192xf32>
    %185 = math.tanh %184 : vector<2x32x192xf32>
    %186 = vector.shape_cast %171 : vector<2x32x192xf32> to vector<2x32x1x192xf32>
    %187 = vector.shape_cast %185 : vector<2x32x192xf32> to vector<2x32x1x192xf32>
    %188 = tpu.concatenate %186, %187 in 2 : vector<2x32x1x192xf32>, vector<2x32x1x192xf32> -> vector<2x32x2x192xf32>
    %189 = vector.shape_cast %188 : vector<2x32x2x192xf32> to vector<2x64x192xf32>
    %190 = vector.extract_strided_slice %189 {offsets = [0, 0, 0], sizes = [2, 64, 64], strides = [1, 1, 1]} : vector<2x64x192xf32> to vector<2x64x64xf32>
    %c0_182 = arith.constant 0 : index
    %c0_183 = arith.constant 0 : index
    %c0_184 = arith.constant 0 : index
    %c0_185 = arith.constant 0 : index
    %191 = vector.load %arg12[%c0_182, %c0_183, %c0_184, %c0_185] : memref<2x3x64x64xf32, #tpu.memory_space<vmem>>, vector<2x1x64x64xf32>
    %192 = vector.shape_cast %191 : vector<2x1x64x64xf32> to vector<2x64x64xf32>
    %193 = vector.shape_cast %190 : vector<2x64x64xf32> to vector<2x1x64x64xf32>
    tpu.vector_store %arg12[%c0_182, %c0_183, %c0_184, %c0_185], %193 {strides = array<i32>} : memref<2x3x64x64xf32, #tpu.memory_space<vmem>>, vector<2x1x64x64xf32>,
    %194 = vector.extract_strided_slice %189 {offsets = [0, 0, 64], sizes = [2, 64, 64], strides = [1, 1, 1]} : vector<2x64x192xf32> to vector<2x64x64xf32>
    %c0_186 = arith.constant 0 : index
    %c1_187 = arith.constant 1 : index
    %c0_188 = arith.constant 0 : index
    %c0_189 = arith.constant 0 : index
    %195 = vector.load %arg12[%c0_186, %c1_187, %c0_188, %c0_189] : memref<2x3x64x64xf32, #tpu.memory_space<vmem>>, vector<2x1x64x64xf32>
    %196 = vector.shape_cast %195 : vector<2x1x64x64xf32> to vector<2x64x64xf32>
    %197 = vector.shape_cast %194 : vector<2x64x64xf32> to vector<2x1x64x64xf32>
    tpu.vector_store %arg12[%c0_186, %c1_187, %c0_188, %c0_189], %197 {strides = array<i32>} : memref<2x3x64x64xf32, #tpu.memory_space<vmem>>, vector<2x1x64x64xf32>,
    %198 = vector.extract_strided_slice %189 {offsets = [0, 0, 128], sizes = [2, 64, 64], strides = [1, 1, 1]} : vector<2x64x192xf32> to vector<2x64x64xf32>
    %c0_190 = arith.constant 0 : index
    %c2_191 = arith.constant 2 : index
    %c0_192 = arith.constant 0 : index
    %c0_193 = arith.constant 0 : index
    %199 = vector.load %arg12[%c0_190, %c2_191, %c0_192, %c0_193] : memref<2x3x64x64xf32, #tpu.memory_space<vmem>>, vector<2x1x64x64xf32>
    %200 = vector.shape_cast %199 : vector<2x1x64x64xf32> to vector<2x64x64xf32>
    %201 = vector.shape_cast %198 : vector<2x64x64xf32> to vector<2x1x64x64xf32>
    tpu.vector_store %arg12[%c0_190, %c2_191, %c0_192, %c0_193], %201 {strides = array<i32>} : memref<2x3x64x64xf32, #tpu.memory_space<vmem>>, vector<2x1x64x64xf32>,
    return
  }
  func.func @transform_0(%arg0: i32) -> (i32, i32, i32) {
    %c0_i32 = arith.constant 0 : i32
    %c0_i32_0 = arith.constant 0 : i32
    %c0_i32_1 = arith.constant 0 : i32
    return %arg0, %c0_i32, %c0_i32_0 : i32, i32, i32
  }
  func.func @transform_1(%arg0: i32) -> (i32, i32) {
    %c0_i32 = arith.constant 0 : i32
    %c0_i32_0 = arith.constant 0 : i32
    %c0_i32_1 = arith.constant 0 : i32
    return %c0_i32, %c0_i32_0 : i32, i32
  }
  func.func @transform_2(%arg0: i32) -> (i32, i32) {
    %c0_i32 = arith.constant 0 : i32
    %c0_i32_0 = arith.constant 0 : i32
    %c0_i32_1 = arith.constant 0 : i32
    return %c0_i32, %c0_i32_0 : i32, i32
  }
  func.func @transform_3(%arg0: i32) -> (i32, i32, i32) {
    %c0_i32 = arith.constant 0 : i32
    %c0_i32_0 = arith.constant 0 : i32
    %c0_i32_1 = arith.constant 0 : i32
    %c0_i32_2 = arith.constant 0 : i32
    return %c0_i32, %c0_i32_0, %c0_i32_1 : i32, i32, i32
  }
  func.func @transform_4(%arg0: i32) -> (i32, i32) {
    %c0_i32 = arith.constant 0 : i32
    %c0_i32_0 = arith.constant 0 : i32
    %c0_i32_1 = arith.constant 0 : i32
    return %c0_i32, %c0_i32_0 : i32, i32
  }
  func.func @transform_5(%arg0: i32) -> (i32, i32, i32) {
    %c0_i32 = arith.constant 0 : i32
    %c0_i32_0 = arith.constant 0 : i32
    %c0_i32_1 = arith.constant 0 : i32
    %c0_i32_2 = arith.constant 0 : i32
    return %c0_i32, %c0_i32_0, %c0_i32_1 : i32, i32, i32
  }
  func.func @transform_6(%arg0: i32) -> (i32, i32) {
    %c0_i32 = arith.constant 0 : i32
    %c0_i32_0 = arith.constant 0 : i32
    %c0_i32_1 = arith.constant 0 : i32
    return %c0_i32, %c0_i32_0 : i32, i32
  }
  func.func @transform_7(%arg0: i32) -> (i32, i32, i32) {
    %c0_i32 = arith.constant 0 : i32
    %c0_i32_0 = arith.constant 0 : i32
    %c0_i32_1 = arith.constant 0 : i32
    %c0_i32_2 = arith.constant 0 : i32
    return %c0_i32, %c0_i32_0, %c0_i32_1 : i32, i32, i32
  }
  func.func @transform_8(%arg0: i32) -> (i32, i32) {
    %c0_i32 = arith.constant 0 : i32
    %c0_i32_0 = arith.constant 0 : i32
    %c0_i32_1 = arith.constant 0 : i32
    return %c0_i32, %c0_i32_0 : i32, i32
  }
  func.func @transform_9(%arg0: i32) -> (i32, i32, i32) {
    %c0_i32 = arith.constant 0 : i32
    %c0_i32_0 = arith.constant 0 : i32
    %c0_i32_1 = arith.constant 0 : i32
    %c0_i32_2 = arith.constant 0 : i32
    return %c0_i32, %c0_i32_0, %c0_i32_1 : i32, i32, i32
  }
  func.func @transform_10(%arg0: i32) -> (i32, i32) {
    %c0_i32 = arith.constant 0 : i32
    %c0_i32_0 = arith.constant 0 : i32
    %c0_i32_1 = arith.constant 0 : i32
    return %c0_i32, %c0_i32_0 : i32, i32
  }
  func.func @transform_11(%arg0: i32) -> (i32, i32, i32, i32) {
    %c0_i32 = arith.constant 0 : i32
    %c0_i32_0 = arith.constant 0 : i32
    %c0_i32_1 = arith.constant 0 : i32
    %c0_i32_2 = arith.constant 0 : i32
    return %arg0, %c0_i32, %c0_i32_0, %c0_i32_1 : i32, i32, i32, i32
  }
}

</mosaic_0001>

<llo_original>
// kernel: gen_nn_ske_to_image.1
$region0: #{gen_nn_ske_to_image.1}
  #allocation0 [shape = 'u32[]', space=smem, size = 0x4, offset = 0x4, fixed_abs, tag = 'smem constant byte address 0x4 - core index']
  #allocation1 [shape = 'u32[72,128]{1,0:T(1,128)}', space=vmem, size = 0x9000, scoped, tag = 'internal scratch']
  #allocation2 [shape = 'f32[2,6,512]{2,1,0:T(8,128)}', space=vmem, size = 0x8000, scoped, tag = 'scratch operand']
  #allocation3 [shape = 'f32[2,10,512]{2,1,0:T(8,128)}', space=vmem, size = 0x10000, scoped, tag = 'scratch operand']
  #allocation4 [shape = 'f32[2,18,512]{2,1,0:T(8,128)}', space=vmem, size = 0x18000, scoped, tag = 'scratch operand']
  #allocation5 [shape = 'f32[2,34,96]{2,1,0:T(8,128)}', space=vmem, size = 0xa000, scoped, tag = 'scratch operand']
  %s0 = inlined_call_operand.hbm [shape: f32[2,1,26], index: 0, kind: input, shape index: {}]
  %s1 = inlined_call_operand.hbm [shape: f32[26,2048], index: 1, kind: input, shape index: {}]
  %s2 = inlined_call_operand.hbm [shape: f32[1,2048], index: 2, kind: input, shape index: {}]
  %s3 = inlined_call_operand.hbm [shape: f32[4,512,512], index: 3, kind: input, shape index: {}]
  %s4 = inlined_call_operand.hbm [shape: f32[1,512], index: 4, kind: input, shape index: {}]
  %s5 = inlined_call_operand.hbm [shape: f32[4,512,512], index: 5, kind: input, shape index: {}]
  %s6 = inlined_call_operand.hbm [shape: f32[1,512], index: 6, kind: input, shape index: {}]
  %s7 = inlined_call_operand.vmem [shape: f32[4,512,96], index: 7, kind: input, shape index: {}]
  %s8 = inlined_call_operand.hbm [shape: f32[1,96], index: 8, kind: input, shape index: {}]
  %s9 = inlined_call_operand.hbm [shape: f32[4,96,192], index: 9, kind: input, shape index: {}]
  %s10 = inlined_call_operand.hbm [shape: f32[1,192], index: 10, kind: input, shape index: {}]
  %s11 = inlined_call_operand.hbm [shape: f32[2,3,64,64], index: 11, kind: output, shape index: {}]
  %s12 = sld [smem:[#allocation0]]
  $region94: #{gen_nn_ske_to_image.1} parent=0
    _
  %s14 = ssub.s32 1, %s12
  %s15 = scalar_select 0, %s14, %s12
  $region1: #{gen_nn_ske_to_image.1} parent=0
    #allocation6 [shape = 'u8[1024]{0}', space=vmem, size = 0x400, scoped, tag = 'input window, operand 0, single buffered']
    #allocation7 [shape = 's32[1]{0}', space=sflag, size = 0x4, scoped, tag = 'scoped memory for gen_nn_ske_to_image.1']
    #allocation8 [shape = 's32[1]{0}', space=sflag, size = 0x4, scoped, tag = 'scoped memory for gen_nn_ske_to_image.1']
    #allocation9 [shape = 'u8[262144]{0}', space=vmem, size = 0x40000, scoped, tag = 'input window, operand 1, single buffered']
    #allocation10 [shape = 's32[1]{0}', space=sflag, size = 0x4, scoped, tag = 'scoped memory for gen_nn_ske_to_image.1']
    #allocation11 [shape = 'u8[8192]{0}', space=vmem, size = 0x2000, scoped, tag = 'input window, operand 2, single buffered']
    #allocation12 [shape = 'u8[4194304]{0}', space=vmem, size = 0x400000, scoped, tag = 'input window, operand 3, single buffered']
    #allocation13 [shape = 's32[1]{0}', space=sflag, size = 0x4, scoped, tag = 'scoped memory for gen_nn_ske_to_image.1']
    #allocation14 [shape = 'u8[2048]{0}', space=vmem, size = 0x800, scoped, tag = 'input window, operand 4, single buffered']
    #allocation15 [shape = 'u8[4194304]{0}', space=vmem, size = 0x400000, scoped, tag = 'input window, operand 5, single buffered']
    #allocation16 [shape = 's32[1]{0}', space=sflag, size = 0x4, scoped, tag = 'scoped memory for gen_nn_ske_to_image.1']
    #allocation17 [shape = 'u8[2048]{0}', space=vmem, size = 0x800, scoped, tag = 'input window, operand 6, single buffered']
    #allocation18 [shape = 'u8[512]{0}', space=vmem, size = 0x400, scoped, tag = 'input window, operand 8, single buffered']
    #allocation19 [shape = 's32[1]{0}', space=sflag, size = 0x4, scoped, tag = 'scoped memory for gen_nn_ske_to_image.1']
    #allocation20 [shape = 'u8[393216]{0}', space=vmem, size = 0x60000, scoped, tag = 'input window, operand 9, single buffered']
    #allocation21 [shape = 'u8[1024]{0}', space=vmem, size = 0x400, scoped, tag = 'input window, operand 10, single buffered']
    #allocation22 [shape = 's32[1]{0}', space=sflag, size = 0x4, scoped, tag = 'scoped memory for gen_nn_ske_to_image.1']
    #allocation23 [shape = 'u8[196608]{0}', space=vmem, size = 0x30000, scoped, tag = 'output window, operand 0, single buffered']
    %16 = vsyncpa [#allocation7], 0
    %17 = vsyncpa [#allocation10], 0
    %18 = vsyncpa [#allocation13], 0
    %19 = vsyncpa [#allocation16], 0
    %20 = vsyncpa [#allocation19], 0
    %21 = vsyncpa [#allocation22], 0
    %22 = vsyncpa [#allocation8], 0
    // Predicated region
    $region2: #{gen_nn_ske_to_image.1} parent=1 // pred_check
      _
    $region3: #{gen_nn_ske_to_image.1} parent=1 // pred_check_branch
      %24 = sbr.rel (0) target = $region5
    $region4: #{gen_nn_ske_to_image.1} parent=1 // pred_region
      %26 = vsyncadd [#allocation7], 0
      %s27 = sshll.u32 %s0, 4
      %s28 = int_to_ptr.hbm [resolvable:$true] %s27
      %s29 = sshll.u32 [#allocation6], 4
      %s30 = int_to_ptr.vmem [resolvable:$true] %s29
      %35 = dma.hbm_to_vmem [thread:$0]  %s28, 32, %s30, [#allocation7], 16, 16, 1
    $region5: #{gen_nn_ske_to_image.1} parent=1 // pred_fallthru
      _
    // Predicated region
    $region6: #{gen_nn_ske_to_image.1} parent=1 // pred_check
      _
    $region7: #{gen_nn_ske_to_image.1} parent=1 // pred_check_branch
      %37 = sbr.rel (0) target = $region9
    $region8: #{gen_nn_ske_to_image.1} parent=1 // pred_region
      %39 = vsyncadd [#allocation10], 0
      %s40 = sshll.u32 %s1, 4
      %s41 = int_to_ptr.hbm [resolvable:$true] %s40
      %s42 = sshll.u32 [#allocation9], 4
      %s43 = int_to_ptr.vmem [resolvable:$true] %s42
      %48 = dma.hbm_to_vmem [thread:$0]  %s41, 8192, %s43, [#allocation10], 2048, 2048, 128
    $region9: #{gen_nn_ske_to_image.1} parent=1 // pred_fallthru
      _
    // Predicated region
    $region10: #{gen_nn_ske_to_image.1} parent=1 // pred_check
      _
    $region11: #{gen_nn_ske_to_image.1} parent=1 // pred_check_branch
      %50 = sbr.rel (0) target = $region13
    $region12: #{gen_nn_ske_to_image.1} parent=1 // pred_region
      %52 = vsyncadd [#allocation10], 0
      %s54 = sshll.u32 %s2, 4
      %s55 = int_to_ptr.hbm [resolvable:$true] %s54
      %s56 = sshll.u32 [#allocation11], 4
      %s57 = int_to_ptr.vmem [resolvable:$true] %s56
      %59 = dma.hbm_to_vmem [thread:$0]  %s55, 256, %s57, [#allocation10]
    $region13: #{gen_nn_ske_to_image.1} parent=1 // pred_fallthru
      _
    // Predicated region
    $region14: #{gen_nn_ske_to_image.1} parent=1 // pred_check
      _
    $region15: #{gen_nn_ske_to_image.1} parent=1 // pred_check_branch
      %61 = sbr.rel (0) target = $region17
    $region16: #{gen_nn_ske_to_image.1} parent=1 // pred_region
      %63 = vsyncadd [#allocation13], 0
      %s64 = sshll.u32 %s3, 4
      %s65 = int_to_ptr.hbm [resolvable:$true] %s64
      %s66 = sshll.u32 [#allocation12], 4
      %s67 = int_to_ptr.vmem [resolvable:$true] %s66
      %72 = dma.hbm_to_vmem [thread:$0]  %s65, 131072, %s67, [#allocation13], 512, 512, 32
    $region17: #{gen_nn_ske_to_image.1} parent=1 // pred_fallthru
      _
    // Predicated region
    $region18: #{gen_nn_ske_to_image.1} parent=1 // pred_check
      _
    $region19: #{gen_nn_ske_to_image.1} parent=1 // pred_check_branch
      %74 = sbr.rel (0) target = $region21
    $region20: #{gen_nn_ske_to_image.1} parent=1 // pred_region
      %76 = vsyncadd [#allocation13], 0
      %s78 = sshll.u32 %s4, 4
      %s79 = int_to_ptr.hbm [resolvable:$true] %s78
      %s80 = sshll.u32 [#allocation14], 4
      %s81 = int_to_ptr.vmem [resolvable:$true] %s80
      %83 = dma.hbm_to_vmem [thread:$0]  %s79, 64, %s81, [#allocation13]
    $region21: #{gen_nn_ske_to_image.1} parent=1 // pred_fallthru
      _
    // Predicated region
    $region22: #{gen_nn_ske_to_image.1} parent=1 // pred_check
      _
    $region23: #{gen_nn_ske_to_image.1} parent=1 // pred_check_branch
      %85 = sbr.rel (0) target = $region25
    $region24: #{gen_nn_ske_to_image.1} parent=1 // pred_region
      %87 = vsyncadd [#allocation16], 0
      %s88 = sshll.u32 %s5, 4
      %s89 = int_to_ptr.hbm [resolvable:$true] %s88
      %s90 = sshll.u32 [#allocation15], 4
      %s91 = int_to_ptr.vmem [resolvable:$true] %s90
      %96 = dma.hbm_to_vmem [thread:$0]  %s89, 131072, %s91, [#allocation16], 512, 512, 32
    $region25: #{gen_nn_ske_to_image.1} parent=1 // pred_fallthru
      _
    // Predicated region
    $region26: #{gen_nn_ske_to_image.1} parent=1 // pred_check
      _
    $region27: #{gen_nn_ske_to_image.1} parent=1 // pred_check_branch
      %98 = sbr.rel (0) target = $region29
    $region28: #{gen_nn_ske_to_image.1} parent=1 // pred_region
      %100 = vsyncadd [#allocation16], 0
      %s102 = sshll.u32 %s6, 4
      %s103 = int_to_ptr.hbm [resolvable:$true] %s102
      %s104 = sshll.u32 [#allocation17], 4
      %s105 = int_to_ptr.vmem [resolvable:$true] %s104
      %107 = dma.hbm_to_vmem [thread:$0]  %s103, 64, %s105, [#allocation16]
    $region29: #{gen_nn_ske_to_image.1} parent=1 // pred_fallthru
      _
    // Predicated region
    $region30: #{gen_nn_ske_to_image.1} parent=1 // pred_check
      _
    $region31: #{gen_nn_ske_to_image.1} parent=1 // pred_check_branch
      %109 = sbr.rel (0) target = $region33
    $region32: #{gen_nn_ske_to_image.1} parent=1 // pred_region
      _
    $region33: #{gen_nn_ske_to_image.1} parent=1 // pred_fallthru
      _
    // Predicated region
    $region34: #{gen_nn_ske_to_image.1} parent=1 // pred_check
      _
    $region35: #{gen_nn_ske_to_image.1} parent=1 // pred_check_branch
      %111 = sbr.rel (0) target = $region37
    $region36: #{gen_nn_ske_to_image.1} parent=1 // pred_region
      %113 = vsyncadd [#allocation19], 0
      %s115 = sshll.u32 %s8, 4
      %s116 = int_to_ptr.hbm [resolvable:$true] %s115
      %s117 = sshll.u32 [#allocation18], 4
      %s118 = int_to_ptr.vmem [resolvable:$true] %s117
      %120 = dma.hbm_to_vmem [thread:$0]  %s116, 16, %s118, [#allocation19]
    $region37: #{gen_nn_ske_to_image.1} parent=1 // pred_fallthru
      _
    // Predicated region
    $region38: #{gen_nn_ske_to_image.1} parent=1 // pred_check
      _
    $region39: #{gen_nn_ske_to_image.1} parent=1 // pred_check_branch
      %122 = sbr.rel (0) target = $region41
    $region40: #{gen_nn_ske_to_image.1} parent=1 // pred_region
      %124 = vsyncadd [#allocation19], 0
      %s125 = sshll.u32 %s9, 4
      %s126 = int_to_ptr.hbm [resolvable:$true] %s125
      %s127 = sshll.u32 [#allocation20], 4
      %s128 = int_to_ptr.vmem [resolvable:$true] %s127
      %133 = dma.hbm_to_vmem [thread:$0]  %s126, 12288, %s128, [#allocation19], 256, 256, 16
    $region41: #{gen_nn_ske_to_image.1} parent=1 // pred_fallthru
      _
    // Predicated region
    $region42: #{gen_nn_ske_to_image.1} parent=1 // pred_check
      _
    $region43: #{gen_nn_ske_to_image.1} parent=1 // pred_check_branch
      %135 = sbr.rel (0) target = $region45
    $region44: #{gen_nn_ske_to_image.1} parent=1 // pred_region
      %137 = vsyncadd [#allocation22], 0
      %s139 = sshll.u32 %s10, 4
      %s140 = int_to_ptr.hbm [resolvable:$true] %s139
      %s141 = sshll.u32 [#allocation21], 4
      %s142 = int_to_ptr.vmem [resolvable:$true] %s141
      %144 = dma.hbm_to_vmem [thread:$0]  %s140, 32, %s142, [#allocation22]
    $region45: #{gen_nn_ske_to_image.1} parent=1 // pred_fallthru
      _
    // Predicated region
    $region46: #{gen_nn_ske_to_image.1} parent=1 // pred_check
      _
    $region47: #{gen_nn_ske_to_image.1} parent=1 // pred_check_branch
      %146 = sbr.rel (0) target = $region49
    $region48: #{gen_nn_ske_to_image.1} parent=1 // pred_region
      %148 = dma.done [#allocation7], 32
    $region49: #{gen_nn_ske_to_image.1} parent=1 // pred_fallthru
      _
    // Predicated region
    $region50: #{gen_nn_ske_to_image.1} parent=1 // pred_check
      _
    $region51: #{gen_nn_ske_to_image.1} parent=1 // pred_check_branch
      %150 = sbr.rel (0) target = $region53
    $region52: #{gen_nn_ske_to_image.1} parent=1 // pred_region
      %152 = dma.done [#allocation10], 8192
    $region53: #{gen_nn_ske_to_image.1} parent=1 // pred_fallthru
      _
    // Predicated region
    $region54: #{gen_nn_ske_to_image.1} parent=1 // pred_check
      _
    $region55: #{gen_nn_ske_to_image.1} parent=1 // pred_check_branch
      %154 = sbr.rel (0) target = $region57
    $region56: #{gen_nn_ske_to_image.1} parent=1 // pred_region
      %156 = dma.done [#allocation10], 256
    $region57: #{gen_nn_ske_to_image.1} parent=1 // pred_fallthru
      _
    // Predicated region
    $region58: #{gen_nn_ske_to_image.1} parent=1 // pred_check
      _
    $region59: #{gen_nn_ske_to_image.1} parent=1 // pred_check_branch
      %158 = sbr.rel (0) target = $region61
    $region60: #{gen_nn_ske_to_image.1} parent=1 // pred_region
      %160 = dma.done [#allocation13], 131072
    $region61: #{gen_nn_ske_to_image.1} parent=1 // pred_fallthru
      _
    // Predicated region
    $region62: #{gen_nn_ske_to_image.1} parent=1 // pred_check
      _
    $region63: #{gen_nn_ske_to_image.1} parent=1 // pred_check_branch
      %162 = sbr.rel (0) target = $region65
    $region64: #{gen_nn_ske_to_image.1} parent=1 // pred_region
      %164 = dma.done [#allocation13], 64
    $region65: #{gen_nn_ske_to_image.1} parent=1 // pred_fallthru
      _
    // Predicated region
    $region66: #{gen_nn_ske_to_image.1} parent=1 // pred_check
      _
    $region67: #{gen_nn_ske_to_image.1} parent=1 // pred_check_branch
      %166 = sbr.rel (0) target = $region69
    $region68: #{gen_nn_ske_to_image.1} parent=1 // pred_region
      %168 = dma.done [#allocation16], 131072
    $region69: #{gen_nn_ske_to_image.1} parent=1 // pred_fallthru
      _
    // Predicated region
    $region70: #{gen_nn_ske_to_image.1} parent=1 // pred_check
      _
    $region71: #{gen_nn_ske_to_image.1} parent=1 // pred_check_branch
      %170 = sbr.rel (0) target = $region73
    $region72: #{gen_nn_ske_to_image.1} parent=1 // pred_region
      %172 = dma.done [#allocation16], 64
    $region73: #{gen_nn_ske_to_image.1} parent=1 // pred_fallthru
      _
    // Predicated region
    $region74: #{gen_nn_ske_to_image.1} parent=1 // pred_check
      _
    $region75: #{gen_nn_ske_to_image.1} parent=1 // pred_check_branch
      %174 = sbr.rel (0) target = $region77
    $region76: #{gen_nn_ske_to_image.1} parent=1 // pred_region
      %176 = dma.done [#allocation19], 16
    $region77: #{gen_nn_ske_to_image.1} parent=1 // pred_fallthru
      _
    // Predicated region
    $region78: #{gen_nn_ske_to_image.1} parent=1 // pred_check
      _
    $region79: #{gen_nn_ske_to_image.1} parent=1 // pred_check_branch
      %178 = sbr.rel (0) target = $region81
    $region80: #{gen_nn_ske_to_image.1} parent=1 // pred_region
      %180 = dma.done [#allocation19], 12288
    $region81: #{gen_nn_ske_to_image.1} parent=1 // pred_fallthru
      _
    // Predicated region
    $region82: #{gen_nn_ske_to_image.1} parent=1 // pred_check
      _
    $region83: #{gen_nn_ske_to_image.1} parent=1 // pred_check_branch
      %182 = sbr.rel (0) target = $region85
    $region84: #{gen_nn_ske_to_image.1} parent=1 // pred_region
      %184 = dma.done [#allocation22], 32
    $region85: #{gen_nn_ske_to_image.1} parent=1 // pred_fallthru
      _
    %v185 = vlaneseq
    %vm186 = vcmp.ge.s32.totalorder %v185, 0
    %vm187 = vcmp.lt.s32.totalorder %v185, 512
    %vm188 = vmand %vm186, %vm187
    %189 = vst.msk [vmem:[#allocation2] ss:$8 sm:$0xf] %vm188, 0.0
    %190 = vst.msk [vmem:[#allocation2] ss:$8 sm:$0x0] %vm188, 0.0
    %s191 = scalar_lea.vmem [#allocation2], 32
    %192 = vst.msk [vmem:[%s191] ss:$8 sm:$0xf] %vm188, 0.0
    %193 = vst.msk [vmem:[%s191] ss:$8 sm:$0x0] %vm188, 0.0
    %s194 = scalar_lea.vmem [#allocation2], 5
    %195 = vst.msk [vmem:[%s194] ss:$8 sm:$0xf] %vm188, 0.0
    %196 = vst.msk [vmem:[%s194] ss:$8 sm:$0x0] %vm188, 0.0
    %s197 = scalar_lea.vmem [#allocation2], 37
    %198 = vst.msk [vmem:[%s197] ss:$8 sm:$0xf] %vm188, 0.0
    %199 = vst.msk [vmem:[%s197] ss:$8 sm:$0x0] %vm188, 0.0
    %200 = vst.msk [vmem:[#allocation3] ss:$8 sm:$0xf] %vm188, 0.0
    %201 = vst.msk [vmem:[#allocation3] ss:$8 sm:$0x0] %vm188, 0.0
    %s202 = scalar_lea.vmem [#allocation3], 64
    %203 = vst.msk [vmem:[%s202] ss:$8 sm:$0xf] %vm188, 0.0
    %204 = vst.msk [vmem:[%s202] ss:$8 sm:$0x0] %vm188, 0.0
    %s205 = scalar_lea.vmem [#allocation3], 33
    %206 = vst.msk [vmem:[%s205] ss:$8 sm:$0xf] %vm188, 0.0
    %207 = vst.msk [vmem:[%s205] ss:$8 sm:$0x0] %vm188, 0.0
    %s208 = scalar_lea.vmem [#allocation3], 97
    %209 = vst.msk [vmem:[%s208] ss:$8 sm:$0xf] %vm188, 0.0
    %210 = vst.msk [vmem:[%s208] ss:$8 sm:$0x0] %vm188, 0.0
    %211 = vst.msk [vmem:[#allocation4] ss:$8 sm:$0xf] %vm188, 0.0
    %212 = vst.msk [vmem:[#allocation4] ss:$8 sm:$0x0] %vm188, 0.0
    %s213 = scalar_lea.vmem [#allocation4], 96
    %214 = vst.msk [vmem:[%s213] ss:$8 sm:$0xf] %vm188, 0.0
    %215 = vst.msk [vmem:[%s213] ss:$8 sm:$0x0] %vm188, 0.0
    %s216 = scalar_lea.vmem [#allocation4], 65
    %217 = vst.msk [vmem:[%s216] ss:$8 sm:$0xf] %vm188, 0.0
    %218 = vst.msk [vmem:[%s216] ss:$8 sm:$0x0] %vm188, 0.0
    %s219 = scalar_lea.vmem [#allocation4], 161
    %220 = vst.msk [vmem:[%s219] ss:$8 sm:$0xf] %vm188, 0.0
    %221 = vst.msk [vmem:[%s219] ss:$8 sm:$0x0] %vm188, 0.0
    %vm222 = vcmask 778240
    %223 = vst.msk [vmem:[#allocation5] sm:$0x1] %vm222, 0.0
    %224 = vst.msk [vmem:[#allocation5 + $0x28] sm:$0x1] %vm222, 0.0
    %225 = vst.msk [vmem:[#allocation5 + $0x21] sm:$0x1] %vm222, 0.0
    %226 = vst.msk [vmem:[#allocation5 + $0x49] sm:$0x1] %vm222, 0.0
    %v227 = vld [vmem:[#allocation6] sm:$0x1]
    %v228 = vld [vmem:[#allocation6 + $0x1] sm:$0x1]
    %v229 = vld [vmem:[#allocation9] sm:$0xff]
    %v230 = vld [vmem:[#allocation9 + $0x8] sm:$0xff]
    %v231 = vld [vmem:[#allocation9 + $0x10] sm:$0xff]
    %v232 = vld [vmem:[#allocation9 + $0x18] sm:$0xff]
    %v233 = vld [vmem:[#allocation9 + $0x20] sm:$0xff]
    %v234 = vld [vmem:[#allocation9 + $0x28] sm:$0xff]
    %v235 = vld [vmem:[#allocation9 + $0x30] sm:$0xff]
    %v236 = vld [vmem:[#allocation9 + $0x38] sm:$0xff]
    %v237 = vld [vmem:[#allocation9 + $0x40] sm:$0xff]
    %v238 = vld [vmem:[#allocation9 + $0x48] sm:$0xff]
    %v239 = vld [vmem:[#allocation9 + $0x50] sm:$0xff]
    %v240 = vld [vmem:[#allocation9 + $0x58] sm:$0xff]
    %v241 = vld [vmem:[#allocation9 + $0x60] sm:$0xff]
    %v242 = vld [vmem:[#allocation9 + $0x68] sm:$0xff]
    %v243 = vld [vmem:[#allocation9 + $0x70] sm:$0xff]
    %v244 = vld [vmem:[#allocation9 + $0x78] sm:$0xff]
    %v245 = vld [vmem:[#allocation9 + $0x80] sm:$0xff]
    %v246 = vld [vmem:[#allocation9 + $0x88] sm:$0xff]
    %v247 = vld [vmem:[#allocation9 + $0x90] sm:$0xff]
    %v248 = vld [vmem:[#allocation9 + $0x98] sm:$0xff]
    %v249 = vld [vmem:[#allocation9 + $0xa0] sm:$0xff]
    %v250 = vld [vmem:[#allocation9 + $0xa8] sm:$0xff]
    %v251 = vld [vmem:[#allocation9 + $0xb0] sm:$0xff]
    %v252 = vld [vmem:[#allocation9 + $0xb8] sm:$0xff]
    %v253 = vld [vmem:[#allocation9 + $0xc0] sm:$0xff]
    %v254 = vld [vmem:[#allocation9 + $0xc8] sm:$0xff]
    %v255 = vld [vmem:[#allocation9 + $0xd0] sm:$0xff]
    %v256 = vld [vmem:[#allocation9 + $0xd8] sm:$0xff]
    %v257 = vld [vmem:[#allocation9 + $0xe0] sm:$0xff]
    %v258 = vld [vmem:[#allocation9 + $0xe8] sm:$0xff]
    %v259 = vld [vmem:[#allocation9 + $0xf0] sm:$0xff]
    %v260 = vld [vmem:[#allocation9 + $0xf8] sm:$0xff]
    %v261 = vld [vmem:[#allocation9 + $0x100] sm:$0xff]
    %v262 = vld [vmem:[#allocation9 + $0x108] sm:$0xff]
    %v263 = vld [vmem:[#allocation9 + $0x110] sm:$0xff]
    %v264 = vld [vmem:[#allocation9 + $0x118] sm:$0xff]
    %v265 = vld [vmem:[#allocation9 + $0x120] sm:$0xff]
    %v266 = vld [vmem:[#allocation9 + $0x128] sm:$0xff]
    %v267 = vld [vmem:[#allocation9 + $0x130] sm:$0xff]
    %v268 = vld [vmem:[#allocation9 + $0x138] sm:$0xff]
    %v269 = vld [vmem:[#allocation9 + $0x140] sm:$0xff]
    %v270 = vld [vmem:[#allocation9 + $0x148] sm:$0xff]
    %v271 = vld [vmem:[#allocation9 + $0x150] sm:$0xff]
    %v272 = vld [vmem:[#allocation9 + $0x158] sm:$0xff]
    %v273 = vld [vmem:[#allocation9 + $0x160] sm:$0xff]
    %v274 = vld [vmem:[#allocation9 + $0x168] sm:$0xff]
    %v275 = vld [vmem:[#allocation9 + $0x170] sm:$0xff]
    %v276 = vld [vmem:[#allocation9 + $0x178] sm:$0xff]
    %v277 = vld [vmem:[#allocation9 + $0x180] sm:$0x3]
    %v278 = vld [vmem:[#allocation9 + $0x188] sm:$0x3]
    %v279 = vld [vmem:[#allocation9 + $0x190] sm:$0x3]
    %v280 = vld [vmem:[#allocation9 + $0x198] sm:$0x3]
    %v281 = vld [vmem:[#allocation9 + $0x1a0] sm:$0x3]
    %v282 = vld [vmem:[#allocation9 + $0x1a8] sm:$0x3]
    %v283 = vld [vmem:[#allocation9 + $0x1b0] sm:$0x3]
    %v284 = vld [vmem:[#allocation9 + $0x1b8] sm:$0x3]
    %v285 = vld [vmem:[#allocation9 + $0x1c0] sm:$0x3]
    %v286 = vld [vmem:[#allocation9 + $0x1c8] sm:$0x3]
    %v287 = vld [vmem:[#allocation9 + $0x1d0] sm:$0x3]
    %v288 = vld [vmem:[#allocation9 + $0x1d8] sm:$0x3]
    %v289 = vld [vmem:[#allocation9 + $0x1e0] sm:$0x3]
    %v290 = vld [vmem:[#allocation9 + $0x1e8] sm:$0x3]
    %v291 = vld [vmem:[#allocation9 + $0x1f0] sm:$0x3]
    %v292 = vld [vmem:[#allocation9 + $0x1f8] sm:$0x3]
    %v293 = vld [vmem:[#allocation11] sm:$0xff]
    %v294 = vld [vmem:[#allocation11 + $0x8] sm:$0xff]
    %v297 = vperm.slane %v293, 0
    %v298 = vperm.slane %v293, 1
    %v299 = vperm.slane %v293, 2
    %v300 = vperm.slane %v293, 3
    %v301 = vperm.slane %v293, 4
    %v302 = vperm.slane %v293, 5
    %v303 = vperm.slane %v293, 6
    %v304 = vperm.slane %v293, 7
    %v305 = vperm.slane %v294, 0
    %v306 = vperm.slane %v294, 1
    %v307 = vperm.slane %v294, 2
    %v308 = vperm.slane %v294, 3
    %v309 = vperm.slane %v294, 4
    %v310 = vperm.slane %v294, 5
    %v311 = vperm.slane %v294, 6
    %v312 = vperm.slane %v294, 7
    %331 = vst [vmem:[#allocation1] ss:$9 sm:$0xff] %v227
    %s332 = scalar_lea.vmem [#allocation1], 1
    %333 = vst [vmem:[%s332] ss:$9 sm:$0xff] %v228
    %v334 = vld [vmem:[#allocation1] sm:$0xff]
    %vm335 = vcmask 211968
    %v336 = vsel %vm335, %v334, 0
    %vm338 = vcmask 1041408
    %v340 = vsel %vm338, %v277, 0
    %v343 = vsel %vm338, %v278, 0
    %v346 = vsel %vm338, %v279, 0
    %v349 = vsel %vm338, %v280, 0
    %v352 = vsel %vm338, %v281, 0
    %v355 = vsel %vm338, %v282, 0
    %v358 = vsel %vm338, %v283, 0
    %v361 = vsel %vm338, %v284, 0
    %v364 = vsel %vm338, %v285, 0
    %v367 = vsel %vm338, %v286, 0
    %v370 = vsel %vm338, %v287, 0
    %v373 = vsel %vm338, %v288, 0
    %v376 = vsel %vm338, %v289, 0
    %v379 = vsel %vm338, %v290, 0
    %v382 = vsel %vm338, %v291, 0
    %v385 = vsel %vm338, %v292, 0
    %387 = vmatpush.msra.mxu0 0.0
    %388 = vmatpush.msra.mxu0 0.0
    %389 = vmatpush.msra.mxu0 0.0
    %390 = vmatpush.msra.mxu0 0.0
    %391 = vmatpush.msra.mxu0 0.0
    %392 = vmatpush.msra.mxu0 0.0
    %393 = vmatpush.msra.mxu0 0.0
    %394 = vmatpush.msra.mxu0 0.0
    %395 = vmatpush.msra.mxu0 0.0
    %396 = vmatpush.msra.mxu0 0.0
    %397 = vmatpush.msra.mxu0 0.0
    %398 = vmatpush.msra.mxu0 0.0
    %399 = vmatpush.msra.mxu0 %v340
    %400 = vmatpush.msra.mxu0 %v261
    %401 = vmatpush.msra.mxu0 %v245
    %402 = vmatpush.msra.mxu0 %v229
    %403 = vmatmul.f32.gmra.mxu0 %v336
    %v404 = vpop.f32.mrf.mxu0
    %v405 = vadd.f32 %v297, %v404
    %406 = vdwg.mxu0
    %407 = vmatpush.msra.mxu0 0.0
    %408 = vmatpush.msra.mxu0 0.0
    %409 = vmatpush.msra.mxu0 0.0
    %410 = vmatpush.msra.mxu0 0.0
    %411 = vmatpush.msra.mxu0 0.0
    %412 = vmatpush.msra.mxu0 0.0
    %413 = vmatpush.msra.mxu0 0.0
    %414 = vmatpush.msra.mxu0 0.0
    %415 = vmatpush.msra.mxu0 0.0
    %416 = vmatpush.msra.mxu0 0.0
    %417 = vmatpush.msra.mxu0 0.0
    %418 = vmatpush.msra.mxu0 0.0
    %419 = vmatpush.msra.mxu0 %v343
    %420 = vmatpush.msra.mxu0 %v262
    %421 = vmatpush.msra.mxu0 %v246
    %422 = vmatpush.msra.mxu0 %v230
    %423 = vmatmul.f32.gmra.mxu0 %v336
    %v424 = vpop.f32.mrf.mxu0
    %v425 = vadd.f32 %v298, %v424
    %426 = vdwg.mxu0
    %427 = vmatpush.msra.mxu0 0.0
    %428 = vmatpush.msra.mxu0 0.0
    %429 = vmatpush.msra.mxu0 0.0
    %430 = vmatpush.msra.mxu0 0.0
    %431 = vmatpush.msra.mxu0 0.0
    %432 = vmatpush.msra.mxu0 0.0
    %433 = vmatpush.msra.mxu0 0.0
    %434 = vmatpush.msra.mxu0 0.0
    %435 = vmatpush.msra.mxu0 0.0
    %436 = vmatpush.msra.mxu0 0.0
    %437 = vmatpush.msra.mxu0 0.0
    %438 = vmatpush.msra.mxu0 0.0
    %439 = vmatpush.msra.mxu0 %v346
    %440 = vmatpush.msra.mxu0 %v263
    %441 = vmatpush.msra.mxu0 %v247
    %442 = vmatpush.msra.mxu0 %v231
    %443 = vmatmul.f32.gmra.mxu0 %v336
    %v444 = vpop.f32.mrf.mxu0
    %v445 = vadd.f32 %v299, %v444
    %446 = vdwg.mxu0
    %447 = vmatpush.msra.mxu0 0.0
    %448 = vmatpush.msra.mxu0 0.0
    %449 = vmatpush.msra.mxu0 0.0
    %450 = vmatpush.msra.mxu0 0.0
    %451 = vmatpush.msra.mxu0 0.0
    %452 = vmatpush.msra.mxu0 0.0
    %453 = vmatpush.msra.mxu0 0.0
    %454 = vmatpush.msra.mxu0 0.0
    %455 = vmatpush.msra.mxu0 0.0
    %456 = vmatpush.msra.mxu0 0.0
    %457 = vmatpush.msra.mxu0 0.0
    %458 = vmatpush.msra.mxu0 0.0
    %459 = vmatpush.msra.mxu0 %v349
    %460 = vmatpush.msra.mxu0 %v264
    %461 = vmatpush.msra.mxu0 %v248
    %462 = vmatpush.msra.mxu0 %v232
    %463 = vmatmul.f32.gmra.mxu0 %v336
    %v464 = vpop.f32.mrf.mxu0
    %v465 = vadd.f32 %v300, %v464
    %466 = vdwg.mxu0
    %467 = vmatpush.msra.mxu0 0.0
    %468 = vmatpush.msra.mxu0 0.0
    %469 = vmatpush.msra.mxu0 0.0
    %470 = vmatpush.msra.mxu0 0.0
    %471 = vmatpush.msra.mxu0 0.0
    %472 = vmatpush.msra.mxu0 0.0
    %473 = vmatpush.msra.mxu0 0.0
    %474 = vmatpush.msra.mxu0 0.0
    %475 = vmatpush.msra.mxu0 0.0
    %476 = vmatpush.msra.mxu0 0.0
    %477 = vmatpush.msra.mxu0 0.0
    %478 = vmatpush.msra.mxu0 0.0
    %479 = vmatpush.msra.mxu0 %v352
    %480 = vmatpush.msra.mxu0 %v265
    %481 = vmatpush.msra.mxu0 %v249
    %482 = vmatpush.msra.mxu0 %v233
    %483 = vmatmul.f32.gmra.mxu0 %v336
    %v484 = vpop.f32.mrf.mxu0
    %v485 = vadd.f32 %v301, %v484
    %486 = vdwg.mxu0
    %487 = vmatpush.msra.mxu0 0.0
    %488 = vmatpush.msra.mxu0 0.0
    %489 = vmatpush.msra.mxu0 0.0
    %490 = vmatpush.msra.mxu0 0.0
    %491 = vmatpush.msra.mxu0 0.0
    %492 = vmatpush.msra.mxu0 0.0
    %493 = vmatpush.msra.mxu0 0.0
    %494 = vmatpush.msra.mxu0 0.0
    %495 = vmatpush.msra.mxu0 0.0
    %496 = vmatpush.msra.mxu0 0.0
    %497 = vmatpush.msra.mxu0 0.0
    %498 = vmatpush.msra.mxu0 0.0
    %499 = vmatpush.msra.mxu0 %v355
    %500 = vmatpush.msra.mxu0 %v266
    %501 = vmatpush.msra.mxu0 %v250
    %502 = vmatpush.msra.mxu0 %v234
    %503 = vmatmul.f32.gmra.mxu0 %v336
    %v504 = vpop.f32.mrf.mxu0
    %v505 = vadd.f32 %v302, %v504
    %506 = vdwg.mxu0
    %507 = vmatpush.msra.mxu0 0.0
    %508 = vmatpush.msra.mxu0 0.0
    %509 = vmatpush.msra.mxu0 0.0
    %510 = vmatpush.msra.mxu0 0.0
    %511 = vmatpush.msra.mxu0 0.0
    %512 = vmatpush.msra.mxu0 0.0
    %513 = vmatpush.msra.mxu0 0.0
    %514 = vmatpush.msra.mxu0 0.0
    %515 = vmatpush.msra.mxu0 0.0
    %516 = vmatpush.msra.mxu0 0.0
    %517 = vmatpush.msra.mxu0 0.0
    %518 = vmatpush.msra.mxu0 0.0
    %519 = vmatpush.msra.mxu0 %v358
    %520 = vmatpush.msra.mxu0 %v267
    %521 = vmatpush.msra.mxu0 %v251
    %522 = vmatpush.msra.mxu0 %v235
    %523 = vmatmul.f32.gmra.mxu0 %v336
    %v524 = vpop.f32.mrf.mxu0
    %v525 = vadd.f32 %v303, %v524
    %526 = vdwg.mxu0
    %527 = vmatpush.msra.mxu0 0.0
    %528 = vmatpush.msra.mxu0 0.0
    %529 = vmatpush.msra.mxu0 0.0
    %530 = vmatpush.msra.mxu0 0.0
    %531 = vmatpush.msra.mxu0 0.0
    %532 = vmatpush.msra.mxu0 0.0
    %533 = vmatpush.msra.mxu0 0.0
    %534 = vmatpush.msra.mxu0 0.0
    %535 = vmatpush.msra.mxu0 0.0
    %536 = vmatpush.msra.mxu0 0.0
    %537 = vmatpush.msra.mxu0 0.0
    %538 = vmatpush.msra.mxu0 0.0
    %539 = vmatpush.msra.mxu0 %v361
    %540 = vmatpush.msra.mxu0 %v268
    %541 = vmatpush.msra.mxu0 %v252
    %542 = vmatpush.msra.mxu0 %v236
    %543 = vmatmul.f32.gmra.mxu0 %v336
    %v544 = vpop.f32.mrf.mxu0
    %v545 = vadd.f32 %v304, %v544
    %546 = vdwg.mxu0
    %547 = vmatpush.msra.mxu0 0.0
    %548 = vmatpush.msra.mxu0 0.0
    %549 = vmatpush.msra.mxu0 0.0
    %550 = vmatpush.msra.mxu0 0.0
    %551 = vmatpush.msra.mxu0 0.0
    %552 = vmatpush.msra.mxu0 0.0
    %553 = vmatpush.msra.mxu0 0.0
    %554 = vmatpush.msra.mxu0 0.0
    %555 = vmatpush.msra.mxu0 0.0
    %556 = vmatpush.msra.mxu0 0.0
    %557 = vmatpush.msra.mxu0 0.0
    %558 = vmatpush.msra.mxu0 0.0
    %559 = vmatpush.msra.mxu0 %v364
    %560 = vmatpush.msra.mxu0 %v269
    %561 = vmatpush.msra.mxu0 %v253
    %562 = vmatpush.msra.mxu0 %v237
    %563 = vmatmul.f32.gmra.mxu0 %v336
    %v564 = vpop.f32.mrf.mxu0
    %v565 = vadd.f32 %v305, %v564
    %566 = vdwg.mxu0
    %567 = vmatpush.msra.mxu0 0.0
    %568 = vmatpush.msra.mxu0 0.0
    %569 = vmatpush.msra.mxu0 0.0
    %570 = vmatpush.msra.mxu0 0.0
    %571 = vmatpush.msra.mxu0 0.0
    %572 = vmatpush.msra.mxu0 0.0
    %573 = vmatpush.msra.mxu0 0.0
    %574 = vmatpush.msra.mxu0 0.0
    %575 = vmatpush.msra.mxu0 0.0
    %576 = vmatpush.msra.mxu0 0.0
    %577 = vmatpush.msra.mxu0 0.0
    %578 = vmatpush.msra.mxu0 0.0
    %579 = vmatpush.msra.mxu0 %v367
    %580 = vmatpush.msra.mxu0 %v270
    %581 = vmatpush.msra.mxu0 %v254
    %582 = vmatpush.msra.mxu0 %v238
    %583 = vmatmul.f32.gmra.mxu0 %v336
    %v584 = vpop.f32.mrf.mxu0
    %v585 = vadd.f32 %v306, %v584
    %586 = vdwg.mxu0
    %587 = vmatpush.msra.mxu0 0.0
    %588 = vmatpush.msra.mxu0 0.0
    %589 = vmatpush.msra.mxu0 0.0
    %590 = vmatpush.msra.mxu0 0.0
    %591 = vmatpush.msra.mxu0 0.0
    %592 = vmatpush.msra.mxu0 0.0
    %593 = vmatpush.msra.mxu0 0.0
    %594 = vmatpush.msra.mxu0 0.0
    %595 = vmatpush.msra.mxu0 0.0
    %596 = vmatpush.msra.mxu0 0.0
    %597 = vmatpush.msra.mxu0 0.0
    %598 = vmatpush.msra.mxu0 0.0
    %599 = vmatpush.msra.mxu0 %v370
    %600 = vmatpush.msra.mxu0 %v271
    %601 = vmatpush.msra.mxu0 %v255
    %602 = vmatpush.msra.mxu0 %v239
    %603 = vmatmul.f32.gmra.mxu0 %v336
    %v604 = vpop.f32.mrf.mxu0
    %v605 = vadd.f32 %v307, %v604
    %606 = vdwg.mxu0
    %607 = vmatpush.msra.mxu0 0.0
    %608 = vmatpush.msra.mxu0 0.0
    %609 = vmatpush.msra.mxu0 0.0
    %610 = vmatpush.msra.mxu0 0.0
    %611 = vmatpush.msra.mxu0 0.0
    %612 = vmatpush.msra.mxu0 0.0
    %613 = vmatpush.msra.mxu0 0.0
    %614 = vmatpush.msra.mxu0 0.0
    %615 = vmatpush.msra.mxu0 0.0
    %616 = vmatpush.msra.mxu0 0.0
    %617 = vmatpush.msra.mxu0 0.0
    %618 = vmatpush.msra.mxu0 0.0
    %619 = vmatpush.msra.mxu0 %v373
    %620 = vmatpush.msra.mxu0 %v272
    %621 = vmatpush.msra.mxu0 %v256
    %622 = vmatpush.msra.mxu0 %v240
    %623 = vmatmul.f32.gmra.mxu0 %v336
    %v624 = vpop.f32.mrf.mxu0
    %v625 = vadd.f32 %v308, %v624
    %626 = vdwg.mxu0
    %627 = vmatpush.msra.mxu0 0.0
    %628 = vmatpush.msra.mxu0 0.0
    %629 = vmatpush.msra.mxu0 0.0
    %630 = vmatpush.msra.mxu0 0.0
    %631 = vmatpush.msra.mxu0 0.0
    %632 = vmatpush.msra.mxu0 0.0
    %633 = vmatpush.msra.mxu0 0.0
    %634 = vmatpush.msra.mxu0 0.0
    %635 = vmatpush.msra.mxu0 0.0
    %636 = vmatpush.msra.mxu0 0.0
    %637 = vmatpush.msra.mxu0 0.0
    %638 = vmatpush.msra.mxu0 0.0
    %639 = vmatpush.msra.mxu0 %v376
    %640 = vmatpush.msra.mxu0 %v273
    %641 = vmatpush.msra.mxu0 %v257
    %642 = vmatpush.msra.mxu0 %v241
    %643 = vmatmul.f32.gmra.mxu0 %v336
    %v644 = vpop.f32.mrf.mxu0
    %v645 = vadd.f32 %v309, %v644
    %646 = vdwg.mxu0
    %647 = vmatpush.msra.mxu0 0.0
    %648 = vmatpush.msra.mxu0 0.0
    %649 = vmatpush.msra.mxu0 0.0
    %650 = vmatpush.msra.mxu0 0.0
    %651 = vmatpush.msra.mxu0 0.0
    %652 = vmatpush.msra.mxu0 0.0
    %653 = vmatpush.msra.mxu0 0.0
    %654 = vmatpush.msra.mxu0 0.0
    %655 = vmatpush.msra.mxu0 0.0
    %656 = vmatpush.msra.mxu0 0.0
    %657 = vmatpush.msra.mxu0 0.0
    %658 = vmatpush.msra.mxu0 0.0
    %659 = vmatpush.msra.mxu0 %v379
    %660 = vmatpush.msra.mxu0 %v274
    %661 = vmatpush.msra.mxu0 %v258
    %662 = vmatpush.msra.mxu0 %v242
    %663 = vmatmul.f32.gmra.mxu0 %v336
    %v664 = vpop.f32.mrf.mxu0
    %v665 = vadd.f32 %v310, %v664
    %666 = vdwg.mxu0
    %667 = vmatpush.msra.mxu0 0.0
    %668 = vmatpush.msra.mxu0 0.0
    %669 = vmatpush.msra.mxu0 0.0
    %670 = vmatpush.msra.mxu0 0.0
    %671 = vmatpush.msra.mxu0 0.0
    %672 = vmatpush.msra.mxu0 0.0
    %673 = vmatpush.msra.mxu0 0.0
    %674 = vmatpush.msra.mxu0 0.0
    %675 = vmatpush.msra.mxu0 0.0
    %676 = vmatpush.msra.mxu0 0.0
    %677 = vmatpush.msra.mxu0 0.0
    %678 = vmatpush.msra.mxu0 0.0
    %679 = vmatpush.msra.mxu0 %v382
    %680 = vmatpush.msra.mxu0 %v275
    %681 = vmatpush.msra.mxu0 %v259
    %682 = vmatpush.msra.mxu0 %v243
    %683 = vmatmul.f32.gmra.mxu0 %v336
    %v684 = vpop.f32.mrf.mxu0
    %v685 = vadd.f32 %v311, %v684
    %686 = vdwg.mxu0
    %687 = vmatpush.msra.mxu0 0.0
    %688 = vmatpush.msra.mxu0 0.0
    %689 = vmatpush.msra.mxu0 0.0
    %690 = vmatpush.msra.mxu0 0.0
    %691 = vmatpush.msra.mxu0 0.0
    %692 = vmatpush.msra.mxu0 0.0
    %693 = vmatpush.msra.mxu0 0.0
    %694 = vmatpush.msra.mxu0 0.0
    %695 = vmatpush.msra.mxu0 0.0
    %696 = vmatpush.msra.mxu0 0.0
    %697 = vmatpush.msra.mxu0 0.0
    %698 = vmatpush.msra.mxu0 0.0
    %699 = vmatpush.msra.mxu0 %v385
    %700 = vmatpush.msra.mxu0 %v276
    %701 = vmatpush.msra.mxu0 %v260
    %702 = vmatpush.msra.mxu0 %v244
    %703 = vmatmul.f32.gmra.mxu0 %v336
    %v704 = vpop.f32.mrf.mxu0
    %v705 = vadd.f32 %v312, %v704
    %706 = vdwg.mxu0
    %v707 = vmax.f32 %v405, 0.0
    %v708 = vmax.f32 %v425, 0.0
    %v709 = vmax.f32 %v445, 0.0
    %v710 = vmax.f32 %v465, 0.0
    %v711 = vmax.f32 %v485, 0.0
    %v712 = vmax.f32 %v505, 0.0
    %v713 = vmax.f32 %v525, 0.0
    %v714 = vmax.f32 %v545, 0.0
    %v715 = vmax.f32 %v565, 0.0
    %v716 = vmax.f32 %v585, 0.0
    %v717 = vmax.f32 %v605, 0.0
    %v718 = vmax.f32 %v625, 0.0
    %v719 = vmax.f32 %v645, 0.0
    %v720 = vmax.f32 %v665, 0.0
    %v721 = vmax.f32 %v685, 0.0
    %v722 = vmax.f32 %v705, 0.0
    %v727 = vrot.slane %v708, 7
    %v728 = vrot.slane %v709, 6
    %v729 = vrot.slane %v710, 5
    %vm730 = vcmask 1040384
    %v731 = vsel %vm730, %v707, %v727
    %vm732 = vcmask 1042434
    %v733 = vsel %vm732, %v728, %v729
    %v734 = vsel %vm338, %v731, %v733
    %vm735 = vcmask 1041409
    %v736 = vsel %vm735, %v707, %v727
    %vm737 = vcmask 1043459
    %v738 = vsel %vm737, %v728, %v729
    %vm739 = vcmask 1042433
    %v740 = vsel %vm739, %v736, %v738
    %v741 = vrot.slane %v740, 1
    %s744 = scalar_lea.vmem [#allocation2], 1
    %745 = vst.msk [vmem:[%s744] ss:$8 sm:$0xf] %vm188, %v734
    %746 = vst.msk [vmem:[%s744] ss:$8 sm:$0x0] %vm188, %v734
    %s747 = scalar_lea.vmem [#allocation2], 33
    %748 = vst.msk [vmem:[%s747] ss:$8 sm:$0xf] %vm188, %v741
    %749 = vst.msk [vmem:[%s747] ss:$8 sm:$0x0] %vm188, %v741
    %v754 = vrot.slane %v712, 7
    %v755 = vrot.slane %v713, 6
    %v756 = vrot.slane %v714, 5
    %v757 = vsel %vm730, %v711, %v754
    %v758 = vsel %vm732, %v755, %v756
    %v759 = vsel %vm338, %v757, %v758
    %v760 = vsel %vm735, %v711, %v754
    %v761 = vsel %vm737, %v755, %v756
    %v762 = vsel %vm739, %v760, %v761
    %v763 = vrot.slane %v762, 1
    %s766 = scalar_lea.vmem [#allocation2], 2
    %767 = vst.msk [vmem:[%s766] ss:$8 sm:$0xf] %vm188, %v759
    %768 = vst.msk [vmem:[%s766] ss:$8 sm:$0x0] %vm188, %v759
    %s769 = scalar_lea.vmem [#allocation2], 34
    %770 = vst.msk [vmem:[%s769] ss:$8 sm:$0xf] %vm188, %v763
    %771 = vst.msk [vmem:[%s769] ss:$8 sm:$0x0] %vm188, %v763
    %v776 = vrot.slane %v716, 7
    %v777 = vrot.slane %v717, 6
    %v778 = vrot.slane %v718, 5
    %v779 = vsel %vm730, %v715, %v776
    %v780 = vsel %vm732, %v777, %v778
    %v781 = vsel %vm338, %v779, %v780
    %v782 = vsel %vm735, %v715, %v776
    %v783 = vsel %vm737, %v777, %v778
    %v784 = vsel %vm739, %v782, %v783
    %v785 = vrot.slane %v784, 1
    %s788 = scalar_lea.vmem [#allocation2], 3
    %789 = vst.msk [vmem:[%s788] ss:$8 sm:$0xf] %vm188, %v781
    %790 = vst.msk [vmem:[%s788] ss:$8 sm:$0x0] %vm188, %v781
    %s791 = scalar_lea.vmem [#allocation2], 35
    %792 = vst.msk [vmem:[%s791] ss:$8 sm:$0xf] %vm188, %v785
    %793 = vst.msk [vmem:[%s791] ss:$8 sm:$0x0] %vm188, %v785
    %v798 = vrot.slane %v720, 7
    %v799 = vrot.slane %v721, 6
    %v800 = vrot.slane %v722, 5
    %v801 = vsel %vm730, %v719, %v798
    %v802 = vsel %vm732, %v799, %v800
    %v803 = vsel %vm338, %v801, %v802
    %v804 = vsel %vm735, %v719, %v798
    %v805 = vsel %vm737, %v799, %v800
    %v806 = vsel %vm739, %v804, %v805
    %v807 = vrot.slane %v806, 1
    %s810 = scalar_lea.vmem [#allocation2], 4
    %811 = vst.msk [vmem:[%s810] ss:$8 sm:$0xf] %vm188, %v803
    %812 = vst.msk [vmem:[%s810] ss:$8 sm:$0x0] %vm188, %v803
    %s813 = scalar_lea.vmem [#allocation2], 36
    %814 = vst.msk [vmem:[%s813] ss:$8 sm:$0xf] %vm188, %v807
    %815 = vst.msk [vmem:[%s813] ss:$8 sm:$0x0] %vm188, %v807
    %v816 = vld [vmem:[#allocation2] sm:$0xf]
    %v817 = vld [vmem:[#allocation2 + $0x8] sm:$0xf]
    %v818 = vld [vmem:[#allocation2 + $0x10] sm:$0xf]
    %v819 = vld [vmem:[#allocation2 + $0x18] sm:$0xf]
    %v820 = vld [vmem:[#allocation2 + $0x20] sm:$0xf]
    %v821 = vld [vmem:[#allocation2 + $0x28] sm:$0xf]
    %v822 = vld [vmem:[#allocation2 + $0x30] sm:$0xf]
    %v823 = vld [vmem:[#allocation2 + $0x38] sm:$0xf]
    %v824 = vld [vmem:[#allocation12] sm:$0xff]
    %v825 = vld [vmem:[#allocation12 + $0x8] sm:$0xff]
    %v826 = vld [vmem:[#allocation12 + $0x10] sm:$0xff]
    %v827 = vld [vmem:[#allocation12 + $0x18] sm:$0xff]
    %v828 = vld [vmem:[#allocation12 + $0x20] sm:$0xff]
    %v829 = vld [vmem:[#allocation12 + $0x28] sm:$0xff]
    %v830 = vld [vmem:[#allocation12 + $0x30] sm:$0xff]
    %v831 = vld [vmem:[#allocation12 + $0x38] sm:$0xff]
    %v832 = vld [vmem:[#allocation12 + $0x40] sm:$0xff]
    %v833 = vld [vmem:[#allocation12 + $0x48] sm:$0xff]
    %v834 = vld [vmem:[#allocation12 + $0x50] sm:$0xff]
    %v835 = vld [vmem:[#allocation12 + $0x58] sm:$0xff]
    %v836 = vld [vmem:[#allocation12 + $0x60] sm:$0xff]
    %v837 = vld [vmem:[#allocation12 + $0x68] sm:$0xff]
    %v838 = vld [vmem:[#allocation12 + $0x70] sm:$0xff]
    %v839 = vld [vmem:[#allocation12 + $0x78] sm:$0xff]
    %v840 = vld [vmem:[#allocation12 + $0x80] sm:$0xff]
    %v841 = vld [vmem:[#allocation12 + $0x88] sm:$0xff]
    %v842 = vld [vmem:[#allocation12 + $0x90] sm:$0xff]
    %v843 = vld [vmem:[#allocation12 + $0x98] sm:$0xff]
    %v844 = vld [vmem:[#allocation12 + $0xa0] sm:$0xff]
    %v845 = vld [vmem:[#allocation12 + $0xa8] sm:$0xff]
    %v846 = vld [vmem:[#allocation12 + $0xb0] sm:$0xff]
    %v847 = vld [vmem:[#allocation12 + $0xb8] sm:$0xff]
    %v848 = vld [vmem:[#allocation12 + $0xc0] sm:$0xff]
    %v849 = vld [vmem:[#allocation12 + $0xc8] sm:$0xff]
    %v850 = vld [vmem:[#allocation12 + $0xd0] sm:$0xff]
    %v851 = vld [vmem:[#allocation12 + $0xd8] sm:$0xff]
    %v852 = vld [vmem:[#allocation12 + $0xe0] sm:$0xff]
    %v853 = vld [vmem:[#allocation12 + $0xe8] sm:$0xff]
    %v854 = vld [vmem:[#allocation12 + $0xf0] sm:$0xff]
    %v855 = vld [vmem:[#allocation12 + $0xf8] sm:$0xff]
    %v856 = vld [vmem:[#allocation12 + $0x100] sm:$0xff]
    %v857 = vld [vmem:[#allocation12 + $0x108] sm:$0xff]
    %v858 = vld [vmem:[#allocation12 + $0x110] sm:$0xff]
    %v859 = vld [vmem:[#allocation12 + $0x118] sm:$0xff]
    %v860 = vld [vmem:[#allocation12 + $0x120] sm:$0xff]
    %v861 = vld [vmem:[#allocation12 + $0x128] sm:$0xff]
    %v862 = vld [vmem:[#allocation12 + $0x130] sm:$0xff]
    %v863 = vld [vmem:[#allocation12 + $0x138] sm:$0xff]
    %v864 = vld [vmem:[#allocation12 + $0x140] sm:$0xff]
    %v865 = vld [vmem:[#allocation12 + $0x148] sm:$0xff]
    %v866 = vld [vmem:[#allocation12 + $0x150] sm:$0xff]
    %v867 = vld [vmem:[#allocation12 + $0x158] sm:$0xff]
    %v868 = vld [vmem:[#allocation12 + $0x160] sm:$0xff]
    %v869 = vld [vmem:[#allocation12 + $0x168] sm:$0xff]
    %v870 = vld [vmem:[#allocation12 + $0x170] sm:$0xff]
    %v871 = vld [vmem:[#allocation12 + $0x178] sm:$0xff]
    %v872 = vld [vmem:[#allocation12 + $0x180] sm:$0xff]
    %v873 = vld [vmem:[#allocation12 + $0x188] sm:$0xff]
    %v874 = vld [vmem:[#allocation12 + $0x190] sm:$0xff]
    %v875 = vld [vmem:[#allocation12 + $0x198] sm:$0xff]
    %v876 = vld [vmem:[#allocation12 + $0x1a0] sm:$0xff]
    %v877 = vld [vmem:[#allocation12 + $0x1a8] sm:$0xff]
    %v878 = vld [vmem:[#allocation12 + $0x1b0] sm:$0xff]
    %v879 = vld [vmem:[#allocation12 + $0x1b8] sm:$0xff]
    %v880 = vld [vmem:[#allocation12 + $0x1c0] sm:$0xff]
    %v881 = vld [vmem:[#allocation12 + $0x1c8] sm:$0xff]
    %v882 = vld [vmem:[#allocation12 + $0x1d0] sm:$0xff]
    %v883 = vld [vmem:[#allocation12 + $0x1d8] sm:$0xff]
    %v884 = vld [vmem:[#allocation12 + $0x1e0] sm:$0xff]
    %v885 = vld [vmem:[#allocation12 + $0x1e8] sm:$0xff]
    %v886 = vld [vmem:[#allocation12 + $0x1f0] sm:$0xff]
    %v887 = vld [vmem:[#allocation12 + $0x1f8] sm:$0xff]
    %v888 = vld [vmem:[#allocation12 + $0x200] sm:$0xff]
    %v889 = vld [vmem:[#allocation12 + $0x208] sm:$0xff]
    %v890 = vld [vmem:[#allocation12 + $0x210] sm:$0xff]
    %v891 = vld [vmem:[#allocation12 + $0x218] sm:$0xff]
    %v892 = vld [vmem:[#allocation12 + $0x220] sm:$0xff]
    %v893 = vld [vmem:[#allocation12 + $0x228] sm:$0xff]
    %v894 = vld [vmem:[#allocation12 + $0x230] sm:$0xff]
    %v895 = vld [vmem:[#allocation12 + $0x238] sm:$0xff]
    %v896 = vld [vmem:[#allocation12 + $0x240] sm:$0xff]
    %v897 = vld [vmem:[#allocation12 + $0x248] sm:$0xff]
    %v898 = vld [vmem:[#allocation12 + $0x250] sm:$0xff]
    %v899 = vld [vmem:[#allocation12 + $0x258] sm:$0xff]
    %v900 = vld [vmem:[#allocation12 + $0x260] sm:$0xff]
    %v901 = vld [vmem:[#allocation12 + $0x268] sm:$0xff]
    %v902 = vld [vmem:[#allocation12 + $0x270] sm:$0xff]
    %v903 = vld [vmem:[#allocation12 + $0x278] sm:$0xff]
    %v904 = vld [vmem:[#allocation12 + $0x280] sm:$0xff]
    %v905 = vld [vmem:[#allocation12 + $0x288] sm:$0xff]
    %v906 = vld [vmem:[#allocation12 + $0x290] sm:$0xff]
    %v907 = vld [vmem:[#allocation12 + $0x298] sm:$0xff]
    %v908 = vld [vmem:[#allocation12 + $0x2a0] sm:$0xff]
    %v909 = vld [vmem:[#allocation12 + $0x2a8] sm:$0xff]
    %v910 = vld [vmem:[#allocation12 + $0x2b0] sm:$0xff]
    %v911 = vld [vmem:[#allocation12 + $0x2b8] sm:$0xff]
    %v912 = vld [vmem:[#allocation12 + $0x2c0] sm:$0xff]
    %v913 = vld [vmem:[#allocation12 + $0x2c8] sm:$0xff]
    %v914 = vld [vmem:[#allocation12 + $0x2d0] sm:$0xff]
    %v915 = vld [vmem:[#allocation12 + $0x2d8] sm:$0xff]
    %v916 = vld [vmem:[#allocation12 + $0x2e0] sm:$0xff]
    %v917 = vld [vmem:[#allocation12 + $0x2e8] sm:$0xff]
    %v918 = vld [vmem:[#allocation12 + $0x2f0] sm:$0xff]
    %v919 = vld [vmem:[#allocation12 + $0x2f8] sm:$0xff]
    %v920 = vld [vmem:[#allocation12 + $0x300] sm:$0xff]
    %v921 = vld [vmem:[#allocation12 + $0x308] sm:$0xff]
    %v922 = vld [vmem:[#allocation12 + $0x310] sm:$0xff]
    %v923 = vld [vmem:[#allocation12 + $0x318] sm:$0xff]
    %v924 = vld [vmem:[#allocation12 + $0x320] sm:$0xff]
    %v925 = vld [vmem:[#allocation12 + $0x328] sm:$0xff]
    %v926 = vld [vmem:[#allocation12 + $0x330] sm:$0xff]
    %v927 = vld [vmem:[#allocation12 + $0x338] sm:$0xff]
    %v928 = vld [vmem:[#allocation12 + $0x340] sm:$0xff]
    %v929 = vld [vmem:[#allocation12 + $0x348] sm:$0xff]
    %v930 = vld [vmem:[#allocation12 + $0x350] sm:$0xff]
    %v931 = vld [vmem:[#allocation12 + $0x358] sm:$0xff]
    %v932 = vld [vmem:[#allocation12 + $0x360] sm:$0xff]
    %v933 = vld [vmem:[#allocation12 + $0x368] sm:$0xff]
    %v934 = vld [vmem:[#allocation12 + $0x370] sm:$0xff]
    %v935 = vld [vmem:[#allocation12 + $0x378] sm:$0xff]
    %v936 = vld [vmem:[#allocation12 + $0x380] sm:$0xff]
    %v937 = vld [vmem:[#allocation12 + $0x388] sm:$0xff]
    %v938 = vld [vmem:[#allocation12 + $0x390] sm:$0xff]
    %v939 = vld [vmem:[#allocation12 + $0x398] sm:$0xff]
    %v940 = vld [vmem:[#allocation12 + $0x3a0] sm:$0xff]
    %v941 = vld [vmem:[#allocation12 + $0x3a8] sm:$0xff]
    %v942 = vld [vmem:[#allocation12 + $0x3b0] sm:$0xff]
    %v943 = vld [vmem:[#allocation12 + $0x3b8] sm:$0xff]
    %v944 = vld [vmem:[#allocation12 + $0x3c0] sm:$0xff]
    %v945 = vld [vmem:[#allocation12 + $0x3c8] sm:$0xff]
    %v946 = vld [vmem:[#allocation12 + $0x3d0] sm:$0xff]
    %v947 = vld [vmem:[#allocation12 + $0x3d8] sm:$0xff]
    %v948 = vld [vmem:[#allocation12 + $0x3e0] sm:$0xff]
    %v949 = vld [vmem:[#allocation12 + $0x3e8] sm:$0xff]
    %v950 = vld [vmem:[#allocation12 + $0x3f0] sm:$0xff]
    %v951 = vld [vmem:[#allocation12 + $0x3f8] sm:$0xff]
    %v952 = vld [vmem:[#allocation12 + $0x400] sm:$0xff]
    %v953 = vld [vmem:[#allocation12 + $0x408] sm:$0xff]
    %v954 = vld [vmem:[#allocation12 + $0x410] sm:$0xff]
    %v955 = vld [vmem:[#allocation12 + $0x418] sm:$0xff]
    %v956 = vld [vmem:[#allocation12 + $0x420] sm:$0xff]
    %v957 = vld [vmem:[#allocation12 + $0x428] sm:$0xff]
    %v958 = vld [vmem:[#allocation12 + $0x430] sm:$0xff]
    %v959 = vld [vmem:[#allocation12 + $0x438] sm:$0xff]
    %v960 = vld [vmem:[#allocation12 + $0x440] sm:$0xff]
    %v961 = vld [vmem:[#allocation12 + $0x448] sm:$0xff]
    %v962 = vld [vmem:[#allocation12 + $0x450] sm:$0xff]
    %v963 = vld [vmem:[#allocation12 + $0x458] sm:$0xff]
    %v964 = vld [vmem:[#allocation12 + $0x460] sm:$0xff]
    %v965 = vld [vmem:[#allocation12 + $0x468] sm:$0xff]
    %v966 = vld [vmem:[#allocation12 + $0x470] sm:$0xff]
    %v967 = vld [vmem:[#allocation12 + $0x478] sm:$0xff]
    %v968 = vld [vmem:[#allocation12 + $0x480] sm:$0xff]
    %v969 = vld [vmem:[#allocation12 + $0x488] sm:$0xff]
    %v970 = vld [vmem:[#allocation12 + $0x490] sm:$0xff]
    %v971 = vld [vmem:[#allocation12 + $0x498] sm:$0xff]
    %v972 = vld [vmem:[#allocation12 + $0x4a0] sm:$0xff]
    %v973 = vld [vmem:[#allocation12 + $0x4a8] sm:$0xff]
    %v974 = vld [vmem:[#allocation12 + $0x4b0] sm:$0xff]
    %v975 = vld [vmem:[#allocation12 + $0x4b8] sm:$0xff]
    %v976 = vld [vmem:[#allocation12 + $0x4c0] sm:$0xff]
    %v977 = vld [vmem:[#allocation12 + $0x4c8] sm:$0xff]
    %v978 = vld [vmem:[#allocation12 + $0x4d0] sm:$0xff]
    %v979 = vld [vmem:[#allocation12 + $0x4d8] sm:$0xff]
    %v980 = vld [vmem:[#allocation12 + $0x4e0] sm:$0xff]
    %v981 = vld [vmem:[#allocation12 + $0x4e8] sm:$0xff]
    %v982 = vld [vmem:[#allocation12 + $0x4f0] sm:$0xff]
    %v983 = vld [vmem:[#allocation12 + $0x4f8] sm:$0xff]
    %v984 = vld [vmem:[#allocation12 + $0x500] sm:$0xff]
    %v985 = vld [vmem:[#allocation12 + $0x508] sm:$0xff]
    %v986 = vld [vmem:[#allocation12 + $0x510] sm:$0xff]
    %v987 = vld [vmem:[#allocation12 + $0x518] sm:$0xff]
    %v988 = vld [vmem:[#allocation12 + $0x520] sm:$0xff]
    %v989 = vld [vmem:[#allocation12 + $0x528] sm:$0xff]
    %v990 = vld [vmem:[#allocation12 + $0x530] sm:$0xff]
    %v991 = vld [vmem:[#allocation12 + $0x538] sm:$0xff]
    %v992 = vld [vmem:[#allocation12 + $0x540] sm:$0xff]
    %v993 = vld [vmem:[#allocation12 + $0x548] sm:$0xff]
    %v994 = vld [vmem:[#allocation12 + $0x550] sm:$0xff]
    %v995 = vld [vmem:[#allocation12 + $0x558] sm:$0xff]
    %v996 = vld [vmem:[#allocation12 + $0x560] sm:$0xff]
    %v997 = vld [vmem:[#allocation12 + $0x568] sm:$0xff]
    %v998 = vld [vmem:[#allocation12 + $0x570] sm:$0xff]
    %v999 = vld [vmem:[#allocation12 + $0x578] sm:$0xff]
    %v1000 = vld [vmem:[#allocation12 + $0x580] sm:$0xff]
    %v1001 = vld [vmem:[#allocation12 + $0x588] sm:$0xff]
    %v1002 = vld [vmem:[#allocation12 + $0x590] sm:$0xff]
    %v1003 = vld [vmem:[#allocation12 + $0x598] sm:$0xff]
    %v1004 = vld [vmem:[#allocation12 + $0x5a0] sm:$0xff]
    %v1005 = vld [vmem:[#allocation12 + $0x5a8] sm:$0xff]
    %v1006 = vld [vmem:[#allocation12 + $0x5b0] sm:$0xff]
    %v1007 = vld [vmem:[#allocation12 + $0x5b8] sm:$0xff]
    %v1008 = vld [vmem:[#allocation12 + $0x5c0] sm:$0xff]
    %v1009 = vld [vmem:[#allocation12 + $0x5c8] sm:$0xff]
    %v1010 = vld [vmem:[#allocation12 + $0x5d0] sm:$0xff]
    %v1011 = vld [vmem:[#allocation12 + $0x5d8] sm:$0xff]
    %v1012 = vld [vmem:[#allocation12 + $0x5e0] sm:$0xff]
    %v1013 = vld [vmem:[#allocation12 + $0x5e8] sm:$0xff]
    %v1014 = vld [vmem:[#allocation12 + $0x5f0] sm:$0xff]
    %v1015 = vld [vmem:[#allocation12 + $0x5f8] sm:$0xff]
    %v1016 = vld [vmem:[#allocation12 + $0x600] sm:$0xff]
    %v1017 = vld [vmem:[#allocation12 + $0x608] sm:$0xff]
    %v1018 = vld [vmem:[#allocation12 + $0x610] sm:$0xff]
    %v1019 = vld [vmem:[#allocation12 + $0x618] sm:$0xff]
    %v1020 = vld [vmem:[#allocation12 + $0x620] sm:$0xff]
    %v1021 = vld [vmem:[#allocation12 + $0x628] sm:$0xff]
    %v1022 = vld [vmem:[#allocation12 + $0x630] sm:$0xff]
    %v1023 = vld [vmem:[#allocation12 + $0x638] sm:$0xff]
    %v1024 = vld [vmem:[#allocation12 + $0x640] sm:$0xff]
    %v1025 = vld [vmem:[#allocation12 + $0x648] sm:$0xff]
    %v1026 = vld [vmem:[#allocation12 + $0x650] sm:$0xff]
    %v1027 = vld [vmem:[#allocation12 + $0x658] sm:$0xff]
    %v1028 = vld [vmem:[#allocation12 + $0x660] sm:$0xff]
    %v1029 = vld [vmem:[#allocation12 + $0x668] sm:$0xff]
    %v1030 = vld [vmem:[#allocation12 + $0x670] sm:$0xff]
    %v1031 = vld [vmem:[#allocation12 + $0x678] sm:$0xff]
    %v1032 = vld [vmem:[#allocation12 + $0x680] sm:$0xff]
    %v1033 = vld [vmem:[#allocation12 + $0x688] sm:$0xff]
    %v1034 = vld [vmem:[#allocation12 + $0x690] sm:$0xff]
    %v1035 = vld [vmem:[#allocation12 + $0x698] sm:$0xff]
    %v1036 = vld [vmem:[#allocation12 + $0x6a0] sm:$0xff]
    %v1037 = vld [vmem:[#allocation12 + $0x6a8] sm:$0xff]
    %v1038 = vld [vmem:[#allocation12 + $0x6b0] sm:$0xff]
    %v1039 = vld [vmem:[#allocation12 + $0x6b8] sm:$0xff]
    %v1040 = vld [vmem:[#allocation12 + $0x6c0] sm:$0xff]
    %v1041 = vld [vmem:[#allocation12 + $0x6c8] sm:$0xff]
    %v1042 = vld [vmem:[#allocation12 + $0x6d0] sm:$0xff]
    %v1043 = vld [vmem:[#allocation12 + $0x6d8] sm:$0xff]
    %v1044 = vld [vmem:[#allocation12 + $0x6e0] sm:$0xff]
    %v1045 = vld [vmem:[#allocation12 + $0x6e8] sm:$0xff]
    %v1046 = vld [vmem:[#allocation12 + $0x6f0] sm:$0xff]
    %v1047 = vld [vmem:[#allocation12 + $0x6f8] sm:$0xff]
    %v1048 = vld [vmem:[#allocation12 + $0x700] sm:$0xff]
    %v1049 = vld [vmem:[#allocation12 + $0x708] sm:$0xff]
    %v1050 = vld [vmem:[#allocation12 + $0x710] sm:$0xff]
    %v1051 = vld [vmem:[#allocation12 + $0x718] sm:$0xff]
    %v1052 = vld [vmem:[#allocation12 + $0x720] sm:$0xff]
    %v1053 = vld [vmem:[#allocation12 + $0x728] sm:$0xff]
    %v1054 = vld [vmem:[#allocation12 + $0x730] sm:$0xff]
    %v1055 = vld [vmem:[#allocation12 + $0x738] sm:$0xff]
    %v1056 = vld [vmem:[#allocation12 + $0x740] sm:$0xff]
    %v1057 = vld [vmem:[#allocation12 + $0x748] sm:$0xff]
    %v1058 = vld [vmem:[#allocation12 + $0x750] sm:$0xff]
    %v1059 = vld [vmem:[#allocation12 + $0x758] sm:$0xff]
    %v1060 = vld [vmem:[#allocation12 + $0x760] sm:$0xff]
    %v1061 = vld [vmem:[#allocation12 + $0x768] sm:$0xff]
    %v1062 = vld [vmem:[#allocation12 + $0x770] sm:$0xff]
    %v1063 = vld [vmem:[#allocation12 + $0x778] sm:$0xff]
    %v1064 = vld [vmem:[#allocation12 + $0x780] sm:$0xff]
    %v1065 = vld [vmem:[#allocation12 + $0x788] sm:$0xff]
    %v1066 = vld [vmem:[#allocation12 + $0x790] sm:$0xff]
    %v1067 = vld [vmem:[#allocation12 + $0x798] sm:$0xff]
    %v1068 = vld [vmem:[#allocation12 + $0x7a0] sm:$0xff]
    %v1069 = vld [vmem:[#allocation12 + $0x7a8] sm:$0xff]
    %v1070 = vld [vmem:[#allocation12 + $0x7b0] sm:$0xff]
    %v1071 = vld [vmem:[#allocation12 + $0x7b8] sm:$0xff]
    %v1072 = vld [vmem:[#allocation12 + $0x7c0] sm:$0xff]
    %v1073 = vld [vmem:[#allocation12 + $0x7c8] sm:$0xff]
    %v1074 = vld [vmem:[#allocation12 + $0x7d0] sm:$0xff]
    %v1075 = vld [vmem:[#allocation12 + $0x7d8] sm:$0xff]
    %v1076 = vld [vmem:[#allocation12 + $0x7e0] sm:$0xff]
    %v1077 = vld [vmem:[#allocation12 + $0x7e8] sm:$0xff]
    %v1078 = vld [vmem:[#allocation12 + $0x7f0] sm:$0xff]
    %v1079 = vld [vmem:[#allocation12 + $0x7f8] sm:$0xff]
    %v1080 = vld [vmem:[#allocation2] sm:$0x1e]
    %v1081 = vld [vmem:[#allocation2 + $0x8] sm:$0x1e]
    %v1082 = vld [vmem:[#allocation2 + $0x10] sm:$0x1e]
    %v1083 = vld [vmem:[#allocation2 + $0x18] sm:$0x1e]
    %v1084 = vld [vmem:[#allocation2 + $0x20] sm:$0x1e]
    %v1085 = vld [vmem:[#allocation2 + $0x28] sm:$0x1e]
    %v1086 = vld [vmem:[#allocation2 + $0x30] sm:$0x1e]
    %v1087 = vld [vmem:[#allocation2 + $0x38] sm:$0x1e]
    %s1088 = scalar_lea.vmem [#allocation12], 2048
    %v1089 = vld [vmem:[%s1088] sm:$0xff]
    %v1090 = vld [vmem:[%s1088 + $0x8] sm:$0xff]
    %v1091 = vld [vmem:[%s1088 + $0x10] sm:$0xff]
    %v1092 = vld [vmem:[%s1088 + $0x18] sm:$0xff]
    %v1093 = vld [vmem:[%s1088 + $0x20] sm:$0xff]
    %v1094 = vld [vmem:[%s1088 + $0x28] sm:$0xff]
    %v1095 = vld [vmem:[%s1088 + $0x30] sm:$0xff]
    %v1096 = vld [vmem:[%s1088 + $0x38] sm:$0xff]
    %v1097 = vld [vmem:[%s1088 + $0x40] sm:$0xff]
    %v1098 = vld [vmem:[%s1088 + $0x48] sm:$0xff]
    %v1099 = vld [vmem:[%s1088 + $0x50] sm:$0xff]
    %v1100 = vld [vmem:[%s1088 + $0x58] sm:$0xff]
    %v1101 = vld [vmem:[%s1088 + $0x60] sm:$0xff]
    %v1102 = vld [vmem:[%s1088 + $0x68] sm:$0xff]
    %v1103 = vld [vmem:[%s1088 + $0x70] sm:$0xff]
    %v1104 = vld [vmem:[%s1088 + $0x78] sm:$0xff]
    %v1105 = vld [vmem:[%s1088 + $0x80] sm:$0xff]
    %v1106 = vld [vmem:[%s1088 + $0x88] sm:$0xff]
    %v1107 = vld [vmem:[%s1088 + $0x90] sm:$0xff]
    %v1108 = vld [vmem:[%s1088 + $0x98] sm:$0xff]
    %v1109 = vld [vmem:[%s1088 + $0xa0] sm:$0xff]
    %v1110 = vld [vmem:[%s1088 + $0xa8] sm:$0xff]
    %v1111 = vld [vmem:[%s1088 + $0xb0] sm:$0xff]
    %v1112 = vld [vmem:[%s1088 + $0xb8] sm:$0xff]
    %v1113 = vld [vmem:[%s1088 + $0xc0] sm:$0xff]
    %v1114 = vld [vmem:[%s1088 + $0xc8] sm:$0xff]
    %v1115 = vld [vmem:[%s1088 + $0xd0] sm:$0xff]
    %v1116 = vld [vmem:[%s1088 + $0xd8] sm:$0xff]
    %v1117 = vld [vmem:[%s1088 + $0xe0] sm:$0xff]
    %v1118 = vld [vmem:[%s1088 + $0xe8] sm:$0xff]
    %v1119 = vld [vmem:[%s1088 + $0xf0] sm:$0xff]
    %v1120 = vld [vmem:[%s1088 + $0xf8] sm:$0xff]
    %v1121 = vld [vmem:[%s1088 + $0x100] sm:$0xff]
    %v1122 = vld [vmem:[%s1088 + $0x108] sm:$0xff]
    %v1123 = vld [vmem:[%s1088 + $0x110] sm:$0xff]
    %v1124 = vld [vmem:[%s1088 + $0x118] sm:$0xff]
    %v1125 = vld [vmem:[%s1088 + $0x120] sm:$0xff]
    %v1126 = vld [vmem:[%s1088 + $0x128] sm:$0xff]
    %v1127 = vld [vmem:[%s1088 + $0x130] sm:$0xff]
    %v1128 = vld [vmem:[%s1088 + $0x138] sm:$0xff]
    %v1129 = vld [vmem:[%s1088 + $0x140] sm:$0xff]
    %v1130 = vld [vmem:[%s1088 + $0x148] sm:$0xff]
    %v1131 = vld [vmem:[%s1088 + $0x150] sm:$0xff]
    %v1132 = vld [vmem:[%s1088 + $0x158] sm:$0xff]
    %v1133 = vld [vmem:[%s1088 + $0x160] sm:$0xff]
    %v1134 = vld [vmem:[%s1088 + $0x168] sm:$0xff]
    %v1135 = vld [vmem:[%s1088 + $0x170] sm:$0xff]
    %v1136 = vld [vmem:[%s1088 + $0x178] sm:$0xff]
    %v1137 = vld [vmem:[%s1088 + $0x180] sm:$0xff]
    %v1138 = vld [vmem:[%s1088 + $0x188] sm:$0xff]
    %v1139 = vld [vmem:[%s1088 + $0x190] sm:$0xff]
    %v1140 = vld [vmem:[%s1088 + $0x198] sm:$0xff]
    %v1141 = vld [vmem:[%s1088 + $0x1a0] sm:$0xff]
    %v1142 = vld [vmem:[%s1088 + $0x1a8] sm:$0xff]
    %v1143 = vld [vmem:[%s1088 + $0x1b0] sm:$0xff]
    %v1144 = vld [vmem:[%s1088 + $0x1b8] sm:$0xff]
    %v1145 = vld [vmem:[%s1088 + $0x1c0] sm:$0xff]
    %v1146 = vld [vmem:[%s1088 + $0x1c8] sm:$0xff]
    %v1147 = vld [vmem:[%s1088 + $0x1d0] sm:$0xff]
    %v1148 = vld [vmem:[%s1088 + $0x1d8] sm:$0xff]
    %v1149 = vld [vmem:[%s1088 + $0x1e0] sm:$0xff]
    %v1150 = vld [vmem:[%s1088 + $0x1e8] sm:$0xff]
    %v1151 = vld [vmem:[%s1088 + $0x1f0] sm:$0xff]
    %v1152 = vld [vmem:[%s1088 + $0x1f8] sm:$0xff]
    %v1153 = vld [vmem:[%s1088 + $0x200] sm:$0xff]
    %v1154 = vld [vmem:[%s1088 + $0x208] sm:$0xff]
    %v1155 = vld [vmem:[%s1088 + $0x210] sm:$0xff]
    %v1156 = vld [vmem:[%s1088 + $0x218] sm:$0xff]
    %v1157 = vld [vmem:[%s1088 + $0x220] sm:$0xff]
    %v1158 = vld [vmem:[%s1088 + $0x228] sm:$0xff]
    %v1159 = vld [vmem:[%s1088 + $0x230] sm:$0xff]
    %v1160 = vld [vmem:[%s1088 + $0x238] sm:$0xff]
    %v1161 = vld [vmem:[%s1088 + $0x240] sm:$0xff]
    %v1162 = vld [vmem:[%s1088 + $0x248] sm:$0xff]
    %v1163 = vld [vmem:[%s1088 + $0x250] sm:$0xff]
    %v1164 = vld [vmem:[%s1088 + $0x258] sm:$0xff]
    %v1165 = vld [vmem:[%s1088 + $0x260] sm:$0xff]
    %v1166 = vld [vmem:[%s1088 + $0x268] sm:$0xff]
    %v1167 = vld [vmem:[%s1088 + $0x270] sm:$0xff]
    %v1168 = vld [vmem:[%s1088 + $0x278] sm:$0xff]
    %v1169 = vld [vmem:[%s1088 + $0x280] sm:$0xff]
    %v1170 = vld [vmem:[%s1088 + $0x288] sm:$0xff]
    %v1171 = vld [vmem:[%s1088 + $0x290] sm:$0xff]
    %v1172 = vld [vmem:[%s1088 + $0x298] sm:$0xff]
    %v1173 = vld [vmem:[%s1088 + $0x2a0] sm:$0xff]
    %v1174 = vld [vmem:[%s1088 + $0x2a8] sm:$0xff]
    %v1175 = vld [vmem:[%s1088 + $0x2b0] sm:$0xff]
    %v1176 = vld [vmem:[%s1088 + $0x2b8] sm:$0xff]
    %v1177 = vld [vmem:[%s1088 + $0x2c0] sm:$0xff]
    %v1178 = vld [vmem:[%s1088 + $0x2c8] sm:$0xff]
    %v1179 = vld [vmem:[%s1088 + $0x2d0] sm:$0xff]
    %v1180 = vld [vmem:[%s1088 + $0x2d8] sm:$0xff]
    %v1181 = vld [vmem:[%s1088 + $0x2e0] sm:$0xff]
    %v1182 = vld [vmem:[%s1088 + $0x2e8] sm:$0xff]
    %v1183 = vld [vmem:[%s1088 + $0x2f0] sm:$0xff]
    %v1184 = vld [vmem:[%s1088 + $0x2f8] sm:$0xff]
    %v1185 = vld [vmem:[%s1088 + $0x300] sm:$0xff]
    %v1186 = vld [vmem:[%s1088 + $0x308] sm:$0xff]
    %v1187 = vld [vmem:[%s1088 + $0x310] sm:$0xff]
    %v1188 = vld [vmem:[%s1088 + $0x318] sm:$0xff]
    %v1189 = vld [vmem:[%s1088 + $0x320] sm:$0xff]
    %v1190 = vld [vmem:[%s1088 + $0x328] sm:$0xff]
    %v1191 = vld [vmem:[%s1088 + $0x330] sm:$0xff]
    %v1192 = vld [vmem:[%s1088 + $0x338] sm:$0xff]
    %v1193 = vld [vmem:[%s1088 + $0x340] sm:$0xff]
    %v1194 = vld [vmem:[%s1088 + $0x348] sm:$0xff]
    %v1195 = vld [vmem:[%s1088 + $0x350] sm:$0xff]
    %v1196 = vld [vmem:[%s1088 + $0x358] sm:$0xff]
    %v1197 = vld [vmem:[%s1088 + $0x360] sm:$0xff]
    %v1198 = vld [vmem:[%s1088 + $0x368] sm:$0xff]
    %v1199 = vld [vmem:[%s1088 + $0x370] sm:$0xff]
    %v1200 = vld [vmem:[%s1088 + $0x378] sm:$0xff]
    %v1201 = vld [vmem:[%s1088 + $0x380] sm:$0xff]
    %v1202 = vld [vmem:[%s1088 + $0x388] sm:$0xff]
    %v1203 = vld [vmem:[%s1088 + $0x390] sm:$0xff]
    %v1204 = vld [vmem:[%s1088 + $0x398] sm:$0xff]
    %v1205 = vld [vmem:[%s1088 + $0x3a0] sm:$0xff]
    %v1206 = vld [vmem:[%s1088 + $0x3a8] sm:$0xff]
    %v1207 = vld [vmem:[%s1088 + $0x3b0] sm:$0xff]
    %v1208 = vld [vmem:[%s1088 + $0x3b8] sm:$0xff]
    %v1209 = vld [vmem:[%s1088 + $0x3c0] sm:$0xff]
    %v1210 = vld [vmem:[%s1088 + $0x3c8] sm:$0xff]
    %v1211 = vld [vmem:[%s1088 + $0x3d0] sm:$0xff]
    %v1212 = vld [vmem:[%s1088 + $0x3d8] sm:$0xff]
    %v1213 = vld [vmem:[%s1088 + $0x3e0] sm:$0xff]
    %v1214 = vld [vmem:[%s1088 + $0x3e8] sm:$0xff]
    %v1215 = vld [vmem:[%s1088 + $0x3f0] sm:$0xff]
    %v1216 = vld [vmem:[%s1088 + $0x3f8] sm:$0xff]
    %v1217 = vld [vmem:[%s1088 + $0x400] sm:$0xff]
    %v1218 = vld [vmem:[%s1088 + $0x408] sm:$0xff]
    %v1219 = vld [vmem:[%s1088 + $0x410] sm:$0xff]
    %v1220 = vld [vmem:[%s1088 + $0x418] sm:$0xff]
    %v1221 = vld [vmem:[%s1088 + $0x420] sm:$0xff]
    %v1222 = vld [vmem:[%s1088 + $0x428] sm:$0xff]
    %v1223 = vld [vmem:[%s1088 + $0x430] sm:$0xff]
    %v1224 = vld [vmem:[%s1088 + $0x438] sm:$0xff]
    %v1225 = vld [vmem:[%s1088 + $0x440] sm:$0xff]
    %v1226 = vld [vmem:[%s1088 + $0x448] sm:$0xff]
    %v1227 = vld [vmem:[%s1088 + $0x450] sm:$0xff]
    %v1228 = vld [vmem:[%s1088 + $0x458] sm:$0xff]
    %v1229 = vld [vmem:[%s1088 + $0x460] sm:$0xff]
    %v1230 = vld [vmem:[%s1088 + $0x468] sm:$0xff]
    %v1231 = vld [vmem:[%s1088 + $0x470] sm:$0xff]
    %v1232 = vld [vmem:[%s1088 + $0x478] sm:$0xff]
    %v1233 = vld [vmem:[%s1088 + $0x480] sm:$0xff]
    %v1234 = vld [vmem:[%s1088 + $0x488] sm:$0xff]
    %v1235 = vld [vmem:[%s1088 + $0x490] sm:$0xff]
    %v1236 = vld [vmem:[%s1088 + $0x498] sm:$0xff]
    %v1237 = vld [vmem:[%s1088 + $0x4a0] sm:$0xff]
    %v1238 = vld [vmem:[%s1088 + $0x4a8] sm:$0xff]
    %v1239 = vld [vmem:[%s1088 + $0x4b0] sm:$0xff]
    %v1240 = vld [vmem:[%s1088 + $0x4b8] sm:$0xff]
    %v1241 = vld [vmem:[%s1088 + $0x4c0] sm:$0xff]
    %v1242 = vld [vmem:[%s1088 + $0x4c8] sm:$0xff]
    %v1243 = vld [vmem:[%s1088 + $0x4d0] sm:$0xff]
    %v1244 = vld [vmem:[%s1088 + $0x4d8] sm:$0xff]
    %v1245 = vld [vmem:[%s1088 + $0x4e0] sm:$0xff]
    %v1246 = vld [vmem:[%s1088 + $0x4e8] sm:$0xff]
    %v1247 = vld [vmem:[%s1088 + $0x4f0] sm:$0xff]
    %v1248 = vld [vmem:[%s1088 + $0x4f8] sm:$0xff]
    %v1249 = vld [vmem:[%s1088 + $0x500] sm:$0xff]
    %v1250 = vld [vmem:[%s1088 + $0x508] sm:$0xff]
    %v1251 = vld [vmem:[%s1088 + $0x510] sm:$0xff]
    %v1252 = vld [vmem:[%s1088 + $0x518] sm:$0xff]
    %v1253 = vld [vmem:[%s1088 + $0x520] sm:$0xff]
    %v1254 = vld [vmem:[%s1088 + $0x528] sm:$0xff]
    %v1255 = vld [vmem:[%s1088 + $0x530] sm:$0xff]
    %v1256 = vld [vmem:[%s1088 + $0x538] sm:$0xff]
    %v1257 = vld [vmem:[%s1088 + $0x540] sm:$0xff]
    %v1258 = vld [vmem:[%s1088 + $0x548] sm:$0xff]
    %v1259 = vld [vmem:[%s1088 + $0x550] sm:$0xff]
    %v1260 = vld [vmem:[%s1088 + $0x558] sm:$0xff]
    %v1261 = vld [vmem:[%s1088 + $0x560] sm:$0xff]
    %v1262 = vld [vmem:[%s1088 + $0x568] sm:$0xff]
    %v1263 = vld [vmem:[%s1088 + $0x570] sm:$0xff]
    %v1264 = vld [vmem:[%s1088 + $0x578] sm:$0xff]
    %v1265 = vld [vmem:[%s1088 + $0x580] sm:$0xff]
    %v1266 = vld [vmem:[%s1088 + $0x588] sm:$0xff]
    %v1267 = vld [vmem:[%s1088 + $0x590] sm:$0xff]
    %v1268 = vld [vmem:[%s1088 + $0x598] sm:$0xff]
    %v1269 = vld [vmem:[%s1088 + $0x5a0] sm:$0xff]
    %v1270 = vld [vmem:[%s1088 + $0x5a8] sm:$0xff]
    %v1271 = vld [vmem:[%s1088 + $0x5b0] sm:$0xff]
    %v1272 = vld [vmem:[%s1088 + $0x5b8] sm:$0xff]
    %v1273 = vld [vmem:[%s1088 + $0x5c0] sm:$0xff]
    %v1274 = vld [vmem:[%s1088 + $0x5c8] sm:$0xff]
    %v1275 = vld [vmem:[%s1088 + $0x5d0] sm:$0xff]
    %v1276 = vld [vmem:[%s1088 + $0x5d8] sm:$0xff]
    %v1277 = vld [vmem:[%s1088 + $0x5e0] sm:$0xff]
    %v1278 = vld [vmem:[%s1088 + $0x5e8] sm:$0xff]
    %v1279 = vld [vmem:[%s1088 + $0x5f0] sm:$0xff]
    %v1280 = vld [vmem:[%s1088 + $0x5f8] sm:$0xff]
    %v1281 = vld [vmem:[%s1088 + $0x600] sm:$0xff]
    %v1282 = vld [vmem:[%s1088 + $0x608] sm:$0xff]
    %v1283 = vld [vmem:[%s1088 + $0x610] sm:$0xff]
    %v1284 = vld [vmem:[%s1088 + $0x618] sm:$0xff]
    %v1285 = vld [vmem:[%s1088 + $0x620] sm:$0xff]
    %v1286 = vld [vmem:[%s1088 + $0x628] sm:$0xff]
    %v1287 = vld [vmem:[%s1088 + $0x630] sm:$0xff]
    %v1288 = vld [vmem:[%s1088 + $0x638] sm:$0xff]
    %v1289 = vld [vmem:[%s1088 + $0x640] sm:$0xff]
    %v1290 = vld [vmem:[%s1088 + $0x648] sm:$0xff]
    %v1291 = vld [vmem:[%s1088 + $0x650] sm:$0xff]
    %v1292 = vld [vmem:[%s1088 + $0x658] sm:$0xff]
    %v1293 = vld [vmem:[%s1088 + $0x660] sm:$0xff]
    %v1294 = vld [vmem:[%s1088 + $0x668] sm:$0xff]
    %v1295 = vld [vmem:[%s1088 + $0x670] sm:$0xff]
    %v1296 = vld [vmem:[%s1088 + $0x678] sm:$0xff]
    %v1297 = vld [vmem:[%s1088 + $0x680] sm:$0xff]
    %v1298 = vld [vmem:[%s1088 + $0x688] sm:$0xff]
    %v1299 = vld [vmem:[%s1088 + $0x690] sm:$0xff]
    %v1300 = vld [vmem:[%s1088 + $0x698] sm:$0xff]
    %v1301 = vld [vmem:[%s1088 + $0x6a0] sm:$0xff]
    %v1302 = vld [vmem:[%s1088 + $0x6a8] sm:$0xff]
    %v1303 = vld [vmem:[%s1088 + $0x6b0] sm:$0xff]
    %v1304 = vld [vmem:[%s1088 + $0x6b8] sm:$0xff]
    %v1305 = vld [vmem:[%s1088 + $0x6c0] sm:$0xff]
    %v1306 = vld [vmem:[%s1088 + $0x6c8] sm:$0xff]
    %v1307 = vld [vmem:[%s1088 + $0x6d0] sm:$0xff]
    %v1308 = vld [vmem:[%s1088 + $0x6d8] sm:$0xff]
    %v1309 = vld [vmem:[%s1088 + $0x6e0] sm:$0xff]
    %v1310 = vld [vmem:[%s1088 + $0x6e8] sm:$0xff]
    %v1311 = vld [vmem:[%s1088 + $0x6f0] sm:$0xff]
    %v1312 = vld [vmem:[%s1088 + $0x6f8] sm:$0xff]
    %v1313 = vld [vmem:[%s1088 + $0x700] sm:$0xff]
    %v1314 = vld [vmem:[%s1088 + $0x708] sm:$0xff]
    %v1315 = vld [vmem:[%s1088 + $0x710] sm:$0xff]
    %v1316 = vld [vmem:[%s1088 + $0x718] sm:$0xff]
    %v1317 = vld [vmem:[%s1088 + $0x720] sm:$0xff]
    %v1318 = vld [vmem:[%s1088 + $0x728] sm:$0xff]
    %v1319 = vld [vmem:[%s1088 + $0x730] sm:$0xff]
    %v1320 = vld [vmem:[%s1088 + $0x738] sm:$0xff]
    %v1321 = vld [vmem:[%s1088 + $0x740] sm:$0xff]
    %v1322 = vld [vmem:[%s1088 + $0x748] sm:$0xff]
    %v1323 = vld [vmem:[%s1088 + $0x750] sm:$0xff]
    %v1324 = vld [vmem:[%s1088 + $0x758] sm:$0xff]
    %v1325 = vld [vmem:[%s1088 + $0x760] sm:$0xff]
    %v1326 = vld [vmem:[%s1088 + $0x768] sm:$0xff]
    %v1327 = vld [vmem:[%s1088 + $0x770] sm:$0xff]
    %v1328 = vld [vmem:[%s1088 + $0x778] sm:$0xff]
    %v1329 = vld [vmem:[%s1088 + $0x780] sm:$0xff]
    %v1330 = vld [vmem:[%s1088 + $0x788] sm:$0xff]
    %v1331 = vld [vmem:[%s1088 + $0x790] sm:$0xff]
    %v1332 = vld [vmem:[%s1088 + $0x798] sm:$0xff]
    %v1333 = vld [vmem:[%s1088 + $0x7a0] sm:$0xff]
    %v1334 = vld [vmem:[%s1088 + $0x7a8] sm:$0xff]
    %v1335 = vld [vmem:[%s1088 + $0x7b0] sm:$0xff]
    %v1336 = vld [vmem:[%s1088 + $0x7b8] sm:$0xff]
    %v1337 = vld [vmem:[%s1088 + $0x7c0] sm:$0xff]
    %v1338 = vld [vmem:[%s1088 + $0x7c8] sm:$0xff]
    %v1339 = vld [vmem:[%s1088 + $0x7d0] sm:$0xff]
    %v1340 = vld [vmem:[%s1088 + $0x7d8] sm:$0xff]
    %v1341 = vld [vmem:[%s1088 + $0x7e0] sm:$0xff]
    %v1342 = vld [vmem:[%s1088 + $0x7e8] sm:$0xff]
    %v1343 = vld [vmem:[%s1088 + $0x7f0] sm:$0xff]
    %v1344 = vld [vmem:[%s1088 + $0x7f8] sm:$0xff]
    %v1353 = vrot.slane %v1081, 4
    %v1354 = vrot.slane %v1083, 4
    %v1355 = vrot.slane %v1085, 4
    %v1356 = vrot.slane %v1087, 4
    %vm1357 = vcmask 1043456
    %v1358 = vsel %vm1357, %v1080, %v1353
    %v1359 = vsel %vm1357, %v1082, %v1354
    %v1360 = vsel %vm1357, %v1353, %v1080
    %v1361 = vrot.slane %v1360, 4
    %v1362 = vsel %vm1357, %v1354, %v1082
    %v1363 = vrot.slane %v1362, 4
    %v1364 = vsel %vm1357, %v1084, %v1355
    %v1365 = vsel %vm1357, %v1086, %v1356
    %v1366 = vsel %vm1357, %v1355, %v1084
    %v1367 = vrot.slane %v1366, 4
    %v1368 = vsel %vm1357, %v1356, %v1086
    %v1369 = vrot.slane %v1368, 4
    %vm1370 = vcmask 1042432
    %vm1371 = vcmask 1046532
    %vm1372 = vmor %vm1370, %vm1371
    %v1373 = vrot.slane %v1358, 5
    %v1374 = vrot.slane %v1373, 4
    %v1375 = vrot.slane %v1361, 5
    %v1376 = vsel %vm1372, %v1374, %v1375
    %v1377 = vrot.slane %v1359, 5
    %v1378 = vrot.slane %v1377, 4
    %v1379 = vrot.slane %v1363, 5
    %v1380 = vsel %vm1372, %v1378, %v1379
    %v1381 = vrot.slane %v1364, 5
    %v1382 = vrot.slane %v1381, 4
    %v1383 = vrot.slane %v1367, 5
    %v1384 = vsel %vm1372, %v1382, %v1383
    %v1385 = vrot.slane %v1365, 5
    %v1386 = vrot.slane %v1385, 4
    %v1387 = vrot.slane %v1369, 5
    %v1388 = vsel %vm1372, %v1386, %v1387
    %1389 = vst [vmem:[#allocation1] ss:$2 sm:$0xff] %v1376
    %s1390 = scalar_lea.vmem [#allocation1], 1
    %1391 = vst [vmem:[%s1390] ss:$2 sm:$0xff] %v1384
    %s1392 = scalar_lea.vmem [#allocation1], 16
    %1393 = vst [vmem:[%s1392] ss:$2 sm:$0xff] %v1380
    %s1394 = scalar_lea.vmem [#allocation1], 17
    %1395 = vst [vmem:[%s1394] ss:$2 sm:$0xff] %v1388
    %v1396 = vld.sshfl [vmem:[#allocation1] sm:$0xff pattern:$0x75316420]
    %v1397 = vld.sshfl [vmem:[#allocation1 + $0x8] sm:$0xff pattern:$0x75316420]
    %v1398 = vld.sshfl [vmem:[#allocation1 + $0x10] sm:$0xff pattern:$0x75316420]
    %v1399 = vld.sshfl [vmem:[#allocation1 + $0x18] sm:$0xff pattern:$0x75316420]
    %1404 = vmatpush.msra.mxu0 %v1149
    %1405 = vmatpush.msra.mxu0 %v1145
    %1406 = vmatpush.msra.mxu0 %v1141
    %1407 = vmatpush.msra.mxu0 %v1137
    %1408 = vmatpush.msra.mxu0 %v1133
    %1409 = vmatpush.msra.mxu0 %v1129
    %1410 = vmatpush.msra.mxu0 %v1125
    %1411 = vmatpush.msra.mxu0 %v1121
    %1412 = vmatpush.msra.mxu0 %v1117
    %1413 = vmatpush.msra.mxu0 %v1113
    %1414 = vmatpush.msra.mxu0 %v1109
    %1415 = vmatpush.msra.mxu0 %v1105
    %1416 = vmatpush.msra.mxu0 %v1101
    %1417 = vmatpush.msra.mxu0 %v1097
    %1418 = vmatpush.msra.mxu0 %v1093
    %1419 = vmatpush.msra.mxu0 %v1089
    %1420 = vmatmul.f32.gmra.mxu0 %v1396
    %v1421 = vpop.f32.mrf.mxu0
    %v1422 = vadd.f32 0.0, %v1421
    %1423 = vdwg.mxu0
    %1424 = vmatpush.msra.mxu0 %v1213
    %1425 = vmatpush.msra.mxu0 %v1209
    %1426 = vmatpush.msra.mxu0 %v1205
    %1427 = vmatpush.msra.mxu0 %v1201
    %1428 = vmatpush.msra.mxu0 %v1197
    %1429 = vmatpush.msra.mxu0 %v1193
    %1430 = vmatpush.msra.mxu0 %v1189
    %1431 = vmatpush.msra.mxu0 %v1185
    %1432 = vmatpush.msra.mxu0 %v1181
    %1433 = vmatpush.msra.mxu0 %v1177
    %1434 = vmatpush.msra.mxu0 %v1173
    %1435 = vmatpush.msra.mxu0 %v1169
    %1436 = vmatpush.msra.mxu0 %v1165
    %1437 = vmatpush.msra.mxu0 %v1161
    %1438 = vmatpush.msra.mxu0 %v1157
    %1439 = vmatpush.msra.mxu0 %v1153
    %1440 = vmatmul.f32.gmra.mxu0 %v1397
    %v1441 = vpop.f32.mrf.mxu0
    %v1442 = vadd.f32 %v1422, %v1441
    %1443 = vdwg.mxu0
    %1444 = vmatpush.msra.mxu0 %v1277
    %1445 = vmatpush.msra.mxu0 %v1273
    %1446 = vmatpush.msra.mxu0 %v1269
    %1447 = vmatpush.msra.mxu0 %v1265
    %1448 = vmatpush.msra.mxu0 %v1261
    %1449 = vmatpush.msra.mxu0 %v1257
    %1450 = vmatpush.msra.mxu0 %v1253
    %1451 = vmatpush.msra.mxu0 %v1249
    %1452 = vmatpush.msra.mxu0 %v1245
    %1453 = vmatpush.msra.mxu0 %v1241
    %1454 = vmatpush.msra.mxu0 %v1237
    %1455 = vmatpush.msra.mxu0 %v1233
    %1456 = vmatpush.msra.mxu0 %v1229
    %1457 = vmatpush.msra.mxu0 %v1225
    %1458 = vmatpush.msra.mxu0 %v1221
    %1459 = vmatpush.msra.mxu0 %v1217
    %1460 = vmatmul.f32.gmra.mxu0 %v1398
    %v1461 = vpop.f32.mrf.mxu0
    %v1462 = vadd.f32 %v1442, %v1461
    %1463 = vdwg.mxu0
    %1464 = vmatpush.msra.mxu0 %v1341
    %1465 = vmatpush.msra.mxu0 %v1337
    %1466 = vmatpush.msra.mxu0 %v1333
    %1467 = vmatpush.msra.mxu0 %v1329
    %1468 = vmatpush.msra.mxu0 %v1325
    %1469 = vmatpush.msra.mxu0 %v1321
    %1470 = vmatpush.msra.mxu0 %v1317
    %1471 = vmatpush.msra.mxu0 %v1313
    %1472 = vmatpush.msra.mxu0 %v1309
    %1473 = vmatpush.msra.mxu0 %v1305
    %1474 = vmatpush.msra.mxu0 %v1301
    %1475 = vmatpush.msra.mxu0 %v1297
    %1476 = vmatpush.msra.mxu0 %v1293
    %1477 = vmatpush.msra.mxu0 %v1289
    %1478 = vmatpush.msra.mxu0 %v1285
    %1479 = vmatpush.msra.mxu0 %v1281
    %1480 = vmatmul.f32.gmra.mxu0 %v1399
    %v1481 = vpop.f32.mrf.mxu0
    %v1482 = vadd.f32 %v1462, %v1481
    %1483 = vdwg.mxu0
    %1484 = vmatpush.msra.mxu0 %v1150
    %1485 = vmatpush.msra.mxu0 %v1146
    %1486 = vmatpush.msra.mxu0 %v1142
    %1487 = vmatpush.msra.mxu0 %v1138
    %1488 = vmatpush.msra.mxu0 %v1134
    %1489 = vmatpush.msra.mxu0 %v1130
    %1490 = vmatpush.msra.mxu0 %v1126
    %1491 = vmatpush.msra.mxu0 %v1122
    %1492 = vmatpush.msra.mxu0 %v1118
    %1493 = vmatpush.msra.mxu0 %v1114
    %1494 = vmatpush.msra.mxu0 %v1110
    %1495 = vmatpush.msra.mxu0 %v1106
    %1496 = vmatpush.msra.mxu0 %v1102
    %1497 = vmatpush.msra.mxu0 %v1098
    %1498 = vmatpush.msra.mxu0 %v1094
    %1499 = vmatpush.msra.mxu0 %v1090
    %1500 = vmatmul.f32.gmra.mxu0 %v1396
    %v1501 = vpop.f32.mrf.mxu0
    %v1502 = vadd.f32 0.0, %v1501
    %1503 = vdwg.mxu0
    %1504 = vmatpush.msra.mxu0 %v1214
    %1505 = vmatpush.msra.mxu0 %v1210
    %1506 = vmatpush.msra.mxu0 %v1206
    %1507 = vmatpush.msra.mxu0 %v1202
    %1508 = vmatpush.msra.mxu0 %v1198
    %1509 = vmatpush.msra.mxu0 %v1194
    %1510 = vmatpush.msra.mxu0 %v1190
    %1511 = vmatpush.msra.mxu0 %v1186
    %1512 = vmatpush.msra.mxu0 %v1182
    %1513 = vmatpush.msra.mxu0 %v1178
    %1514 = vmatpush.msra.mxu0 %v1174
    %1515 = vmatpush.msra.mxu0 %v1170
    %1516 = vmatpush.msra.mxu0 %v1166
    %1517 = vmatpush.msra.mxu0 %v1162
    %1518 = vmatpush.msra.mxu0 %v1158
    %1519 = vmatpush.msra.mxu0 %v1154
    %1520 = vmatmul.f32.gmra.mxu0 %v1397
    %v1521 = vpop.f32.mrf.mxu0
    %v1522 = vadd.f32 %v1502, %v1521
    %1523 = vdwg.mxu0
    %1524 = vmatpush.msra.mxu0 %v1278
    %1525 = vmatpush.msra.mxu0 %v1274
    %1526 = vmatpush.msra.mxu0 %v1270
    %1527 = vmatpush.msra.mxu0 %v1266
    %1528 = vmatpush.msra.mxu0 %v1262
    %1529 = vmatpush.msra.mxu0 %v1258
    %1530 = vmatpush.msra.mxu0 %v1254
    %1531 = vmatpush.msra.mxu0 %v1250
    %1532 = vmatpush.msra.mxu0 %v1246
    %1533 = vmatpush.msra.mxu0 %v1242
    %1534 = vmatpush.msra.mxu0 %v1238
    %1535 = vmatpush.msra.mxu0 %v1234
    %1536 = vmatpush.msra.mxu0 %v1230
    %1537 = vmatpush.msra.mxu0 %v1226
    %1538 = vmatpush.msra.mxu0 %v1222
    %1539 = vmatpush.msra.mxu0 %v1218
    %1540 = vmatmul.f32.gmra.mxu0 %v1398
    %v1541 = vpop.f32.mrf.mxu0
    %v1542 = vadd.f32 %v1522, %v1541
    %1543 = vdwg.mxu0
    %1544 = vmatpush.msra.mxu0 %v1342
    %1545 = vmatpush.msra.mxu0 %v1338
    %1546 = vmatpush.msra.mxu0 %v1334
    %1547 = vmatpush.msra.mxu0 %v1330
    %1548 = vmatpush.msra.mxu0 %v1326
    %1549 = vmatpush.msra.mxu0 %v1322
    %1550 = vmatpush.msra.mxu0 %v1318
    %1551 = vmatpush.msra.mxu0 %v1314
    %1552 = vmatpush.msra.mxu0 %v1310
    %1553 = vmatpush.msra.mxu0 %v1306
    %1554 = vmatpush.msra.mxu0 %v1302
    %1555 = vmatpush.msra.mxu0 %v1298
    %1556 = vmatpush.msra.mxu0 %v1294
    %1557 = vmatpush.msra.mxu0 %v1290
    %1558 = vmatpush.msra.mxu0 %v1286
    %1559 = vmatpush.msra.mxu0 %v1282
    %1560 = vmatmul.f32.gmra.mxu0 %v1399
    %v1561 = vpop.f32.mrf.mxu0
    %v1562 = vadd.f32 %v1542, %v1561
    %1563 = vdwg.mxu0
    %1564 = vmatpush.msra.mxu0 %v1151
    %1565 = vmatpush.msra.mxu0 %v1147
    %1566 = vmatpush.msra.mxu0 %v1143
    %1567 = vmatpush.msra.mxu0 %v1139
    %1568 = vmatpush.msra.mxu0 %v1135
    %1569 = vmatpush.msra.mxu0 %v1131
    %1570 = vmatpush.msra.mxu0 %v1127
    %1571 = vmatpush.msra.mxu0 %v1123
    %1572 = vmatpush.msra.mxu0 %v1119
    %1573 = vmatpush.msra.mxu0 %v1115
    %1574 = vmatpush.msra.mxu0 %v1111
    %1575 = vmatpush.msra.mxu0 %v1107
    %1576 = vmatpush.msra.mxu0 %v1103
    %1577 = vmatpush.msra.mxu0 %v1099
    %1578 = vmatpush.msra.mxu0 %v1095
    %1579 = vmatpush.msra.mxu0 %v1091
    %1580 = vmatmul.f32.gmra.mxu0 %v1396
    %v1581 = vpop.f32.mrf.mxu0
    %v1582 = vadd.f32 0.0, %v1581
    %1583 = vdwg.mxu0
    %1584 = vmatpush.msra.mxu0 %v1215
    %1585 = vmatpush.msra.mxu0 %v1211
    %1586 = vmatpush.msra.mxu0 %v1207
    %1587 = vmatpush.msra.mxu0 %v1203
    %1588 = vmatpush.msra.mxu0 %v1199
    %1589 = vmatpush.msra.mxu0 %v1195
    %1590 = vmatpush.msra.mxu0 %v1191
    %1591 = vmatpush.msra.mxu0 %v1187
    %1592 = vmatpush.msra.mxu0 %v1183
    %1593 = vmatpush.msra.mxu0 %v1179
    %1594 = vmatpush.msra.mxu0 %v1175
    %1595 = vmatpush.msra.mxu0 %v1171
    %1596 = vmatpush.msra.mxu0 %v1167
    %1597 = vmatpush.msra.mxu0 %v1163
    %1598 = vmatpush.msra.mxu0 %v1159
    %1599 = vmatpush.msra.mxu0 %v1155
    %1600 = vmatmul.f32.gmra.mxu0 %v1397
    %v1601 = vpop.f32.mrf.mxu0
    %v1602 = vadd.f32 %v1582, %v1601
    %1603 = vdwg.mxu0
    %1604 = vmatpush.msra.mxu0 %v1279
    %1605 = vmatpush.msra.mxu0 %v1275
    %1606 = vmatpush.msra.mxu0 %v1271
    %1607 = vmatpush.msra.mxu0 %v1267
    %1608 = vmatpush.msra.mxu0 %v1263
    %1609 = vmatpush.msra.mxu0 %v1259
    %1610 = vmatpush.msra.mxu0 %v1255
    %1611 = vmatpush.msra.mxu0 %v1251
    %1612 = vmatpush.msra.mxu0 %v1247
    %1613 = vmatpush.msra.mxu0 %v1243
    %1614 = vmatpush.msra.mxu0 %v1239
    %1615 = vmatpush.msra.mxu0 %v1235
    %1616 = vmatpush.msra.mxu0 %v1231
    %1617 = vmatpush.msra.mxu0 %v1227
    %1618 = vmatpush.msra.mxu0 %v1223
    %1619 = vmatpush.msra.mxu0 %v1219
    %1620 = vmatmul.f32.gmra.mxu0 %v1398
    %v1621 = vpop.f32.mrf.mxu0
    %v1622 = vadd.f32 %v1602, %v1621
    %1623 = vdwg.mxu0
    %1624 = vmatpush.msra.mxu0 %v1343
    %1625 = vmatpush.msra.mxu0 %v1339
    %1626 = vmatpush.msra.mxu0 %v1335
    %1627 = vmatpush.msra.mxu0 %v1331
    %1628 = vmatpush.msra.mxu0 %v1327
    %1629 = vmatpush.msra.mxu0 %v1323
    %1630 = vmatpush.msra.mxu0 %v1319
    %1631 = vmatpush.msra.mxu0 %v1315
    %1632 = vmatpush.msra.mxu0 %v1311
    %1633 = vmatpush.msra.mxu0 %v1307
    %1634 = vmatpush.msra.mxu0 %v1303
    %1635 = vmatpush.msra.mxu0 %v1299
    %1636 = vmatpush.msra.mxu0 %v1295
    %1637 = vmatpush.msra.mxu0 %v1291
    %1638 = vmatpush.msra.mxu0 %v1287
    %1639 = vmatpush.msra.mxu0 %v1283
    %1640 = vmatmul.f32.gmra.mxu0 %v1399
    %v1641 = vpop.f32.mrf.mxu0
    %v1642 = vadd.f32 %v1622, %v1641
    %1643 = vdwg.mxu0
    %1644 = vmatpush.msra.mxu0 %v1152
    %1645 = vmatpush.msra.mxu0 %v1148
    %1646 = vmatpush.msra.mxu0 %v1144
    %1647 = vmatpush.msra.mxu0 %v1140
    %1648 = vmatpush.msra.mxu0 %v1136
    %1649 = vmatpush.msra.mxu0 %v1132
    %1650 = vmatpush.msra.mxu0 %v1128
    %1651 = vmatpush.msra.mxu0 %v1124
    %1652 = vmatpush.msra.mxu0 %v1120
    %1653 = vmatpush.msra.mxu0 %v1116
    %1654 = vmatpush.msra.mxu0 %v1112
    %1655 = vmatpush.msra.mxu0 %v1108
    %1656 = vmatpush.msra.mxu0 %v1104
    %1657 = vmatpush.msra.mxu0 %v1100
    %1658 = vmatpush.msra.mxu0 %v1096
    %1659 = vmatpush.msra.mxu0 %v1092
    %1660 = vmatmul.f32.gmra.mxu0 %v1396
    %v1661 = vpop.f32.mrf.mxu0
    %v1662 = vadd.f32 0.0, %v1661
    %1663 = vdwg.mxu0
    %1664 = vmatpush.msra.mxu0 %v1216
    %1665 = vmatpush.msra.mxu0 %v1212
    %1666 = vmatpush.msra.mxu0 %v1208
    %1667 = vmatpush.msra.mxu0 %v1204
    %1668 = vmatpush.msra.mxu0 %v1200
    %1669 = vmatpush.msra.mxu0 %v1196
    %1670 = vmatpush.msra.mxu0 %v1192
    %1671 = vmatpush.msra.mxu0 %v1188
    %1672 = vmatpush.msra.mxu0 %v1184
    %1673 = vmatpush.msra.mxu0 %v1180
    %1674 = vmatpush.msra.mxu0 %v1176
    %1675 = vmatpush.msra.mxu0 %v1172
    %1676 = vmatpush.msra.mxu0 %v1168
    %1677 = vmatpush.msra.mxu0 %v1164
    %1678 = vmatpush.msra.mxu0 %v1160
    %1679 = vmatpush.msra.mxu0 %v1156
    %1680 = vmatmul.f32.gmra.mxu0 %v1397
    %v1681 = vpop.f32.mrf.mxu0
    %v1682 = vadd.f32 %v1662, %v1681
    %1683 = vdwg.mxu0
    %1684 = vmatpush.msra.mxu0 %v1280
    %1685 = vmatpush.msra.mxu0 %v1276
    %1686 = vmatpush.msra.mxu0 %v1272
    %1687 = vmatpush.msra.mxu0 %v1268
    %1688 = vmatpush.msra.mxu0 %v1264
    %1689 = vmatpush.msra.mxu0 %v1260
    %1690 = vmatpush.msra.mxu0 %v1256
    %1691 = vmatpush.msra.mxu0 %v1252
    %1692 = vmatpush.msra.mxu0 %v1248
    %1693 = vmatpush.msra.mxu0 %v1244
    %1694 = vmatpush.msra.mxu0 %v1240
    %1695 = vmatpush.msra.mxu0 %v1236
    %1696 = vmatpush.msra.mxu0 %v1232
    %1697 = vmatpush.msra.mxu0 %v1228
    %1698 = vmatpush.msra.mxu0 %v1224
    %1699 = vmatpush.msra.mxu0 %v1220
    %1700 = vmatmul.f32.gmra.mxu0 %v1398
    %v1701 = vpop.f32.mrf.mxu0
    %v1702 = vadd.f32 %v1682, %v1701
    %1703 = vdwg.mxu0
    %1704 = vmatpush.msra.mxu0 %v1344
    %1705 = vmatpush.msra.mxu0 %v1340
    %1706 = vmatpush.msra.mxu0 %v1336
    %1707 = vmatpush.msra.mxu0 %v1332
    %1708 = vmatpush.msra.mxu0 %v1328
    %1709 = vmatpush.msra.mxu0 %v1324
    %1710 = vmatpush.msra.mxu0 %v1320
    %1711 = vmatpush.msra.mxu0 %v1316
    %1712 = vmatpush.msra.mxu0 %v1312
    %1713 = vmatpush.msra.mxu0 %v1308
    %1714 = vmatpush.msra.mxu0 %v1304
    %1715 = vmatpush.msra.mxu0 %v1300
    %1716 = vmatpush.msra.mxu0 %v1296
    %1717 = vmatpush.msra.mxu0 %v1292
    %1718 = vmatpush.msra.mxu0 %v1288
    %1719 = vmatpush.msra.mxu0 %v1284
    %1720 = vmatmul.f32.gmra.mxu0 %v1399
    %v1721 = vpop.f32.mrf.mxu0
    %v1722 = vadd.f32 %v1702, %v1721
    %1723 = vdwg.mxu0
    %v1732 = vrot.slane %v817, 4
    %v1733 = vrot.slane %v819, 4
    %v1734 = vrot.slane %v821, 4
    %v1735 = vrot.slane %v823, 4
    %v1736 = vsel %vm1357, %v816, %v1732
    %v1737 = vsel %vm1357, %v818, %v1733
    %v1738 = vsel %vm1357, %v820, %v1734
    %v1739 = vsel %vm1357, %v822, %v1735
    %1740 = vst [vmem:[#allocation1] ss:$2 sm:$0xff] %v1736
    %s1741 = scalar_lea.vmem [#allocation1], 1
    %1742 = vst [vmem:[%s1741] ss:$2 sm:$0xff] %v1738
    %s1743 = scalar_lea.vmem [#allocation1], 16
    %1744 = vst [vmem:[%s1743] ss:$2 sm:$0xff] %v1737
    %s1745 = scalar_lea.vmem [#allocation1], 17
    %1746 = vst [vmem:[%s1745] ss:$2 sm:$0xff] %v1739
    %v1747 = vld.sshfl [vmem:[#allocation1] sm:$0xff pattern:$0x75316420]
    %v1748 = vld.sshfl [vmem:[#allocation1 + $0x8] sm:$0xff pattern:$0x75316420]
    %v1749 = vld.sshfl [vmem:[#allocation1 + $0x10] sm:$0xff pattern:$0x75316420]
    %v1750 = vld.sshfl [vmem:[#allocation1 + $0x18] sm:$0xff pattern:$0x75316420]
    %1755 = vmatpush.msra.mxu0 %v884
    %1756 = vmatpush.msra.mxu0 %v880
    %1757 = vmatpush.msra.mxu0 %v876
    %1758 = vmatpush.msra.mxu0 %v872
    %1759 = vmatpush.msra.mxu0 %v868
    %1760 = vmatpush.msra.mxu0 %v864
    %1761 = vmatpush.msra.mxu0 %v860
    %1762 = vmatpush.msra.mxu0 %v856
    %1763 = vmatpush.msra.mxu0 %v852
    %1764 = vmatpush.msra.mxu0 %v848
    %1765 = vmatpush.msra.mxu0 %v844
    %1766 = vmatpush.msra.mxu0 %v840
    %1767 = vmatpush.msra.mxu0 %v836
    %1768 = vmatpush.msra.mxu0 %v832
    %1769 = vmatpush.msra.mxu0 %v828
    %1770 = vmatpush.msra.mxu0 %v824
    %1771 = vmatmul.f32.gmra.mxu0 %v1747
    %v1772 = vpop.f32.mrf.mxu0
    %v1773 = vadd.f32 %v1482, %v1772
    %1774 = vdwg.mxu0
    %1775 = vmatpush.msra.mxu0 %v948
    %1776 = vmatpush.msra.mxu0 %v944
    %1777 = vmatpush.msra.mxu0 %v940
    %1778 = vmatpush.msra.mxu0 %v936
    %1779 = vmatpush.msra.mxu0 %v932
    %1780 = vmatpush.msra.mxu0 %v928
    %1781 = vmatpush.msra.mxu0 %v924
    %1782 = vmatpush.msra.mxu0 %v920
    %1783 = vmatpush.msra.mxu0 %v916
    %1784 = vmatpush.msra.mxu0 %v912
    %1785 = vmatpush.msra.mxu0 %v908
    %1786 = vmatpush.msra.mxu0 %v904
    %1787 = vmatpush.msra.mxu0 %v900
    %1788 = vmatpush.msra.mxu0 %v896
    %1789 = vmatpush.msra.mxu0 %v892
    %1790 = vmatpush.msra.mxu0 %v888
    %1791 = vmatmul.f32.gmra.mxu0 %v1748
    %v1792 = vpop.f32.mrf.mxu0
    %v1793 = vadd.f32 %v1773, %v1792
    %1794 = vdwg.mxu0
    %1795 = vmatpush.msra.mxu0 %v1012
    %1796 = vmatpush.msra.mxu0 %v1008
    %1797 = vmatpush.msra.mxu0 %v1004
    %1798 = vmatpush.msra.mxu0 %v1000
    %1799 = vmatpush.msra.mxu0 %v996
    %1800 = vmatpush.msra.mxu0 %v992
    %1801 = vmatpush.msra.mxu0 %v988
    %1802 = vmatpush.msra.mxu0 %v984
    %1803 = vmatpush.msra.mxu0 %v980
    %1804 = vmatpush.msra.mxu0 %v976
    %1805 = vmatpush.msra.mxu0 %v972
    %1806 = vmatpush.msra.mxu0 %v968
    %1807 = vmatpush.msra.mxu0 %v964
    %1808 = vmatpush.msra.mxu0 %v960
    %1809 = vmatpush.msra.mxu0 %v956
    %1810 = vmatpush.msra.mxu0 %v952
    %1811 = vmatmul.f32.gmra.mxu0 %v1749
    %v1812 = vpop.f32.mrf.mxu0
    %v1813 = vadd.f32 %v1793, %v1812
    %1814 = vdwg.mxu0
    %1815 = vmatpush.msra.mxu0 %v1076
    %1816 = vmatpush.msra.mxu0 %v1072
    %1817 = vmatpush.msra.mxu0 %v1068
    %1818 = vmatpush.msra.mxu0 %v1064
    %1819 = vmatpush.msra.mxu0 %v1060
    %1820 = vmatpush.msra.mxu0 %v1056
    %1821 = vmatpush.msra.mxu0 %v1052
    %1822 = vmatpush.msra.mxu0 %v1048
    %1823 = vmatpush.msra.mxu0 %v1044
    %1824 = vmatpush.msra.mxu0 %v1040
    %1825 = vmatpush.msra.mxu0 %v1036
    %1826 = vmatpush.msra.mxu0 %v1032
    %1827 = vmatpush.msra.mxu0 %v1028
    %1828 = vmatpush.msra.mxu0 %v1024
    %1829 = vmatpush.msra.mxu0 %v1020
    %1830 = vmatpush.msra.mxu0 %v1016
    %1831 = vmatmul.f32.gmra.mxu0 %v1750
    %v1832 = vpop.f32.mrf.mxu0
    %v1833 = vadd.f32 %v1813, %v1832
    %1834 = vdwg.mxu0
    %1835 = vmatpush.msra.mxu0 %v885
    %1836 = vmatpush.msra.mxu0 %v881
    %1837 = vmatpush.msra.mxu0 %v877
    %1838 = vmatpush.msra.mxu0 %v873
    %1839 = vmatpush.msra.mxu0 %v869
    %1840 = vmatpush.msra.mxu0 %v865
    %1841 = vmatpush.msra.mxu0 %v861
    %1842 = vmatpush.msra.mxu0 %v857
    %1843 = vmatpush.msra.mxu0 %v853
    %1844 = vmatpush.msra.mxu0 %v849
    %1845 = vmatpush.msra.mxu0 %v845
    %1846 = vmatpush.msra.mxu0 %v841
    %1847 = vmatpush.msra.mxu0 %v837
    %1848 = vmatpush.msra.mxu0 %v833
    %1849 = vmatpush.msra.mxu0 %v829
    %1850 = vmatpush.msra.mxu0 %v825
    %1851 = vmatmul.f32.gmra.mxu0 %v1747
    %v1852 = vpop.f32.mrf.mxu0
    %v1853 = vadd.f32 %v1562, %v1852
    %1854 = vdwg.mxu0
    %1855 = vmatpush.msra.mxu0 %v949
    %1856 = vmatpush.msra.mxu0 %v945
    %1857 = vmatpush.msra.mxu0 %v941
    %1858 = vmatpush.msra.mxu0 %v937
    %1859 = vmatpush.msra.mxu0 %v933
    %1860 = vmatpush.msra.mxu0 %v929
    %1861 = vmatpush.msra.mxu0 %v925
    %1862 = vmatpush.msra.mxu0 %v921
    %1863 = vmatpush.msra.mxu0 %v917
    %1864 = vmatpush.msra.mxu0 %v913
    %1865 = vmatpush.msra.mxu0 %v909
    %1866 = vmatpush.msra.mxu0 %v905
    %1867 = vmatpush.msra.mxu0 %v901
    %1868 = vmatpush.msra.mxu0 %v897
    %1869 = vmatpush.msra.mxu0 %v893
    %1870 = vmatpush.msra.mxu0 %v889
    %1871 = vmatmul.f32.gmra.mxu0 %v1748
    %v1872 = vpop.f32.mrf.mxu0
    %v1873 = vadd.f32 %v1853, %v1872
    %1874 = vdwg.mxu0
    %1875 = vmatpush.msra.mxu0 %v1013
    %1876 = vmatpush.msra.mxu0 %v1009
    %1877 = vmatpush.msra.mxu0 %v1005
    %1878 = vmatpush.msra.mxu0 %v1001
    %1879 = vmatpush.msra.mxu0 %v997
    %1880 = vmatpush.msra.mxu0 %v993
    %1881 = vmatpush.msra.mxu0 %v989
    %1882 = vmatpush.msra.mxu0 %v985
    %1883 = vmatpush.msra.mxu0 %v981
    %1884 = vmatpush.msra.mxu0 %v977
    %1885 = vmatpush.msra.mxu0 %v973
    %1886 = vmatpush.msra.mxu0 %v969
    %1887 = vmatpush.msra.mxu0 %v965
    %1888 = vmatpush.msra.mxu0 %v961
    %1889 = vmatpush.msra.mxu0 %v957
    %1890 = vmatpush.msra.mxu0 %v953
    %1891 = vmatmul.f32.gmra.mxu0 %v1749
    %v1892 = vpop.f32.mrf.mxu0
    %v1893 = vadd.f32 %v1873, %v1892
    %1894 = vdwg.mxu0
    %1895 = vmatpush.msra.mxu0 %v1077
    %1896 = vmatpush.msra.mxu0 %v1073
    %1897 = vmatpush.msra.mxu0 %v1069
    %1898 = vmatpush.msra.mxu0 %v1065
    %1899 = vmatpush.msra.mxu0 %v1061
    %1900 = vmatpush.msra.mxu0 %v1057
    %1901 = vmatpush.msra.mxu0 %v1053
    %1902 = vmatpush.msra.mxu0 %v1049
    %1903 = vmatpush.msra.mxu0 %v1045
    %1904 = vmatpush.msra.mxu0 %v1041
    %1905 = vmatpush.msra.mxu0 %v1037
    %1906 = vmatpush.msra.mxu0 %v1033
    %1907 = vmatpush.msra.mxu0 %v1029
    %1908 = vmatpush.msra.mxu0 %v1025
    %1909 = vmatpush.msra.mxu0 %v1021
    %1910 = vmatpush.msra.mxu0 %v1017
    %1911 = vmatmul.f32.gmra.mxu0 %v1750
    %v1912 = vpop.f32.mrf.mxu0
    %v1913 = vadd.f32 %v1893, %v1912
    %1914 = vdwg.mxu0
    %1915 = vmatpush.msra.mxu0 %v886
    %1916 = vmatpush.msra.mxu0 %v882
    %1917 = vmatpush.msra.mxu0 %v878
    %1918 = vmatpush.msra.mxu0 %v874
    %1919 = vmatpush.msra.mxu0 %v870
    %1920 = vmatpush.msra.mxu0 %v866
    %1921 = vmatpush.msra.mxu0 %v862
    %1922 = vmatpush.msra.mxu0 %v858
    %1923 = vmatpush.msra.mxu0 %v854
    %1924 = vmatpush.msra.mxu0 %v850
    %1925 = vmatpush.msra.mxu0 %v846
    %1926 = vmatpush.msra.mxu0 %v842
    %1927 = vmatpush.msra.mxu0 %v838
    %1928 = vmatpush.msra.mxu0 %v834
    %1929 = vmatpush.msra.mxu0 %v830
    %1930 = vmatpush.msra.mxu0 %v826
    %1931 = vmatmul.f32.gmra.mxu0 %v1747
    %v1932 = vpop.f32.mrf.mxu0
    %v1933 = vadd.f32 %v1642, %v1932
    %1934 = vdwg.mxu0
    %1935 = vmatpush.msra.mxu0 %v950
    %1936 = vmatpush.msra.mxu0 %v946
    %1937 = vmatpush.msra.mxu0 %v942
    %1938 = vmatpush.msra.mxu0 %v938
    %1939 = vmatpush.msra.mxu0 %v934
    %1940 = vmatpush.msra.mxu0 %v930
    %1941 = vmatpush.msra.mxu0 %v926
    %1942 = vmatpush.msra.mxu0 %v922
    %1943 = vmatpush.msra.mxu0 %v918
    %1944 = vmatpush.msra.mxu0 %v914
    %1945 = vmatpush.msra.mxu0 %v910
    %1946 = vmatpush.msra.mxu0 %v906
    %1947 = vmatpush.msra.mxu0 %v902
    %1948 = vmatpush.msra.mxu0 %v898
    %1949 = vmatpush.msra.mxu0 %v894
    %1950 = vmatpush.msra.mxu0 %v890
    %1951 = vmatmul.f32.gmra.mxu0 %v1748
    %v1952 = vpop.f32.mrf.mxu0
    %v1953 = vadd.f32 %v1933, %v1952
    %1954 = vdwg.mxu0
    %1955 = vmatpush.msra.mxu0 %v1014
    %1956 = vmatpush.msra.mxu0 %v1010
    %1957 = vmatpush.msra.mxu0 %v1006
    %1958 = vmatpush.msra.mxu0 %v1002
    %1959 = vmatpush.msra.mxu0 %v998
    %1960 = vmatpush.msra.mxu0 %v994
    %1961 = vmatpush.msra.mxu0 %v990
    %1962 = vmatpush.msra.mxu0 %v986
    %1963 = vmatpush.msra.mxu0 %v982
    %1964 = vmatpush.msra.mxu0 %v978
    %1965 = vmatpush.msra.mxu0 %v974
    %1966 = vmatpush.msra.mxu0 %v970
    %1967 = vmatpush.msra.mxu0 %v966
    %1968 = vmatpush.msra.mxu0 %v962
    %1969 = vmatpush.msra.mxu0 %v958
    %1970 = vmatpush.msra.mxu0 %v954
    %1971 = vmatmul.f32.gmra.mxu0 %v1749
    %v1972 = vpop.f32.mrf.mxu0
    %v1973 = vadd.f32 %v1953, %v1972
    %1974 = vdwg.mxu0
    %1975 = vmatpush.msra.mxu0 %v1078
    %1976 = vmatpush.msra.mxu0 %v1074
    %1977 = vmatpush.msra.mxu0 %v1070
    %1978 = vmatpush.msra.mxu0 %v1066
    %1979 = vmatpush.msra.mxu0 %v1062
    %1980 = vmatpush.msra.mxu0 %v1058
    %1981 = vmatpush.msra.mxu0 %v1054
    %1982 = vmatpush.msra.mxu0 %v1050
    %1983 = vmatpush.msra.mxu0 %v1046
    %1984 = vmatpush.msra.mxu0 %v1042
    %1985 = vmatpush.msra.mxu0 %v1038
    %1986 = vmatpush.msra.mxu0 %v1034
    %1987 = vmatpush.msra.mxu0 %v1030
    %1988 = vmatpush.msra.mxu0 %v1026
    %1989 = vmatpush.msra.mxu0 %v1022
    %1990 = vmatpush.msra.mxu0 %v1018
    %1991 = vmatmul.f32.gmra.mxu0 %v1750
    %v1992 = vpop.f32.mrf.mxu0
    %v1993 = vadd.f32 %v1973, %v1992
    %1994 = vdwg.mxu0
    %1995 = vmatpush.msra.mxu0 %v887
    %1996 = vmatpush.msra.mxu0 %v883
    %1997 = vmatpush.msra.mxu0 %v879
    %1998 = vmatpush.msra.mxu0 %v875
    %1999 = vmatpush.msra.mxu0 %v871
    %2000 = vmatpush.msra.mxu0 %v867
    %2001 = vmatpush.msra.mxu0 %v863
    %2002 = vmatpush.msra.mxu0 %v859
    %2003 = vmatpush.msra.mxu0 %v855
    %2004 = vmatpush.msra.mxu0 %v851
    %2005 = vmatpush.msra.mxu0 %v847
    %2006 = vmatpush.msra.mxu0 %v843
    %2007 = vmatpush.msra.mxu0 %v839
    %2008 = vmatpush.msra.mxu0 %v835
    %2009 = vmatpush.msra.mxu0 %v831
    %2010 = vmatpush.msra.mxu0 %v827
    %2011 = vmatmul.f32.gmra.mxu0 %v1747
    %v2012 = vpop.f32.mrf.mxu0
    %v2013 = vadd.f32 %v1722, %v2012
    %2014 = vdwg.mxu0
    %2015 = vmatpush.msra.mxu0 %v951
    %2016 = vmatpush.msra.mxu0 %v947
    %2017 = vmatpush.msra.mxu0 %v943
    %2018 = vmatpush.msra.mxu0 %v939
    %2019 = vmatpush.msra.mxu0 %v935
    %2020 = vmatpush.msra.mxu0 %v931
    %2021 = vmatpush.msra.mxu0 %v927
    %2022 = vmatpush.msra.mxu0 %v923
    %2023 = vmatpush.msra.mxu0 %v919
    %2024 = vmatpush.msra.mxu0 %v915
    %2025 = vmatpush.msra.mxu0 %v911
    %2026 = vmatpush.msra.mxu0 %v907
    %2027 = vmatpush.msra.mxu0 %v903
    %2028 = vmatpush.msra.mxu0 %v899
    %2029 = vmatpush.msra.mxu0 %v895
    %2030 = vmatpush.msra.mxu0 %v891
    %2031 = vmatmul.f32.gmra.mxu0 %v1748
    %v2032 = vpop.f32.mrf.mxu0
    %v2033 = vadd.f32 %v2013, %v2032
    %2034 = vdwg.mxu0
    %2035 = vmatpush.msra.mxu0 %v1015
    %2036 = vmatpush.msra.mxu0 %v1011
    %2037 = vmatpush.msra.mxu0 %v1007
    %2038 = vmatpush.msra.mxu0 %v1003
    %2039 = vmatpush.msra.mxu0 %v999
    %2040 = vmatpush.msra.mxu0 %v995
    %2041 = vmatpush.msra.mxu0 %v991
    %2042 = vmatpush.msra.mxu0 %v987
    %2043 = vmatpush.msra.mxu0 %v983
    %2044 = vmatpush.msra.mxu0 %v979
    %2045 = vmatpush.msra.mxu0 %v975
    %2046 = vmatpush.msra.mxu0 %v971
    %2047 = vmatpush.msra.mxu0 %v967
    %2048 = vmatpush.msra.mxu0 %v963
    %2049 = vmatpush.msra.mxu0 %v959
    %2050 = vmatpush.msra.mxu0 %v955
    %2051 = vmatmul.f32.gmra.mxu0 %v1749
    %v2052 = vpop.f32.mrf.mxu0
    %v2053 = vadd.f32 %v2033, %v2052
    %2054 = vdwg.mxu0
    %2055 = vmatpush.msra.mxu0 %v1079
    %2056 = vmatpush.msra.mxu0 %v1075
    %2057 = vmatpush.msra.mxu0 %v1071
    %2058 = vmatpush.msra.mxu0 %v1067
    %2059 = vmatpush.msra.mxu0 %v1063
    %2060 = vmatpush.msra.mxu0 %v1059
    %2061 = vmatpush.msra.mxu0 %v1055
    %2062 = vmatpush.msra.mxu0 %v1051
    %2063 = vmatpush.msra.mxu0 %v1047
    %2064 = vmatpush.msra.mxu0 %v1043
    %2065 = vmatpush.msra.mxu0 %v1039
    %2066 = vmatpush.msra.mxu0 %v1035
    %2067 = vmatpush.msra.mxu0 %v1031
    %2068 = vmatpush.msra.mxu0 %v1027
    %2069 = vmatpush.msra.mxu0 %v1023
    %2070 = vmatpush.msra.mxu0 %v1019
    %2071 = vmatmul.f32.gmra.mxu0 %v1750
    %v2072 = vpop.f32.mrf.mxu0
    %v2073 = vadd.f32 %v2053, %v2072
    %2074 = vdwg.mxu0
    %v2079 = vrot.slane %v1913, 4
    %v2080 = vrot.slane %v2073, 4
    %v2081 = vsel %vm1357, %v1833, %v2079
    %v2082 = vsel %vm1357, %v1993, %v2080
    %v2083 = vsel %vm1357, %v2079, %v1833
    %v2084 = vrot.slane %v2083, 4
    %v2085 = vsel %vm1357, %v2080, %v1993
    %v2086 = vrot.slane %v2085, 4
    %v2091 = vld [vmem:[#allocation14] sm:$0xf]
    %v2093 = vperm.slane %v2091, 0
    %v2094 = vperm.slane %v2091, 1
    %v2095 = vperm.slane %v2091, 2
    %v2096 = vperm.slane %v2091, 3
    %v2097 = vrot.slane %v2094, 4
    %v2098 = vrot.slane %v2096, 4
    %v2099 = vsel %vm1357, %v2093, %v2097
    %v2100 = vsel %vm1357, %v2095, %v2098
    %v2103 = vadd.f32 %v2081, %v2099
    %v2104 = vadd.f32 %v2082, %v2100
    %v2105 = vadd.f32 %v2084, %v2099
    %v2106 = vadd.f32 %v2086, %v2100
    %v2107 = vmax.f32 %v2103, 0.0
    %v2108 = vmax.f32 %v2104, 0.0
    %v2109 = vmax.f32 %v2105, 0.0
    %v2110 = vmax.f32 %v2106, 0.0
    %s2111 = scalar_lea.vmem [#allocation12], 4096
    %v2112 = vld [vmem:[%s2111] sm:$0xff]
    %v2113 = vld [vmem:[%s2111 + $0x8] sm:$0xff]
    %v2114 = vld [vmem:[%s2111 + $0x10] sm:$0xff]
    %v2115 = vld [vmem:[%s2111 + $0x18] sm:$0xff]
    %v2116 = vld [vmem:[%s2111 + $0x20] sm:$0xff]
    %v2117 = vld [vmem:[%s2111 + $0x28] sm:$0xff]
    %v2118 = vld [vmem:[%s2111 + $0x30] sm:$0xff]
    %v2119 = vld [vmem:[%s2111 + $0x38] sm:$0xff]
    %v2120 = vld [vmem:[%s2111 + $0x40] sm:$0xff]
    %v2121 = vld [vmem:[%s2111 + $0x48] sm:$0xff]
    %v2122 = vld [vmem:[%s2111 + $0x50] sm:$0xff]
    %v2123 = vld [vmem:[%s2111 + $0x58] sm:$0xff]
    %v2124 = vld [vmem:[%s2111 + $0x60] sm:$0xff]
    %v2125 = vld [vmem:[%s2111 + $0x68] sm:$0xff]
    %v2126 = vld [vmem:[%s2111 + $0x70] sm:$0xff]
    %v2127 = vld [vmem:[%s2111 + $0x78] sm:$0xff]
    %v2128 = vld [vmem:[%s2111 + $0x80] sm:$0xff]
    %v2129 = vld [vmem:[%s2111 + $0x88] sm:$0xff]
    %v2130 = vld [vmem:[%s2111 + $0x90] sm:$0xff]
    %v2131 = vld [vmem:[%s2111 + $0x98] sm:$0xff]
    %v2132 = vld [vmem:[%s2111 + $0xa0] sm:$0xff]
    %v2133 = vld [vmem:[%s2111 + $0xa8] sm:$0xff]
    %v2134 = vld [vmem:[%s2111 + $0xb0] sm:$0xff]
    %v2135 = vld [vmem:[%s2111 + $0xb8] sm:$0xff]
    %v2136 = vld [vmem:[%s2111 + $0xc0] sm:$0xff]
    %v2137 = vld [vmem:[%s2111 + $0xc8] sm:$0xff]
    %v2138 = vld [vmem:[%s2111 + $0xd0] sm:$0xff]
    %v2139 = vld [vmem:[%s2111 + $0xd8] sm:$0xff]
    %v2140 = vld [vmem:[%s2111 + $0xe0] sm:$0xff]
    %v2141 = vld [vmem:[%s2111 + $0xe8] sm:$0xff]
    %v2142 = vld [vmem:[%s2111 + $0xf0] sm:$0xff]
    %v2143 = vld [vmem:[%s2111 + $0xf8] sm:$0xff]
    %v2144 = vld [vmem:[%s2111 + $0x100] sm:$0xff]
    %v2145 = vld [vmem:[%s2111 + $0x108] sm:$0xff]
    %v2146 = vld [vmem:[%s2111 + $0x110] sm:$0xff]
    %v2147 = vld [vmem:[%s2111 + $0x118] sm:$0xff]
    %v2148 = vld [vmem:[%s2111 + $0x120] sm:$0xff]
    %v2149 = vld [vmem:[%s2111 + $0x128] sm:$0xff]
    %v2150 = vld [vmem:[%s2111 + $0x130] sm:$0xff]
    %v2151 = vld [vmem:[%s2111 + $0x138] sm:$0xff]
    %v2152 = vld [vmem:[%s2111 + $0x140] sm:$0xff]
    %v2153 = vld [vmem:[%s2111 + $0x148] sm:$0xff]
    %v2154 = vld [vmem:[%s2111 + $0x150] sm:$0xff]
    %v2155 = vld [vmem:[%s2111 + $0x158] sm:$0xff]
    %v2156 = vld [vmem:[%s2111 + $0x160] sm:$0xff]
    %v2157 = vld [vmem:[%s2111 + $0x168] sm:$0xff]
    %v2158 = vld [vmem:[%s2111 + $0x170] sm:$0xff]
    %v2159 = vld [vmem:[%s2111 + $0x178] sm:$0xff]
    %v2160 = vld [vmem:[%s2111 + $0x180] sm:$0xff]
    %v2161 = vld [vmem:[%s2111 + $0x188] sm:$0xff]
    %v2162 = vld [vmem:[%s2111 + $0x190] sm:$0xff]
    %v2163 = vld [vmem:[%s2111 + $0x198] sm:$0xff]
    %v2164 = vld [vmem:[%s2111 + $0x1a0] sm:$0xff]
    %v2165 = vld [vmem:[%s2111 + $0x1a8] sm:$0xff]
    %v2166 = vld [vmem:[%s2111 + $0x1b0] sm:$0xff]
    %v2167 = vld [vmem:[%s2111 + $0x1b8] sm:$0xff]
    %v2168 = vld [vmem:[%s2111 + $0x1c0] sm:$0xff]
    %v2169 = vld [vmem:[%s2111 + $0x1c8] sm:$0xff]
    %v2170 = vld [vmem:[%s2111 + $0x1d0] sm:$0xff]
    %v2171 = vld [vmem:[%s2111 + $0x1d8] sm:$0xff]
    %v2172 = vld [vmem:[%s2111 + $0x1e0] sm:$0xff]
    %v2173 = vld [vmem:[%s2111 + $0x1e8] sm:$0xff]
    %v2174 = vld [vmem:[%s2111 + $0x1f0] sm:$0xff]
    %v2175 = vld [vmem:[%s2111 + $0x1f8] sm:$0xff]
    %v2176 = vld [vmem:[%s2111 + $0x200] sm:$0xff]
    %v2177 = vld [vmem:[%s2111 + $0x208] sm:$0xff]
    %v2178 = vld [vmem:[%s2111 + $0x210] sm:$0xff]
    %v2179 = vld [vmem:[%s2111 + $0x218] sm:$0xff]
    %v2180 = vld [vmem:[%s2111 + $0x220] sm:$0xff]
    %v2181 = vld [vmem:[%s2111 + $0x228] sm:$0xff]
    %v2182 = vld [vmem:[%s2111 + $0x230] sm:$0xff]
    %v2183 = vld [vmem:[%s2111 + $0x238] sm:$0xff]
    %v2184 = vld [vmem:[%s2111 + $0x240] sm:$0xff]
    %v2185 = vld [vmem:[%s2111 + $0x248] sm:$0xff]
    %v2186 = vld [vmem:[%s2111 + $0x250] sm:$0xff]
    %v2187 = vld [vmem:[%s2111 + $0x258] sm:$0xff]
    %v2188 = vld [vmem:[%s2111 + $0x260] sm:$0xff]
    %v2189 = vld [vmem:[%s2111 + $0x268] sm:$0xff]
    %v2190 = vld [vmem:[%s2111 + $0x270] sm:$0xff]
    %v2191 = vld [vmem:[%s2111 + $0x278] sm:$0xff]
    %v2192 = vld [vmem:[%s2111 + $0x280] sm:$0xff]
    %v2193 = vld [vmem:[%s2111 + $0x288] sm:$0xff]
    %v2194 = vld [vmem:[%s2111 + $0x290] sm:$0xff]
    %v2195 = vld [vmem:[%s2111 + $0x298] sm:$0xff]
    %v2196 = vld [vmem:[%s2111 + $0x2a0] sm:$0xff]
    %v2197 = vld [vmem:[%s2111 + $0x2a8] sm:$0xff]
    %v2198 = vld [vmem:[%s2111 + $0x2b0] sm:$0xff]
    %v2199 = vld [vmem:[%s2111 + $0x2b8] sm:$0xff]
    %v2200 = vld [vmem:[%s2111 + $0x2c0] sm:$0xff]
    %v2201 = vld [vmem:[%s2111 + $0x2c8] sm:$0xff]
    %v2202 = vld [vmem:[%s2111 + $0x2d0] sm:$0xff]
    %v2203 = vld [vmem:[%s2111 + $0x2d8] sm:$0xff]
    %v2204 = vld [vmem:[%s2111 + $0x2e0] sm:$0xff]
    %v2205 = vld [vmem:[%s2111 + $0x2e8] sm:$0xff]
    %v2206 = vld [vmem:[%s2111 + $0x2f0] sm:$0xff]
    %v2207 = vld [vmem:[%s2111 + $0x2f8] sm:$0xff]
    %v2208 = vld [vmem:[%s2111 + $0x300] sm:$0xff]
    %v2209 = vld [vmem:[%s2111 + $0x308] sm:$0xff]
    %v2210 = vld [vmem:[%s2111 + $0x310] sm:$0xff]
    %v2211 = vld [vmem:[%s2111 + $0x318] sm:$0xff]
    %v2212 = vld [vmem:[%s2111 + $0x320] sm:$0xff]
    %v2213 = vld [vmem:[%s2111 + $0x328] sm:$0xff]
    %v2214 = vld [vmem:[%s2111 + $0x330] sm:$0xff]
    %v2215 = vld [vmem:[%s2111 + $0x338] sm:$0xff]
    %v2216 = vld [vmem:[%s2111 + $0x340] sm:$0xff]
    %v2217 = vld [vmem:[%s2111 + $0x348] sm:$0xff]
    %v2218 = vld [vmem:[%s2111 + $0x350] sm:$0xff]
    %v2219 = vld [vmem:[%s2111 + $0x358] sm:$0xff]
    %v2220 = vld [vmem:[%s2111 + $0x360] sm:$0xff]
    %v2221 = vld [vmem:[%s2111 + $0x368] sm:$0xff]
    %v2222 = vld [vmem:[%s2111 + $0x370] sm:$0xff]
    %v2223 = vld [vmem:[%s2111 + $0x378] sm:$0xff]
    %v2224 = vld [vmem:[%s2111 + $0x380] sm:$0xff]
    %v2225 = vld [vmem:[%s2111 + $0x388] sm:$0xff]
    %v2226 = vld [vmem:[%s2111 + $0x390] sm:$0xff]
    %v2227 = vld [vmem:[%s2111 + $0x398] sm:$0xff]
    %v2228 = vld [vmem:[%s2111 + $0x3a0] sm:$0xff]
    %v2229 = vld [vmem:[%s2111 + $0x3a8] sm:$0xff]
    %v2230 = vld [vmem:[%s2111 + $0x3b0] sm:$0xff]
    %v2231 = vld [vmem:[%s2111 + $0x3b8] sm:$0xff]
    %v2232 = vld [vmem:[%s2111 + $0x3c0] sm:$0xff]
    %v2233 = vld [vmem:[%s2111 + $0x3c8] sm:$0xff]
    %v2234 = vld [vmem:[%s2111 + $0x3d0] sm:$0xff]
    %v2235 = vld [vmem:[%s2111 + $0x3d8] sm:$0xff]
    %v2236 = vld [vmem:[%s2111 + $0x3e0] sm:$0xff]
    %v2237 = vld [vmem:[%s2111 + $0x3e8] sm:$0xff]
    %v2238 = vld [vmem:[%s2111 + $0x3f0] sm:$0xff]
    %v2239 = vld [vmem:[%s2111 + $0x3f8] sm:$0xff]
    %v2240 = vld [vmem:[%s2111 + $0x400] sm:$0xff]
    %v2241 = vld [vmem:[%s2111 + $0x408] sm:$0xff]
    %v2242 = vld [vmem:[%s2111 + $0x410] sm:$0xff]
    %v2243 = vld [vmem:[%s2111 + $0x418] sm:$0xff]
    %v2244 = vld [vmem:[%s2111 + $0x420] sm:$0xff]
    %v2245 = vld [vmem:[%s2111 + $0x428] sm:$0xff]
    %v2246 = vld [vmem:[%s2111 + $0x430] sm:$0xff]
    %v2247 = vld [vmem:[%s2111 + $0x438] sm:$0xff]
    %v2248 = vld [vmem:[%s2111 + $0x440] sm:$0xff]
    %v2249 = vld [vmem:[%s2111 + $0x448] sm:$0xff]
    %v2250 = vld [vmem:[%s2111 + $0x450] sm:$0xff]
    %v2251 = vld [vmem:[%s2111 + $0x458] sm:$0xff]
    %v2252 = vld [vmem:[%s2111 + $0x460] sm:$0xff]
    %v2253 = vld [vmem:[%s2111 + $0x468] sm:$0xff]
    %v2254 = vld [vmem:[%s2111 + $0x470] sm:$0xff]
    %v2255 = vld [vmem:[%s2111 + $0x478] sm:$0xff]
    %v2256 = vld [vmem:[%s2111 + $0x480] sm:$0xff]
    %v2257 = vld [vmem:[%s2111 + $0x488] sm:$0xff]
    %v2258 = vld [vmem:[%s2111 + $0x490] sm:$0xff]
    %v2259 = vld [vmem:[%s2111 + $0x498] sm:$0xff]
    %v2260 = vld [vmem:[%s2111 + $0x4a0] sm:$0xff]
    %v2261 = vld [vmem:[%s2111 + $0x4a8] sm:$0xff]
    %v2262 = vld [vmem:[%s2111 + $0x4b0] sm:$0xff]
    %v2263 = vld [vmem:[%s2111 + $0x4b8] sm:$0xff]
    %v2264 = vld [vmem:[%s2111 + $0x4c0] sm:$0xff]
    %v2265 = vld [vmem:[%s2111 + $0x4c8] sm:$0xff]
    %v2266 = vld [vmem:[%s2111 + $0x4d0] sm:$0xff]
    %v2267 = vld [vmem:[%s2111 + $0x4d8] sm:$0xff]
    %v2268 = vld [vmem:[%s2111 + $0x4e0] sm:$0xff]
    %v2269 = vld [vmem:[%s2111 + $0x4e8] sm:$0xff]
    %v2270 = vld [vmem:[%s2111 + $0x4f0] sm:$0xff]
    %v2271 = vld [vmem:[%s2111 + $0x4f8] sm:$0xff]
    %v2272 = vld [vmem:[%s2111 + $0x500] sm:$0xff]
    %v2273 = vld [vmem:[%s2111 + $0x508] sm:$0xff]
    %v2274 = vld [vmem:[%s2111 + $0x510] sm:$0xff]
    %v2275 = vld [vmem:[%s2111 + $0x518] sm:$0xff]
    %v2276 = vld [vmem:[%s2111 + $0x520] sm:$0xff]
    %v2277 = vld [vmem:[%s2111 + $0x528] sm:$0xff]
    %v2278 = vld [vmem:[%s2111 + $0x530] sm:$0xff]
    %v2279 = vld [vmem:[%s2111 + $0x538] sm:$0xff]
    %v2280 = vld [vmem:[%s2111 + $0x540] sm:$0xff]
    %v2281 = vld [vmem:[%s2111 + $0x548] sm:$0xff]
    %v2282 = vld [vmem:[%s2111 + $0x550] sm:$0xff]
    %v2283 = vld [vmem:[%s2111 + $0x558] sm:$0xff]
    %v2284 = vld [vmem:[%s2111 + $0x560] sm:$0xff]
    %v2285 = vld [vmem:[%s2111 + $0x568] sm:$0xff]
    %v2286 = vld [vmem:[%s2111 + $0x570] sm:$0xff]
    %v2287 = vld [vmem:[%s2111 + $0x578] sm:$0xff]
    %v2288 = vld [vmem:[%s2111 + $0x580] sm:$0xff]
    %v2289 = vld [vmem:[%s2111 + $0x588] sm:$0xff]
    %v2290 = vld [vmem:[%s2111 + $0x590] sm:$0xff]
    %v2291 = vld [vmem:[%s2111 + $0x598] sm:$0xff]
    %v2292 = vld [vmem:[%s2111 + $0x5a0] sm:$0xff]
    %v2293 = vld [vmem:[%s2111 + $0x5a8] sm:$0xff]
    %v2294 = vld [vmem:[%s2111 + $0x5b0] sm:$0xff]
    %v2295 = vld [vmem:[%s2111 + $0x5b8] sm:$0xff]
    %v2296 = vld [vmem:[%s2111 + $0x5c0] sm:$0xff]
    %v2297 = vld [vmem:[%s2111 + $0x5c8] sm:$0xff]
    %v2298 = vld [vmem:[%s2111 + $0x5d0] sm:$0xff]
    %v2299 = vld [vmem:[%s2111 + $0x5d8] sm:$0xff]
    %v2300 = vld [vmem:[%s2111 + $0x5e0] sm:$0xff]
    %v2301 = vld [vmem:[%s2111 + $0x5e8] sm:$0xff]
    %v2302 = vld [vmem:[%s2111 + $0x5f0] sm:$0xff]
    %v2303 = vld [vmem:[%s2111 + $0x5f8] sm:$0xff]
    %v2304 = vld [vmem:[%s2111 + $0x600] sm:$0xff]
    %v2305 = vld [vmem:[%s2111 + $0x608] sm:$0xff]
    %v2306 = vld [vmem:[%s2111 + $0x610] sm:$0xff]
    %v2307 = vld [vmem:[%s2111 + $0x618] sm:$0xff]
    %v2308 = vld [vmem:[%s2111 + $0x620] sm:$0xff]
    %v2309 = vld [vmem:[%s2111 + $0x628] sm:$0xff]
    %v2310 = vld [vmem:[%s2111 + $0x630] sm:$0xff]
    %v2311 = vld [vmem:[%s2111 + $0x638] sm:$0xff]
    %v2312 = vld [vmem:[%s2111 + $0x640] sm:$0xff]
    %v2313 = vld [vmem:[%s2111 + $0x648] sm:$0xff]
    %v2314 = vld [vmem:[%s2111 + $0x650] sm:$0xff]
    %v2315 = vld [vmem:[%s2111 + $0x658] sm:$0xff]
    %v2316 = vld [vmem:[%s2111 + $0x660] sm:$0xff]
    %v2317 = vld [vmem:[%s2111 + $0x668] sm:$0xff]
    %v2318 = vld [vmem:[%s2111 + $0x670] sm:$0xff]
    %v2319 = vld [vmem:[%s2111 + $0x678] sm:$0xff]
    %v2320 = vld [vmem:[%s2111 + $0x680] sm:$0xff]
    %v2321 = vld [vmem:[%s2111 + $0x688] sm:$0xff]
    %v2322 = vld [vmem:[%s2111 + $0x690] sm:$0xff]
    %v2323 = vld [vmem:[%s2111 + $0x698] sm:$0xff]
    %v2324 = vld [vmem:[%s2111 + $0x6a0] sm:$0xff]
    %v2325 = vld [vmem:[%s2111 + $0x6a8] sm:$0xff]
    %v2326 = vld [vmem:[%s2111 + $0x6b0] sm:$0xff]
    %v2327 = vld [vmem:[%s2111 + $0x6b8] sm:$0xff]
    %v2328 = vld [vmem:[%s2111 + $0x6c0] sm:$0xff]
    %v2329 = vld [vmem:[%s2111 + $0x6c8] sm:$0xff]
    %v2330 = vld [vmem:[%s2111 + $0x6d0] sm:$0xff]
    %v2331 = vld [vmem:[%s2111 + $0x6d8] sm:$0xff]
    %v2332 = vld [vmem:[%s2111 + $0x6e0] sm:$0xff]
    %v2333 = vld [vmem:[%s2111 + $0x6e8] sm:$0xff]
    %v2334 = vld [vmem:[%s2111 + $0x6f0] sm:$0xff]
    %v2335 = vld [vmem:[%s2111 + $0x6f8] sm:$0xff]
    %v2336 = vld [vmem:[%s2111 + $0x700] sm:$0xff]
    %v2337 = vld [vmem:[%s2111 + $0x708] sm:$0xff]
    %v2338 = vld [vmem:[%s2111 + $0x710] sm:$0xff]
    %v2339 = vld [vmem:[%s2111 + $0x718] sm:$0xff]
    %v2340 = vld [vmem:[%s2111 + $0x720] sm:$0xff]
    %v2341 = vld [vmem:[%s2111 + $0x728] sm:$0xff]
    %v2342 = vld [vmem:[%s2111 + $0x730] sm:$0xff]
    %v2343 = vld [vmem:[%s2111 + $0x738] sm:$0xff]
    %v2344 = vld [vmem:[%s2111 + $0x740] sm:$0xff]
    %v2345 = vld [vmem:[%s2111 + $0x748] sm:$0xff]
    %v2346 = vld [vmem:[%s2111 + $0x750] sm:$0xff]
    %v2347 = vld [vmem:[%s2111 + $0x758] sm:$0xff]
    %v2348 = vld [vmem:[%s2111 + $0x760] sm:$0xff]
    %v2349 = vld [vmem:[%s2111 + $0x768] sm:$0xff]
    %v2350 = vld [vmem:[%s2111 + $0x770] sm:$0xff]
    %v2351 = vld [vmem:[%s2111 + $0x778] sm:$0xff]
    %v2352 = vld [vmem:[%s2111 + $0x780] sm:$0xff]
    %v2353 = vld [vmem:[%s2111 + $0x788] sm:$0xff]
    %v2354 = vld [vmem:[%s2111 + $0x790] sm:$0xff]
    %v2355 = vld [vmem:[%s2111 + $0x798] sm:$0xff]
    %v2356 = vld [vmem:[%s2111 + $0x7a0] sm:$0xff]
    %v2357 = vld [vmem:[%s2111 + $0x7a8] sm:$0xff]
    %v2358 = vld [vmem:[%s2111 + $0x7b0] sm:$0xff]
    %v2359 = vld [vmem:[%s2111 + $0x7b8] sm:$0xff]
    %v2360 = vld [vmem:[%s2111 + $0x7c0] sm:$0xff]
    %v2361 = vld [vmem:[%s2111 + $0x7c8] sm:$0xff]
    %v2362 = vld [vmem:[%s2111 + $0x7d0] sm:$0xff]
    %v2363 = vld [vmem:[%s2111 + $0x7d8] sm:$0xff]
    %v2364 = vld [vmem:[%s2111 + $0x7e0] sm:$0xff]
    %v2365 = vld [vmem:[%s2111 + $0x7e8] sm:$0xff]
    %v2366 = vld [vmem:[%s2111 + $0x7f0] sm:$0xff]
    %v2367 = vld [vmem:[%s2111 + $0x7f8] sm:$0xff]
    %v2368 = vld [vmem:[#allocation2] sm:$0x3c]
    %v2369 = vld [vmem:[#allocation2 + $0x8] sm:$0x3c]
    %v2370 = vld [vmem:[#allocation2 + $0x10] sm:$0x3c]
    %v2371 = vld [vmem:[#allocation2 + $0x18] sm:$0x3c]
    %v2372 = vld [vmem:[#allocation2 + $0x20] sm:$0x3c]
    %v2373 = vld [vmem:[#allocation2 + $0x28] sm:$0x3c]
    %v2374 = vld [vmem:[#allocation2 + $0x30] sm:$0x3c]
    %v2375 = vld [vmem:[#allocation2 + $0x38] sm:$0x3c]
    %s2376 = scalar_lea.vmem [#allocation12], 6144
    %v2377 = vld [vmem:[%s2376] sm:$0xff]
    %v2378 = vld [vmem:[%s2376 + $0x8] sm:$0xff]
    %v2379 = vld [vmem:[%s2376 + $0x10] sm:$0xff]
    %v2380 = vld [vmem:[%s2376 + $0x18] sm:$0xff]
    %v2381 = vld [vmem:[%s2376 + $0x20] sm:$0xff]
    %v2382 = vld [vmem:[%s2376 + $0x28] sm:$0xff]
    %v2383 = vld [vmem:[%s2376 + $0x30] sm:$0xff]
    %v2384 = vld [vmem:[%s2376 + $0x38] sm:$0xff]
    %v2385 = vld [vmem:[%s2376 + $0x40] sm:$0xff]
    %v2386 = vld [vmem:[%s2376 + $0x48] sm:$0xff]
    %v2387 = vld [vmem:[%s2376 + $0x50] sm:$0xff]
    %v2388 = vld [vmem:[%s2376 + $0x58] sm:$0xff]
    %v2389 = vld [vmem:[%s2376 + $0x60] sm:$0xff]
    %v2390 = vld [vmem:[%s2376 + $0x68] sm:$0xff]
    %v2391 = vld [vmem:[%s2376 + $0x70] sm:$0xff]
    %v2392 = vld [vmem:[%s2376 + $0x78] sm:$0xff]
    %v2393 = vld [vmem:[%s2376 + $0x80] sm:$0xff]
    %v2394 = vld [vmem:[%s2376 + $0x88] sm:$0xff]
    %v2395 = vld [vmem:[%s2376 + $0x90] sm:$0xff]
    %v2396 = vld [vmem:[%s2376 + $0x98] sm:$0xff]
    %v2397 = vld [vmem:[%s2376 + $0xa0] sm:$0xff]
    %v2398 = vld [vmem:[%s2376 + $0xa8] sm:$0xff]
    %v2399 = vld [vmem:[%s2376 + $0xb0] sm:$0xff]
    %v2400 = vld [vmem:[%s2376 + $0xb8] sm:$0xff]
    %v2401 = vld [vmem:[%s2376 + $0xc0] sm:$0xff]
    %v2402 = vld [vmem:[%s2376 + $0xc8] sm:$0xff]
    %v2403 = vld [vmem:[%s2376 + $0xd0] sm:$0xff]
    %v2404 = vld [vmem:[%s2376 + $0xd8] sm:$0xff]
    %v2405 = vld [vmem:[%s2376 + $0xe0] sm:$0xff]
    %v2406 = vld [vmem:[%s2376 + $0xe8] sm:$0xff]
    %v2407 = vld [vmem:[%s2376 + $0xf0] sm:$0xff]
    %v2408 = vld [vmem:[%s2376 + $0xf8] sm:$0xff]
    %v2409 = vld [vmem:[%s2376 + $0x100] sm:$0xff]
    %v2410 = vld [vmem:[%s2376 + $0x108] sm:$0xff]
    %v2411 = vld [vmem:[%s2376 + $0x110] sm:$0xff]
    %v2412 = vld [vmem:[%s2376 + $0x118] sm:$0xff]
    %v2413 = vld [vmem:[%s2376 + $0x120] sm:$0xff]
    %v2414 = vld [vmem:[%s2376 + $0x128] sm:$0xff]
    %v2415 = vld [vmem:[%s2376 + $0x130] sm:$0xff]
    %v2416 = vld [vmem:[%s2376 + $0x138] sm:$0xff]
    %v2417 = vld [vmem:[%s2376 + $0x140] sm:$0xff]
    %v2418 = vld [vmem:[%s2376 + $0x148] sm:$0xff]
    %v2419 = vld [vmem:[%s2376 + $0x150] sm:$0xff]
    %v2420 = vld [vmem:[%s2376 + $0x158] sm:$0xff]
    %v2421 = vld [vmem:[%s2376 + $0x160] sm:$0xff]
    %v2422 = vld [vmem:[%s2376 + $0x168] sm:$0xff]
    %v2423 = vld [vmem:[%s2376 + $0x170] sm:$0xff]
    %v2424 = vld [vmem:[%s2376 + $0x178] sm:$0xff]
    %v2425 = vld [vmem:[%s2376 + $0x180] sm:$0xff]
    %v2426 = vld [vmem:[%s2376 + $0x188] sm:$0xff]
    %v2427 = vld [vmem:[%s2376 + $0x190] sm:$0xff]
    %v2428 = vld [vmem:[%s2376 + $0x198] sm:$0xff]
    %v2429 = vld [vmem:[%s2376 + $0x1a0] sm:$0xff]
    %v2430 = vld [vmem:[%s2376 + $0x1a8] sm:$0xff]
    %v2431 = vld [vmem:[%s2376 + $0x1b0] sm:$0xff]
    %v2432 = vld [vmem:[%s2376 + $0x1b8] sm:$0xff]
    %v2433 = vld [vmem:[%s2376 + $0x1c0] sm:$0xff]
    %v2434 = vld [vmem:[%s2376 + $0x1c8] sm:$0xff]
    %v2435 = vld [vmem:[%s2376 + $0x1d0] sm:$0xff]
    %v2436 = vld [vmem:[%s2376 + $0x1d8] sm:$0xff]
    %v2437 = vld [vmem:[%s2376 + $0x1e0] sm:$0xff]
    %v2438 = vld [vmem:[%s2376 + $0x1e8] sm:$0xff]
    %v2439 = vld [vmem:[%s2376 + $0x1f0] sm:$0xff]
    %v2440 = vld [vmem:[%s2376 + $0x1f8] sm:$0xff]
    %v2441 = vld [vmem:[%s2376 + $0x200] sm:$0xff]
    %v2442 = vld [vmem:[%s2376 + $0x208] sm:$0xff]
    %v2443 = vld [vmem:[%s2376 + $0x210] sm:$0xff]
    %v2444 = vld [vmem:[%s2376 + $0x218] sm:$0xff]
    %v2445 = vld [vmem:[%s2376 + $0x220] sm:$0xff]
    %v2446 = vld [vmem:[%s2376 + $0x228] sm:$0xff]
    %v2447 = vld [vmem:[%s2376 + $0x230] sm:$0xff]
    %v2448 = vld [vmem:[%s2376 + $0x238] sm:$0xff]
    %v2449 = vld [vmem:[%s2376 + $0x240] sm:$0xff]
    %v2450 = vld [vmem:[%s2376 + $0x248] sm:$0xff]
    %v2451 = vld [vmem:[%s2376 + $0x250] sm:$0xff]
    %v2452 = vld [vmem:[%s2376 + $0x258] sm:$0xff]
    %v2453 = vld [vmem:[%s2376 + $0x260] sm:$0xff]
    %v2454 = vld [vmem:[%s2376 + $0x268] sm:$0xff]
    %v2455 = vld [vmem:[%s2376 + $0x270] sm:$0xff]
    %v2456 = vld [vmem:[%s2376 + $0x278] sm:$0xff]
    %v2457 = vld [vmem:[%s2376 + $0x280] sm:$0xff]
    %v2458 = vld [vmem:[%s2376 + $0x288] sm:$0xff]
    %v2459 = vld [vmem:[%s2376 + $0x290] sm:$0xff]
    %v2460 = vld [vmem:[%s2376 + $0x298] sm:$0xff]
    %v2461 = vld [vmem:[%s2376 + $0x2a0] sm:$0xff]
    %v2462 = vld [vmem:[%s2376 + $0x2a8] sm:$0xff]
    %v2463 = vld [vmem:[%s2376 + $0x2b0] sm:$0xff]
    %v2464 = vld [vmem:[%s2376 + $0x2b8] sm:$0xff]
    %v2465 = vld [vmem:[%s2376 + $0x2c0] sm:$0xff]
    %v2466 = vld [vmem:[%s2376 + $0x2c8] sm:$0xff]
    %v2467 = vld [vmem:[%s2376 + $0x2d0] sm:$0xff]
    %v2468 = vld [vmem:[%s2376 + $0x2d8] sm:$0xff]
    %v2469 = vld [vmem:[%s2376 + $0x2e0] sm:$0xff]
    %v2470 = vld [vmem:[%s2376 + $0x2e8] sm:$0xff]
    %v2471 = vld [vmem:[%s2376 + $0x2f0] sm:$0xff]
    %v2472 = vld [vmem:[%s2376 + $0x2f8] sm:$0xff]
    %v2473 = vld [vmem:[%s2376 + $0x300] sm:$0xff]
    %v2474 = vld [vmem:[%s2376 + $0x308] sm:$0xff]
    %v2475 = vld [vmem:[%s2376 + $0x310] sm:$0xff]
    %v2476 = vld [vmem:[%s2376 + $0x318] sm:$0xff]
    %v2477 = vld [vmem:[%s2376 + $0x320] sm:$0xff]
    %v2478 = vld [vmem:[%s2376 + $0x328] sm:$0xff]
    %v2479 = vld [vmem:[%s2376 + $0x330] sm:$0xff]
    %v2480 = vld [vmem:[%s2376 + $0x338] sm:$0xff]
    %v2481 = vld [vmem:[%s2376 + $0x340] sm:$0xff]
    %v2482 = vld [vmem:[%s2376 + $0x348] sm:$0xff]
    %v2483 = vld [vmem:[%s2376 + $0x350] sm:$0xff]
    %v2484 = vld [vmem:[%s2376 + $0x358] sm:$0xff]
    %v2485 = vld [vmem:[%s2376 + $0x360] sm:$0xff]
    %v2486 = vld [vmem:[%s2376 + $0x368] sm:$0xff]
    %v2487 = vld [vmem:[%s2376 + $0x370] sm:$0xff]
    %v2488 = vld [vmem:[%s2376 + $0x378] sm:$0xff]
    %v2489 = vld [vmem:[%s2376 + $0x380] sm:$0xff]
    %v2490 = vld [vmem:[%s2376 + $0x388] sm:$0xff]
    %v2491 = vld [vmem:[%s2376 + $0x390] sm:$0xff]
    %v2492 = vld [vmem:[%s2376 + $0x398] sm:$0xff]
    %v2493 = vld [vmem:[%s2376 + $0x3a0] sm:$0xff]
    %v2494 = vld [vmem:[%s2376 + $0x3a8] sm:$0xff]
    %v2495 = vld [vmem:[%s2376 + $0x3b0] sm:$0xff]
    %v2496 = vld [vmem:[%s2376 + $0x3b8] sm:$0xff]
    %v2497 = vld [vmem:[%s2376 + $0x3c0] sm:$0xff]
    %v2498 = vld [vmem:[%s2376 + $0x3c8] sm:$0xff]
    %v2499 = vld [vmem:[%s2376 + $0x3d0] sm:$0xff]
    %v2500 = vld [vmem:[%s2376 + $0x3d8] sm:$0xff]
    %v2501 = vld [vmem:[%s2376 + $0x3e0] sm:$0xff]
    %v2502 = vld [vmem:[%s2376 + $0x3e8] sm:$0xff]
    %v2503 = vld [vmem:[%s2376 + $0x3f0] sm:$0xff]
    %v2504 = vld [vmem:[%s2376 + $0x3f8] sm:$0xff]
    %v2505 = vld [vmem:[%s2376 + $0x400] sm:$0xff]
    %v2506 = vld [vmem:[%s2376 + $0x408] sm:$0xff]
    %v2507 = vld [vmem:[%s2376 + $0x410] sm:$0xff]
    %v2508 = vld [vmem:[%s2376 + $0x418] sm:$0xff]
    %v2509 = vld [vmem:[%s2376 + $0x420] sm:$0xff]
    %v2510 = vld [vmem:[%s2376 + $0x428] sm:$0xff]
    %v2511 = vld [vmem:[%s2376 + $0x430] sm:$0xff]
    %v2512 = vld [vmem:[%s2376 + $0x438] sm:$0xff]
    %v2513 = vld [vmem:[%s2376 + $0x440] sm:$0xff]
    %v2514 = vld [vmem:[%s2376 + $0x448] sm:$0xff]
    %v2515 = vld [vmem:[%s2376 + $0x450] sm:$0xff]
    %v2516 = vld [vmem:[%s2376 + $0x458] sm:$0xff]
    %v2517 = vld [vmem:[%s2376 + $0x460] sm:$0xff]
    %v2518 = vld [vmem:[%s2376 + $0x468] sm:$0xff]
    %v2519 = vld [vmem:[%s2376 + $0x470] sm:$0xff]
    %v2520 = vld [vmem:[%s2376 + $0x478] sm:$0xff]
    %v2521 = vld [vmem:[%s2376 + $0x480] sm:$0xff]
    %v2522 = vld [vmem:[%s2376 + $0x488] sm:$0xff]
    %v2523 = vld [vmem:[%s2376 + $0x490] sm:$0xff]
    %v2524 = vld [vmem:[%s2376 + $0x498] sm:$0xff]
    %v2525 = vld [vmem:[%s2376 + $0x4a0] sm:$0xff]
    %v2526 = vld [vmem:[%s2376 + $0x4a8] sm:$0xff]
    %v2527 = vld [vmem:[%s2376 + $0x4b0] sm:$0xff]
    %v2528 = vld [vmem:[%s2376 + $0x4b8] sm:$0xff]
    %v2529 = vld [vmem:[%s2376 + $0x4c0] sm:$0xff]
    %v2530 = vld [vmem:[%s2376 + $0x4c8] sm:$0xff]
    %v2531 = vld [vmem:[%s2376 + $0x4d0] sm:$0xff]
    %v2532 = vld [vmem:[%s2376 + $0x4d8] sm:$0xff]
    %v2533 = vld [vmem:[%s2376 + $0x4e0] sm:$0xff]
    %v2534 = vld [vmem:[%s2376 + $0x4e8] sm:$0xff]
    %v2535 = vld [vmem:[%s2376 + $0x4f0] sm:$0xff]
    %v2536 = vld [vmem:[%s2376 + $0x4f8] sm:$0xff]
    %v2537 = vld [vmem:[%s2376 + $0x500] sm:$0xff]
    %v2538 = vld [vmem:[%s2376 + $0x508] sm:$0xff]
    %v2539 = vld [vmem:[%s2376 + $0x510] sm:$0xff]
    %v2540 = vld [vmem:[%s2376 + $0x518] sm:$0xff]
    %v2541 = vld [vmem:[%s2376 + $0x520] sm:$0xff]
    %v2542 = vld [vmem:[%s2376 + $0x528] sm:$0xff]
    %v2543 = vld [vmem:[%s2376 + $0x530] sm:$0xff]
    %v2544 = vld [vmem:[%s2376 + $0x538] sm:$0xff]
    %v2545 = vld [vmem:[%s2376 + $0x540] sm:$0xff]
    %v2546 = vld [vmem:[%s2376 + $0x548] sm:$0xff]
    %v2547 = vld [vmem:[%s2376 + $0x550] sm:$0xff]
    %v2548 = vld [vmem:[%s2376 + $0x558] sm:$0xff]
    %v2549 = vld [vmem:[%s2376 + $0x560] sm:$0xff]
    %v2550 = vld [vmem:[%s2376 + $0x568] sm:$0xff]
    %v2551 = vld [vmem:[%s2376 + $0x570] sm:$0xff]
    %v2552 = vld [vmem:[%s2376 + $0x578] sm:$0xff]
    %v2553 = vld [vmem:[%s2376 + $0x580] sm:$0xff]
    %v2554 = vld [vmem:[%s2376 + $0x588] sm:$0xff]
    %v2555 = vld [vmem:[%s2376 + $0x590] sm:$0xff]
    %v2556 = vld [vmem:[%s2376 + $0x598] sm:$0xff]
    %v2557 = vld [vmem:[%s2376 + $0x5a0] sm:$0xff]
    %v2558 = vld [vmem:[%s2376 + $0x5a8] sm:$0xff]
    %v2559 = vld [vmem:[%s2376 + $0x5b0] sm:$0xff]
    %v2560 = vld [vmem:[%s2376 + $0x5b8] sm:$0xff]
    %v2561 = vld [vmem:[%s2376 + $0x5c0] sm:$0xff]
    %v2562 = vld [vmem:[%s2376 + $0x5c8] sm:$0xff]
    %v2563 = vld [vmem:[%s2376 + $0x5d0] sm:$0xff]
    %v2564 = vld [vmem:[%s2376 + $0x5d8] sm:$0xff]
    %v2565 = vld [vmem:[%s2376 + $0x5e0] sm:$0xff]
    %v2566 = vld [vmem:[%s2376 + $0x5e8] sm:$0xff]
    %v2567 = vld [vmem:[%s2376 + $0x5f0] sm:$0xff]
    %v2568 = vld [vmem:[%s2376 + $0x5f8] sm:$0xff]
    %v2569 = vld [vmem:[%s2376 + $0x600] sm:$0xff]
    %v2570 = vld [vmem:[%s2376 + $0x608] sm:$0xff]
    %v2571 = vld [vmem:[%s2376 + $0x610] sm:$0xff]
    %v2572 = vld [vmem:[%s2376 + $0x618] sm:$0xff]
    %v2573 = vld [vmem:[%s2376 + $0x620] sm:$0xff]
    %v2574 = vld [vmem:[%s2376 + $0x628] sm:$0xff]
    %v2575 = vld [vmem:[%s2376 + $0x630] sm:$0xff]
    %v2576 = vld [vmem:[%s2376 + $0x638] sm:$0xff]
    %v2577 = vld [vmem:[%s2376 + $0x640] sm:$0xff]
    %v2578 = vld [vmem:[%s2376 + $0x648] sm:$0xff]
    %v2579 = vld [vmem:[%s2376 + $0x650] sm:$0xff]
    %v2580 = vld [vmem:[%s2376 + $0x658] sm:$0xff]
    %v2581 = vld [vmem:[%s2376 + $0x660] sm:$0xff]
    %v2582 = vld [vmem:[%s2376 + $0x668] sm:$0xff]
    %v2583 = vld [vmem:[%s2376 + $0x670] sm:$0xff]
    %v2584 = vld [vmem:[%s2376 + $0x678] sm:$0xff]
    %v2585 = vld [vmem:[%s2376 + $0x680] sm:$0xff]
    %v2586 = vld [vmem:[%s2376 + $0x688] sm:$0xff]
    %v2587 = vld [vmem:[%s2376 + $0x690] sm:$0xff]
    %v2588 = vld [vmem:[%s2376 + $0x698] sm:$0xff]
    %v2589 = vld [vmem:[%s2376 + $0x6a0] sm:$0xff]
    %v2590 = vld [vmem:[%s2376 + $0x6a8] sm:$0xff]
    %v2591 = vld [vmem:[%s2376 + $0x6b0] sm:$0xff]
    %v2592 = vld [vmem:[%s2376 + $0x6b8] sm:$0xff]
    %v2593 = vld [vmem:[%s2376 + $0x6c0] sm:$0xff]
    %v2594 = vld [vmem:[%s2376 + $0x6c8] sm:$0xff]
    %v2595 = vld [vmem:[%s2376 + $0x6d0] sm:$0xff]
    %v2596 = vld [vmem:[%s2376 + $0x6d8] sm:$0xff]
    %v2597 = vld [vmem:[%s2376 + $0x6e0] sm:$0xff]
    %v2598 = vld [vmem:[%s2376 + $0x6e8] sm:$0xff]
    %v2599 = vld [vmem:[%s2376 + $0x6f0] sm:$0xff]
    %v2600 = vld [vmem:[%s2376 + $0x6f8] sm:$0xff]
    %v2601 = vld [vmem:[%s2376 + $0x700] sm:$0xff]
    %v2602 = vld [vmem:[%s2376 + $0x708] sm:$0xff]
    %v2603 = vld [vmem:[%s2376 + $0x710] sm:$0xff]
    %v2604 = vld [vmem:[%s2376 + $0x718] sm:$0xff]
    %v2605 = vld [vmem:[%s2376 + $0x720] sm:$0xff]
    %v2606 = vld [vmem:[%s2376 + $0x728] sm:$0xff]
    %v2607 = vld [vmem:[%s2376 + $0x730] sm:$0xff]
    %v2608 = vld [vmem:[%s2376 + $0x738] sm:$0xff]
    %v2609 = vld [vmem:[%s2376 + $0x740] sm:$0xff]
    %v2610 = vld [vmem:[%s2376 + $0x748] sm:$0xff]
    %v2611 = vld [vmem:[%s2376 + $0x750] sm:$0xff]
    %v2612 = vld [vmem:[%s2376 + $0x758] sm:$0xff]
    %v2613 = vld [vmem:[%s2376 + $0x760] sm:$0xff]
    %v2614 = vld [vmem:[%s2376 + $0x768] sm:$0xff]
    %v2615 = vld [vmem:[%s2376 + $0x770] sm:$0xff]
    %v2616 = vld [vmem:[%s2376 + $0x778] sm:$0xff]
    %v2617 = vld [vmem:[%s2376 + $0x780] sm:$0xff]
    %v2618 = vld [vmem:[%s2376 + $0x788] sm:$0xff]
    %v2619 = vld [vmem:[%s2376 + $0x790] sm:$0xff]
    %v2620 = vld [vmem:[%s2376 + $0x798] sm:$0xff]
    %v2621 = vld [vmem:[%s2376 + $0x7a0] sm:$0xff]
    %v2622 = vld [vmem:[%s2376 + $0x7a8] sm:$0xff]
    %v2623 = vld [vmem:[%s2376 + $0x7b0] sm:$0xff]
    %v2624 = vld [vmem:[%s2376 + $0x7b8] sm:$0xff]
    %v2625 = vld [vmem:[%s2376 + $0x7c0] sm:$0xff]
    %v2626 = vld [vmem:[%s2376 + $0x7c8] sm:$0xff]
    %v2627 = vld [vmem:[%s2376 + $0x7d0] sm:$0xff]
    %v2628 = vld [vmem:[%s2376 + $0x7d8] sm:$0xff]
    %v2629 = vld [vmem:[%s2376 + $0x7e0] sm:$0xff]
    %v2630 = vld [vmem:[%s2376 + $0x7e8] sm:$0xff]
    %v2631 = vld [vmem:[%s2376 + $0x7f0] sm:$0xff]
    %v2632 = vld [vmem:[%s2376 + $0x7f8] sm:$0xff]
    %v2641 = vrot.slane %v2369, 4
    %v2642 = vrot.slane %v2371, 4
    %v2643 = vrot.slane %v2373, 4
    %v2644 = vrot.slane %v2375, 4
    %v2645 = vsel %vm1357, %v2368, %v2641
    %v2646 = vsel %vm1357, %v2370, %v2642
    %v2647 = vsel %vm1357, %v2641, %v2368
    %v2648 = vrot.slane %v2647, 4
    %v2649 = vsel %vm1357, %v2642, %v2370
    %v2650 = vrot.slane %v2649, 4
    %v2651 = vsel %vm1357, %v2372, %v2643
    %v2652 = vsel %vm1357, %v2374, %v2644
    %v2653 = vsel %vm1357, %v2643, %v2372
    %v2654 = vrot.slane %v2653, 4
    %v2655 = vsel %vm1357, %v2644, %v2374
    %v2656 = vrot.slane %v2655, 4
    %vm2657 = vcmask 1045508
    %vm2658 = vmor %vm338, %vm2657
    %v2659 = vrot.slane %v2645, 6
    %v2660 = vrot.slane %v2659, 4
    %v2661 = vrot.slane %v2648, 6
    %v2662 = vsel %vm2658, %v2660, %v2661
    %v2663 = vrot.slane %v2646, 6
    %v2664 = vrot.slane %v2663, 4
    %v2665 = vrot.slane %v2650, 6
    %v2666 = vsel %vm2658, %v2664, %v2665
    %v2667 = vrot.slane %v2651, 6
    %v2668 = vrot.slane %v2667, 4
    %v2669 = vrot.slane %v2654, 6
    %v2670 = vsel %vm2658, %v2668, %v2669
    %v2671 = vrot.slane %v2652, 6
    %v2672 = vrot.slane %v2671, 4
    %v2673 = vrot.slane %v2656, 6
    %v2674 = vsel %vm2658, %v2672, %v2673
    %2675 = vst [vmem:[#allocation1] ss:$2 sm:$0xff] %v2662
    %s2676 = scalar_lea.vmem [#allocation1], 1
    %2677 = vst [vmem:[%s2676] ss:$2 sm:$0xff] %v2670
    %s2678 = scalar_lea.vmem [#allocation1], 16
    %2679 = vst [vmem:[%s2678] ss:$2 sm:$0xff] %v2666
    %s2680 = scalar_lea.vmem [#allocation1], 17
    %2681 = vst [vmem:[%s2680] ss:$2 sm:$0xff] %v2674
    %v2682 = vld.sshfl [vmem:[#allocation1] sm:$0xff pattern:$0x75316420]
    %v2683 = vld.sshfl [vmem:[#allocation1 + $0x8] sm:$0xff pattern:$0x75316420]
    %v2684 = vld.sshfl [vmem:[#allocation1 + $0x10] sm:$0xff pattern:$0x75316420]
    %v2685 = vld.sshfl [vmem:[#allocation1 + $0x18] sm:$0xff pattern:$0x75316420]
    %2690 = vmatpush.msra.mxu0 %v2437
    %2691 = vmatpush.msra.mxu0 %v2433
    %2692 = vmatpush.msra.mxu0 %v2429
    %2693 = vmatpush.msra.mxu0 %v2425
    %2694 = vmatpush.msra.mxu0 %v2421
    %2695 = vmatpush.msra.mxu0 %v2417
    %2696 = vmatpush.msra.mxu0 %v2413
    %2697 = vmatpush.msra.mxu0 %v2409
    %2698 = vmatpush.msra.mxu0 %v2405
    %2699 = vmatpush.msra.mxu0 %v2401
    %2700 = vmatpush.msra.mxu0 %v2397
    %2701 = vmatpush.msra.mxu0 %v2393
    %2702 = vmatpush.msra.mxu0 %v2389
    %2703 = vmatpush.msra.mxu0 %v2385
    %2704 = vmatpush.msra.mxu0 %v2381
    %2705 = vmatpush.msra.mxu0 %v2377
    %2706 = vmatmul.f32.gmra.mxu0 %v2682
    %v2707 = vpop.f32.mrf.mxu0
    %v2708 = vadd.f32 0.0, %v2707
    %2709 = vdwg.mxu0
    %2710 = vmatpush.msra.mxu0 %v2501
    %2711 = vmatpush.msra.mxu0 %v2497
    %2712 = vmatpush.msra.mxu0 %v2493
    %2713 = vmatpush.msra.mxu0 %v2489
    %2714 = vmatpush.msra.mxu0 %v2485
    %2715 = vmatpush.msra.mxu0 %v2481
    %2716 = vmatpush.msra.mxu0 %v2477
    %2717 = vmatpush.msra.mxu0 %v2473
    %2718 = vmatpush.msra.mxu0 %v2469
    %2719 = vmatpush.msra.mxu0 %v2465
    %2720 = vmatpush.msra.mxu0 %v2461
    %2721 = vmatpush.msra.mxu0 %v2457
    %2722 = vmatpush.msra.mxu0 %v2453
    %2723 = vmatpush.msra.mxu0 %v2449
    %2724 = vmatpush.msra.mxu0 %v2445
    %2725 = vmatpush.msra.mxu0 %v2441
    %2726 = vmatmul.f32.gmra.mxu0 %v2683
    %v2727 = vpop.f32.mrf.mxu0
    %v2728 = vadd.f32 %v2708, %v2727
    %2729 = vdwg.mxu0
    %2730 = vmatpush.msra.mxu0 %v2565
    %2731 = vmatpush.msra.mxu0 %v2561
    %2732 = vmatpush.msra.mxu0 %v2557
    %2733 = vmatpush.msra.mxu0 %v2553
    %2734 = vmatpush.msra.mxu0 %v2549
    %2735 = vmatpush.msra.mxu0 %v2545
    %2736 = vmatpush.msra.mxu0 %v2541
    %2737 = vmatpush.msra.mxu0 %v2537
    %2738 = vmatpush.msra.mxu0 %v2533
    %2739 = vmatpush.msra.mxu0 %v2529
    %2740 = vmatpush.msra.mxu0 %v2525
    %2741 = vmatpush.msra.mxu0 %v2521
    %2742 = vmatpush.msra.mxu0 %v2517
    %2743 = vmatpush.msra.mxu0 %v2513
    %2744 = vmatpush.msra.mxu0 %v2509
    %2745 = vmatpush.msra.mxu0 %v2505
    %2746 = vmatmul.f32.gmra.mxu0 %v2684
    %v2747 = vpop.f32.mrf.mxu0
    %v2748 = vadd.f32 %v2728, %v2747
    %2749 = vdwg.mxu0
    %2750 = vmatpush.msra.mxu0 %v2629
    %2751 = vmatpush.msra.mxu0 %v2625
    %2752 = vmatpush.msra.mxu0 %v2621
    %2753 = vmatpush.msra.mxu0 %v2617
    %2754 = vmatpush.msra.mxu0 %v2613
    %2755 = vmatpush.msra.mxu0 %v2609
    %2756 = vmatpush.msra.mxu0 %v2605
    %2757 = vmatpush.msra.mxu0 %v2601
    %2758 = vmatpush.msra.mxu0 %v2597
    %2759 = vmatpush.msra.mxu0 %v2593
    %2760 = vmatpush.msra.mxu0 %v2589
    %2761 = vmatpush.msra.mxu0 %v2585
    %2762 = vmatpush.msra.mxu0 %v2581
    %2763 = vmatpush.msra.mxu0 %v2577
    %2764 = vmatpush.msra.mxu0 %v2573
    %2765 = vmatpush.msra.mxu0 %v2569
    %2766 = vmatmul.f32.gmra.mxu0 %v2685
    %v2767 = vpop.f32.mrf.mxu0
    %v2768 = vadd.f32 %v2748, %v2767
    %2769 = vdwg.mxu0
    %2770 = vmatpush.msra.mxu0 %v2438
    %2771 = vmatpush.msra.mxu0 %v2434
    %2772 = vmatpush.msra.mxu0 %v2430
    %2773 = vmatpush.msra.mxu0 %v2426
    %2774 = vmatpush.msra.mxu0 %v2422
    %2775 = vmatpush.msra.mxu0 %v2418
    %2776 = vmatpush.msra.mxu0 %v2414
    %2777 = vmatpush.msra.mxu0 %v2410
    %2778 = vmatpush.msra.mxu0 %v2406
    %2779 = vmatpush.msra.mxu0 %v2402
    %2780 = vmatpush.msra.mxu0 %v2398
    %2781 = vmatpush.msra.mxu0 %v2394
    %2782 = vmatpush.msra.mxu0 %v2390
    %2783 = vmatpush.msra.mxu0 %v2386
    %2784 = vmatpush.msra.mxu0 %v2382
    %2785 = vmatpush.msra.mxu0 %v2378
    %2786 = vmatmul.f32.gmra.mxu0 %v2682
    %v2787 = vpop.f32.mrf.mxu0
    %v2788 = vadd.f32 0.0, %v2787
    %2789 = vdwg.mxu0
    %2790 = vmatpush.msra.mxu0 %v2502
    %2791 = vmatpush.msra.mxu0 %v2498
    %2792 = vmatpush.msra.mxu0 %v2494
    %2793 = vmatpush.msra.mxu0 %v2490
    %2794 = vmatpush.msra.mxu0 %v2486
    %2795 = vmatpush.msra.mxu0 %v2482
    %2796 = vmatpush.msra.mxu0 %v2478
    %2797 = vmatpush.msra.mxu0 %v2474
    %2798 = vmatpush.msra.mxu0 %v2470
    %2799 = vmatpush.msra.mxu0 %v2466
    %2800 = vmatpush.msra.mxu0 %v2462
    %2801 = vmatpush.msra.mxu0 %v2458
    %2802 = vmatpush.msra.mxu0 %v2454
    %2803 = vmatpush.msra.mxu0 %v2450
    %2804 = vmatpush.msra.mxu0 %v2446
    %2805 = vmatpush.msra.mxu0 %v2442
    %2806 = vmatmul.f32.gmra.mxu0 %v2683
    %v2807 = vpop.f32.mrf.mxu0
    %v2808 = vadd.f32 %v2788, %v2807
    %2809 = vdwg.mxu0
    %2810 = vmatpush.msra.mxu0 %v2566
    %2811 = vmatpush.msra.mxu0 %v2562
    %2812 = vmatpush.msra.mxu0 %v2558
    %2813 = vmatpush.msra.mxu0 %v2554
    %2814 = vmatpush.msra.mxu0 %v2550
    %2815 = vmatpush.msra.mxu0 %v2546
    %2816 = vmatpush.msra.mxu0 %v2542
    %2817 = vmatpush.msra.mxu0 %v2538
    %2818 = vmatpush.msra.mxu0 %v2534
    %2819 = vmatpush.msra.mxu0 %v2530
    %2820 = vmatpush.msra.mxu0 %v2526
    %2821 = vmatpush.msra.mxu0 %v2522
    %2822 = vmatpush.msra.mxu0 %v2518
    %2823 = vmatpush.msra.mxu0 %v2514
    %2824 = vmatpush.msra.mxu0 %v2510
    %2825 = vmatpush.msra.mxu0 %v2506
    %2826 = vmatmul.f32.gmra.mxu0 %v2684
    %v2827 = vpop.f32.mrf.mxu0
    %v2828 = vadd.f32 %v2808, %v2827
    %2829 = vdwg.mxu0
    %2830 = vmatpush.msra.mxu0 %v2630
    %2831 = vmatpush.msra.mxu0 %v2626
    %2832 = vmatpush.msra.mxu0 %v2622
    %2833 = vmatpush.msra.mxu0 %v2618
    %2834 = vmatpush.msra.mxu0 %v2614
    %2835 = vmatpush.msra.mxu0 %v2610
    %2836 = vmatpush.msra.mxu0 %v2606
    %2837 = vmatpush.msra.mxu0 %v2602
    %2838 = vmatpush.msra.mxu0 %v2598
    %2839 = vmatpush.msra.mxu0 %v2594
    %2840 = vmatpush.msra.mxu0 %v2590
    %2841 = vmatpush.msra.mxu0 %v2586
    %2842 = vmatpush.msra.mxu0 %v2582
    %2843 = vmatpush.msra.mxu0 %v2578
    %2844 = vmatpush.msra.mxu0 %v2574
    %2845 = vmatpush.msra.mxu0 %v2570
    %2846 = vmatmul.f32.gmra.mxu0 %v2685
    %v2847 = vpop.f32.mrf.mxu0
    %v2848 = vadd.f32 %v2828, %v2847
    %2849 = vdwg.mxu0
    %2850 = vmatpush.msra.mxu0 %v2439
    %2851 = vmatpush.msra.mxu0 %v2435
    %2852 = vmatpush.msra.mxu0 %v2431
    %2853 = vmatpush.msra.mxu0 %v2427
    %2854 = vmatpush.msra.mxu0 %v2423
    %2855 = vmatpush.msra.mxu0 %v2419
    %2856 = vmatpush.msra.mxu0 %v2415
    %2857 = vmatpush.msra.mxu0 %v2411
    %2858 = vmatpush.msra.mxu0 %v2407
    %2859 = vmatpush.msra.mxu0 %v2403
    %2860 = vmatpush.msra.mxu0 %v2399
    %2861 = vmatpush.msra.mxu0 %v2395
    %2862 = vmatpush.msra.mxu0 %v2391
    %2863 = vmatpush.msra.mxu0 %v2387
    %2864 = vmatpush.msra.mxu0 %v2383
    %2865 = vmatpush.msra.mxu0 %v2379
    %2866 = vmatmul.f32.gmra.mxu0 %v2682
    %v2867 = vpop.f32.mrf.mxu0
    %v2868 = vadd.f32 0.0, %v2867
    %2869 = vdwg.mxu0
    %2870 = vmatpush.msra.mxu0 %v2503
    %2871 = vmatpush.msra.mxu0 %v2499
    %2872 = vmatpush.msra.mxu0 %v2495
    %2873 = vmatpush.msra.mxu0 %v2491
    %2874 = vmatpush.msra.mxu0 %v2487
    %2875 = vmatpush.msra.mxu0 %v2483
    %2876 = vmatpush.msra.mxu0 %v2479
    %2877 = vmatpush.msra.mxu0 %v2475
    %2878 = vmatpush.msra.mxu0 %v2471
    %2879 = vmatpush.msra.mxu0 %v2467
    %2880 = vmatpush.msra.mxu0 %v2463
    %2881 = vmatpush.msra.mxu0 %v2459
    %2882 = vmatpush.msra.mxu0 %v2455
    %2883 = vmatpush.msra.mxu0 %v2451
    %2884 = vmatpush.msra.mxu0 %v2447
    %2885 = vmatpush.msra.mxu0 %v2443
    %2886 = vmatmul.f32.gmra.mxu0 %v2683
    %v2887 = vpop.f32.mrf.mxu0
    %v2888 = vadd.f32 %v2868, %v2887
    %2889 = vdwg.mxu0
    %2890 = vmatpush.msra.mxu0 %v2567
    %2891 = vmatpush.msra.mxu0 %v2563
    %2892 = vmatpush.msra.mxu0 %v2559
    %2893 = vmatpush.msra.mxu0 %v2555
    %2894 = vmatpush.msra.mxu0 %v2551
    %2895 = vmatpush.msra.mxu0 %v2547
    %2896 = vmatpush.msra.mxu0 %v2543
    %2897 = vmatpush.msra.mxu0 %v2539
    %2898 = vmatpush.msra.mxu0 %v2535
    %2899 = vmatpush.msra.mxu0 %v2531
    %2900 = vmatpush.msra.mxu0 %v2527
    %2901 = vmatpush.msra.mxu0 %v2523
    %2902 = vmatpush.msra.mxu0 %v2519
    %2903 = vmatpush.msra.mxu0 %v2515
    %2904 = vmatpush.msra.mxu0 %v2511
    %2905 = vmatpush.msra.mxu0 %v2507
    %2906 = vmatmul.f32.gmra.mxu0 %v2684
    %v2907 = vpop.f32.mrf.mxu0
    %v2908 = vadd.f32 %v2888, %v2907
    %2909 = vdwg.mxu0
    %2910 = vmatpush.msra.mxu0 %v2631
    %2911 = vmatpush.msra.mxu0 %v2627
    %2912 = vmatpush.msra.mxu0 %v2623
    %2913 = vmatpush.msra.mxu0 %v2619
    %2914 = vmatpush.msra.mxu0 %v2615
    %2915 = vmatpush.msra.mxu0 %v2611
    %2916 = vmatpush.msra.mxu0 %v2607
    %2917 = vmatpush.msra.mxu0 %v2603
    %2918 = vmatpush.msra.mxu0 %v2599
    %2919 = vmatpush.msra.mxu0 %v2595
    %2920 = vmatpush.msra.mxu0 %v2591
    %2921 = vmatpush.msra.mxu0 %v2587
    %2922 = vmatpush.msra.mxu0 %v2583
    %2923 = vmatpush.msra.mxu0 %v2579
    %2924 = vmatpush.msra.mxu0 %v2575
    %2925 = vmatpush.msra.mxu0 %v2571
    %2926 = vmatmul.f32.gmra.mxu0 %v2685
    %v2927 = vpop.f32.mrf.mxu0
    %v2928 = vadd.f32 %v2908, %v2927
    %2929 = vdwg.mxu0
    %2930 = vmatpush.msra.mxu0 %v2440
    %2931 = vmatpush.msra.mxu0 %v2436
    %2932 = vmatpush.msra.mxu0 %v2432
    %2933 = vmatpush.msra.mxu0 %v2428
    %2934 = vmatpush.msra.mxu0 %v2424
    %2935 = vmatpush.msra.mxu0 %v2420
    %2936 = vmatpush.msra.mxu0 %v2416
    %2937 = vmatpush.msra.mxu0 %v2412
    %2938 = vmatpush.msra.mxu0 %v2408
    %2939 = vmatpush.msra.mxu0 %v2404
    %2940 = vmatpush.msra.mxu0 %v2400
    %2941 = vmatpush.msra.mxu0 %v2396
    %2942 = vmatpush.msra.mxu0 %v2392
    %2943 = vmatpush.msra.mxu0 %v2388
    %2944 = vmatpush.msra.mxu0 %v2384
    %2945 = vmatpush.msra.mxu0 %v2380
    %2946 = vmatmul.f32.gmra.mxu0 %v2682
    %v2947 = vpop.f32.mrf.mxu0
    %v2948 = vadd.f32 0.0, %v2947
    %2949 = vdwg.mxu0
    %2950 = vmatpush.msra.mxu0 %v2504
    %2951 = vmatpush.msra.mxu0 %v2500
    %2952 = vmatpush.msra.mxu0 %v2496
    %2953 = vmatpush.msra.mxu0 %v2492
    %2954 = vmatpush.msra.mxu0 %v2488
    %2955 = vmatpush.msra.mxu0 %v2484
    %2956 = vmatpush.msra.mxu0 %v2480
    %2957 = vmatpush.msra.mxu0 %v2476
    %2958 = vmatpush.msra.mxu0 %v2472
    %2959 = vmatpush.msra.mxu0 %v2468
    %2960 = vmatpush.msra.mxu0 %v2464
    %2961 = vmatpush.msra.mxu0 %v2460
    %2962 = vmatpush.msra.mxu0 %v2456
    %2963 = vmatpush.msra.mxu0 %v2452
    %2964 = vmatpush.msra.mxu0 %v2448
    %2965 = vmatpush.msra.mxu0 %v2444
    %2966 = vmatmul.f32.gmra.mxu0 %v2683
    %v2967 = vpop.f32.mrf.mxu0
    %v2968 = vadd.f32 %v2948, %v2967
    %2969 = vdwg.mxu0
    %2970 = vmatpush.msra.mxu0 %v2568
    %2971 = vmatpush.msra.mxu0 %v2564
    %2972 = vmatpush.msra.mxu0 %v2560
    %2973 = vmatpush.msra.mxu0 %v2556
    %2974 = vmatpush.msra.mxu0 %v2552
    %2975 = vmatpush.msra.mxu0 %v2548
    %2976 = vmatpush.msra.mxu0 %v2544
    %2977 = vmatpush.msra.mxu0 %v2540
    %2978 = vmatpush.msra.mxu0 %v2536
    %2979 = vmatpush.msra.mxu0 %v2532
    %2980 = vmatpush.msra.mxu0 %v2528
    %2981 = vmatpush.msra.mxu0 %v2524
    %2982 = vmatpush.msra.mxu0 %v2520
    %2983 = vmatpush.msra.mxu0 %v2516
    %2984 = vmatpush.msra.mxu0 %v2512
    %2985 = vmatpush.msra.mxu0 %v2508
    %2986 = vmatmul.f32.gmra.mxu0 %v2684
    %v2987 = vpop.f32.mrf.mxu0
    %v2988 = vadd.f32 %v2968, %v2987
    %2989 = vdwg.mxu0
    %2990 = vmatpush.msra.mxu0 %v2632
    %2991 = vmatpush.msra.mxu0 %v2628
    %2992 = vmatpush.msra.mxu0 %v2624
    %2993 = vmatpush.msra.mxu0 %v2620
    %2994 = vmatpush.msra.mxu0 %v2616
    %2995 = vmatpush.msra.mxu0 %v2612
    %2996 = vmatpush.msra.mxu0 %v2608
    %2997 = vmatpush.msra.mxu0 %v2604
    %2998 = vmatpush.msra.mxu0 %v2600
    %2999 = vmatpush.msra.mxu0 %v2596
    %3000 = vmatpush.msra.mxu0 %v2592
    %3001 = vmatpush.msra.mxu0 %v2588
    %3002 = vmatpush.msra.mxu0 %v2584
    %3003 = vmatpush.msra.mxu0 %v2580
    %3004 = vmatpush.msra.mxu0 %v2576
    %3005 = vmatpush.msra.mxu0 %v2572
    %3006 = vmatmul.f32.gmra.mxu0 %v2685
    %v3007 = vpop.f32.mrf.mxu0
    %v3008 = vadd.f32 %v2988, %v3007
    %3009 = vdwg.mxu0
    %3010 = vst [vmem:[#allocation1] ss:$2 sm:$0xff] %v1376
    %s3011 = scalar_lea.vmem [#allocation1], 1
    %3012 = vst [vmem:[%s3011] ss:$2 sm:$0xff] %v1384
    %s3013 = scalar_lea.vmem [#allocation1], 16
    %3014 = vst [vmem:[%s3013] ss:$2 sm:$0xff] %v1380
    %s3015 = scalar_lea.vmem [#allocation1], 17
    %3016 = vst [vmem:[%s3015] ss:$2 sm:$0xff] %v1388
    %v3017 = vld.sshfl [vmem:[#allocation1] sm:$0xff pattern:$0x75316420]
    %v3018 = vld.sshfl [vmem:[#allocation1 + $0x8] sm:$0xff pattern:$0x75316420]
    %v3019 = vld.sshfl [vmem:[#allocation1 + $0x10] sm:$0xff pattern:$0x75316420]
    %v3020 = vld.sshfl [vmem:[#allocation1 + $0x18] sm:$0xff pattern:$0x75316420]
    %3025 = vmatpush.msra.mxu0 %v2172
    %3026 = vmatpush.msra.mxu0 %v2168
    %3027 = vmatpush.msra.mxu0 %v2164
    %3028 = vmatpush.msra.mxu0 %v2160
    %3029 = vmatpush.msra.mxu0 %v2156
    %3030 = vmatpush.msra.mxu0 %v2152
    %3031 = vmatpush.msra.mxu0 %v2148
    %3032 = vmatpush.msra.mxu0 %v2144
    %3033 = vmatpush.msra.mxu0 %v2140
    %3034 = vmatpush.msra.mxu0 %v2136
    %3035 = vmatpush.msra.mxu0 %v2132
    %3036 = vmatpush.msra.mxu0 %v2128
    %3037 = vmatpush.msra.mxu0 %v2124
    %3038 = vmatpush.msra.mxu0 %v2120
    %3039 = vmatpush.msra.mxu0 %v2116
    %3040 = vmatpush.msra.mxu0 %v2112
    %3041 = vmatmul.f32.gmra.mxu0 %v3017
    %v3042 = vpop.f32.mrf.mxu0
    %v3043 = vadd.f32 %v2768, %v3042
    %3044 = vdwg.mxu0
    %3045 = vmatpush.msra.mxu0 %v2236
    %3046 = vmatpush.msra.mxu0 %v2232
    %3047 = vmatpush.msra.mxu0 %v2228
    %3048 = vmatpush.msra.mxu0 %v2224
    %3049 = vmatpush.msra.mxu0 %v2220
    %3050 = vmatpush.msra.mxu0 %v2216
    %3051 = vmatpush.msra.mxu0 %v2212
    %3052 = vmatpush.msra.mxu0 %v2208
    %3053 = vmatpush.msra.mxu0 %v2204
    %3054 = vmatpush.msra.mxu0 %v2200
    %3055 = vmatpush.msra.mxu0 %v2196
    %3056 = vmatpush.msra.mxu0 %v2192
    %3057 = vmatpush.msra.mxu0 %v2188
    %3058 = vmatpush.msra.mxu0 %v2184
    %3059 = vmatpush.msra.mxu0 %v2180
    %3060 = vmatpush.msra.mxu0 %v2176
    %3061 = vmatmul.f32.gmra.mxu0 %v3018
    %v3062 = vpop.f32.mrf.mxu0
    %v3063 = vadd.f32 %v3043, %v3062
    %3064 = vdwg.mxu0
    %3065 = vmatpush.msra.mxu0 %v2300
    %3066 = vmatpush.msra.mxu0 %v2296
    %3067 = vmatpush.msra.mxu0 %v2292
    %3068 = vmatpush.msra.mxu0 %v2288
    %3069 = vmatpush.msra.mxu0 %v2284
    %3070 = vmatpush.msra.mxu0 %v2280
    %3071 = vmatpush.msra.mxu0 %v2276
    %3072 = vmatpush.msra.mxu0 %v2272
    %3073 = vmatpush.msra.mxu0 %v2268
    %3074 = vmatpush.msra.mxu0 %v2264
    %3075 = vmatpush.msra.mxu0 %v2260
    %3076 = vmatpush.msra.mxu0 %v2256
    %3077 = vmatpush.msra.mxu0 %v2252
    %3078 = vmatpush.msra.mxu0 %v2248
    %3079 = vmatpush.msra.mxu0 %v2244
    %3080 = vmatpush.msra.mxu0 %v2240
    %3081 = vmatmul.f32.gmra.mxu0 %v3019
    %v3082 = vpop.f32.mrf.mxu0
    %v3083 = vadd.f32 %v3063, %v3082
    %3084 = vdwg.mxu0
    %3085 = vmatpush.msra.mxu0 %v2364
    %3086 = vmatpush.msra.mxu0 %v2360
    %3087 = vmatpush.msra.mxu0 %v2356
    %3088 = vmatpush.msra.mxu0 %v2352
    %3089 = vmatpush.msra.mxu0 %v2348
    %3090 = vmatpush.msra.mxu0 %v2344
    %3091 = vmatpush.msra.mxu0 %v2340
    %3092 = vmatpush.msra.mxu0 %v2336
    %3093 = vmatpush.msra.mxu0 %v2332
    %3094 = vmatpush.msra.mxu0 %v2328
    %3095 = vmatpush.msra.mxu0 %v2324
    %3096 = vmatpush.msra.mxu0 %v2320
    %3097 = vmatpush.msra.mxu0 %v2316
    %3098 = vmatpush.msra.mxu0 %v2312
    %3099 = vmatpush.msra.mxu0 %v2308
    %3100 = vmatpush.msra.mxu0 %v2304
    %3101 = vmatmul.f32.gmra.mxu0 %v3020
    %v3102 = vpop.f32.mrf.mxu0
    %v3103 = vadd.f32 %v3083, %v3102
    %3104 = vdwg.mxu0
    %3105 = vmatpush.msra.mxu0 %v2173
    %3106 = vmatpush.msra.mxu0 %v2169
    %3107 = vmatpush.msra.mxu0 %v2165
    %3108 = vmatpush.msra.mxu0 %v2161
    %3109 = vmatpush.msra.mxu0 %v2157
    %3110 = vmatpush.msra.mxu0 %v2153
    %3111 = vmatpush.msra.mxu0 %v2149
    %3112 = vmatpush.msra.mxu0 %v2145
    %3113 = vmatpush.msra.mxu0 %v2141
    %3114 = vmatpush.msra.mxu0 %v2137
    %3115 = vmatpush.msra.mxu0 %v2133
    %3116 = vmatpush.msra.mxu0 %v2129
    %3117 = vmatpush.msra.mxu0 %v2125
    %3118 = vmatpush.msra.mxu0 %v2121
    %3119 = vmatpush.msra.mxu0 %v2117
    %3120 = vmatpush.msra.mxu0 %v2113
    %3121 = vmatmul.f32.gmra.mxu0 %v3017
    %v3122 = vpop.f32.mrf.mxu0
    %v3123 = vadd.f32 %v2848, %v3122
    %3124 = vdwg.mxu0
    %3125 = vmatpush.msra.mxu0 %v2237
    %3126 = vmatpush.msra.mxu0 %v2233
    %3127 = vmatpush.msra.mxu0 %v2229
    %3128 = vmatpush.msra.mxu0 %v2225
    %3129 = vmatpush.msra.mxu0 %v2221
    %3130 = vmatpush.msra.mxu0 %v2217
    %3131 = vmatpush.msra.mxu0 %v2213
    %3132 = vmatpush.msra.mxu0 %v2209
    %3133 = vmatpush.msra.mxu0 %v2205
    %3134 = vmatpush.msra.mxu0 %v2201
    %3135 = vmatpush.msra.mxu0 %v2197
    %3136 = vmatpush.msra.mxu0 %v2193
    %3137 = vmatpush.msra.mxu0 %v2189
    %3138 = vmatpush.msra.mxu0 %v2185
    %3139 = vmatpush.msra.mxu0 %v2181
    %3140 = vmatpush.msra.mxu0 %v2177
    %3141 = vmatmul.f32.gmra.mxu0 %v3018
    %v3142 = vpop.f32.mrf.mxu0
    %v3143 = vadd.f32 %v3123, %v3142
    %3144 = vdwg.mxu0
    %3145 = vmatpush.msra.mxu0 %v2301
    %3146 = vmatpush.msra.mxu0 %v2297
    %3147 = vmatpush.msra.mxu0 %v2293
    %3148 = vmatpush.msra.mxu0 %v2289
    %3149 = vmatpush.msra.mxu0 %v2285
    %3150 = vmatpush.msra.mxu0 %v2281
    %3151 = vmatpush.msra.mxu0 %v2277
    %3152 = vmatpush.msra.mxu0 %v2273
    %3153 = vmatpush.msra.mxu0 %v2269
    %3154 = vmatpush.msra.mxu0 %v2265
    %3155 = vmatpush.msra.mxu0 %v2261
    %3156 = vmatpush.msra.mxu0 %v2257
    %3157 = vmatpush.msra.mxu0 %v2253
    %3158 = vmatpush.msra.mxu0 %v2249
    %3159 = vmatpush.msra.mxu0 %v2245
    %3160 = vmatpush.msra.mxu0 %v2241
    %3161 = vmatmul.f32.gmra.mxu0 %v3019
    %v3162 = vpop.f32.mrf.mxu0
    %v3163 = vadd.f32 %v3143, %v3162
    %3164 = vdwg.mxu0
    %3165 = vmatpush.msra.mxu0 %v2365
    %3166 = vmatpush.msra.mxu0 %v2361
    %3167 = vmatpush.msra.mxu0 %v2357
    %3168 = vmatpush.msra.mxu0 %v2353
    %3169 = vmatpush.msra.mxu0 %v2349
    %3170 = vmatpush.msra.mxu0 %v2345
    %3171 = vmatpush.msra.mxu0 %v2341
    %3172 = vmatpush.msra.mxu0 %v2337
    %3173 = vmatpush.msra.mxu0 %v2333
    %3174 = vmatpush.msra.mxu0 %v2329
    %3175 = vmatpush.msra.mxu0 %v2325
    %3176 = vmatpush.msra.mxu0 %v2321
    %3177 = vmatpush.msra.mxu0 %v2317
    %3178 = vmatpush.msra.mxu0 %v2313
    %3179 = vmatpush.msra.mxu0 %v2309
    %3180 = vmatpush.msra.mxu0 %v2305
    %3181 = vmatmul.f32.gmra.mxu0 %v3020
    %v3182 = vpop.f32.mrf.mxu0
    %v3183 = vadd.f32 %v3163, %v3182
    %3184 = vdwg.mxu0
    %3185 = vmatpush.msra.mxu0 %v2174
    %3186 = vmatpush.msra.mxu0 %v2170
    %3187 = vmatpush.msra.mxu0 %v2166
    %3188 = vmatpush.msra.mxu0 %v2162
    %3189 = vmatpush.msra.mxu0 %v2158
    %3190 = vmatpush.msra.mxu0 %v2154
    %3191 = vmatpush.msra.mxu0 %v2150
    %3192 = vmatpush.msra.mxu0 %v2146
    %3193 = vmatpush.msra.mxu0 %v2142
    %3194 = vmatpush.msra.mxu0 %v2138
    %3195 = vmatpush.msra.mxu0 %v2134
    %3196 = vmatpush.msra.mxu0 %v2130
    %3197 = vmatpush.msra.mxu0 %v2126
    %3198 = vmatpush.msra.mxu0 %v2122
    %3199 = vmatpush.msra.mxu0 %v2118
    %3200 = vmatpush.msra.mxu0 %v2114
    %3201 = vmatmul.f32.gmra.mxu0 %v3017
    %v3202 = vpop.f32.mrf.mxu0
    %v3203 = vadd.f32 %v2928, %v3202
    %3204 = vdwg.mxu0
    %3205 = vmatpush.msra.mxu0 %v2238
    %3206 = vmatpush.msra.mxu0 %v2234
    %3207 = vmatpush.msra.mxu0 %v2230
    %3208 = vmatpush.msra.mxu0 %v2226
    %3209 = vmatpush.msra.mxu0 %v2222
    %3210 = vmatpush.msra.mxu0 %v2218
    %3211 = vmatpush.msra.mxu0 %v2214
    %3212 = vmatpush.msra.mxu0 %v2210
    %3213 = vmatpush.msra.mxu0 %v2206
    %3214 = vmatpush.msra.mxu0 %v2202
    %3215 = vmatpush.msra.mxu0 %v2198
    %3216 = vmatpush.msra.mxu0 %v2194
    %3217 = vmatpush.msra.mxu0 %v2190
    %3218 = vmatpush.msra.mxu0 %v2186
    %3219 = vmatpush.msra.mxu0 %v2182
    %3220 = vmatpush.msra.mxu0 %v2178
    %3221 = vmatmul.f32.gmra.mxu0 %v3018
    %v3222 = vpop.f32.mrf.mxu0
    %v3223 = vadd.f32 %v3203, %v3222
    %3224 = vdwg.mxu0
    %3225 = vmatpush.msra.mxu0 %v2302
    %3226 = vmatpush.msra.mxu0 %v2298
    %3227 = vmatpush.msra.mxu0 %v2294
    %3228 = vmatpush.msra.mxu0 %v2290
    %3229 = vmatpush.msra.mxu0 %v2286
    %3230 = vmatpush.msra.mxu0 %v2282
    %3231 = vmatpush.msra.mxu0 %v2278
    %3232 = vmatpush.msra.mxu0 %v2274
    %3233 = vmatpush.msra.mxu0 %v2270
    %3234 = vmatpush.msra.mxu0 %v2266
    %3235 = vmatpush.msra.mxu0 %v2262
    %3236 = vmatpush.msra.mxu0 %v2258
    %3237 = vmatpush.msra.mxu0 %v2254
    %3238 = vmatpush.msra.mxu0 %v2250
    %3239 = vmatpush.msra.mxu0 %v2246
    %3240 = vmatpush.msra.mxu0 %v2242
    %3241 = vmatmul.f32.gmra.mxu0 %v3019
    %v3242 = vpop.f32.mrf.mxu0
    %v3243 = vadd.f32 %v3223, %v3242
    %3244 = vdwg.mxu0
    %3245 = vmatpush.msra.mxu0 %v2366
    %3246 = vmatpush.msra.mxu0 %v2362
    %3247 = vmatpush.msra.mxu0 %v2358
    %3248 = vmatpush.msra.mxu0 %v2354
    %3249 = vmatpush.msra.mxu0 %v2350
    %3250 = vmatpush.msra.mxu0 %v2346
    %3251 = vmatpush.msra.mxu0 %v2342
    %3252 = vmatpush.msra.mxu0 %v2338
    %3253 = vmatpush.msra.mxu0 %v2334
    %3254 = vmatpush.msra.mxu0 %v2330
    %3255 = vmatpush.msra.mxu0 %v2326
    %3256 = vmatpush.msra.mxu0 %v2322
    %3257 = vmatpush.msra.mxu0 %v2318
    %3258 = vmatpush.msra.mxu0 %v2314
    %3259 = vmatpush.msra.mxu0 %v2310
    %3260 = vmatpush.msra.mxu0 %v2306
    %3261 = vmatmul.f32.gmra.mxu0 %v3020
    %v3262 = vpop.f32.mrf.mxu0
    %v3263 = vadd.f32 %v3243, %v3262
    %3264 = vdwg.mxu0
    %3265 = vmatpush.msra.mxu0 %v2175
    %3266 = vmatpush.msra.mxu0 %v2171
    %3267 = vmatpush.msra.mxu0 %v2167
    %3268 = vmatpush.msra.mxu0 %v2163
    %3269 = vmatpush.msra.mxu0 %v2159
    %3270 = vmatpush.msra.mxu0 %v2155
    %3271 = vmatpush.msra.mxu0 %v2151
    %3272 = vmatpush.msra.mxu0 %v2147
    %3273 = vmatpush.msra.mxu0 %v2143
    %3274 = vmatpush.msra.mxu0 %v2139
    %3275 = vmatpush.msra.mxu0 %v2135
    %3276 = vmatpush.msra.mxu0 %v2131
    %3277 = vmatpush.msra.mxu0 %v2127
    %3278 = vmatpush.msra.mxu0 %v2123
    %3279 = vmatpush.msra.mxu0 %v2119
    %3280 = vmatpush.msra.mxu0 %v2115
    %3281 = vmatmul.f32.gmra.mxu0 %v3017
    %v3282 = vpop.f32.mrf.mxu0
    %v3283 = vadd.f32 %v3008, %v3282
    %3284 = vdwg.mxu0
    %3285 = vmatpush.msra.mxu0 %v2239
    %3286 = vmatpush.msra.mxu0 %v2235
    %3287 = vmatpush.msra.mxu0 %v2231
    %3288 = vmatpush.msra.mxu0 %v2227
    %3289 = vmatpush.msra.mxu0 %v2223
    %3290 = vmatpush.msra.mxu0 %v2219
    %3291 = vmatpush.msra.mxu0 %v2215
    %3292 = vmatpush.msra.mxu0 %v2211
    %3293 = vmatpush.msra.mxu0 %v2207
    %3294 = vmatpush.msra.mxu0 %v2203
    %3295 = vmatpush.msra.mxu0 %v2199
    %3296 = vmatpush.msra.mxu0 %v2195
    %3297 = vmatpush.msra.mxu0 %v2191
    %3298 = vmatpush.msra.mxu0 %v2187
    %3299 = vmatpush.msra.mxu0 %v2183
    %3300 = vmatpush.msra.mxu0 %v2179
    %3301 = vmatmul.f32.gmra.mxu0 %v3018
    %v3302 = vpop.f32.mrf.mxu0
    %v3303 = vadd.f32 %v3283, %v3302
    %3304 = vdwg.mxu0
    %3305 = vmatpush.msra.mxu0 %v2303
    %3306 = vmatpush.msra.mxu0 %v2299
    %3307 = vmatpush.msra.mxu0 %v2295
    %3308 = vmatpush.msra.mxu0 %v2291
    %3309 = vmatpush.msra.mxu0 %v2287
    %3310 = vmatpush.msra.mxu0 %v2283
    %3311 = vmatpush.msra.mxu0 %v2279
    %3312 = vmatpush.msra.mxu0 %v2275
    %3313 = vmatpush.msra.mxu0 %v2271
    %3314 = vmatpush.msra.mxu0 %v2267
    %3315 = vmatpush.msra.mxu0 %v2263
    %3316 = vmatpush.msra.mxu0 %v2259
    %3317 = vmatpush.msra.mxu0 %v2255
    %3318 = vmatpush.msra.mxu0 %v2251
    %3319 = vmatpush.msra.mxu0 %v2247
    %3320 = vmatpush.msra.mxu0 %v2243
    %3321 = vmatmul.f32.gmra.mxu0 %v3019
    %v3322 = vpop.f32.mrf.mxu0
    %v3323 = vadd.f32 %v3303, %v3322
    %3324 = vdwg.mxu0
    %3325 = vmatpush.msra.mxu0 %v2367
    %3326 = vmatpush.msra.mxu0 %v2363
    %3327 = vmatpush.msra.mxu0 %v2359
    %3328 = vmatpush.msra.mxu0 %v2355
    %3329 = vmatpush.msra.mxu0 %v2351
    %3330 = vmatpush.msra.mxu0 %v2347
    %3331 = vmatpush.msra.mxu0 %v2343
    %3332 = vmatpush.msra.mxu0 %v2339
    %3333 = vmatpush.msra.mxu0 %v2335
    %3334 = vmatpush.msra.mxu0 %v2331
    %3335 = vmatpush.msra.mxu0 %v2327
    %3336 = vmatpush.msra.mxu0 %v2323
    %3337 = vmatpush.msra.mxu0 %v2319
    %3338 = vmatpush.msra.mxu0 %v2315
    %3339 = vmatpush.msra.mxu0 %v2311
    %3340 = vmatpush.msra.mxu0 %v2307
    %3341 = vmatmul.f32.gmra.mxu0 %v3020
    %v3342 = vpop.f32.mrf.mxu0
    %v3343 = vadd.f32 %v3323, %v3342
    %3344 = vdwg.mxu0
    %v3349 = vrot.slane %v3183, 4
    %v3350 = vrot.slane %v3343, 4
    %v3351 = vsel %vm1357, %v3103, %v3349
    %v3352 = vsel %vm1357, %v3263, %v3350
    %v3353 = vsel %vm1357, %v3349, %v3103
    %v3354 = vrot.slane %v3353, 4
    %v3355 = vsel %vm1357, %v3350, %v3263
    %v3356 = vrot.slane %v3355, 4
    %v3361 = vadd.f32 %v3351, %v2099
    %v3362 = vadd.f32 %v3352, %v2100
    %v3363 = vadd.f32 %v3354, %v2099
    %v3364 = vadd.f32 %v3356, %v2100
    %v3365 = vmax.f32 %v3361, 0.0
    %v3366 = vmax.f32 %v3362, 0.0
    %v3367 = vmax.f32 %v3363, 0.0
    %v3368 = vmax.f32 %v3364, 0.0
    %v3373 = vrot.slane %v2107, 3
    %v3374 = vrot.slane %v2108, 6
    %v3375 = vrot.slane %v2108, 1
    %v3376 = vrot.slane %v2109, 3
    %v3377 = vrot.slane %v2110, 6
    %v3378 = vrot.slane %v2110, 1
    %v3379 = vsel %vm730, %v2107, %v3373
    %v3380 = vsel %vm732, %v3374, %v3375
    %v3381 = vsel %vm338, %v3379, %v3380
    %v3382 = vsel %vm735, %v2107, %v3373
    %v3383 = vsel %vm737, %v3374, %v3375
    %v3384 = vsel %vm739, %v3382, %v3383
    %v3385 = vrot.slane %v3384, 1
    %v3386 = vsel %vm732, %v2107, %v3373
    %vm3387 = vcmask 1044484
    %v3388 = vsel %vm3387, %v3374, %v3375
    %vm3389 = vcmask 1043458
    %v3390 = vsel %vm3389, %v3386, %v3388
    %v3391 = vrot.slane %v3390, 2
    %v3392 = vsel %vm737, %v2107, %v3373
    %vm3393 = vcmask 1045509
    %v3394 = vsel %vm3393, %v3374, %v3375
    %vm3395 = vcmask 1044483
    %v3396 = vsel %vm3395, %v3392, %v3394
    %v3397 = vrot.slane %v3396, 3
    %v3398 = vsel %vm730, %v2109, %v3376
    %v3399 = vsel %vm732, %v3377, %v3378
    %v3400 = vsel %vm338, %v3398, %v3399
    %v3401 = vsel %vm735, %v2109, %v3376
    %v3402 = vsel %vm737, %v3377, %v3378
    %v3403 = vsel %vm739, %v3401, %v3402
    %v3404 = vrot.slane %v3403, 1
    %v3405 = vsel %vm732, %v2109, %v3376
    %v3406 = vsel %vm3387, %v3377, %v3378
    %v3407 = vsel %vm3389, %v3405, %v3406
    %v3408 = vrot.slane %v3407, 2
    %v3409 = vsel %vm737, %v2109, %v3376
    %v3410 = vsel %vm3393, %v3377, %v3378
    %v3411 = vsel %vm3395, %v3409, %v3410
    %v3412 = vrot.slane %v3411, 3
    %v3417 = vrot.slane %v3365, 3
    %v3418 = vrot.slane %v3366, 6
    %v3419 = vrot.slane %v3366, 1
    %v3420 = vrot.slane %v3367, 3
    %v3421 = vrot.slane %v3368, 6
    %v3422 = vrot.slane %v3368, 1
    %v3423 = vsel %vm730, %v3365, %v3417
    %v3424 = vsel %vm732, %v3418, %v3419
    %v3425 = vsel %vm338, %v3423, %v3424
    %v3426 = vsel %vm735, %v3365, %v3417
    %v3427 = vsel %vm737, %v3418, %v3419
    %v3428 = vsel %vm739, %v3426, %v3427
    %v3429 = vrot.slane %v3428, 1
    %v3430 = vsel %vm732, %v3365, %v3417
    %v3431 = vsel %vm3387, %v3418, %v3419
    %v3432 = vsel %vm3389, %v3430, %v3431
    %v3433 = vrot.slane %v3432, 2
    %v3434 = vsel %vm737, %v3365, %v3417
    %v3435 = vsel %vm3393, %v3418, %v3419
    %v3436 = vsel %vm3395, %v3434, %v3435
    %v3437 = vrot.slane %v3436, 3
    %v3438 = vsel %vm730, %v3367, %v3420
    %v3439 = vsel %vm732, %v3421, %v3422
    %v3440 = vsel %vm338, %v3438, %v3439
    %v3441 = vsel %vm735, %v3367, %v3420
    %v3442 = vsel %vm737, %v3421, %v3422
    %v3443 = vsel %vm739, %v3441, %v3442
    %v3444 = vrot.slane %v3443, 1
    %v3445 = vsel %vm732, %v3367, %v3420
    %v3446 = vsel %vm3387, %v3421, %v3422
    %v3447 = vsel %vm3389, %v3445, %v3446
    %v3448 = vrot.slane %v3447, 2
    %v3449 = vsel %vm737, %v3367, %v3420
    %v3450 = vsel %vm3393, %v3421, %v3422
    %v3451 = vsel %vm3395, %v3449, %v3450
    %v3452 = vrot.slane %v3451, 3
    %v3453 = vperm.slane %v3381, 0
    %v3454 = vperm.slane %v3381, 1
    %v3455 = vperm.slane %v3381, 2
    %v3456 = vperm.slane %v3381, 3
    %v3457 = vperm.slane %v3385, 0
    %v3458 = vperm.slane %v3385, 1
    %v3459 = vperm.slane %v3385, 2
    %v3460 = vperm.slane %v3385, 3
    %v3461 = vperm.slane %v3391, 0
    %v3462 = vperm.slane %v3391, 1
    %v3463 = vperm.slane %v3391, 2
    %v3464 = vperm.slane %v3391, 3
    %v3465 = vperm.slane %v3397, 0
    %v3466 = vperm.slane %v3397, 1
    %v3467 = vperm.slane %v3397, 2
    %v3468 = vperm.slane %v3397, 3
    %v3469 = vperm.slane %v3400, 0
    %v3470 = vperm.slane %v3400, 1
    %v3471 = vperm.slane %v3400, 2
    %v3472 = vperm.slane %v3400, 3
    %v3473 = vperm.slane %v3404, 0
    %v3474 = vperm.slane %v3404, 1
    %v3475 = vperm.slane %v3404, 2
    %v3476 = vperm.slane %v3404, 3
    %v3477 = vperm.slane %v3408, 0
    %v3478 = vperm.slane %v3408, 1
    %v3479 = vperm.slane %v3408, 2
    %v3480 = vperm.slane %v3408, 3
    %v3481 = vperm.slane %v3412, 0
    %v3482 = vperm.slane %v3412, 1
    %v3483 = vperm.slane %v3412, 2
    %v3484 = vperm.slane %v3412, 3
    %v3517 = vperm.slane %v3425, 0
    %v3518 = vperm.slane %v3425, 1
    %v3519 = vperm.slane %v3425, 2
    %v3520 = vperm.slane %v3425, 3
    %v3521 = vperm.slane %v3429, 0
    %v3522 = vperm.slane %v3429, 1
    %v3523 = vperm.slane %v3429, 2
    %v3524 = vperm.slane %v3429, 3
    %v3525 = vperm.slane %v3433, 0
    %v3526 = vperm.slane %v3433, 1
    %v3527 = vperm.slane %v3433, 2
    %v3528 = vperm.slane %v3433, 3
    %v3529 = vperm.slane %v3437, 0
    %v3530 = vperm.slane %v3437, 1
    %v3531 = vperm.slane %v3437, 2
    %v3532 = vperm.slane %v3437, 3
    %v3533 = vperm.slane %v3440, 0
    %v3534 = vperm.slane %v3440, 1
    %v3535 = vperm.slane %v3440, 2
    %v3536 = vperm.slane %v3440, 3
    %v3537 = vperm.slane %v3444, 0
    %v3538 = vperm.slane %v3444, 1
    %v3539 = vperm.slane %v3444, 2
    %v3540 = vperm.slane %v3444, 3
    %v3541 = vperm.slane %v3448, 0
    %v3542 = vperm.slane %v3448, 1
    %v3543 = vperm.slane %v3448, 2
    %v3544 = vperm.slane %v3448, 3
    %v3545 = vperm.slane %v3452, 0
    %v3546 = vperm.slane %v3452, 1
    %v3547 = vperm.slane %v3452, 2
    %v3548 = vperm.slane %v3452, 3
    %v3581 = vsel %vm730, %v3453, %v3517
    %v3582 = vsel %vm730, %v3454, %v3518
    %v3583 = vsel %vm730, %v3455, %v3519
    %v3584 = vsel %vm730, %v3456, %v3520
    %v3585 = vsel %vm730, %v3457, %v3521
    %v3586 = vsel %vm730, %v3458, %v3522
    %v3587 = vsel %vm730, %v3459, %v3523
    %v3588 = vsel %vm730, %v3460, %v3524
    %v3589 = vsel %vm730, %v3461, %v3525
    %v3590 = vsel %vm730, %v3462, %v3526
    %v3591 = vsel %vm730, %v3463, %v3527
    %v3592 = vsel %vm730, %v3464, %v3528
    %v3593 = vsel %vm730, %v3465, %v3529
    %v3594 = vsel %vm730, %v3466, %v3530
    %v3595 = vsel %vm730, %v3467, %v3531
    %v3596 = vsel %vm730, %v3468, %v3532
    %v3597 = vsel %vm730, %v3469, %v3533
    %v3598 = vsel %vm730, %v3470, %v3534
    %v3599 = vsel %vm730, %v3471, %v3535
    %v3600 = vsel %vm730, %v3472, %v3536
    %v3601 = vsel %vm730, %v3473, %v3537
    %v3602 = vsel %vm730, %v3474, %v3538
    %v3603 = vsel %vm730, %v3475, %v3539
    %v3604 = vsel %vm730, %v3476, %v3540
    %v3605 = vsel %vm730, %v3477, %v3541
    %v3606 = vsel %vm730, %v3478, %v3542
    %v3607 = vsel %vm730, %v3479, %v3543
    %v3608 = vsel %vm730, %v3480, %v3544
    %v3609 = vsel %vm730, %v3481, %v3545
    %v3610 = vsel %vm730, %v3482, %v3546
    %v3611 = vsel %vm730, %v3483, %v3547
    %v3612 = vsel %vm730, %v3484, %v3548
    %v3645 = vrot.slane %v3582, 6
    %v3646 = vrot.slane %v3583, 4
    %v3647 = vrot.slane %v3584, 2
    %v3648 = vrot.slane %v3586, 6
    %v3649 = vrot.slane %v3587, 4
    %v3650 = vrot.slane %v3588, 2
    %v3651 = vrot.slane %v3590, 6
    %v3652 = vrot.slane %v3591, 4
    %v3653 = vrot.slane %v3592, 2
    %v3654 = vrot.slane %v3594, 6
    %v3655 = vrot.slane %v3595, 4
    %v3656 = vrot.slane %v3596, 2
    %v3657 = vrot.slane %v3598, 6
    %v3658 = vrot.slane %v3599, 4
    %v3659 = vrot.slane %v3600, 2
    %v3660 = vrot.slane %v3602, 6
    %v3661 = vrot.slane %v3603, 4
    %v3662 = vrot.slane %v3604, 2
    %v3663 = vrot.slane %v3606, 6
    %v3664 = vrot.slane %v3607, 4
    %v3665 = vrot.slane %v3608, 2
    %v3666 = vrot.slane %v3610, 6
    %v3667 = vrot.slane %v3611, 4
    %v3668 = vrot.slane %v3612, 2
    %v3669 = vsel %vm338, %v3581, %v3645
    %v3670 = vsel %vm2657, %v3646, %v3647
    %v3671 = vsel %vm1357, %v3669, %v3670
    %v3672 = vsel %vm338, %v3585, %v3648
    %v3673 = vsel %vm2657, %v3649, %v3650
    %v3674 = vsel %vm1357, %v3672, %v3673
    %v3675 = vsel %vm338, %v3589, %v3651
    %v3676 = vsel %vm2657, %v3652, %v3653
    %v3677 = vsel %vm1357, %v3675, %v3676
    %v3678 = vsel %vm338, %v3593, %v3654
    %v3679 = vsel %vm2657, %v3655, %v3656
    %v3680 = vsel %vm1357, %v3678, %v3679
    %v3681 = vsel %vm338, %v3597, %v3657
    %v3682 = vsel %vm2657, %v3658, %v3659
    %v3683 = vsel %vm1357, %v3681, %v3682
    %v3684 = vsel %vm338, %v3601, %v3660
    %v3685 = vsel %vm2657, %v3661, %v3662
    %v3686 = vsel %vm1357, %v3684, %v3685
    %v3687 = vsel %vm338, %v3605, %v3663
    %v3688 = vsel %vm2657, %v3664, %v3665
    %v3689 = vsel %vm1357, %v3687, %v3688
    %v3690 = vsel %vm338, %v3609, %v3666
    %v3691 = vsel %vm2657, %v3667, %v3668
    %v3692 = vsel %vm1357, %v3690, %v3691
    %3693 = vst [vmem:[#allocation1] ss:$4 sm:$0xff] %v3671
    %s3694 = scalar_lea.vmem [#allocation1], 1
    %3695 = vst [vmem:[%s3694] ss:$4 sm:$0xff] %v3674
    %s3696 = scalar_lea.vmem [#allocation1], 2
    %3697 = vst [vmem:[%s3696] ss:$4 sm:$0xff] %v3677
    %s3698 = scalar_lea.vmem [#allocation1], 3
    %3699 = vst [vmem:[%s3698] ss:$4 sm:$0xff] %v3680
    %v3700 = vld.sshfl [vmem:[#allocation1] sm:$0xff pattern:$0x73625140]
    %v3701 = vld.sshfl [vmem:[#allocation1 + $0x8] sm:$0xff pattern:$0x73625140]
    %v3702 = vld.sshfl [vmem:[#allocation1 + $0x10] sm:$0xff pattern:$0x73625140]
    %v3703 = vld.sshfl [vmem:[#allocation1 + $0x18] sm:$0xff pattern:$0x73625140]
    %s3704 = scalar_lea.vmem [#allocation1], 32
    %3705 = vst [vmem:[%s3704] ss:$4 sm:$0xff] %v3683
    %s3706 = scalar_lea.vmem [#allocation1], 33
    %3707 = vst [vmem:[%s3706] ss:$4 sm:$0xff] %v3686
    %s3708 = scalar_lea.vmem [#allocation1], 34
    %3709 = vst [vmem:[%s3708] ss:$4 sm:$0xff] %v3689
    %s3710 = scalar_lea.vmem [#allocation1], 35
    %3711 = vst [vmem:[%s3710] ss:$4 sm:$0xff] %v3692
    %v3712 = vld.sshfl [vmem:[#allocation1 + $0x20] sm:$0xff pattern:$0x73625140]
    %v3713 = vld.sshfl [vmem:[#allocation1 + $0x28] sm:$0xff pattern:$0x73625140]
    %v3714 = vld.sshfl [vmem:[#allocation1 + $0x30] sm:$0xff pattern:$0x73625140]
    %v3715 = vld.sshfl [vmem:[#allocation1 + $0x38] sm:$0xff pattern:$0x73625140]
    %v3716 = vrot.slane %v3700, 7
    %v3717 = vrot.slane %v3701, 7
    %v3718 = vrot.slane %v3702, 7
    %v3719 = vrot.slane %v3703, 7
    %v3720 = vrot.slane %v3712, 7
    %v3721 = vrot.slane %v3713, 7
    %v3722 = vrot.slane %v3714, 7
    %v3723 = vrot.slane %v3715, 7
    %3732 = vst [vmem:[#allocation3] sm:$0xfe] %v3716
    %3733 = vst [vmem:[#allocation3 + $0x8] sm:$0xfe] %v3717
    %3734 = vst [vmem:[#allocation3 + $0x10] sm:$0xfe] %v3718
    %3735 = vst [vmem:[#allocation3 + $0x18] sm:$0xfe] %v3719
    %3736 = vst [vmem:[#allocation3 + $0x20] sm:$0x1] %v3716
    %3737 = vst [vmem:[#allocation3 + $0x28] sm:$0x1] %v3717
    %3738 = vst [vmem:[#allocation3 + $0x30] sm:$0x1] %v3718
    %3739 = vst [vmem:[#allocation3 + $0x38] sm:$0x1] %v3719
    %3740 = vst [vmem:[#allocation3 + $0x40] sm:$0xfe] %v3720
    %3741 = vst [vmem:[#allocation3 + $0x48] sm:$0xfe] %v3721
    %3742 = vst [vmem:[#allocation3 + $0x50] sm:$0xfe] %v3722
    %3743 = vst [vmem:[#allocation3 + $0x58] sm:$0xfe] %v3723
    %3744 = vst [vmem:[#allocation3 + $0x60] sm:$0x1] %v3720
    %3745 = vst [vmem:[#allocation3 + $0x68] sm:$0x1] %v3721
    %3746 = vst [vmem:[#allocation3 + $0x70] sm:$0x1] %v3722
    %3747 = vst [vmem:[#allocation3 + $0x78] sm:$0x1] %v3723
    %v3748 = vld [vmem:[#allocation3] sm:$0xff]
    %v3749 = vld [vmem:[#allocation3 + $0x8] sm:$0xff]
    %v3750 = vld [vmem:[#allocation3 + $0x10] sm:$0xff]
    %v3751 = vld [vmem:[#allocation3 + $0x18] sm:$0xff]
    %v3752 = vld [vmem:[#allocation3 + $0x40] sm:$0xff]
    %v3753 = vld [vmem:[#allocation3 + $0x48] sm:$0xff]
    %v3754 = vld [vmem:[#allocation3 + $0x50] sm:$0xff]
    %v3755 = vld [vmem:[#allocation3 + $0x58] sm:$0xff]
    %v3756 = vld [vmem:[#allocation15] sm:$0xff]
    %v3757 = vld [vmem:[#allocation15 + $0x8] sm:$0xff]
    %v3758 = vld [vmem:[#allocation15 + $0x10] sm:$0xff]
    %v3759 = vld [vmem:[#allocation15 + $0x18] sm:$0xff]
    %v3760 = vld [vmem:[#allocation15 + $0x20] sm:$0xff]
    %v3761 = vld [vmem:[#allocation15 + $0x28] sm:$0xff]
    %v3762 = vld [vmem:[#allocation15 + $0x30] sm:$0xff]
    %v3763 = vld [vmem:[#allocation15 + $0x38] sm:$0xff]
    %v3764 = vld [vmem:[#allocation15 + $0x40] sm:$0xff]
    %v3765 = vld [vmem:[#allocation15 + $0x48] sm:$0xff]
    %v3766 = vld [vmem:[#allocation15 + $0x50] sm:$0xff]
    %v3767 = vld [vmem:[#allocation15 + $0x58] sm:$0xff]
    %v3768 = vld [vmem:[#allocation15 + $0x60] sm:$0xff]
    %v3769 = vld [vmem:[#allocation15 + $0x68] sm:$0xff]
    %v3770 = vld [vmem:[#allocation15 + $0x70] sm:$0xff]
    %v3771 = vld [vmem:[#allocation15 + $0x78] sm:$0xff]
    %v3772 = vld [vmem:[#allocation15 + $0x80] sm:$0xff]
    %v3773 = vld [vmem:[#allocation15 + $0x88] sm:$0xff]
    %v3774 = vld [vmem:[#allocation15 + $0x90] sm:$0xff]
    %v3775 = vld [vmem:[#allocation15 + $0x98] sm:$0xff]
    %v3776 = vld [vmem:[#allocation15 + $0xa0] sm:$0xff]
    %v3777 = vld [vmem:[#allocation15 + $0xa8] sm:$0xff]
    %v3778 = vld [vmem:[#allocation15 + $0xb0] sm:$0xff]
    %v3779 = vld [vmem:[#allocation15 + $0xb8] sm:$0xff]
    %v3780 = vld [vmem:[#allocation15 + $0xc0] sm:$0xff]
    %v3781 = vld [vmem:[#allocation15 + $0xc8] sm:$0xff]
    %v3782 = vld [vmem:[#allocation15 + $0xd0] sm:$0xff]
    %v3783 = vld [vmem:[#allocation15 + $0xd8] sm:$0xff]
    %v3784 = vld [vmem:[#allocation15 + $0xe0] sm:$0xff]
    %v3785 = vld [vmem:[#allocation15 + $0xe8] sm:$0xff]
    %v3786 = vld [vmem:[#allocation15 + $0xf0] sm:$0xff]
    %v3787 = vld [vmem:[#allocation15 + $0xf8] sm:$0xff]
    %v3788 = vld [vmem:[#allocation15 + $0x100] sm:$0xff]
    %v3789 = vld [vmem:[#allocation15 + $0x108] sm:$0xff]
    %v3790 = vld [vmem:[#allocation15 + $0x110] sm:$0xff]
    %v3791 = vld [vmem:[#allocation15 + $0x118] sm:$0xff]
    %v3792 = vld [vmem:[#allocation15 + $0x120] sm:$0xff]
    %v3793 = vld [vmem:[#allocation15 + $0x128] sm:$0xff]
    %v3794 = vld [vmem:[#allocation15 + $0x130] sm:$0xff]
    %v3795 = vld [vmem:[#allocation15 + $0x138] sm:$0xff]
    %v3796 = vld [vmem:[#allocation15 + $0x140] sm:$0xff]
    %v3797 = vld [vmem:[#allocation15 + $0x148] sm:$0xff]
    %v3798 = vld [vmem:[#allocation15 + $0x150] sm:$0xff]
    %v3799 = vld [vmem:[#allocation15 + $0x158] sm:$0xff]
    %v3800 = vld [vmem:[#allocation15 + $0x160] sm:$0xff]
    %v3801 = vld [vmem:[#allocation15 + $0x168] sm:$0xff]
    %v3802 = vld [vmem:[#allocation15 + $0x170] sm:$0xff]
    %v3803 = vld [vmem:[#allocation15 + $0x178] sm:$0xff]
    %v3804 = vld [vmem:[#allocation15 + $0x180] sm:$0xff]
    %v3805 = vld [vmem:[#allocation15 + $0x188] sm:$0xff]
    %v3806 = vld [vmem:[#allocation15 + $0x190] sm:$0xff]
    %v3807 = vld [vmem:[#allocation15 + $0x198] sm:$0xff]
    %v3808 = vld [vmem:[#allocation15 + $0x1a0] sm:$0xff]
    %v3809 = vld [vmem:[#allocation15 + $0x1a8] sm:$0xff]
    %v3810 = vld [vmem:[#allocation15 + $0x1b0] sm:$0xff]
    %v3811 = vld [vmem:[#allocation15 + $0x1b8] sm:$0xff]
    %v3812 = vld [vmem:[#allocation15 + $0x1c0] sm:$0xff]
    %v3813 = vld [vmem:[#allocation15 + $0x1c8] sm:$0xff]
    %v3814 = vld [vmem:[#allocation15 + $0x1d0] sm:$0xff]
    %v3815 = vld [vmem:[#allocation15 + $0x1d8] sm:$0xff]
    %v3816 = vld [vmem:[#allocation15 + $0x1e0] sm:$0xff]
    %v3817 = vld [vmem:[#allocation15 + $0x1e8] sm:$0xff]
    %v3818 = vld [vmem:[#allocation15 + $0x1f0] sm:$0xff]
    %v3819 = vld [vmem:[#allocation15 + $0x1f8] sm:$0xff]
    %v3820 = vld [vmem:[#allocation15 + $0x200] sm:$0xff]
    %v3821 = vld [vmem:[#allocation15 + $0x208] sm:$0xff]
    %v3822 = vld [vmem:[#allocation15 + $0x210] sm:$0xff]
    %v3823 = vld [vmem:[#allocation15 + $0x218] sm:$0xff]
    %v3824 = vld [vmem:[#allocation15 + $0x220] sm:$0xff]
    %v3825 = vld [vmem:[#allocation15 + $0x228] sm:$0xff]
    %v3826 = vld [vmem:[#allocation15 + $0x230] sm:$0xff]
    %v3827 = vld [vmem:[#allocation15 + $0x238] sm:$0xff]
    %v3828 = vld [vmem:[#allocation15 + $0x240] sm:$0xff]
    %v3829 = vld [vmem:[#allocation15 + $0x248] sm:$0xff]
    %v3830 = vld [vmem:[#allocation15 + $0x250] sm:$0xff]
    %v3831 = vld [vmem:[#allocation15 + $0x258] sm:$0xff]
    %v3832 = vld [vmem:[#allocation15 + $0x260] sm:$0xff]
    %v3833 = vld [vmem:[#allocation15 + $0x268] sm:$0xff]
    %v3834 = vld [vmem:[#allocation15 + $0x270] sm:$0xff]
    %v3835 = vld [vmem:[#allocation15 + $0x278] sm:$0xff]
    %v3836 = vld [vmem:[#allocation15 + $0x280] sm:$0xff]
    %v3837 = vld [vmem:[#allocation15 + $0x288] sm:$0xff]
    %v3838 = vld [vmem:[#allocation15 + $0x290] sm:$0xff]
    %v3839 = vld [vmem:[#allocation15 + $0x298] sm:$0xff]
    %v3840 = vld [vmem:[#allocation15 + $0x2a0] sm:$0xff]
    %v3841 = vld [vmem:[#allocation15 + $0x2a8] sm:$0xff]
    %v3842 = vld [vmem:[#allocation15 + $0x2b0] sm:$0xff]
    %v3843 = vld [vmem:[#allocation15 + $0x2b8] sm:$0xff]
    %v3844 = vld [vmem:[#allocation15 + $0x2c0] sm:$0xff]
    %v3845 = vld [vmem:[#allocation15 + $0x2c8] sm:$0xff]
    %v3846 = vld [vmem:[#allocation15 + $0x2d0] sm:$0xff]
    %v3847 = vld [vmem:[#allocation15 + $0x2d8] sm:$0xff]
    %v3848 = vld [vmem:[#allocation15 + $0x2e0] sm:$0xff]
    %v3849 = vld [vmem:[#allocation15 + $0x2e8] sm:$0xff]
    %v3850 = vld [vmem:[#allocation15 + $0x2f0] sm:$0xff]
    %v3851 = vld [vmem:[#allocation15 + $0x2f8] sm:$0xff]
    %v3852 = vld [vmem:[#allocation15 + $0x300] sm:$0xff]
    %v3853 = vld [vmem:[#allocation15 + $0x308] sm:$0xff]
    %v3854 = vld [vmem:[#allocation15 + $0x310] sm:$0xff]
    %v3855 = vld [vmem:[#allocation15 + $0x318] sm:$0xff]
    %v3856 = vld [vmem:[#allocation15 + $0x320] sm:$0xff]
    %v3857 = vld [vmem:[#allocation15 + $0x328] sm:$0xff]
    %v3858 = vld [vmem:[#allocation15 + $0x330] sm:$0xff]
    %v3859 = vld [vmem:[#allocation15 + $0x338] sm:$0xff]
    %v3860 = vld [vmem:[#allocation15 + $0x340] sm:$0xff]
    %v3861 = vld [vmem:[#allocation15 + $0x348] sm:$0xff]
    %v3862 = vld [vmem:[#allocation15 + $0x350] sm:$0xff]
    %v3863 = vld [vmem:[#allocation15 + $0x358] sm:$0xff]
    %v3864 = vld [vmem:[#allocation15 + $0x360] sm:$0xff]
    %v3865 = vld [vmem:[#allocation15 + $0x368] sm:$0xff]
    %v3866 = vld [vmem:[#allocation15 + $0x370] sm:$0xff]
    %v3867 = vld [vmem:[#allocation15 + $0x378] sm:$0xff]
    %v3868 = vld [vmem:[#allocation15 + $0x380] sm:$0xff]
    %v3869 = vld [vmem:[#allocation15 + $0x388] sm:$0xff]
    %v3870 = vld [vmem:[#allocation15 + $0x390] sm:$0xff]
    %v3871 = vld [vmem:[#allocation15 + $0x398] sm:$0xff]
    %v3872 = vld [vmem:[#allocation15 + $0x3a0] sm:$0xff]
    %v3873 = vld [vmem:[#allocation15 + $0x3a8] sm:$0xff]
    %v3874 = vld [vmem:[#allocation15 + $0x3b0] sm:$0xff]
    %v3875 = vld [vmem:[#allocation15 + $0x3b8] sm:$0xff]
    %v3876 = vld [vmem:[#allocation15 + $0x3c0] sm:$0xff]
    %v3877 = vld [vmem:[#allocation15 + $0x3c8] sm:$0xff]
    %v3878 = vld [vmem:[#allocation15 + $0x3d0] sm:$0xff]
    %v3879 = vld [vmem:[#allocation15 + $0x3d8] sm:$0xff]
    %v3880 = vld [vmem:[#allocation15 + $0x3e0] sm:$0xff]
    %v3881 = vld [vmem:[#allocation15 + $0x3e8] sm:$0xff]
    %v3882 = vld [vmem:[#allocation15 + $0x3f0] sm:$0xff]
    %v3883 = vld [vmem:[#allocation15 + $0x3f8] sm:$0xff]
    %v3884 = vld [vmem:[#allocation15 + $0x400] sm:$0xff]
    %v3885 = vld [vmem:[#allocation15 + $0x408] sm:$0xff]
    %v3886 = vld [vmem:[#allocation15 + $0x410] sm:$0xff]
    %v3887 = vld [vmem:[#allocation15 + $0x418] sm:$0xff]
    %v3888 = vld [vmem:[#allocation15 + $0x420] sm:$0xff]
    %v3889 = vld [vmem:[#allocation15 + $0x428] sm:$0xff]
    %v3890 = vld [vmem:[#allocation15 + $0x430] sm:$0xff]
    %v3891 = vld [vmem:[#allocation15 + $0x438] sm:$0xff]
    %v3892 = vld [vmem:[#allocation15 + $0x440] sm:$0xff]
    %v3893 = vld [vmem:[#allocation15 + $0x448] sm:$0xff]
    %v3894 = vld [vmem:[#allocation15 + $0x450] sm:$0xff]
    %v3895 = vld [vmem:[#allocation15 + $0x458] sm:$0xff]
    %v3896 = vld [vmem:[#allocation15 + $0x460] sm:$0xff]
    %v3897 = vld [vmem:[#allocation15 + $0x468] sm:$0xff]
    %v3898 = vld [vmem:[#allocation15 + $0x470] sm:$0xff]
    %v3899 = vld [vmem:[#allocation15 + $0x478] sm:$0xff]
    %v3900 = vld [vmem:[#allocation15 + $0x480] sm:$0xff]
    %v3901 = vld [vmem:[#allocation15 + $0x488] sm:$0xff]
    %v3902 = vld [vmem:[#allocation15 + $0x490] sm:$0xff]
    %v3903 = vld [vmem:[#allocation15 + $0x498] sm:$0xff]
    %v3904 = vld [vmem:[#allocation15 + $0x4a0] sm:$0xff]
    %v3905 = vld [vmem:[#allocation15 + $0x4a8] sm:$0xff]
    %v3906 = vld [vmem:[#allocation15 + $0x4b0] sm:$0xff]
    %v3907 = vld [vmem:[#allocation15 + $0x4b8] sm:$0xff]
    %v3908 = vld [vmem:[#allocation15 + $0x4c0] sm:$0xff]
    %v3909 = vld [vmem:[#allocation15 + $0x4c8] sm:$0xff]
    %v3910 = vld [vmem:[#allocation15 + $0x4d0] sm:$0xff]
    %v3911 = vld [vmem:[#allocation15 + $0x4d8] sm:$0xff]
    %v3912 = vld [vmem:[#allocation15 + $0x4e0] sm:$0xff]
    %v3913 = vld [vmem:[#allocation15 + $0x4e8] sm:$0xff]
    %v3914 = vld [vmem:[#allocation15 + $0x4f0] sm:$0xff]
    %v3915 = vld [vmem:[#allocation15 + $0x4f8] sm:$0xff]
    %v3916 = vld [vmem:[#allocation15 + $0x500] sm:$0xff]
    %v3917 = vld [vmem:[#allocation15 + $0x508] sm:$0xff]
    %v3918 = vld [vmem:[#allocation15 + $0x510] sm:$0xff]
    %v3919 = vld [vmem:[#allocation15 + $0x518] sm:$0xff]
    %v3920 = vld [vmem:[#allocation15 + $0x520] sm:$0xff]
    %v3921 = vld [vmem:[#allocation15 + $0x528] sm:$0xff]
    %v3922 = vld [vmem:[#allocation15 + $0x530] sm:$0xff]
    %v3923 = vld [vmem:[#allocation15 + $0x538] sm:$0xff]
    %v3924 = vld [vmem:[#allocation15 + $0x540] sm:$0xff]
    %v3925 = vld [vmem:[#allocation15 + $0x548] sm:$0xff]
    %v3926 = vld [vmem:[#allocation15 + $0x550] sm:$0xff]
    %v3927 = vld [vmem:[#allocation15 + $0x558] sm:$0xff]
    %v3928 = vld [vmem:[#allocation15 + $0x560] sm:$0xff]
    %v3929 = vld [vmem:[#allocation15 + $0x568] sm:$0xff]
    %v3930 = vld [vmem:[#allocation15 + $0x570] sm:$0xff]
    %v3931 = vld [vmem:[#allocation15 + $0x578] sm:$0xff]
    %v3932 = vld [vmem:[#allocation15 + $0x580] sm:$0xff]
    %v3933 = vld [vmem:[#allocation15 + $0x588] sm:$0xff]
    %v3934 = vld [vmem:[#allocation15 + $0x590] sm:$0xff]
    %v3935 = vld [vmem:[#allocation15 + $0x598] sm:$0xff]
    %v3936 = vld [vmem:[#allocation15 + $0x5a0] sm:$0xff]
    %v3937 = vld [vmem:[#allocation15 + $0x5a8] sm:$0xff]
    %v3938 = vld [vmem:[#allocation15 + $0x5b0] sm:$0xff]
    %v3939 = vld [vmem:[#allocation15 + $0x5b8] sm:$0xff]
    %v3940 = vld [vmem:[#allocation15 + $0x5c0] sm:$0xff]
    %v3941 = vld [vmem:[#allocation15 + $0x5c8] sm:$0xff]
    %v3942 = vld [vmem:[#allocation15 + $0x5d0] sm:$0xff]
    %v3943 = vld [vmem:[#allocation15 + $0x5d8] sm:$0xff]
    %v3944 = vld [vmem:[#allocation15 + $0x5e0] sm:$0xff]
    %v3945 = vld [vmem:[#allocation15 + $0x5e8] sm:$0xff]
    %v3946 = vld [vmem:[#allocation15 + $0x5f0] sm:$0xff]
    %v3947 = vld [vmem:[#allocation15 + $0x5f8] sm:$0xff]
    %v3948 = vld [vmem:[#allocation15 + $0x600] sm:$0xff]
    %v3949 = vld [vmem:[#allocation15 + $0x608] sm:$0xff]
    %v3950 = vld [vmem:[#allocation15 + $0x610] sm:$0xff]
    %v3951 = vld [vmem:[#allocation15 + $0x618] sm:$0xff]
    %v3952 = vld [vmem:[#allocation15 + $0x620] sm:$0xff]
    %v3953 = vld [vmem:[#allocation15 + $0x628] sm:$0xff]
    %v3954 = vld [vmem:[#allocation15 + $0x630] sm:$0xff]
    %v3955 = vld [vmem:[#allocation15 + $0x638] sm:$0xff]
    %v3956 = vld [vmem:[#allocation15 + $0x640] sm:$0xff]
    %v3957 = vld [vmem:[#allocation15 + $0x648] sm:$0xff]
    %v3958 = vld [vmem:[#allocation15 + $0x650] sm:$0xff]
    %v3959 = vld [vmem:[#allocation15 + $0x658] sm:$0xff]
    %v3960 = vld [vmem:[#allocation15 + $0x660] sm:$0xff]
    %v3961 = vld [vmem:[#allocation15 + $0x668] sm:$0xff]
    %v3962 = vld [vmem:[#allocation15 + $0x670] sm:$0xff]
    %v3963 = vld [vmem:[#allocation15 + $0x678] sm:$0xff]
    %v3964 = vld [vmem:[#allocation15 + $0x680] sm:$0xff]
    %v3965 = vld [vmem:[#allocation15 + $0x688] sm:$0xff]
    %v3966 = vld [vmem:[#allocation15 + $0x690] sm:$0xff]
    %v3967 = vld [vmem:[#allocation15 + $0x698] sm:$0xff]
    %v3968 = vld [vmem:[#allocation15 + $0x6a0] sm:$0xff]
    %v3969 = vld [vmem:[#allocation15 + $0x6a8] sm:$0xff]
    %v3970 = vld [vmem:[#allocation15 + $0x6b0] sm:$0xff]
    %v3971 = vld [vmem:[#allocation15 + $0x6b8] sm:$0xff]
    %v3972 = vld [vmem:[#allocation15 + $0x6c0] sm:$0xff]
    %v3973 = vld [vmem:[#allocation15 + $0x6c8] sm:$0xff]
    %v3974 = vld [vmem:[#allocation15 + $0x6d0] sm:$0xff]
    %v3975 = vld [vmem:[#allocation15 + $0x6d8] sm:$0xff]
    %v3976 = vld [vmem:[#allocation15 + $0x6e0] sm:$0xff]
    %v3977 = vld [vmem:[#allocation15 + $0x6e8] sm:$0xff]
    %v3978 = vld [vmem:[#allocation15 + $0x6f0] sm:$0xff]
    %v3979 = vld [vmem:[#allocation15 + $0x6f8] sm:$0xff]
    %v3980 = vld [vmem:[#allocation15 + $0x700] sm:$0xff]
    %v3981 = vld [vmem:[#allocation15 + $0x708] sm:$0xff]
    %v3982 = vld [vmem:[#allocation15 + $0x710] sm:$0xff]
    %v3983 = vld [vmem:[#allocation15 + $0x718] sm:$0xff]
    %v3984 = vld [vmem:[#allocation15 + $0x720] sm:$0xff]
    %v3985 = vld [vmem:[#allocation15 + $0x728] sm:$0xff]
    %v3986 = vld [vmem:[#allocation15 + $0x730] sm:$0xff]
    %v3987 = vld [vmem:[#allocation15 + $0x738] sm:$0xff]
    %v3988 = vld [vmem:[#allocation15 + $0x740] sm:$0xff]
    %v3989 = vld [vmem:[#allocation15 + $0x748] sm:$0xff]
    %v3990 = vld [vmem:[#allocation15 + $0x750] sm:$0xff]
    %v3991 = vld [vmem:[#allocation15 + $0x758] sm:$0xff]
    %v3992 = vld [vmem:[#allocation15 + $0x760] sm:$0xff]
    %v3993 = vld [vmem:[#allocation15 + $0x768] sm:$0xff]
    %v3994 = vld [vmem:[#allocation15 + $0x770] sm:$0xff]
    %v3995 = vld [vmem:[#allocation15 + $0x778] sm:$0xff]
    %v3996 = vld [vmem:[#allocation15 + $0x780] sm:$0xff]
    %v3997 = vld [vmem:[#allocation15 + $0x788] sm:$0xff]
    %v3998 = vld [vmem:[#allocation15 + $0x790] sm:$0xff]
    %v3999 = vld [vmem:[#allocation15 + $0x798] sm:$0xff]
    %v4000 = vld [vmem:[#allocation15 + $0x7a0] sm:$0xff]
    %v4001 = vld [vmem:[#allocation15 + $0x7a8] sm:$0xff]
    %v4002 = vld [vmem:[#allocation15 + $0x7b0] sm:$0xff]
    %v4003 = vld [vmem:[#allocation15 + $0x7b8] sm:$0xff]
    %v4004 = vld [vmem:[#allocation15 + $0x7c0] sm:$0xff]
    %v4005 = vld [vmem:[#allocation15 + $0x7c8] sm:$0xff]
    %v4006 = vld [vmem:[#allocation15 + $0x7d0] sm:$0xff]
    %v4007 = vld [vmem:[#allocation15 + $0x7d8] sm:$0xff]
    %v4008 = vld [vmem:[#allocation15 + $0x7e0] sm:$0xff]
    %v4009 = vld [vmem:[#allocation15 + $0x7e8] sm:$0xff]
    %v4010 = vld [vmem:[#allocation15 + $0x7f0] sm:$0xff]
    %v4011 = vld [vmem:[#allocation15 + $0x7f8] sm:$0xff]
    %v4012 = vld [vmem:[#allocation3] sm:$0xfe]
    %v4013 = vld [vmem:[#allocation3 + $0x8] sm:$0xfe]
    %v4014 = vld [vmem:[#allocation3 + $0x10] sm:$0xfe]
    %v4015 = vld [vmem:[#allocation3 + $0x18] sm:$0xfe]
    %v4016 = vld [vmem:[#allocation3 + $0x20] sm:$0x1]
    %v4017 = vld [vmem:[#allocation3 + $0x28] sm:$0x1]
    %v4018 = vld [vmem:[#allocation3 + $0x30] sm:$0x1]
    %v4019 = vld [vmem:[#allocation3 + $0x38] sm:$0x1]
    %v4020 = vld [vmem:[#allocation3 + $0x40] sm:$0xfe]
    %v4021 = vld [vmem:[#allocation3 + $0x48] sm:$0xfe]
    %v4022 = vld [vmem:[#allocation3 + $0x50] sm:$0xfe]
    %v4023 = vld [vmem:[#allocation3 + $0x58] sm:$0xfe]
    %v4024 = vld [vmem:[#allocation3 + $0x60] sm:$0x1]
    %v4025 = vld [vmem:[#allocation3 + $0x68] sm:$0x1]
    %v4026 = vld [vmem:[#allocation3 + $0x70] sm:$0x1]
    %v4027 = vld [vmem:[#allocation3 + $0x78] sm:$0x1]
    %s4028 = scalar_lea.vmem [#allocation15], 2048
    %v4029 = vld [vmem:[%s4028] sm:$0xff]
    %v4030 = vld [vmem:[%s4028 + $0x8] sm:$0xff]
    %v4031 = vld [vmem:[%s4028 + $0x10] sm:$0xff]
    %v4032 = vld [vmem:[%s4028 + $0x18] sm:$0xff]
    %v4033 = vld [vmem:[%s4028 + $0x20] sm:$0xff]
    %v4034 = vld [vmem:[%s4028 + $0x28] sm:$0xff]
    %v4035 = vld [vmem:[%s4028 + $0x30] sm:$0xff]
    %v4036 = vld [vmem:[%s4028 + $0x38] sm:$0xff]
    %v4037 = vld [vmem:[%s4028 + $0x40] sm:$0xff]
    %v4038 = vld [vmem:[%s4028 + $0x48] sm:$0xff]
    %v4039 = vld [vmem:[%s4028 + $0x50] sm:$0xff]
    %v4040 = vld [vmem:[%s4028 + $0x58] sm:$0xff]
    %v4041 = vld [vmem:[%s4028 + $0x60] sm:$0xff]
    %v4042 = vld [vmem:[%s4028 + $0x68] sm:$0xff]
    %v4043 = vld [vmem:[%s4028 + $0x70] sm:$0xff]
    %v4044 = vld [vmem:[%s4028 + $0x78] sm:$0xff]
    %v4045 = vld [vmem:[%s4028 + $0x80] sm:$0xff]
    %v4046 = vld [vmem:[%s4028 + $0x88] sm:$0xff]
    %v4047 = vld [vmem:[%s4028 + $0x90] sm:$0xff]
    %v4048 = vld [vmem:[%s4028 + $0x98] sm:$0xff]
    %v4049 = vld [vmem:[%s4028 + $0xa0] sm:$0xff]
    %v4050 = vld [vmem:[%s4028 + $0xa8] sm:$0xff]
    %v4051 = vld [vmem:[%s4028 + $0xb0] sm:$0xff]
    %v4052 = vld [vmem:[%s4028 + $0xb8] sm:$0xff]
    %v4053 = vld [vmem:[%s4028 + $0xc0] sm:$0xff]
    %v4054 = vld [vmem:[%s4028 + $0xc8] sm:$0xff]
    %v4055 = vld [vmem:[%s4028 + $0xd0] sm:$0xff]
    %v4056 = vld [vmem:[%s4028 + $0xd8] sm:$0xff]
    %v4057 = vld [vmem:[%s4028 + $0xe0] sm:$0xff]
    %v4058 = vld [vmem:[%s4028 + $0xe8] sm:$0xff]
    %v4059 = vld [vmem:[%s4028 + $0xf0] sm:$0xff]
    %v4060 = vld [vmem:[%s4028 + $0xf8] sm:$0xff]
    %v4061 = vld [vmem:[%s4028 + $0x100] sm:$0xff]
    %v4062 = vld [vmem:[%s4028 + $0x108] sm:$0xff]
    %v4063 = vld [vmem:[%s4028 + $0x110] sm:$0xff]
    %v4064 = vld [vmem:[%s4028 + $0x118] sm:$0xff]
    %v4065 = vld [vmem:[%s4028 + $0x120] sm:$0xff]
    %v4066 = vld [vmem:[%s4028 + $0x128] sm:$0xff]
    %v4067 = vld [vmem:[%s4028 + $0x130] sm:$0xff]
    %v4068 = vld [vmem:[%s4028 + $0x138] sm:$0xff]
    %v4069 = vld [vmem:[%s4028 + $0x140] sm:$0xff]
    %v4070 = vld [vmem:[%s4028 + $0x148] sm:$0xff]
    %v4071 = vld [vmem:[%s4028 + $0x150] sm:$0xff]
    %v4072 = vld [vmem:[%s4028 + $0x158] sm:$0xff]
    %v4073 = vld [vmem:[%s4028 + $0x160] sm:$0xff]
    %v4074 = vld [vmem:[%s4028 + $0x168] sm:$0xff]
    %v4075 = vld [vmem:[%s4028 + $0x170] sm:$0xff]
    %v4076 = vld [vmem:[%s4028 + $0x178] sm:$0xff]
    %v4077 = vld [vmem:[%s4028 + $0x180] sm:$0xff]
    %v4078 = vld [vmem:[%s4028 + $0x188] sm:$0xff]
    %v4079 = vld [vmem:[%s4028 + $0x190] sm:$0xff]
    %v4080 = vld [vmem:[%s4028 + $0x198] sm:$0xff]
    %v4081 = vld [vmem:[%s4028 + $0x1a0] sm:$0xff]
    %v4082 = vld [vmem:[%s4028 + $0x1a8] sm:$0xff]
    %v4083 = vld [vmem:[%s4028 + $0x1b0] sm:$0xff]
    %v4084 = vld [vmem:[%s4028 + $0x1b8] sm:$0xff]
    %v4085 = vld [vmem:[%s4028 + $0x1c0] sm:$0xff]
    %v4086 = vld [vmem:[%s4028 + $0x1c8] sm:$0xff]
    %v4087 = vld [vmem:[%s4028 + $0x1d0] sm:$0xff]
    %v4088 = vld [vmem:[%s4028 + $0x1d8] sm:$0xff]
    %v4089 = vld [vmem:[%s4028 + $0x1e0] sm:$0xff]
    %v4090 = vld [vmem:[%s4028 + $0x1e8] sm:$0xff]
    %v4091 = vld [vmem:[%s4028 + $0x1f0] sm:$0xff]
    %v4092 = vld [vmem:[%s4028 + $0x1f8] sm:$0xff]
    %v4093 = vld [vmem:[%s4028 + $0x200] sm:$0xff]
    %v4094 = vld [vmem:[%s4028 + $0x208] sm:$0xff]
    %v4095 = vld [vmem:[%s4028 + $0x210] sm:$0xff]
    %v4096 = vld [vmem:[%s4028 + $0x218] sm:$0xff]
    %v4097 = vld [vmem:[%s4028 + $0x220] sm:$0xff]
    %v4098 = vld [vmem:[%s4028 + $0x228] sm:$0xff]
    %v4099 = vld [vmem:[%s4028 + $0x230] sm:$0xff]
    %v4100 = vld [vmem:[%s4028 + $0x238] sm:$0xff]
    %v4101 = vld [vmem:[%s4028 + $0x240] sm:$0xff]
    %v4102 = vld [vmem:[%s4028 + $0x248] sm:$0xff]
    %v4103 = vld [vmem:[%s4028 + $0x250] sm:$0xff]
    %v4104 = vld [vmem:[%s4028 + $0x258] sm:$0xff]
    %v4105 = vld [vmem:[%s4028 + $0x260] sm:$0xff]
    %v4106 = vld [vmem:[%s4028 + $0x268] sm:$0xff]
    %v4107 = vld [vmem:[%s4028 + $0x270] sm:$0xff]
    %v4108 = vld [vmem:[%s4028 + $0x278] sm:$0xff]
    %v4109 = vld [vmem:[%s4028 + $0x280] sm:$0xff]
    %v4110 = vld [vmem:[%s4028 + $0x288] sm:$0xff]
    %v4111 = vld [vmem:[%s4028 + $0x290] sm:$0xff]
    %v4112 = vld [vmem:[%s4028 + $0x298] sm:$0xff]
    %v4113 = vld [vmem:[%s4028 + $0x2a0] sm:$0xff]
    %v4114 = vld [vmem:[%s4028 + $0x2a8] sm:$0xff]
    %v4115 = vld [vmem:[%s4028 + $0x2b0] sm:$0xff]
    %v4116 = vld [vmem:[%s4028 + $0x2b8] sm:$0xff]
    %v4117 = vld [vmem:[%s4028 + $0x2c0] sm:$0xff]
    %v4118 = vld [vmem:[%s4028 + $0x2c8] sm:$0xff]
    %v4119 = vld [vmem:[%s4028 + $0x2d0] sm:$0xff]
    %v4120 = vld [vmem:[%s4028 + $0x2d8] sm:$0xff]
    %v4121 = vld [vmem:[%s4028 + $0x2e0] sm:$0xff]
    %v4122 = vld [vmem:[%s4028 + $0x2e8] sm:$0xff]
    %v4123 = vld [vmem:[%s4028 + $0x2f0] sm:$0xff]
    %v4124 = vld [vmem:[%s4028 + $0x2f8] sm:$0xff]
    %v4125 = vld [vmem:[%s4028 + $0x300] sm:$0xff]
    %v4126 = vld [vmem:[%s4028 + $0x308] sm:$0xff]
    %v4127 = vld [vmem:[%s4028 + $0x310] sm:$0xff]
    %v4128 = vld [vmem:[%s4028 + $0x318] sm:$0xff]
    %v4129 = vld [vmem:[%s4028 + $0x320] sm:$0xff]
    %v4130 = vld [vmem:[%s4028 + $0x328] sm:$0xff]
    %v4131 = vld [vmem:[%s4028 + $0x330] sm:$0xff]
    %v4132 = vld [vmem:[%s4028 + $0x338] sm:$0xff]
    %v4133 = vld [vmem:[%s4028 + $0x340] sm:$0xff]
    %v4134 = vld [vmem:[%s4028 + $0x348] sm:$0xff]
    %v4135 = vld [vmem:[%s4028 + $0x350] sm:$0xff]
    %v4136 = vld [vmem:[%s4028 + $0x358] sm:$0xff]
    %v4137 = vld [vmem:[%s4028 + $0x360] sm:$0xff]
    %v4138 = vld [vmem:[%s4028 + $0x368] sm:$0xff]
    %v4139 = vld [vmem:[%s4028 + $0x370] sm:$0xff]
    %v4140 = vld [vmem:[%s4028 + $0x378] sm:$0xff]
    %v4141 = vld [vmem:[%s4028 + $0x380] sm:$0xff]
    %v4142 = vld [vmem:[%s4028 + $0x388] sm:$0xff]
    %v4143 = vld [vmem:[%s4028 + $0x390] sm:$0xff]
    %v4144 = vld [vmem:[%s4028 + $0x398] sm:$0xff]
    %v4145 = vld [vmem:[%s4028 + $0x3a0] sm:$0xff]
    %v4146 = vld [vmem:[%s4028 + $0x3a8] sm:$0xff]
    %v4147 = vld [vmem:[%s4028 + $0x3b0] sm:$0xff]
    %v4148 = vld [vmem:[%s4028 + $0x3b8] sm:$0xff]
    %v4149 = vld [vmem:[%s4028 + $0x3c0] sm:$0xff]
    %v4150 = vld [vmem:[%s4028 + $0x3c8] sm:$0xff]
    %v4151 = vld [vmem:[%s4028 + $0x3d0] sm:$0xff]
    %v4152 = vld [vmem:[%s4028 + $0x3d8] sm:$0xff]
    %v4153 = vld [vmem:[%s4028 + $0x3e0] sm:$0xff]
    %v4154 = vld [vmem:[%s4028 + $0x3e8] sm:$0xff]
    %v4155 = vld [vmem:[%s4028 + $0x3f0] sm:$0xff]
    %v4156 = vld [vmem:[%s4028 + $0x3f8] sm:$0xff]
    %v4157 = vld [vmem:[%s4028 + $0x400] sm:$0xff]
    %v4158 = vld [vmem:[%s4028 + $0x408] sm:$0xff]
    %v4159 = vld [vmem:[%s4028 + $0x410] sm:$0xff]
    %v4160 = vld [vmem:[%s4028 + $0x418] sm:$0xff]
    %v4161 = vld [vmem:[%s4028 + $0x420] sm:$0xff]
    %v4162 = vld [vmem:[%s4028 + $0x428] sm:$0xff]
    %v4163 = vld [vmem:[%s4028 + $0x430] sm:$0xff]
    %v4164 = vld [vmem:[%s4028 + $0x438] sm:$0xff]
    %v4165 = vld [vmem:[%s4028 + $0x440] sm:$0xff]
    %v4166 = vld [vmem:[%s4028 + $0x448] sm:$0xff]
    %v4167 = vld [vmem:[%s4028 + $0x450] sm:$0xff]
    %v4168 = vld [vmem:[%s4028 + $0x458] sm:$0xff]
    %v4169 = vld [vmem:[%s4028 + $0x460] sm:$0xff]
    %v4170 = vld [vmem:[%s4028 + $0x468] sm:$0xff]
    %v4171 = vld [vmem:[%s4028 + $0x470] sm:$0xff]
    %v4172 = vld [vmem:[%s4028 + $0x478] sm:$0xff]
    %v4173 = vld [vmem:[%s4028 + $0x480] sm:$0xff]
    %v4174 = vld [vmem:[%s4028 + $0x488] sm:$0xff]
    %v4175 = vld [vmem:[%s4028 + $0x490] sm:$0xff]
    %v4176 = vld [vmem:[%s4028 + $0x498] sm:$0xff]
    %v4177 = vld [vmem:[%s4028 + $0x4a0] sm:$0xff]
    %v4178 = vld [vmem:[%s4028 + $0x4a8] sm:$0xff]
    %v4179 = vld [vmem:[%s4028 + $0x4b0] sm:$0xff]
    %v4180 = vld [vmem:[%s4028 + $0x4b8] sm:$0xff]
    %v4181 = vld [vmem:[%s4028 + $0x4c0] sm:$0xff]
    %v4182 = vld [vmem:[%s4028 + $0x4c8] sm:$0xff]
    %v4183 = vld [vmem:[%s4028 + $0x4d0] sm:$0xff]
    %v4184 = vld [vmem:[%s4028 + $0x4d8] sm:$0xff]
    %v4185 = vld [vmem:[%s4028 + $0x4e0] sm:$0xff]
    %v4186 = vld [vmem:[%s4028 + $0x4e8] sm:$0xff]
    %v4187 = vld [vmem:[%s4028 + $0x4f0] sm:$0xff]
    %v4188 = vld [vmem:[%s4028 + $0x4f8] sm:$0xff]
    %v4189 = vld [vmem:[%s4028 + $0x500] sm:$0xff]
    %v4190 = vld [vmem:[%s4028 + $0x508] sm:$0xff]
    %v4191 = vld [vmem:[%s4028 + $0x510] sm:$0xff]
    %v4192 = vld [vmem:[%s4028 + $0x518] sm:$0xff]
    %v4193 = vld [vmem:[%s4028 + $0x520] sm:$0xff]
    %v4194 = vld [vmem:[%s4028 + $0x528] sm:$0xff]
    %v4195 = vld [vmem:[%s4028 + $0x530] sm:$0xff]
    %v4196 = vld [vmem:[%s4028 + $0x538] sm:$0xff]
    %v4197 = vld [vmem:[%s4028 + $0x540] sm:$0xff]
    %v4198 = vld [vmem:[%s4028 + $0x548] sm:$0xff]
    %v4199 = vld [vmem:[%s4028 + $0x550] sm:$0xff]
    %v4200 = vld [vmem:[%s4028 + $0x558] sm:$0xff]
    %v4201 = vld [vmem:[%s4028 + $0x560] sm:$0xff]
    %v4202 = vld [vmem:[%s4028 + $0x568] sm:$0xff]
    %v4203 = vld [vmem:[%s4028 + $0x570] sm:$0xff]
    %v4204 = vld [vmem:[%s4028 + $0x578] sm:$0xff]
    %v4205 = vld [vmem:[%s4028 + $0x580] sm:$0xff]
    %v4206 = vld [vmem:[%s4028 + $0x588] sm:$0xff]
    %v4207 = vld [vmem:[%s4028 + $0x590] sm:$0xff]
    %v4208 = vld [vmem:[%s4028 + $0x598] sm:$0xff]
    %v4209 = vld [vmem:[%s4028 + $0x5a0] sm:$0xff]
    %v4210 = vld [vmem:[%s4028 + $0x5a8] sm:$0xff]
    %v4211 = vld [vmem:[%s4028 + $0x5b0] sm:$0xff]
    %v4212 = vld [vmem:[%s4028 + $0x5b8] sm:$0xff]
    %v4213 = vld [vmem:[%s4028 + $0x5c0] sm:$0xff]
    %v4214 = vld [vmem:[%s4028 + $0x5c8] sm:$0xff]
    %v4215 = vld [vmem:[%s4028 + $0x5d0] sm:$0xff]
    %v4216 = vld [vmem:[%s4028 + $0x5d8] sm:$0xff]
    %v4217 = vld [vmem:[%s4028 + $0x5e0] sm:$0xff]
    %v4218 = vld [vmem:[%s4028 + $0x5e8] sm:$0xff]
    %v4219 = vld [vmem:[%s4028 + $0x5f0] sm:$0xff]
    %v4220 = vld [vmem:[%s4028 + $0x5f8] sm:$0xff]
    %v4221 = vld [vmem:[%s4028 + $0x600] sm:$0xff]
    %v4222 = vld [vmem:[%s4028 + $0x608] sm:$0xff]
    %v4223 = vld [vmem:[%s4028 + $0x610] sm:$0xff]
    %v4224 = vld [vmem:[%s4028 + $0x618] sm:$0xff]
    %v4225 = vld [vmem:[%s4028 + $0x620] sm:$0xff]
    %v4226 = vld [vmem:[%s4028 + $0x628] sm:$0xff]
    %v4227 = vld [vmem:[%s4028 + $0x630] sm:$0xff]
    %v4228 = vld [vmem:[%s4028 + $0x638] sm:$0xff]
    %v4229 = vld [vmem:[%s4028 + $0x640] sm:$0xff]
    %v4230 = vld [vmem:[%s4028 + $0x648] sm:$0xff]
    %v4231 = vld [vmem:[%s4028 + $0x650] sm:$0xff]
    %v4232 = vld [vmem:[%s4028 + $0x658] sm:$0xff]
    %v4233 = vld [vmem:[%s4028 + $0x660] sm:$0xff]
    %v4234 = vld [vmem:[%s4028 + $0x668] sm:$0xff]
    %v4235 = vld [vmem:[%s4028 + $0x670] sm:$0xff]
    %v4236 = vld [vmem:[%s4028 + $0x678] sm:$0xff]
    %v4237 = vld [vmem:[%s4028 + $0x680] sm:$0xff]
    %v4238 = vld [vmem:[%s4028 + $0x688] sm:$0xff]
    %v4239 = vld [vmem:[%s4028 + $0x690] sm:$0xff]
    %v4240 = vld [vmem:[%s4028 + $0x698] sm:$0xff]
    %v4241 = vld [vmem:[%s4028 + $0x6a0] sm:$0xff]
    %v4242 = vld [vmem:[%s4028 + $0x6a8] sm:$0xff]
    %v4243 = vld [vmem:[%s4028 + $0x6b0] sm:$0xff]
    %v4244 = vld [vmem:[%s4028 + $0x6b8] sm:$0xff]
    %v4245 = vld [vmem:[%s4028 + $0x6c0] sm:$0xff]
    %v4246 = vld [vmem:[%s4028 + $0x6c8] sm:$0xff]
    %v4247 = vld [vmem:[%s4028 + $0x6d0] sm:$0xff]
    %v4248 = vld [vmem:[%s4028 + $0x6d8] sm:$0xff]
    %v4249 = vld [vmem:[%s4028 + $0x6e0] sm:$0xff]
    %v4250 = vld [vmem:[%s4028 + $0x6e8] sm:$0xff]
    %v4251 = vld [vmem:[%s4028 + $0x6f0] sm:$0xff]
    %v4252 = vld [vmem:[%s4028 + $0x6f8] sm:$0xff]
    %v4253 = vld [vmem:[%s4028 + $0x700] sm:$0xff]
    %v4254 = vld [vmem:[%s4028 + $0x708] sm:$0xff]
    %v4255 = vld [vmem:[%s4028 + $0x710] sm:$0xff]
    %v4256 = vld [vmem:[%s4028 + $0x718] sm:$0xff]
    %v4257 = vld [vmem:[%s4028 + $0x720] sm:$0xff]
    %v4258 = vld [vmem:[%s4028 + $0x728] sm:$0xff]
    %v4259 = vld [vmem:[%s4028 + $0x730] sm:$0xff]
    %v4260 = vld [vmem:[%s4028 + $0x738] sm:$0xff]
    %v4261 = vld [vmem:[%s4028 + $0x740] sm:$0xff]
    %v4262 = vld [vmem:[%s4028 + $0x748] sm:$0xff]
    %v4263 = vld [vmem:[%s4028 + $0x750] sm:$0xff]
    %v4264 = vld [vmem:[%s4028 + $0x758] sm:$0xff]
    %v4265 = vld [vmem:[%s4028 + $0x760] sm:$0xff]
    %v4266 = vld [vmem:[%s4028 + $0x768] sm:$0xff]
    %v4267 = vld [vmem:[%s4028 + $0x770] sm:$0xff]
    %v4268 = vld [vmem:[%s4028 + $0x778] sm:$0xff]
    %v4269 = vld [vmem:[%s4028 + $0x780] sm:$0xff]
    %v4270 = vld [vmem:[%s4028 + $0x788] sm:$0xff]
    %v4271 = vld [vmem:[%s4028 + $0x790] sm:$0xff]
    %v4272 = vld [vmem:[%s4028 + $0x798] sm:$0xff]
    %v4273 = vld [vmem:[%s4028 + $0x7a0] sm:$0xff]
    %v4274 = vld [vmem:[%s4028 + $0x7a8] sm:$0xff]
    %v4275 = vld [vmem:[%s4028 + $0x7b0] sm:$0xff]
    %v4276 = vld [vmem:[%s4028 + $0x7b8] sm:$0xff]
    %v4277 = vld [vmem:[%s4028 + $0x7c0] sm:$0xff]
    %v4278 = vld [vmem:[%s4028 + $0x7c8] sm:$0xff]
    %v4279 = vld [vmem:[%s4028 + $0x7d0] sm:$0xff]
    %v4280 = vld [vmem:[%s4028 + $0x7d8] sm:$0xff]
    %v4281 = vld [vmem:[%s4028 + $0x7e0] sm:$0xff]
    %v4282 = vld [vmem:[%s4028 + $0x7e8] sm:$0xff]
    %v4283 = vld [vmem:[%s4028 + $0x7f0] sm:$0xff]
    %v4284 = vld [vmem:[%s4028 + $0x7f8] sm:$0xff]
    %vm4301 = vcmask 1046528
    %v4302 = vrot.slane %v4012, 1
    %v4303 = vrot.slane %v4016, 1
    %v4304 = vsel %vm4301, %v4302, %v4303
    %v4305 = vrot.slane %v4013, 1
    %v4306 = vrot.slane %v4017, 1
    %v4307 = vsel %vm4301, %v4305, %v4306
    %v4308 = vrot.slane %v4014, 1
    %v4309 = vrot.slane %v4018, 1
    %v4310 = vsel %vm4301, %v4308, %v4309
    %v4311 = vrot.slane %v4015, 1
    %v4312 = vrot.slane %v4019, 1
    %v4313 = vsel %vm4301, %v4311, %v4312
    %v4314 = vrot.slane %v4020, 1
    %v4315 = vrot.slane %v4024, 1
    %v4316 = vsel %vm4301, %v4314, %v4315
    %v4317 = vrot.slane %v4021, 1
    %v4318 = vrot.slane %v4025, 1
    %v4319 = vsel %vm4301, %v4317, %v4318
    %v4320 = vrot.slane %v4022, 1
    %v4321 = vrot.slane %v4026, 1
    %v4322 = vsel %vm4301, %v4320, %v4321
    %v4323 = vrot.slane %v4023, 1
    %v4324 = vrot.slane %v4027, 1
    %v4325 = vsel %vm4301, %v4323, %v4324
    %4334 = vmatpush.msra.mxu0 %v4089
    %4335 = vmatpush.msra.mxu0 %v4085
    %4336 = vmatpush.msra.mxu0 %v4081
    %4337 = vmatpush.msra.mxu0 %v4077
    %4338 = vmatpush.msra.mxu0 %v4073
    %4339 = vmatpush.msra.mxu0 %v4069
    %4340 = vmatpush.msra.mxu0 %v4065
    %4341 = vmatpush.msra.mxu0 %v4061
    %4342 = vmatpush.msra.mxu0 %v4057
    %4343 = vmatpush.msra.mxu0 %v4053
    %4344 = vmatpush.msra.mxu0 %v4049
    %4345 = vmatpush.msra.mxu0 %v4045
    %4346 = vmatpush.msra.mxu0 %v4041
    %4347 = vmatpush.msra.mxu0 %v4037
    %4348 = vmatpush.msra.mxu0 %v4033
    %4349 = vmatpush.msra.mxu0 %v4029
    %4350 = vmatmul.f32.gmra.mxu0 %v4304
    %v4351 = vpop.f32.mrf.mxu0
    %v4352 = vadd.f32 0.0, %v4351
    %4353 = vmatmul.f32.gmra.mxu0 %v4316
    %v4354 = vpop.f32.mrf.mxu0
    %v4355 = vadd.f32 0.0, %v4354
    %4356 = vdwg.mxu0
    %4357 = vmatpush.msra.mxu0 %v4153
    %4358 = vmatpush.msra.mxu0 %v4149
    %4359 = vmatpush.msra.mxu0 %v4145
    %4360 = vmatpush.msra.mxu0 %v4141
    %4361 = vmatpush.msra.mxu0 %v4137
    %4362 = vmatpush.msra.mxu0 %v4133
    %4363 = vmatpush.msra.mxu0 %v4129
    %4364 = vmatpush.msra.mxu0 %v4125
    %4365 = vmatpush.msra.mxu0 %v4121
    %4366 = vmatpush.msra.mxu0 %v4117
    %4367 = vmatpush.msra.mxu0 %v4113
    %4368 = vmatpush.msra.mxu0 %v4109
    %4369 = vmatpush.msra.mxu0 %v4105
    %4370 = vmatpush.msra.mxu0 %v4101
    %4371 = vmatpush.msra.mxu0 %v4097
    %4372 = vmatpush.msra.mxu0 %v4093
    %4373 = vmatmul.f32.gmra.mxu0 %v4307
    %v4374 = vpop.f32.mrf.mxu0
    %v4375 = vadd.f32 %v4352, %v4374
    %4376 = vmatmul.f32.gmra.mxu0 %v4319
    %v4377 = vpop.f32.mrf.mxu0
    %v4378 = vadd.f32 %v4355, %v4377
    %4379 = vdwg.mxu0
    %4380 = vmatpush.msra.mxu0 %v4217
    %4381 = vmatpush.msra.mxu0 %v4213
    %4382 = vmatpush.msra.mxu0 %v4209
    %4383 = vmatpush.msra.mxu0 %v4205
    %4384 = vmatpush.msra.mxu0 %v4201
    %4385 = vmatpush.msra.mxu0 %v4197
    %4386 = vmatpush.msra.mxu0 %v4193
    %4387 = vmatpush.msra.mxu0 %v4189
    %4388 = vmatpush.msra.mxu0 %v4185
    %4389 = vmatpush.msra.mxu0 %v4181
    %4390 = vmatpush.msra.mxu0 %v4177
    %4391 = vmatpush.msra.mxu0 %v4173
    %4392 = vmatpush.msra.mxu0 %v4169
    %4393 = vmatpush.msra.mxu0 %v4165
    %4394 = vmatpush.msra.mxu0 %v4161
    %4395 = vmatpush.msra.mxu0 %v4157
    %4396 = vmatmul.f32.gmra.mxu0 %v4310
    %v4397 = vpop.f32.mrf.mxu0
    %v4398 = vadd.f32 %v4375, %v4397
    %4399 = vmatmul.f32.gmra.mxu0 %v4322
    %v4400 = vpop.f32.mrf.mxu0
    %v4401 = vadd.f32 %v4378, %v4400
    %4402 = vdwg.mxu0
    %4403 = vmatpush.msra.mxu0 %v4281
    %4404 = vmatpush.msra.mxu0 %v4277
    %4405 = vmatpush.msra.mxu0 %v4273
    %4406 = vmatpush.msra.mxu0 %v4269
    %4407 = vmatpush.msra.mxu0 %v4265
    %4408 = vmatpush.msra.mxu0 %v4261
    %4409 = vmatpush.msra.mxu0 %v4257
    %4410 = vmatpush.msra.mxu0 %v4253
    %4411 = vmatpush.msra.mxu0 %v4249
    %4412 = vmatpush.msra.mxu0 %v4245
    %4413 = vmatpush.msra.mxu0 %v4241
    %4414 = vmatpush.msra.mxu0 %v4237
    %4415 = vmatpush.msra.mxu0 %v4233
    %4416 = vmatpush.msra.mxu0 %v4229
    %4417 = vmatpush.msra.mxu0 %v4225
    %4418 = vmatpush.msra.mxu0 %v4221
    %4419 = vmatmul.f32.gmra.mxu0 %v4313
    %v4420 = vpop.f32.mrf.mxu0
    %v4421 = vadd.f32 %v4398, %v4420
    %4422 = vmatmul.f32.gmra.mxu0 %v4325
    %v4423 = vpop.f32.mrf.mxu0
    %v4424 = vadd.f32 %v4401, %v4423
    %4425 = vdwg.mxu0
    %4426 = vmatpush.msra.mxu0 %v4090
    %4427 = vmatpush.msra.mxu0 %v4086
    %4428 = vmatpush.msra.mxu0 %v4082
    %4429 = vmatpush.msra.mxu0 %v4078
    %4430 = vmatpush.msra.mxu0 %v4074
    %4431 = vmatpush.msra.mxu0 %v4070
    %4432 = vmatpush.msra.mxu0 %v4066
    %4433 = vmatpush.msra.mxu0 %v4062
    %4434 = vmatpush.msra.mxu0 %v4058
    %4435 = vmatpush.msra.mxu0 %v4054
    %4436 = vmatpush.msra.mxu0 %v4050
    %4437 = vmatpush.msra.mxu0 %v4046
    %4438 = vmatpush.msra.mxu0 %v4042
    %4439 = vmatpush.msra.mxu0 %v4038
    %4440 = vmatpush.msra.mxu0 %v4034
    %4441 = vmatpush.msra.mxu0 %v4030
    %4442 = vmatmul.f32.gmra.mxu0 %v4304
    %v4443 = vpop.f32.mrf.mxu0
    %v4444 = vadd.f32 0.0, %v4443
    %4445 = vmatmul.f32.gmra.mxu0 %v4316
    %v4446 = vpop.f32.mrf.mxu0
    %v4447 = vadd.f32 0.0, %v4446
    %4448 = vdwg.mxu0
    %4449 = vmatpush.msra.mxu0 %v4154
    %4450 = vmatpush.msra.mxu0 %v4150
    %4451 = vmatpush.msra.mxu0 %v4146
    %4452 = vmatpush.msra.mxu0 %v4142
    %4453 = vmatpush.msra.mxu0 %v4138
    %4454 = vmatpush.msra.mxu0 %v4134
    %4455 = vmatpush.msra.mxu0 %v4130
    %4456 = vmatpush.msra.mxu0 %v4126
    %4457 = vmatpush.msra.mxu0 %v4122
    %4458 = vmatpush.msra.mxu0 %v4118
    %4459 = vmatpush.msra.mxu0 %v4114
    %4460 = vmatpush.msra.mxu0 %v4110
    %4461 = vmatpush.msra.mxu0 %v4106
    %4462 = vmatpush.msra.mxu0 %v4102
    %4463 = vmatpush.msra.mxu0 %v4098
    %4464 = vmatpush.msra.mxu0 %v4094
    %4465 = vmatmul.f32.gmra.mxu0 %v4307
    %v4466 = vpop.f32.mrf.mxu0
    %v4467 = vadd.f32 %v4444, %v4466
    %4468 = vmatmul.f32.gmra.mxu0 %v4319
    %v4469 = vpop.f32.mrf.mxu0
    %v4470 = vadd.f32 %v4447, %v4469
    %4471 = vdwg.mxu0
    %4472 = vmatpush.msra.mxu0 %v4218
    %4473 = vmatpush.msra.mxu0 %v4214
    %4474 = vmatpush.msra.mxu0 %v4210
    %4475 = vmatpush.msra.mxu0 %v4206
    %4476 = vmatpush.msra.mxu0 %v4202
    %4477 = vmatpush.msra.mxu0 %v4198
    %4478 = vmatpush.msra.mxu0 %v4194
    %4479 = vmatpush.msra.mxu0 %v4190
    %4480 = vmatpush.msra.mxu0 %v4186
    %4481 = vmatpush.msra.mxu0 %v4182
    %4482 = vmatpush.msra.mxu0 %v4178
    %4483 = vmatpush.msra.mxu0 %v4174
    %4484 = vmatpush.msra.mxu0 %v4170
    %4485 = vmatpush.msra.mxu0 %v4166
    %4486 = vmatpush.msra.mxu0 %v4162
    %4487 = vmatpush.msra.mxu0 %v4158
    %4488 = vmatmul.f32.gmra.mxu0 %v4310
    %v4489 = vpop.f32.mrf.mxu0
    %v4490 = vadd.f32 %v4467, %v4489
    %4491 = vmatmul.f32.gmra.mxu0 %v4322
    %v4492 = vpop.f32.mrf.mxu0
    %v4493 = vadd.f32 %v4470, %v4492
    %4494 = vdwg.mxu0
    %4495 = vmatpush.msra.mxu0 %v4282
    %4496 = vmatpush.msra.mxu0 %v4278
    %4497 = vmatpush.msra.mxu0 %v4274
    %4498 = vmatpush.msra.mxu0 %v4270
    %4499 = vmatpush.msra.mxu0 %v4266
    %4500 = vmatpush.msra.mxu0 %v4262
    %4501 = vmatpush.msra.mxu0 %v4258
    %4502 = vmatpush.msra.mxu0 %v4254
    %4503 = vmatpush.msra.mxu0 %v4250
    %4504 = vmatpush.msra.mxu0 %v4246
    %4505 = vmatpush.msra.mxu0 %v4242
    %4506 = vmatpush.msra.mxu0 %v4238
    %4507 = vmatpush.msra.mxu0 %v4234
    %4508 = vmatpush.msra.mxu0 %v4230
    %4509 = vmatpush.msra.mxu0 %v4226
    %4510 = vmatpush.msra.mxu0 %v4222
    %4511 = vmatmul.f32.gmra.mxu0 %v4313
    %v4512 = vpop.f32.mrf.mxu0
    %v4513 = vadd.f32 %v4490, %v4512
    %4514 = vmatmul.f32.gmra.mxu0 %v4325
    %v4515 = vpop.f32.mrf.mxu0
    %v4516 = vadd.f32 %v4493, %v4515
    %4517 = vdwg.mxu0
    %4518 = vmatpush.msra.mxu0 %v4091
    %4519 = vmatpush.msra.mxu0 %v4087
    %4520 = vmatpush.msra.mxu0 %v4083
    %4521 = vmatpush.msra.mxu0 %v4079
    %4522 = vmatpush.msra.mxu0 %v4075
    %4523 = vmatpush.msra.mxu0 %v4071
    %4524 = vmatpush.msra.mxu0 %v4067
    %4525 = vmatpush.msra.mxu0 %v4063
    %4526 = vmatpush.msra.mxu0 %v4059
    %4527 = vmatpush.msra.mxu0 %v4055
    %4528 = vmatpush.msra.mxu0 %v4051
    %4529 = vmatpush.msra.mxu0 %v4047
    %4530 = vmatpush.msra.mxu0 %v4043
    %4531 = vmatpush.msra.mxu0 %v4039
    %4532 = vmatpush.msra.mxu0 %v4035
    %4533 = vmatpush.msra.mxu0 %v4031
    %4534 = vmatmul.f32.gmra.mxu0 %v4304
    %v4535 = vpop.f32.mrf.mxu0
    %v4536 = vadd.f32 0.0, %v4535
    %4537 = vmatmul.f32.gmra.mxu0 %v4316
    %v4538 = vpop.f32.mrf.mxu0
    %v4539 = vadd.f32 0.0, %v4538
    %4540 = vdwg.mxu0
    %4541 = vmatpush.msra.mxu0 %v4155
    %4542 = vmatpush.msra.mxu0 %v4151
    %4543 = vmatpush.msra.mxu0 %v4147
    %4544 = vmatpush.msra.mxu0 %v4143
    %4545 = vmatpush.msra.mxu0 %v4139
    %4546 = vmatpush.msra.mxu0 %v4135
    %4547 = vmatpush.msra.mxu0 %v4131
    %4548 = vmatpush.msra.mxu0 %v4127
    %4549 = vmatpush.msra.mxu0 %v4123
    %4550 = vmatpush.msra.mxu0 %v4119
    %4551 = vmatpush.msra.mxu0 %v4115
    %4552 = vmatpush.msra.mxu0 %v4111
    %4553 = vmatpush.msra.mxu0 %v4107
    %4554 = vmatpush.msra.mxu0 %v4103
    %4555 = vmatpush.msra.mxu0 %v4099
    %4556 = vmatpush.msra.mxu0 %v4095
    %4557 = vmatmul.f32.gmra.mxu0 %v4307
    %v4558 = vpop.f32.mrf.mxu0
    %v4559 = vadd.f32 %v4536, %v4558
    %4560 = vmatmul.f32.gmra.mxu0 %v4319
    %v4561 = vpop.f32.mrf.mxu0
    %v4562 = vadd.f32 %v4539, %v4561
    %4563 = vdwg.mxu0
    %4564 = vmatpush.msra.mxu0 %v4219
    %4565 = vmatpush.msra.mxu0 %v4215
    %4566 = vmatpush.msra.mxu0 %v4211
    %4567 = vmatpush.msra.mxu0 %v4207
    %4568 = vmatpush.msra.mxu0 %v4203
    %4569 = vmatpush.msra.mxu0 %v4199
    %4570 = vmatpush.msra.mxu0 %v4195
    %4571 = vmatpush.msra.mxu0 %v4191
    %4572 = vmatpush.msra.mxu0 %v4187
    %4573 = vmatpush.msra.mxu0 %v4183
    %4574 = vmatpush.msra.mxu0 %v4179
    %4575 = vmatpush.msra.mxu0 %v4175
    %4576 = vmatpush.msra.mxu0 %v4171
    %4577 = vmatpush.msra.mxu0 %v4167
    %4578 = vmatpush.msra.mxu0 %v4163
    %4579 = vmatpush.msra.mxu0 %v4159
    %4580 = vmatmul.f32.gmra.mxu0 %v4310
    %v4581 = vpop.f32.mrf.mxu0
    %v4582 = vadd.f32 %v4559, %v4581
    %4583 = vmatmul.f32.gmra.mxu0 %v4322
    %v4584 = vpop.f32.mrf.mxu0
    %v4585 = vadd.f32 %v4562, %v4584
    %4586 = vdwg.mxu0
    %4587 = vmatpush.msra.mxu0 %v4283
    %4588 = vmatpush.msra.mxu0 %v4279
    %4589 = vmatpush.msra.mxu0 %v4275
    %4590 = vmatpush.msra.mxu0 %v4271
    %4591 = vmatpush.msra.mxu0 %v4267
    %4592 = vmatpush.msra.mxu0 %v4263
    %4593 = vmatpush.msra.mxu0 %v4259
    %4594 = vmatpush.msra.mxu0 %v4255
    %4595 = vmatpush.msra.mxu0 %v4251
    %4596 = vmatpush.msra.mxu0 %v4247
    %4597 = vmatpush.msra.mxu0 %v4243
    %4598 = vmatpush.msra.mxu0 %v4239
    %4599 = vmatpush.msra.mxu0 %v4235
    %4600 = vmatpush.msra.mxu0 %v4231
    %4601 = vmatpush.msra.mxu0 %v4227
    %4602 = vmatpush.msra.mxu0 %v4223
    %4603 = vmatmul.f32.gmra.mxu0 %v4313
    %v4604 = vpop.f32.mrf.mxu0
    %v4605 = vadd.f32 %v4582, %v4604
    %4606 = vmatmul.f32.gmra.mxu0 %v4325
    %v4607 = vpop.f32.mrf.mxu0
    %v4608 = vadd.f32 %v4585, %v4607
    %4609 = vdwg.mxu0
    %4610 = vmatpush.msra.mxu0 %v4092
    %4611 = vmatpush.msra.mxu0 %v4088
    %4612 = vmatpush.msra.mxu0 %v4084
    %4613 = vmatpush.msra.mxu0 %v4080
    %4614 = vmatpush.msra.mxu0 %v4076
    %4615 = vmatpush.msra.mxu0 %v4072
    %4616 = vmatpush.msra.mxu0 %v4068
    %4617 = vmatpush.msra.mxu0 %v4064
    %4618 = vmatpush.msra.mxu0 %v4060
    %4619 = vmatpush.msra.mxu0 %v4056
    %4620 = vmatpush.msra.mxu0 %v4052
    %4621 = vmatpush.msra.mxu0 %v4048
    %4622 = vmatpush.msra.mxu0 %v4044
    %4623 = vmatpush.msra.mxu0 %v4040
    %4624 = vmatpush.msra.mxu0 %v4036
    %4625 = vmatpush.msra.mxu0 %v4032
    %4626 = vmatmul.f32.gmra.mxu0 %v4304
    %v4627 = vpop.f32.mrf.mxu0
    %v4628 = vadd.f32 0.0, %v4627
    %4629 = vmatmul.f32.gmra.mxu0 %v4316
    %v4630 = vpop.f32.mrf.mxu0
    %v4631 = vadd.f32 0.0, %v4630
    %4632 = vdwg.mxu0
    %4633 = vmatpush.msra.mxu0 %v4156
    %4634 = vmatpush.msra.mxu0 %v4152
    %4635 = vmatpush.msra.mxu0 %v4148
    %4636 = vmatpush.msra.mxu0 %v4144
    %4637 = vmatpush.msra.mxu0 %v4140
    %4638 = vmatpush.msra.mxu0 %v4136
    %4639 = vmatpush.msra.mxu0 %v4132
    %4640 = vmatpush.msra.mxu0 %v4128
    %4641 = vmatpush.msra.mxu0 %v4124
    %4642 = vmatpush.msra.mxu0 %v4120
    %4643 = vmatpush.msra.mxu0 %v4116
    %4644 = vmatpush.msra.mxu0 %v4112
    %4645 = vmatpush.msra.mxu0 %v4108
    %4646 = vmatpush.msra.mxu0 %v4104
    %4647 = vmatpush.msra.mxu0 %v4100
    %4648 = vmatpush.msra.mxu0 %v4096
    %4649 = vmatmul.f32.gmra.mxu0 %v4307
    %v4650 = vpop.f32.mrf.mxu0
    %v4651 = vadd.f32 %v4628, %v4650
    %4652 = vmatmul.f32.gmra.mxu0 %v4319
    %v4653 = vpop.f32.mrf.mxu0
    %v4654 = vadd.f32 %v4631, %v4653
    %4655 = vdwg.mxu0
    %4656 = vmatpush.msra.mxu0 %v4220
    %4657 = vmatpush.msra.mxu0 %v4216
    %4658 = vmatpush.msra.mxu0 %v4212
    %4659 = vmatpush.msra.mxu0 %v4208
    %4660 = vmatpush.msra.mxu0 %v4204
    %4661 = vmatpush.msra.mxu0 %v4200
    %4662 = vmatpush.msra.mxu0 %v4196
    %4663 = vmatpush.msra.mxu0 %v4192
    %4664 = vmatpush.msra.mxu0 %v4188
    %4665 = vmatpush.msra.mxu0 %v4184
    %4666 = vmatpush.msra.mxu0 %v4180
    %4667 = vmatpush.msra.mxu0 %v4176
    %4668 = vmatpush.msra.mxu0 %v4172
    %4669 = vmatpush.msra.mxu0 %v4168
    %4670 = vmatpush.msra.mxu0 %v4164
    %4671 = vmatpush.msra.mxu0 %v4160
    %4672 = vmatmul.f32.gmra.mxu0 %v4310
    %v4673 = vpop.f32.mrf.mxu0
    %v4674 = vadd.f32 %v4651, %v4673
    %4675 = vmatmul.f32.gmra.mxu0 %v4322
    %v4676 = vpop.f32.mrf.mxu0
    %v4677 = vadd.f32 %v4654, %v4676
    %4678 = vdwg.mxu0
    %4679 = vmatpush.msra.mxu0 %v4284
    %4680 = vmatpush.msra.mxu0 %v4280
    %4681 = vmatpush.msra.mxu0 %v4276
    %4682 = vmatpush.msra.mxu0 %v4272
    %4683 = vmatpush.msra.mxu0 %v4268
    %4684 = vmatpush.msra.mxu0 %v4264
    %4685 = vmatpush.msra.mxu0 %v4260
    %4686 = vmatpush.msra.mxu0 %v4256
    %4687 = vmatpush.msra.mxu0 %v4252
    %4688 = vmatpush.msra.mxu0 %v4248
    %4689 = vmatpush.msra.mxu0 %v4244
    %4690 = vmatpush.msra.mxu0 %v4240
    %4691 = vmatpush.msra.mxu0 %v4236
    %4692 = vmatpush.msra.mxu0 %v4232
    %4693 = vmatpush.msra.mxu0 %v4228
    %4694 = vmatpush.msra.mxu0 %v4224
    %4695 = vmatmul.f32.gmra.mxu0 %v4313
    %v4696 = vpop.f32.mrf.mxu0
    %v4697 = vadd.f32 %v4674, %v4696
    %4698 = vmatmul.f32.gmra.mxu0 %v4325
    %v4699 = vpop.f32.mrf.mxu0
    %v4700 = vadd.f32 %v4677, %v4699
    %4701 = vdwg.mxu0
    %4702 = vmatpush.msra.mxu0 %v3816
    %4703 = vmatpush.msra.mxu0 %v3812
    %4704 = vmatpush.msra.mxu0 %v3808
    %4705 = vmatpush.msra.mxu0 %v3804
    %4706 = vmatpush.msra.mxu0 %v3800
    %4707 = vmatpush.msra.mxu0 %v3796
    %4708 = vmatpush.msra.mxu0 %v3792
    %4709 = vmatpush.msra.mxu0 %v3788
    %4710 = vmatpush.msra.mxu0 %v3784
    %4711 = vmatpush.msra.mxu0 %v3780
    %4712 = vmatpush.msra.mxu0 %v3776
    %4713 = vmatpush.msra.mxu0 %v3772
    %4714 = vmatpush.msra.mxu0 %v3768
    %4715 = vmatpush.msra.mxu0 %v3764
    %4716 = vmatpush.msra.mxu0 %v3760
    %4717 = vmatpush.msra.mxu0 %v3756
    %4718 = vmatmul.f32.gmra.mxu0 %v3748
    %v4719 = vpop.f32.mrf.mxu0
    %v4720 = vadd.f32 %v4421, %v4719
    %4721 = vmatmul.f32.gmra.mxu0 %v3752
    %v4722 = vpop.f32.mrf.mxu0
    %v4723 = vadd.f32 %v4424, %v4722
    %4724 = vdwg.mxu0
    %4725 = vmatpush.msra.mxu0 %v3880
    %4726 = vmatpush.msra.mxu0 %v3876
    %4727 = vmatpush.msra.mxu0 %v3872
    %4728 = vmatpush.msra.mxu0 %v3868
    %4729 = vmatpush.msra.mxu0 %v3864
    %4730 = vmatpush.msra.mxu0 %v3860
    %4731 = vmatpush.msra.mxu0 %v3856
    %4732 = vmatpush.msra.mxu0 %v3852
    %4733 = vmatpush.msra.mxu0 %v3848
    %4734 = vmatpush.msra.mxu0 %v3844
    %4735 = vmatpush.msra.mxu0 %v3840
    %4736 = vmatpush.msra.mxu0 %v3836
    %4737 = vmatpush.msra.mxu0 %v3832
    %4738 = vmatpush.msra.mxu0 %v3828
    %4739 = vmatpush.msra.mxu0 %v3824
    %4740 = vmatpush.msra.mxu0 %v3820
    %4741 = vmatmul.f32.gmra.mxu0 %v3749
    %v4742 = vpop.f32.mrf.mxu0
    %v4743 = vadd.f32 %v4720, %v4742
    %4744 = vmatmul.f32.gmra.mxu0 %v3753
    %v4745 = vpop.f32.mrf.mxu0
    %v4746 = vadd.f32 %v4723, %v4745
    %4747 = vdwg.mxu0
    %4748 = vmatpush.msra.mxu0 %v3944
    %4749 = vmatpush.msra.mxu0 %v3940
    %4750 = vmatpush.msra.mxu0 %v3936
    %4751 = vmatpush.msra.mxu0 %v3932
    %4752 = vmatpush.msra.mxu0 %v3928
    %4753 = vmatpush.msra.mxu0 %v3924
    %4754 = vmatpush.msra.mxu0 %v3920
    %4755 = vmatpush.msra.mxu0 %v3916
    %4756 = vmatpush.msra.mxu0 %v3912
    %4757 = vmatpush.msra.mxu0 %v3908
    %4758 = vmatpush.msra.mxu0 %v3904
    %4759 = vmatpush.msra.mxu0 %v3900
    %4760 = vmatpush.msra.mxu0 %v3896
    %4761 = vmatpush.msra.mxu0 %v3892
    %4762 = vmatpush.msra.mxu0 %v3888
    %4763 = vmatpush.msra.mxu0 %v3884
    %4764 = vmatmul.f32.gmra.mxu0 %v3750
    %v4765 = vpop.f32.mrf.mxu0
    %v4766 = vadd.f32 %v4743, %v4765
    %4767 = vmatmul.f32.gmra.mxu0 %v3754
    %v4768 = vpop.f32.mrf.mxu0
    %v4769 = vadd.f32 %v4746, %v4768
    %4770 = vdwg.mxu0
    %4771 = vmatpush.msra.mxu0 %v4008
    %4772 = vmatpush.msra.mxu0 %v4004
    %4773 = vmatpush.msra.mxu0 %v4000
    %4774 = vmatpush.msra.mxu0 %v3996
    %4775 = vmatpush.msra.mxu0 %v3992
    %4776 = vmatpush.msra.mxu0 %v3988
    %4777 = vmatpush.msra.mxu0 %v3984
    %4778 = vmatpush.msra.mxu0 %v3980
    %4779 = vmatpush.msra.mxu0 %v3976
    %4780 = vmatpush.msra.mxu0 %v3972
    %4781 = vmatpush.msra.mxu0 %v3968
    %4782 = vmatpush.msra.mxu0 %v3964
    %4783 = vmatpush.msra.mxu0 %v3960
    %4784 = vmatpush.msra.mxu0 %v3956
    %4785 = vmatpush.msra.mxu0 %v3952
    %4786 = vmatpush.msra.mxu0 %v3948
    %4787 = vmatmul.f32.gmra.mxu0 %v3751
    %v4788 = vpop.f32.mrf.mxu0
    %v4789 = vadd.f32 %v4766, %v4788
    %4790 = vmatmul.f32.gmra.mxu0 %v3755
    %v4791 = vpop.f32.mrf.mxu0
    %v4792 = vadd.f32 %v4769, %v4791
    %4793 = vdwg.mxu0
    %4794 = vmatpush.msra.mxu0 %v3817
    %4795 = vmatpush.msra.mxu0 %v3813
    %4796 = vmatpush.msra.mxu0 %v3809
    %4797 = vmatpush.msra.mxu0 %v3805
    %4798 = vmatpush.msra.mxu0 %v3801
    %4799 = vmatpush.msra.mxu0 %v3797
    %4800 = vmatpush.msra.mxu0 %v3793
    %4801 = vmatpush.msra.mxu0 %v3789
    %4802 = vmatpush.msra.mxu0 %v3785
    %4803 = vmatpush.msra.mxu0 %v3781
    %4804 = vmatpush.msra.mxu0 %v3777
    %4805 = vmatpush.msra.mxu0 %v3773
    %4806 = vmatpush.msra.mxu0 %v3769
    %4807 = vmatpush.msra.mxu0 %v3765
    %4808 = vmatpush.msra.mxu0 %v3761
    %4809 = vmatpush.msra.mxu0 %v3757
    %4810 = vmatmul.f32.gmra.mxu0 %v3748
    %v4811 = vpop.f32.mrf.mxu0
    %v4812 = vadd.f32 %v4513, %v4811
    %4813 = vmatmul.f32.gmra.mxu0 %v3752
    %v4814 = vpop.f32.mrf.mxu0
    %v4815 = vadd.f32 %v4516, %v4814
    %4816 = vdwg.mxu0
    %4817 = vmatpush.msra.mxu0 %v3881
    %4818 = vmatpush.msra.mxu0 %v3877
    %4819 = vmatpush.msra.mxu0 %v3873
    %4820 = vmatpush.msra.mxu0 %v3869
    %4821 = vmatpush.msra.mxu0 %v3865
    %4822 = vmatpush.msra.mxu0 %v3861
    %4823 = vmatpush.msra.mxu0 %v3857
    %4824 = vmatpush.msra.mxu0 %v3853
    %4825 = vmatpush.msra.mxu0 %v3849
    %4826 = vmatpush.msra.mxu0 %v3845
    %4827 = vmatpush.msra.mxu0 %v3841
    %4828 = vmatpush.msra.mxu0 %v3837
    %4829 = vmatpush.msra.mxu0 %v3833
    %4830 = vmatpush.msra.mxu0 %v3829
    %4831 = vmatpush.msra.mxu0 %v3825
    %4832 = vmatpush.msra.mxu0 %v3821
    %4833 = vmatmul.f32.gmra.mxu0 %v3749
    %v4834 = vpop.f32.mrf.mxu0
    %v4835 = vadd.f32 %v4812, %v4834
    %4836 = vmatmul.f32.gmra.mxu0 %v3753
    %v4837 = vpop.f32.mrf.mxu0
    %v4838 = vadd.f32 %v4815, %v4837
    %4839 = vdwg.mxu0
    %4840 = vmatpush.msra.mxu0 %v3945
    %4841 = vmatpush.msra.mxu0 %v3941
    %4842 = vmatpush.msra.mxu0 %v3937
    %4843 = vmatpush.msra.mxu0 %v3933
    %4844 = vmatpush.msra.mxu0 %v3929
    %4845 = vmatpush.msra.mxu0 %v3925
    %4846 = vmatpush.msra.mxu0 %v3921
    %4847 = vmatpush.msra.mxu0 %v3917
    %4848 = vmatpush.msra.mxu0 %v3913
    %4849 = vmatpush.msra.mxu0 %v3909
    %4850 = vmatpush.msra.mxu0 %v3905
    %4851 = vmatpush.msra.mxu0 %v3901
    %4852 = vmatpush.msra.mxu0 %v3897
    %4853 = vmatpush.msra.mxu0 %v3893
    %4854 = vmatpush.msra.mxu0 %v3889
    %4855 = vmatpush.msra.mxu0 %v3885
    %4856 = vmatmul.f32.gmra.mxu0 %v3750
    %v4857 = vpop.f32.mrf.mxu0
    %v4858 = vadd.f32 %v4835, %v4857
    %4859 = vmatmul.f32.gmra.mxu0 %v3754
    %v4860 = vpop.f32.mrf.mxu0
    %v4861 = vadd.f32 %v4838, %v4860
    %4862 = vdwg.mxu0
    %4863 = vmatpush.msra.mxu0 %v4009
    %4864 = vmatpush.msra.mxu0 %v4005
    %4865 = vmatpush.msra.mxu0 %v4001
    %4866 = vmatpush.msra.mxu0 %v3997
    %4867 = vmatpush.msra.mxu0 %v3993
    %4868 = vmatpush.msra.mxu0 %v3989
    %4869 = vmatpush.msra.mxu0 %v3985
    %4870 = vmatpush.msra.mxu0 %v3981
    %4871 = vmatpush.msra.mxu0 %v3977
    %4872 = vmatpush.msra.mxu0 %v3973
    %4873 = vmatpush.msra.mxu0 %v3969
    %4874 = vmatpush.msra.mxu0 %v3965
    %4875 = vmatpush.msra.mxu0 %v3961
    %4876 = vmatpush.msra.mxu0 %v3957
    %4877 = vmatpush.msra.mxu0 %v3953
    %4878 = vmatpush.msra.mxu0 %v3949
    %4879 = vmatmul.f32.gmra.mxu0 %v3751
    %v4880 = vpop.f32.mrf.mxu0
    %v4881 = vadd.f32 %v4858, %v4880
    %4882 = vmatmul.f32.gmra.mxu0 %v3755
    %v4883 = vpop.f32.mrf.mxu0
    %v4884 = vadd.f32 %v4861, %v4883
    %4885 = vdwg.mxu0
    %4886 = vmatpush.msra.mxu0 %v3818
    %4887 = vmatpush.msra.mxu0 %v3814
    %4888 = vmatpush.msra.mxu0 %v3810
    %4889 = vmatpush.msra.mxu0 %v3806
    %4890 = vmatpush.msra.mxu0 %v3802
    %4891 = vmatpush.msra.mxu0 %v3798
    %4892 = vmatpush.msra.mxu0 %v3794
    %4893 = vmatpush.msra.mxu0 %v3790
    %4894 = vmatpush.msra.mxu0 %v3786
    %4895 = vmatpush.msra.mxu0 %v3782
    %4896 = vmatpush.msra.mxu0 %v3778
    %4897 = vmatpush.msra.mxu0 %v3774
    %4898 = vmatpush.msra.mxu0 %v3770
    %4899 = vmatpush.msra.mxu0 %v3766
    %4900 = vmatpush.msra.mxu0 %v3762
    %4901 = vmatpush.msra.mxu0 %v3758
    %4902 = vmatmul.f32.gmra.mxu0 %v3748
    %v4903 = vpop.f32.mrf.mxu0
    %v4904 = vadd.f32 %v4605, %v4903
    %4905 = vmatmul.f32.gmra.mxu0 %v3752
    %v4906 = vpop.f32.mrf.mxu0
    %v4907 = vadd.f32 %v4608, %v4906
    %4908 = vdwg.mxu0
    %4909 = vmatpush.msra.mxu0 %v3882
    %4910 = vmatpush.msra.mxu0 %v3878
    %4911 = vmatpush.msra.mxu0 %v3874
    %4912 = vmatpush.msra.mxu0 %v3870
    %4913 = vmatpush.msra.mxu0 %v3866
    %4914 = vmatpush.msra.mxu0 %v3862
    %4915 = vmatpush.msra.mxu0 %v3858
    %4916 = vmatpush.msra.mxu0 %v3854
    %4917 = vmatpush.msra.mxu0 %v3850
    %4918 = vmatpush.msra.mxu0 %v3846
    %4919 = vmatpush.msra.mxu0 %v3842
    %4920 = vmatpush.msra.mxu0 %v3838
    %4921 = vmatpush.msra.mxu0 %v3834
    %4922 = vmatpush.msra.mxu0 %v3830
    %4923 = vmatpush.msra.mxu0 %v3826
    %4924 = vmatpush.msra.mxu0 %v3822
    %4925 = vmatmul.f32.gmra.mxu0 %v3749
    %v4926 = vpop.f32.mrf.mxu0
    %v4927 = vadd.f32 %v4904, %v4926
    %4928 = vmatmul.f32.gmra.mxu0 %v3753
    %v4929 = vpop.f32.mrf.mxu0
    %v4930 = vadd.f32 %v4907, %v4929
    %4931 = vdwg.mxu0
    %4932 = vmatpush.msra.mxu0 %v3946
    %4933 = vmatpush.msra.mxu0 %v3942
    %4934 = vmatpush.msra.mxu0 %v3938
    %4935 = vmatpush.msra.mxu0 %v3934
    %4936 = vmatpush.msra.mxu0 %v3930
    %4937 = vmatpush.msra.mxu0 %v3926
    %4938 = vmatpush.msra.mxu0 %v3922
    %4939 = vmatpush.msra.mxu0 %v3918
    %4940 = vmatpush.msra.mxu0 %v3914
    %4941 = vmatpush.msra.mxu0 %v3910
    %4942 = vmatpush.msra.mxu0 %v3906
    %4943 = vmatpush.msra.mxu0 %v3902
    %4944 = vmatpush.msra.mxu0 %v3898
    %4945 = vmatpush.msra.mxu0 %v3894
    %4946 = vmatpush.msra.mxu0 %v3890
    %4947 = vmatpush.msra.mxu0 %v3886
    %4948 = vmatmul.f32.gmra.mxu0 %v3750
    %v4949 = vpop.f32.mrf.mxu0
    %v4950 = vadd.f32 %v4927, %v4949
    %4951 = vmatmul.f32.gmra.mxu0 %v3754
    %v4952 = vpop.f32.mrf.mxu0
    %v4953 = vadd.f32 %v4930, %v4952
    %4954 = vdwg.mxu0
    %4955 = vmatpush.msra.mxu0 %v4010
    %4956 = vmatpush.msra.mxu0 %v4006
    %4957 = vmatpush.msra.mxu0 %v4002
    %4958 = vmatpush.msra.mxu0 %v3998
    %4959 = vmatpush.msra.mxu0 %v3994
    %4960 = vmatpush.msra.mxu0 %v3990
    %4961 = vmatpush.msra.mxu0 %v3986
    %4962 = vmatpush.msra.mxu0 %v3982
    %4963 = vmatpush.msra.mxu0 %v3978
    %4964 = vmatpush.msra.mxu0 %v3974
    %4965 = vmatpush.msra.mxu0 %v3970
    %4966 = vmatpush.msra.mxu0 %v3966
    %4967 = vmatpush.msra.mxu0 %v3962
    %4968 = vmatpush.msra.mxu0 %v3958
    %4969 = vmatpush.msra.mxu0 %v3954
    %4970 = vmatpush.msra.mxu0 %v3950
    %4971 = vmatmul.f32.gmra.mxu0 %v3751
    %v4972 = vpop.f32.mrf.mxu0
    %v4973 = vadd.f32 %v4950, %v4972
    %4974 = vmatmul.f32.gmra.mxu0 %v3755
    %v4975 = vpop.f32.mrf.mxu0
    %v4976 = vadd.f32 %v4953, %v4975
    %4977 = vdwg.mxu0
    %4978 = vmatpush.msra.mxu0 %v3819
    %4979 = vmatpush.msra.mxu0 %v3815
    %4980 = vmatpush.msra.mxu0 %v3811
    %4981 = vmatpush.msra.mxu0 %v3807
    %4982 = vmatpush.msra.mxu0 %v3803
    %4983 = vmatpush.msra.mxu0 %v3799
    %4984 = vmatpush.msra.mxu0 %v3795
    %4985 = vmatpush.msra.mxu0 %v3791
    %4986 = vmatpush.msra.mxu0 %v3787
    %4987 = vmatpush.msra.mxu0 %v3783
    %4988 = vmatpush.msra.mxu0 %v3779
    %4989 = vmatpush.msra.mxu0 %v3775
    %4990 = vmatpush.msra.mxu0 %v3771
    %4991 = vmatpush.msra.mxu0 %v3767
    %4992 = vmatpush.msra.mxu0 %v3763
    %4993 = vmatpush.msra.mxu0 %v3759
    %4994 = vmatmul.f32.gmra.mxu0 %v3748
    %v4995 = vpop.f32.mrf.mxu0
    %v4996 = vadd.f32 %v4697, %v4995
    %4997 = vmatmul.f32.gmra.mxu0 %v3752
    %v4998 = vpop.f32.mrf.mxu0
    %v4999 = vadd.f32 %v4700, %v4998
    %5000 = vdwg.mxu0
    %5001 = vmatpush.msra.mxu0 %v3883
    %5002 = vmatpush.msra.mxu0 %v3879
    %5003 = vmatpush.msra.mxu0 %v3875
    %5004 = vmatpush.msra.mxu0 %v3871
    %5005 = vmatpush.msra.mxu0 %v3867
    %5006 = vmatpush.msra.mxu0 %v3863
    %5007 = vmatpush.msra.mxu0 %v3859
    %5008 = vmatpush.msra.mxu0 %v3855
    %5009 = vmatpush.msra.mxu0 %v3851
    %5010 = vmatpush.msra.mxu0 %v3847
    %5011 = vmatpush.msra.mxu0 %v3843
    %5012 = vmatpush.msra.mxu0 %v3839
    %5013 = vmatpush.msra.mxu0 %v3835
    %5014 = vmatpush.msra.mxu0 %v3831
    %5015 = vmatpush.msra.mxu0 %v3827
    %5016 = vmatpush.msra.mxu0 %v3823
    %5017 = vmatmul.f32.gmra.mxu0 %v3749
    %v5018 = vpop.f32.mrf.mxu0
    %v5019 = vadd.f32 %v4996, %v5018
    %5020 = vmatmul.f32.gmra.mxu0 %v3753
    %v5021 = vpop.f32.mrf.mxu0
    %v5022 = vadd.f32 %v4999, %v5021
    %5023 = vdwg.mxu0
    %5024 = vmatpush.msra.mxu0 %v3947
    %5025 = vmatpush.msra.mxu0 %v3943
    %5026 = vmatpush.msra.mxu0 %v3939
    %5027 = vmatpush.msra.mxu0 %v3935
    %5028 = vmatpush.msra.mxu0 %v3931
    %5029 = vmatpush.msra.mxu0 %v3927
    %5030 = vmatpush.msra.mxu0 %v3923
    %5031 = vmatpush.msra.mxu0 %v3919
    %5032 = vmatpush.msra.mxu0 %v3915
    %5033 = vmatpush.msra.mxu0 %v3911
    %5034 = vmatpush.msra.mxu0 %v3907
    %5035 = vmatpush.msra.mxu0 %v3903
    %5036 = vmatpush.msra.mxu0 %v3899
    %5037 = vmatpush.msra.mxu0 %v3895
    %5038 = vmatpush.msra.mxu0 %v3891
    %5039 = vmatpush.msra.mxu0 %v3887
    %5040 = vmatmul.f32.gmra.mxu0 %v3750
    %v5041 = vpop.f32.mrf.mxu0
    %v5042 = vadd.f32 %v5019, %v5041
    %5043 = vmatmul.f32.gmra.mxu0 %v3754
    %v5044 = vpop.f32.mrf.mxu0
    %v5045 = vadd.f32 %v5022, %v5044
    %5046 = vdwg.mxu0
    %5047 = vmatpush.msra.mxu0 %v4011
    %5048 = vmatpush.msra.mxu0 %v4007
    %5049 = vmatpush.msra.mxu0 %v4003
    %5050 = vmatpush.msra.mxu0 %v3999
    %5051 = vmatpush.msra.mxu0 %v3995
    %5052 = vmatpush.msra.mxu0 %v3991
    %5053 = vmatpush.msra.mxu0 %v3987
    %5054 = vmatpush.msra.mxu0 %v3983
    %5055 = vmatpush.msra.mxu0 %v3979
    %5056 = vmatpush.msra.mxu0 %v3975
    %5057 = vmatpush.msra.mxu0 %v3971
    %5058 = vmatpush.msra.mxu0 %v3967
    %5059 = vmatpush.msra.mxu0 %v3963
    %5060 = vmatpush.msra.mxu0 %v3959
    %5061 = vmatpush.msra.mxu0 %v3955
    %5062 = vmatpush.msra.mxu0 %v3951
    %5063 = vmatmul.f32.gmra.mxu0 %v3751
    %v5064 = vpop.f32.mrf.mxu0
    %v5065 = vadd.f32 %v5042, %v5064
    %5066 = vmatmul.f32.gmra.mxu0 %v3755
    %v5067 = vpop.f32.mrf.mxu0
    %v5068 = vadd.f32 %v5045, %v5067
    %5069 = vdwg.mxu0
    %v5070 = vld [vmem:[#allocation17] sm:$0xf]
    %v5072 = vperm.slane %v5070, 0
    %v5073 = vperm.slane %v5070, 1
    %v5074 = vperm.slane %v5070, 2
    %v5075 = vperm.slane %v5070, 3
    %v5080 = vadd.f32 %v4789, %v5072
    %v5081 = vadd.f32 %v4881, %v5073
    %v5082 = vadd.f32 %v4973, %v5074
    %v5083 = vadd.f32 %v5065, %v5075
    %v5084 = vadd.f32 %v4792, %v5072
    %v5085 = vadd.f32 %v4884, %v5073
    %v5086 = vadd.f32 %v4976, %v5074
    %v5087 = vadd.f32 %v5068, %v5075
    %v5088 = vmax.f32 %v5080, 0.0
    %v5089 = vmax.f32 %v5081, 0.0
    %v5090 = vmax.f32 %v5082, 0.0
    %v5091 = vmax.f32 %v5083, 0.0
    %v5092 = vmax.f32 %v5084, 0.0
    %v5093 = vmax.f32 %v5085, 0.0
    %v5094 = vmax.f32 %v5086, 0.0
    %v5095 = vmax.f32 %v5087, 0.0
    %s5096 = scalar_lea.vmem [#allocation15], 4096
    %v5097 = vld [vmem:[%s5096] sm:$0xff]
    %v5098 = vld [vmem:[%s5096 + $0x8] sm:$0xff]
    %v5099 = vld [vmem:[%s5096 + $0x10] sm:$0xff]
    %v5100 = vld [vmem:[%s5096 + $0x18] sm:$0xff]
    %v5101 = vld [vmem:[%s5096 + $0x20] sm:$0xff]
    %v5102 = vld [vmem:[%s5096 + $0x28] sm:$0xff]
    %v5103 = vld [vmem:[%s5096 + $0x30] sm:$0xff]
    %v5104 = vld [vmem:[%s5096 + $0x38] sm:$0xff]
    %v5105 = vld [vmem:[%s5096 + $0x40] sm:$0xff]
    %v5106 = vld [vmem:[%s5096 + $0x48] sm:$0xff]
    %v5107 = vld [vmem:[%s5096 + $0x50] sm:$0xff]
    %v5108 = vld [vmem:[%s5096 + $0x58] sm:$0xff]
    %v5109 = vld [vmem:[%s5096 + $0x60] sm:$0xff]
    %v5110 = vld [vmem:[%s5096 + $0x68] sm:$0xff]
    %v5111 = vld [vmem:[%s5096 + $0x70] sm:$0xff]
    %v5112 = vld [vmem:[%s5096 + $0x78] sm:$0xff]
    %v5113 = vld [vmem:[%s5096 + $0x80] sm:$0xff]
    %v5114 = vld [vmem:[%s5096 + $0x88] sm:$0xff]
    %v5115 = vld [vmem:[%s5096 + $0x90] sm:$0xff]
    %v5116 = vld [vmem:[%s5096 + $0x98] sm:$0xff]
    %v5117 = vld [vmem:[%s5096 + $0xa0] sm:$0xff]
    %v5118 = vld [vmem:[%s5096 + $0xa8] sm:$0xff]
    %v5119 = vld [vmem:[%s5096 + $0xb0] sm:$0xff]
    %v5120 = vld [vmem:[%s5096 + $0xb8] sm:$0xff]
    %v5121 = vld [vmem:[%s5096 + $0xc0] sm:$0xff]
    %v5122 = vld [vmem:[%s5096 + $0xc8] sm:$0xff]
    %v5123 = vld [vmem:[%s5096 + $0xd0] sm:$0xff]
    %v5124 = vld [vmem:[%s5096 + $0xd8] sm:$0xff]
    %v5125 = vld [vmem:[%s5096 + $0xe0] sm:$0xff]
    %v5126 = vld [vmem:[%s5096 + $0xe8] sm:$0xff]
    %v5127 = vld [vmem:[%s5096 + $0xf0] sm:$0xff]
    %v5128 = vld [vmem:[%s5096 + $0xf8] sm:$0xff]
    %v5129 = vld [vmem:[%s5096 + $0x100] sm:$0xff]
    %v5130 = vld [vmem:[%s5096 + $0x108] sm:$0xff]
    %v5131 = vld [vmem:[%s5096 + $0x110] sm:$0xff]
    %v5132 = vld [vmem:[%s5096 + $0x118] sm:$0xff]
    %v5133 = vld [vmem:[%s5096 + $0x120] sm:$0xff]
    %v5134 = vld [vmem:[%s5096 + $0x128] sm:$0xff]
    %v5135 = vld [vmem:[%s5096 + $0x130] sm:$0xff]
    %v5136 = vld [vmem:[%s5096 + $0x138] sm:$0xff]
    %v5137 = vld [vmem:[%s5096 + $0x140] sm:$0xff]
    %v5138 = vld [vmem:[%s5096 + $0x148] sm:$0xff]
    %v5139 = vld [vmem:[%s5096 + $0x150] sm:$0xff]
    %v5140 = vld [vmem:[%s5096 + $0x158] sm:$0xff]
    %v5141 = vld [vmem:[%s5096 + $0x160] sm:$0xff]
    %v5142 = vld [vmem:[%s5096 + $0x168] sm:$0xff]
    %v5143 = vld [vmem:[%s5096 + $0x170] sm:$0xff]
    %v5144 = vld [vmem:[%s5096 + $0x178] sm:$0xff]
    %v5145 = vld [vmem:[%s5096 + $0x180] sm:$0xff]
    %v5146 = vld [vmem:[%s5096 + $0x188] sm:$0xff]
    %v5147 = vld [vmem:[%s5096 + $0x190] sm:$0xff]
    %v5148 = vld [vmem:[%s5096 + $0x198] sm:$0xff]
    %v5149 = vld [vmem:[%s5096 + $0x1a0] sm:$0xff]
    %v5150 = vld [vmem:[%s5096 + $0x1a8] sm:$0xff]
    %v5151 = vld [vmem:[%s5096 + $0x1b0] sm:$0xff]
    %v5152 = vld [vmem:[%s5096 + $0x1b8] sm:$0xff]
    %v5153 = vld [vmem:[%s5096 + $0x1c0] sm:$0xff]
    %v5154 = vld [vmem:[%s5096 + $0x1c8] sm:$0xff]
    %v5155 = vld [vmem:[%s5096 + $0x1d0] sm:$0xff]
    %v5156 = vld [vmem:[%s5096 + $0x1d8] sm:$0xff]
    %v5157 = vld [vmem:[%s5096 + $0x1e0] sm:$0xff]
    %v5158 = vld [vmem:[%s5096 + $0x1e8] sm:$0xff]
    %v5159 = vld [vmem:[%s5096 + $0x1f0] sm:$0xff]
    %v5160 = vld [vmem:[%s5096 + $0x1f8] sm:$0xff]
    %v5161 = vld [vmem:[%s5096 + $0x200] sm:$0xff]
    %v5162 = vld [vmem:[%s5096 + $0x208] sm:$0xff]
    %v5163 = vld [vmem:[%s5096 + $0x210] sm:$0xff]
    %v5164 = vld [vmem:[%s5096 + $0x218] sm:$0xff]
    %v5165 = vld [vmem:[%s5096 + $0x220] sm:$0xff]
    %v5166 = vld [vmem:[%s5096 + $0x228] sm:$0xff]
    %v5167 = vld [vmem:[%s5096 + $0x230] sm:$0xff]
    %v5168 = vld [vmem:[%s5096 + $0x238] sm:$0xff]
    %v5169 = vld [vmem:[%s5096 + $0x240] sm:$0xff]
    %v5170 = vld [vmem:[%s5096 + $0x248] sm:$0xff]
    %v5171 = vld [vmem:[%s5096 + $0x250] sm:$0xff]
    %v5172 = vld [vmem:[%s5096 + $0x258] sm:$0xff]
    %v5173 = vld [vmem:[%s5096 + $0x260] sm:$0xff]
    %v5174 = vld [vmem:[%s5096 + $0x268] sm:$0xff]
    %v5175 = vld [vmem:[%s5096 + $0x270] sm:$0xff]
    %v5176 = vld [vmem:[%s5096 + $0x278] sm:$0xff]
    %v5177 = vld [vmem:[%s5096 + $0x280] sm:$0xff]
    %v5178 = vld [vmem:[%s5096 + $0x288] sm:$0xff]
    %v5179 = vld [vmem:[%s5096 + $0x290] sm:$0xff]
    %v5180 = vld [vmem:[%s5096 + $0x298] sm:$0xff]
    %v5181 = vld [vmem:[%s5096 + $0x2a0] sm:$0xff]
    %v5182 = vld [vmem:[%s5096 + $0x2a8] sm:$0xff]
    %v5183 = vld [vmem:[%s5096 + $0x2b0] sm:$0xff]
    %v5184 = vld [vmem:[%s5096 + $0x2b8] sm:$0xff]
    %v5185 = vld [vmem:[%s5096 + $0x2c0] sm:$0xff]
    %v5186 = vld [vmem:[%s5096 + $0x2c8] sm:$0xff]
    %v5187 = vld [vmem:[%s5096 + $0x2d0] sm:$0xff]
    %v5188 = vld [vmem:[%s5096 + $0x2d8] sm:$0xff]
    %v5189 = vld [vmem:[%s5096 + $0x2e0] sm:$0xff]
    %v5190 = vld [vmem:[%s5096 + $0x2e8] sm:$0xff]
    %v5191 = vld [vmem:[%s5096 + $0x2f0] sm:$0xff]
    %v5192 = vld [vmem:[%s5096 + $0x2f8] sm:$0xff]
    %v5193 = vld [vmem:[%s5096 + $0x300] sm:$0xff]
    %v5194 = vld [vmem:[%s5096 + $0x308] sm:$0xff]
    %v5195 = vld [vmem:[%s5096 + $0x310] sm:$0xff]
    %v5196 = vld [vmem:[%s5096 + $0x318] sm:$0xff]
    %v5197 = vld [vmem:[%s5096 + $0x320] sm:$0xff]
    %v5198 = vld [vmem:[%s5096 + $0x328] sm:$0xff]
    %v5199 = vld [vmem:[%s5096 + $0x330] sm:$0xff]
    %v5200 = vld [vmem:[%s5096 + $0x338] sm:$0xff]
    %v5201 = vld [vmem:[%s5096 + $0x340] sm:$0xff]
    %v5202 = vld [vmem:[%s5096 + $0x348] sm:$0xff]
    %v5203 = vld [vmem:[%s5096 + $0x350] sm:$0xff]
    %v5204 = vld [vmem:[%s5096 + $0x358] sm:$0xff]
    %v5205 = vld [vmem:[%s5096 + $0x360] sm:$0xff]
    %v5206 = vld [vmem:[%s5096 + $0x368] sm:$0xff]
    %v5207 = vld [vmem:[%s5096 + $0x370] sm:$0xff]
    %v5208 = vld [vmem:[%s5096 + $0x378] sm:$0xff]
    %v5209 = vld [vmem:[%s5096 + $0x380] sm:$0xff]
    %v5210 = vld [vmem:[%s5096 + $0x388] sm:$0xff]
    %v5211 = vld [vmem:[%s5096 + $0x390] sm:$0xff]
    %v5212 = vld [vmem:[%s5096 + $0x398] sm:$0xff]
    %v5213 = vld [vmem:[%s5096 + $0x3a0] sm:$0xff]
    %v5214 = vld [vmem:[%s5096 + $0x3a8] sm:$0xff]
    %v5215 = vld [vmem:[%s5096 + $0x3b0] sm:$0xff]
    %v5216 = vld [vmem:[%s5096 + $0x3b8] sm:$0xff]
    %v5217 = vld [vmem:[%s5096 + $0x3c0] sm:$0xff]
    %v5218 = vld [vmem:[%s5096 + $0x3c8] sm:$0xff]
    %v5219 = vld [vmem:[%s5096 + $0x3d0] sm:$0xff]
    %v5220 = vld [vmem:[%s5096 + $0x3d8] sm:$0xff]
    %v5221 = vld [vmem:[%s5096 + $0x3e0] sm:$0xff]
    %v5222 = vld [vmem:[%s5096 + $0x3e8] sm:$0xff]
    %v5223 = vld [vmem:[%s5096 + $0x3f0] sm:$0xff]
    %v5224 = vld [vmem:[%s5096 + $0x3f8] sm:$0xff]
    %v5225 = vld [vmem:[%s5096 + $0x400] sm:$0xff]
    %v5226 = vld [vmem:[%s5096 + $0x408] sm:$0xff]
    %v5227 = vld [vmem:[%s5096 + $0x410] sm:$0xff]
    %v5228 = vld [vmem:[%s5096 + $0x418] sm:$0xff]
    %v5229 = vld [vmem:[%s5096 + $0x420] sm:$0xff]
    %v5230 = vld [vmem:[%s5096 + $0x428] sm:$0xff]
    %v5231 = vld [vmem:[%s5096 + $0x430] sm:$0xff]
    %v5232 = vld [vmem:[%s5096 + $0x438] sm:$0xff]
    %v5233 = vld [vmem:[%s5096 + $0x440] sm:$0xff]
    %v5234 = vld [vmem:[%s5096 + $0x448] sm:$0xff]
    %v5235 = vld [vmem:[%s5096 + $0x450] sm:$0xff]
    %v5236 = vld [vmem:[%s5096 + $0x458] sm:$0xff]
    %v5237 = vld [vmem:[%s5096 + $0x460] sm:$0xff]
    %v5238 = vld [vmem:[%s5096 + $0x468] sm:$0xff]
    %v5239 = vld [vmem:[%s5096 + $0x470] sm:$0xff]
    %v5240 = vld [vmem:[%s5096 + $0x478] sm:$0xff]
    %v5241 = vld [vmem:[%s5096 + $0x480] sm:$0xff]
    %v5242 = vld [vmem:[%s5096 + $0x488] sm:$0xff]
    %v5243 = vld [vmem:[%s5096 + $0x490] sm:$0xff]
    %v5244 = vld [vmem:[%s5096 + $0x498] sm:$0xff]
    %v5245 = vld [vmem:[%s5096 + $0x4a0] sm:$0xff]
    %v5246 = vld [vmem:[%s5096 + $0x4a8] sm:$0xff]
    %v5247 = vld [vmem:[%s5096 + $0x4b0] sm:$0xff]
    %v5248 = vld [vmem:[%s5096 + $0x4b8] sm:$0xff]
    %v5249 = vld [vmem:[%s5096 + $0x4c0] sm:$0xff]
    %v5250 = vld [vmem:[%s5096 + $0x4c8] sm:$0xff]
    %v5251 = vld [vmem:[%s5096 + $0x4d0] sm:$0xff]
    %v5252 = vld [vmem:[%s5096 + $0x4d8] sm:$0xff]
    %v5253 = vld [vmem:[%s5096 + $0x4e0] sm:$0xff]
    %v5254 = vld [vmem:[%s5096 + $0x4e8] sm:$0xff]
    %v5255 = vld [vmem:[%s5096 + $0x4f0] sm:$0xff]
    %v5256 = vld [vmem:[%s5096 + $0x4f8] sm:$0xff]
    %v5257 = vld [vmem:[%s5096 + $0x500] sm:$0xff]
    %v5258 = vld [vmem:[%s5096 + $0x508] sm:$0xff]
    %v5259 = vld [vmem:[%s5096 + $0x510] sm:$0xff]
    %v5260 = vld [vmem:[%s5096 + $0x518] sm:$0xff]
    %v5261 = vld [vmem:[%s5096 + $0x520] sm:$0xff]
    %v5262 = vld [vmem:[%s5096 + $0x528] sm:$0xff]
    %v5263 = vld [vmem:[%s5096 + $0x530] sm:$0xff]
    %v5264 = vld [vmem:[%s5096 + $0x538] sm:$0xff]
    %v5265 = vld [vmem:[%s5096 + $0x540] sm:$0xff]
    %v5266 = vld [vmem:[%s5096 + $0x548] sm:$0xff]
    %v5267 = vld [vmem:[%s5096 + $0x550] sm:$0xff]
    %v5268 = vld [vmem:[%s5096 + $0x558] sm:$0xff]
    %v5269 = vld [vmem:[%s5096 + $0x560] sm:$0xff]
    %v5270 = vld [vmem:[%s5096 + $0x568] sm:$0xff]
    %v5271 = vld [vmem:[%s5096 + $0x570] sm:$0xff]
    %v5272 = vld [vmem:[%s5096 + $0x578] sm:$0xff]
    %v5273 = vld [vmem:[%s5096 + $0x580] sm:$0xff]
    %v5274 = vld [vmem:[%s5096 + $0x588] sm:$0xff]
    %v5275 = vld [vmem:[%s5096 + $0x590] sm:$0xff]
    %v5276 = vld [vmem:[%s5096 + $0x598] sm:$0xff]
    %v5277 = vld [vmem:[%s5096 + $0x5a0] sm:$0xff]
    %v5278 = vld [vmem:[%s5096 + $0x5a8] sm:$0xff]
    %v5279 = vld [vmem:[%s5096 + $0x5b0] sm:$0xff]
    %v5280 = vld [vmem:[%s5096 + $0x5b8] sm:$0xff]
    %v5281 = vld [vmem:[%s5096 + $0x5c0] sm:$0xff]
    %v5282 = vld [vmem:[%s5096 + $0x5c8] sm:$0xff]
    %v5283 = vld [vmem:[%s5096 + $0x5d0] sm:$0xff]
    %v5284 = vld [vmem:[%s5096 + $0x5d8] sm:$0xff]
    %v5285 = vld [vmem:[%s5096 + $0x5e0] sm:$0xff]
    %v5286 = vld [vmem:[%s5096 + $0x5e8] sm:$0xff]
    %v5287 = vld [vmem:[%s5096 + $0x5f0] sm:$0xff]
    %v5288 = vld [vmem:[%s5096 + $0x5f8] sm:$0xff]
    %v5289 = vld [vmem:[%s5096 + $0x600] sm:$0xff]
    %v5290 = vld [vmem:[%s5096 + $0x608] sm:$0xff]
    %v5291 = vld [vmem:[%s5096 + $0x610] sm:$0xff]
    %v5292 = vld [vmem:[%s5096 + $0x618] sm:$0xff]
    %v5293 = vld [vmem:[%s5096 + $0x620] sm:$0xff]
    %v5294 = vld [vmem:[%s5096 + $0x628] sm:$0xff]
    %v5295 = vld [vmem:[%s5096 + $0x630] sm:$0xff]
    %v5296 = vld [vmem:[%s5096 + $0x638] sm:$0xff]
    %v5297 = vld [vmem:[%s5096 + $0x640] sm:$0xff]
    %v5298 = vld [vmem:[%s5096 + $0x648] sm:$0xff]
    %v5299 = vld [vmem:[%s5096 + $0x650] sm:$0xff]
    %v5300 = vld [vmem:[%s5096 + $0x658] sm:$0xff]
    %v5301 = vld [vmem:[%s5096 + $0x660] sm:$0xff]
    %v5302 = vld [vmem:[%s5096 + $0x668] sm:$0xff]
    %v5303 = vld [vmem:[%s5096 + $0x670] sm:$0xff]
    %v5304 = vld [vmem:[%s5096 + $0x678] sm:$0xff]
    %v5305 = vld [vmem:[%s5096 + $0x680] sm:$0xff]
    %v5306 = vld [vmem:[%s5096 + $0x688] sm:$0xff]
    %v5307 = vld [vmem:[%s5096 + $0x690] sm:$0xff]
    %v5308 = vld [vmem:[%s5096 + $0x698] sm:$0xff]
    %v5309 = vld [vmem:[%s5096 + $0x6a0] sm:$0xff]
    %v5310 = vld [vmem:[%s5096 + $0x6a8] sm:$0xff]
    %v5311 = vld [vmem:[%s5096 + $0x6b0] sm:$0xff]
    %v5312 = vld [vmem:[%s5096 + $0x6b8] sm:$0xff]
    %v5313 = vld [vmem:[%s5096 + $0x6c0] sm:$0xff]
    %v5314 = vld [vmem:[%s5096 + $0x6c8] sm:$0xff]
    %v5315 = vld [vmem:[%s5096 + $0x6d0] sm:$0xff]
    %v5316 = vld [vmem:[%s5096 + $0x6d8] sm:$0xff]
    %v5317 = vld [vmem:[%s5096 + $0x6e0] sm:$0xff]
    %v5318 = vld [vmem:[%s5096 + $0x6e8] sm:$0xff]
    %v5319 = vld [vmem:[%s5096 + $0x6f0] sm:$0xff]
    %v5320 = vld [vmem:[%s5096 + $0x6f8] sm:$0xff]
    %v5321 = vld [vmem:[%s5096 + $0x700] sm:$0xff]
    %v5322 = vld [vmem:[%s5096 + $0x708] sm:$0xff]
    %v5323 = vld [vmem:[%s5096 + $0x710] sm:$0xff]
    %v5324 = vld [vmem:[%s5096 + $0x718] sm:$0xff]
    %v5325 = vld [vmem:[%s5096 + $0x720] sm:$0xff]
    %v5326 = vld [vmem:[%s5096 + $0x728] sm:$0xff]
    %v5327 = vld [vmem:[%s5096 + $0x730] sm:$0xff]
    %v5328 = vld [vmem:[%s5096 + $0x738] sm:$0xff]
    %v5329 = vld [vmem:[%s5096 + $0x740] sm:$0xff]
    %v5330 = vld [vmem:[%s5096 + $0x748] sm:$0xff]
    %v5331 = vld [vmem:[%s5096 + $0x750] sm:$0xff]
    %v5332 = vld [vmem:[%s5096 + $0x758] sm:$0xff]
    %v5333 = vld [vmem:[%s5096 + $0x760] sm:$0xff]
    %v5334 = vld [vmem:[%s5096 + $0x768] sm:$0xff]
    %v5335 = vld [vmem:[%s5096 + $0x770] sm:$0xff]
    %v5336 = vld [vmem:[%s5096 + $0x778] sm:$0xff]
    %v5337 = vld [vmem:[%s5096 + $0x780] sm:$0xff]
    %v5338 = vld [vmem:[%s5096 + $0x788] sm:$0xff]
    %v5339 = vld [vmem:[%s5096 + $0x790] sm:$0xff]
    %v5340 = vld [vmem:[%s5096 + $0x798] sm:$0xff]
    %v5341 = vld [vmem:[%s5096 + $0x7a0] sm:$0xff]
    %v5342 = vld [vmem:[%s5096 + $0x7a8] sm:$0xff]
    %v5343 = vld [vmem:[%s5096 + $0x7b0] sm:$0xff]
    %v5344 = vld [vmem:[%s5096 + $0x7b8] sm:$0xff]
    %v5345 = vld [vmem:[%s5096 + $0x7c0] sm:$0xff]
    %v5346 = vld [vmem:[%s5096 + $0x7c8] sm:$0xff]
    %v5347 = vld [vmem:[%s5096 + $0x7d0] sm:$0xff]
    %v5348 = vld [vmem:[%s5096 + $0x7d8] sm:$0xff]
    %v5349 = vld [vmem:[%s5096 + $0x7e0] sm:$0xff]
    %v5350 = vld [vmem:[%s5096 + $0x7e8] sm:$0xff]
    %v5351 = vld [vmem:[%s5096 + $0x7f0] sm:$0xff]
    %v5352 = vld [vmem:[%s5096 + $0x7f8] sm:$0xff]
    %v5353 = vld [vmem:[#allocation3] sm:$0xfc]
    %v5354 = vld [vmem:[#allocation3 + $0x8] sm:$0xfc]
    %v5355 = vld [vmem:[#allocation3 + $0x10] sm:$0xfc]
    %v5356 = vld [vmem:[#allocation3 + $0x18] sm:$0xfc]
    %v5357 = vld [vmem:[#allocation3 + $0x20] sm:$0x3]
    %v5358 = vld [vmem:[#allocation3 + $0x28] sm:$0x3]
    %v5359 = vld [vmem:[#allocation3 + $0x30] sm:$0x3]
    %v5360 = vld [vmem:[#allocation3 + $0x38] sm:$0x3]
    %v5361 = vld [vmem:[#allocation3 + $0x40] sm:$0xfc]
    %v5362 = vld [vmem:[#allocation3 + $0x48] sm:$0xfc]
    %v5363 = vld [vmem:[#allocation3 + $0x50] sm:$0xfc]
    %v5364 = vld [vmem:[#allocation3 + $0x58] sm:$0xfc]
    %v5365 = vld [vmem:[#allocation3 + $0x60] sm:$0x3]
    %v5366 = vld [vmem:[#allocation3 + $0x68] sm:$0x3]
    %v5367 = vld [vmem:[#allocation3 + $0x70] sm:$0x3]
    %v5368 = vld [vmem:[#allocation3 + $0x78] sm:$0x3]
    %s5369 = scalar_lea.vmem [#allocation15], 6144
    %v5370 = vld [vmem:[%s5369] sm:$0xff]
    %v5371 = vld [vmem:[%s5369 + $0x8] sm:$0xff]
    %v5372 = vld [vmem:[%s5369 + $0x10] sm:$0xff]
    %v5373 = vld [vmem:[%s5369 + $0x18] sm:$0xff]
    %v5374 = vld [vmem:[%s5369 + $0x20] sm:$0xff]
    %v5375 = vld [vmem:[%s5369 + $0x28] sm:$0xff]
    %v5376 = vld [vmem:[%s5369 + $0x30] sm:$0xff]
    %v5377 = vld [vmem:[%s5369 + $0x38] sm:$0xff]
    %v5378 = vld [vmem:[%s5369 + $0x40] sm:$0xff]
    %v5379 = vld [vmem:[%s5369 + $0x48] sm:$0xff]
    %v5380 = vld [vmem:[%s5369 + $0x50] sm:$0xff]
    %v5381 = vld [vmem:[%s5369 + $0x58] sm:$0xff]
    %v5382 = vld [vmem:[%s5369 + $0x60] sm:$0xff]
    %v5383 = vld [vmem:[%s5369 + $0x68] sm:$0xff]
    %v5384 = vld [vmem:[%s5369 + $0x70] sm:$0xff]
    %v5385 = vld [vmem:[%s5369 + $0x78] sm:$0xff]
    %v5386 = vld [vmem:[%s5369 + $0x80] sm:$0xff]
    %v5387 = vld [vmem:[%s5369 + $0x88] sm:$0xff]
    %v5388 = vld [vmem:[%s5369 + $0x90] sm:$0xff]
    %v5389 = vld [vmem:[%s5369 + $0x98] sm:$0xff]
    %v5390 = vld [vmem:[%s5369 + $0xa0] sm:$0xff]
    %v5391 = vld [vmem:[%s5369 + $0xa8] sm:$0xff]
    %v5392 = vld [vmem:[%s5369 + $0xb0] sm:$0xff]
    %v5393 = vld [vmem:[%s5369 + $0xb8] sm:$0xff]
    %v5394 = vld [vmem:[%s5369 + $0xc0] sm:$0xff]
    %v5395 = vld [vmem:[%s5369 + $0xc8] sm:$0xff]
    %v5396 = vld [vmem:[%s5369 + $0xd0] sm:$0xff]
    %v5397 = vld [vmem:[%s5369 + $0xd8] sm:$0xff]
    %v5398 = vld [vmem:[%s5369 + $0xe0] sm:$0xff]
    %v5399 = vld [vmem:[%s5369 + $0xe8] sm:$0xff]
    %v5400 = vld [vmem:[%s5369 + $0xf0] sm:$0xff]
    %v5401 = vld [vmem:[%s5369 + $0xf8] sm:$0xff]
    %v5402 = vld [vmem:[%s5369 + $0x100] sm:$0xff]
    %v5403 = vld [vmem:[%s5369 + $0x108] sm:$0xff]
    %v5404 = vld [vmem:[%s5369 + $0x110] sm:$0xff]
    %v5405 = vld [vmem:[%s5369 + $0x118] sm:$0xff]
    %v5406 = vld [vmem:[%s5369 + $0x120] sm:$0xff]
    %v5407 = vld [vmem:[%s5369 + $0x128] sm:$0xff]
    %v5408 = vld [vmem:[%s5369 + $0x130] sm:$0xff]
    %v5409 = vld [vmem:[%s5369 + $0x138] sm:$0xff]
    %v5410 = vld [vmem:[%s5369 + $0x140] sm:$0xff]
    %v5411 = vld [vmem:[%s5369 + $0x148] sm:$0xff]
    %v5412 = vld [vmem:[%s5369 + $0x150] sm:$0xff]
    %v5413 = vld [vmem:[%s5369 + $0x158] sm:$0xff]
    %v5414 = vld [vmem:[%s5369 + $0x160] sm:$0xff]
    %v5415 = vld [vmem:[%s5369 + $0x168] sm:$0xff]
    %v5416 = vld [vmem:[%s5369 + $0x170] sm:$0xff]
    %v5417 = vld [vmem:[%s5369 + $0x178] sm:$0xff]
    %v5418 = vld [vmem:[%s5369 + $0x180] sm:$0xff]
    %v5419 = vld [vmem:[%s5369 + $0x188] sm:$0xff]
    %v5420 = vld [vmem:[%s5369 + $0x190] sm:$0xff]
    %v5421 = vld [vmem:[%s5369 + $0x198] sm:$0xff]
    %v5422 = vld [vmem:[%s5369 + $0x1a0] sm:$0xff]
    %v5423 = vld [vmem:[%s5369 + $0x1a8] sm:$0xff]
    %v5424 = vld [vmem:[%s5369 + $0x1b0] sm:$0xff]
    %v5425 = vld [vmem:[%s5369 + $0x1b8] sm:$0xff]
    %v5426 = vld [vmem:[%s5369 + $0x1c0] sm:$0xff]
    %v5427 = vld [vmem:[%s5369 + $0x1c8] sm:$0xff]
    %v5428 = vld [vmem:[%s5369 + $0x1d0] sm:$0xff]
    %v5429 = vld [vmem:[%s5369 + $0x1d8] sm:$0xff]
    %v5430 = vld [vmem:[%s5369 + $0x1e0] sm:$0xff]
    %v5431 = vld [vmem:[%s5369 + $0x1e8] sm:$0xff]
    %v5432 = vld [vmem:[%s5369 + $0x1f0] sm:$0xff]
    %v5433 = vld [vmem:[%s5369 + $0x1f8] sm:$0xff]
    %v5434 = vld [vmem:[%s5369 + $0x200] sm:$0xff]
    %v5435 = vld [vmem:[%s5369 + $0x208] sm:$0xff]
    %v5436 = vld [vmem:[%s5369 + $0x210] sm:$0xff]
    %v5437 = vld [vmem:[%s5369 + $0x218] sm:$0xff]
    %v5438 = vld [vmem:[%s5369 + $0x220] sm:$0xff]
    %v5439 = vld [vmem:[%s5369 + $0x228] sm:$0xff]
    %v5440 = vld [vmem:[%s5369 + $0x230] sm:$0xff]
    %v5441 = vld [vmem:[%s5369 + $0x238] sm:$0xff]
    %v5442 = vld [vmem:[%s5369 + $0x240] sm:$0xff]
    %v5443 = vld [vmem:[%s5369 + $0x248] sm:$0xff]
    %v5444 = vld [vmem:[%s5369 + $0x250] sm:$0xff]
    %v5445 = vld [vmem:[%s5369 + $0x258] sm:$0xff]
    %v5446 = vld [vmem:[%s5369 + $0x260] sm:$0xff]
    %v5447 = vld [vmem:[%s5369 + $0x268] sm:$0xff]
    %v5448 = vld [vmem:[%s5369 + $0x270] sm:$0xff]
    %v5449 = vld [vmem:[%s5369 + $0x278] sm:$0xff]
    %v5450 = vld [vmem:[%s5369 + $0x280] sm:$0xff]
    %v5451 = vld [vmem:[%s5369 + $0x288] sm:$0xff]
    %v5452 = vld [vmem:[%s5369 + $0x290] sm:$0xff]
    %v5453 = vld [vmem:[%s5369 + $0x298] sm:$0xff]
    %v5454 = vld [vmem:[%s5369 + $0x2a0] sm:$0xff]
    %v5455 = vld [vmem:[%s5369 + $0x2a8] sm:$0xff]
    %v5456 = vld [vmem:[%s5369 + $0x2b0] sm:$0xff]
    %v5457 = vld [vmem:[%s5369 + $0x2b8] sm:$0xff]
    %v5458 = vld [vmem:[%s5369 + $0x2c0] sm:$0xff]
    %v5459 = vld [vmem:[%s5369 + $0x2c8] sm:$0xff]
    %v5460 = vld [vmem:[%s5369 + $0x2d0] sm:$0xff]
    %v5461 = vld [vmem:[%s5369 + $0x2d8] sm:$0xff]
    %v5462 = vld [vmem:[%s5369 + $0x2e0] sm:$0xff]
    %v5463 = vld [vmem:[%s5369 + $0x2e8] sm:$0xff]
    %v5464 = vld [vmem:[%s5369 + $0x2f0] sm:$0xff]
    %v5465 = vld [vmem:[%s5369 + $0x2f8] sm:$0xff]
    %v5466 = vld [vmem:[%s5369 + $0x300] sm:$0xff]
    %v5467 = vld [vmem:[%s5369 + $0x308] sm:$0xff]
    %v5468 = vld [vmem:[%s5369 + $0x310] sm:$0xff]
    %v5469 = vld [vmem:[%s5369 + $0x318] sm:$0xff]
    %v5470 = vld [vmem:[%s5369 + $0x320] sm:$0xff]
    %v5471 = vld [vmem:[%s5369 + $0x328] sm:$0xff]
    %v5472 = vld [vmem:[%s5369 + $0x330] sm:$0xff]
    %v5473 = vld [vmem:[%s5369 + $0x338] sm:$0xff]
    %v5474 = vld [vmem:[%s5369 + $0x340] sm:$0xff]
    %v5475 = vld [vmem:[%s5369 + $0x348] sm:$0xff]
    %v5476 = vld [vmem:[%s5369 + $0x350] sm:$0xff]
    %v5477 = vld [vmem:[%s5369 + $0x358] sm:$0xff]
    %v5478 = vld [vmem:[%s5369 + $0x360] sm:$0xff]
    %v5479 = vld [vmem:[%s5369 + $0x368] sm:$0xff]
    %v5480 = vld [vmem:[%s5369 + $0x370] sm:$0xff]
    %v5481 = vld [vmem:[%s5369 + $0x378] sm:$0xff]
    %v5482 = vld [vmem:[%s5369 + $0x380] sm:$0xff]
    %v5483 = vld [vmem:[%s5369 + $0x388] sm:$0xff]
    %v5484 = vld [vmem:[%s5369 + $0x390] sm:$0xff]
    %v5485 = vld [vmem:[%s5369 + $0x398] sm:$0xff]
    %v5486 = vld [vmem:[%s5369 + $0x3a0] sm:$0xff]
    %v5487 = vld [vmem:[%s5369 + $0x3a8] sm:$0xff]
    %v5488 = vld [vmem:[%s5369 + $0x3b0] sm:$0xff]
    %v5489 = vld [vmem:[%s5369 + $0x3b8] sm:$0xff]
    %v5490 = vld [vmem:[%s5369 + $0x3c0] sm:$0xff]
    %v5491 = vld [vmem:[%s5369 + $0x3c8] sm:$0xff]
    %v5492 = vld [vmem:[%s5369 + $0x3d0] sm:$0xff]
    %v5493 = vld [vmem:[%s5369 + $0x3d8] sm:$0xff]
    %v5494 = vld [vmem:[%s5369 + $0x3e0] sm:$0xff]
    %v5495 = vld [vmem:[%s5369 + $0x3e8] sm:$0xff]
    %v5496 = vld [vmem:[%s5369 + $0x3f0] sm:$0xff]
    %v5497 = vld [vmem:[%s5369 + $0x3f8] sm:$0xff]
    %v5498 = vld [vmem:[%s5369 + $0x400] sm:$0xff]
    %v5499 = vld [vmem:[%s5369 + $0x408] sm:$0xff]
    %v5500 = vld [vmem:[%s5369 + $0x410] sm:$0xff]
    %v5501 = vld [vmem:[%s5369 + $0x418] sm:$0xff]
    %v5502 = vld [vmem:[%s5369 + $0x420] sm:$0xff]
    %v5503 = vld [vmem:[%s5369 + $0x428] sm:$0xff]
    %v5504 = vld [vmem:[%s5369 + $0x430] sm:$0xff]
    %v5505 = vld [vmem:[%s5369 + $0x438] sm:$0xff]
    %v5506 = vld [vmem:[%s5369 + $0x440] sm:$0xff]
    %v5507 = vld [vmem:[%s5369 + $0x448] sm:$0xff]
    %v5508 = vld [vmem:[%s5369 + $0x450] sm:$0xff]
    %v5509 = vld [vmem:[%s5369 + $0x458] sm:$0xff]
    %v5510 = vld [vmem:[%s5369 + $0x460] sm:$0xff]
    %v5511 = vld [vmem:[%s5369 + $0x468] sm:$0xff]
    %v5512 = vld [vmem:[%s5369 + $0x470] sm:$0xff]
    %v5513 = vld [vmem:[%s5369 + $0x478] sm:$0xff]
    %v5514 = vld [vmem:[%s5369 + $0x480] sm:$0xff]
    %v5515 = vld [vmem:[%s5369 + $0x488] sm:$0xff]
    %v5516 = vld [vmem:[%s5369 + $0x490] sm:$0xff]
    %v5517 = vld [vmem:[%s5369 + $0x498] sm:$0xff]
    %v5518 = vld [vmem:[%s5369 + $0x4a0] sm:$0xff]
    %v5519 = vld [vmem:[%s5369 + $0x4a8] sm:$0xff]
    %v5520 = vld [vmem:[%s5369 + $0x4b0] sm:$0xff]
    %v5521 = vld [vmem:[%s5369 + $0x4b8] sm:$0xff]
    %v5522 = vld [vmem:[%s5369 + $0x4c0] sm:$0xff]
    %v5523 = vld [vmem:[%s5369 + $0x4c8] sm:$0xff]
    %v5524 = vld [vmem:[%s5369 + $0x4d0] sm:$0xff]
    %v5525 = vld [vmem:[%s5369 + $0x4d8] sm:$0xff]
    %v5526 = vld [vmem:[%s5369 + $0x4e0] sm:$0xff]
    %v5527 = vld [vmem:[%s5369 + $0x4e8] sm:$0xff]
    %v5528 = vld [vmem:[%s5369 + $0x4f0] sm:$0xff]
    %v5529 = vld [vmem:[%s5369 + $0x4f8] sm:$0xff]
    %v5530 = vld [vmem:[%s5369 + $0x500] sm:$0xff]
    %v5531 = vld [vmem:[%s5369 + $0x508] sm:$0xff]
    %v5532 = vld [vmem:[%s5369 + $0x510] sm:$0xff]
    %v5533 = vld [vmem:[%s5369 + $0x518] sm:$0xff]
    %v5534 = vld [vmem:[%s5369 + $0x520] sm:$0xff]
    %v5535 = vld [vmem:[%s5369 + $0x528] sm:$0xff]
    %v5536 = vld [vmem:[%s5369 + $0x530] sm:$0xff]
    %v5537 = vld [vmem:[%s5369 + $0x538] sm:$0xff]
    %v5538 = vld [vmem:[%s5369 + $0x540] sm:$0xff]
    %v5539 = vld [vmem:[%s5369 + $0x548] sm:$0xff]
    %v5540 = vld [vmem:[%s5369 + $0x550] sm:$0xff]
    %v5541 = vld [vmem:[%s5369 + $0x558] sm:$0xff]
    %v5542 = vld [vmem:[%s5369 + $0x560] sm:$0xff]
    %v5543 = vld [vmem:[%s5369 + $0x568] sm:$0xff]
    %v5544 = vld [vmem:[%s5369 + $0x570] sm:$0xff]
    %v5545 = vld [vmem:[%s5369 + $0x578] sm:$0xff]
    %v5546 = vld [vmem:[%s5369 + $0x580] sm:$0xff]
    %v5547 = vld [vmem:[%s5369 + $0x588] sm:$0xff]
    %v5548 = vld [vmem:[%s5369 + $0x590] sm:$0xff]
    %v5549 = vld [vmem:[%s5369 + $0x598] sm:$0xff]
    %v5550 = vld [vmem:[%s5369 + $0x5a0] sm:$0xff]
    %v5551 = vld [vmem:[%s5369 + $0x5a8] sm:$0xff]
    %v5552 = vld [vmem:[%s5369 + $0x5b0] sm:$0xff]
    %v5553 = vld [vmem:[%s5369 + $0x5b8] sm:$0xff]
    %v5554 = vld [vmem:[%s5369 + $0x5c0] sm:$0xff]
    %v5555 = vld [vmem:[%s5369 + $0x5c8] sm:$0xff]
    %v5556 = vld [vmem:[%s5369 + $0x5d0] sm:$0xff]
    %v5557 = vld [vmem:[%s5369 + $0x5d8] sm:$0xff]
    %v5558 = vld [vmem:[%s5369 + $0x5e0] sm:$0xff]
    %v5559 = vld [vmem:[%s5369 + $0x5e8] sm:$0xff]
    %v5560 = vld [vmem:[%s5369 + $0x5f0] sm:$0xff]
    %v5561 = vld [vmem:[%s5369 + $0x5f8] sm:$0xff]
    %v5562 = vld [vmem:[%s5369 + $0x600] sm:$0xff]
    %v5563 = vld [vmem:[%s5369 + $0x608] sm:$0xff]
    %v5564 = vld [vmem:[%s5369 + $0x610] sm:$0xff]
    %v5565 = vld [vmem:[%s5369 + $0x618] sm:$0xff]
    %v5566 = vld [vmem:[%s5369 + $0x620] sm:$0xff]
    %v5567 = vld [vmem:[%s5369 + $0x628] sm:$0xff]
    %v5568 = vld [vmem:[%s5369 + $0x630] sm:$0xff]
    %v5569 = vld [vmem:[%s5369 + $0x638] sm:$0xff]
    %v5570 = vld [vmem:[%s5369 + $0x640] sm:$0xff]
    %v5571 = vld [vmem:[%s5369 + $0x648] sm:$0xff]
    %v5572 = vld [vmem:[%s5369 + $0x650] sm:$0xff]
    %v5573 = vld [vmem:[%s5369 + $0x658] sm:$0xff]
    %v5574 = vld [vmem:[%s5369 + $0x660] sm:$0xff]
    %v5575 = vld [vmem:[%s5369 + $0x668] sm:$0xff]
    %v5576 = vld [vmem:[%s5369 + $0x670] sm:$0xff]
    %v5577 = vld [vmem:[%s5369 + $0x678] sm:$0xff]
    %v5578 = vld [vmem:[%s5369 + $0x680] sm:$0xff]
    %v5579 = vld [vmem:[%s5369 + $0x688] sm:$0xff]
    %v5580 = vld [vmem:[%s5369 + $0x690] sm:$0xff]
    %v5581 = vld [vmem:[%s5369 + $0x698] sm:$0xff]
    %v5582 = vld [vmem:[%s5369 + $0x6a0] sm:$0xff]
    %v5583 = vld [vmem:[%s5369 + $0x6a8] sm:$0xff]
    %v5584 = vld [vmem:[%s5369 + $0x6b0] sm:$0xff]
    %v5585 = vld [vmem:[%s5369 + $0x6b8] sm:$0xff]
    %v5586 = vld [vmem:[%s5369 + $0x6c0] sm:$0xff]
    %v5587 = vld [vmem:[%s5369 + $0x6c8] sm:$0xff]
    %v5588 = vld [vmem:[%s5369 + $0x6d0] sm:$0xff]
    %v5589 = vld [vmem:[%s5369 + $0x6d8] sm:$0xff]
    %v5590 = vld [vmem:[%s5369 + $0x6e0] sm:$0xff]
    %v5591 = vld [vmem:[%s5369 + $0x6e8] sm:$0xff]
    %v5592 = vld [vmem:[%s5369 + $0x6f0] sm:$0xff]
    %v5593 = vld [vmem:[%s5369 + $0x6f8] sm:$0xff]
    %v5594 = vld [vmem:[%s5369 + $0x700] sm:$0xff]
    %v5595 = vld [vmem:[%s5369 + $0x708] sm:$0xff]
    %v5596 = vld [vmem:[%s5369 + $0x710] sm:$0xff]
    %v5597 = vld [vmem:[%s5369 + $0x718] sm:$0xff]
    %v5598 = vld [vmem:[%s5369 + $0x720] sm:$0xff]
    %v5599 = vld [vmem:[%s5369 + $0x728] sm:$0xff]
    %v5600 = vld [vmem:[%s5369 + $0x730] sm:$0xff]
    %v5601 = vld [vmem:[%s5369 + $0x738] sm:$0xff]
    %v5602 = vld [vmem:[%s5369 + $0x740] sm:$0xff]
    %v5603 = vld [vmem:[%s5369 + $0x748] sm:$0xff]
    %v5604 = vld [vmem:[%s5369 + $0x750] sm:$0xff]
    %v5605 = vld [vmem:[%s5369 + $0x758] sm:$0xff]
    %v5606 = vld [vmem:[%s5369 + $0x760] sm:$0xff]
    %v5607 = vld [vmem:[%s5369 + $0x768] sm:$0xff]
    %v5608 = vld [vmem:[%s5369 + $0x770] sm:$0xff]
    %v5609 = vld [vmem:[%s5369 + $0x778] sm:$0xff]
    %v5610 = vld [vmem:[%s5369 + $0x780] sm:$0xff]
    %v5611 = vld [vmem:[%s5369 + $0x788] sm:$0xff]
    %v5612 = vld [vmem:[%s5369 + $0x790] sm:$0xff]
    %v5613 = vld [vmem:[%s5369 + $0x798] sm:$0xff]
    %v5614 = vld [vmem:[%s5369 + $0x7a0] sm:$0xff]
    %v5615 = vld [vmem:[%s5369 + $0x7a8] sm:$0xff]
    %v5616 = vld [vmem:[%s5369 + $0x7b0] sm:$0xff]
    %v5617 = vld [vmem:[%s5369 + $0x7b8] sm:$0xff]
    %v5618 = vld [vmem:[%s5369 + $0x7c0] sm:$0xff]
    %v5619 = vld [vmem:[%s5369 + $0x7c8] sm:$0xff]
    %v5620 = vld [vmem:[%s5369 + $0x7d0] sm:$0xff]
    %v5621 = vld [vmem:[%s5369 + $0x7d8] sm:$0xff]
    %v5622 = vld [vmem:[%s5369 + $0x7e0] sm:$0xff]
    %v5623 = vld [vmem:[%s5369 + $0x7e8] sm:$0xff]
    %v5624 = vld [vmem:[%s5369 + $0x7f0] sm:$0xff]
    %v5625 = vld [vmem:[%s5369 + $0x7f8] sm:$0xff]
    %vm5642 = vcmask 1045504
    %v5643 = vrot.slane %v5353, 2
    %v5644 = vrot.slane %v5357, 2
    %v5645 = vsel %vm5642, %v5643, %v5644
    %v5646 = vrot.slane %v5354, 2
    %v5647 = vrot.slane %v5358, 2
    %v5648 = vsel %vm5642, %v5646, %v5647
    %v5649 = vrot.slane %v5355, 2
    %v5650 = vrot.slane %v5359, 2
    %v5651 = vsel %vm5642, %v5649, %v5650
    %v5652 = vrot.slane %v5356, 2
    %v5653 = vrot.slane %v5360, 2
    %v5654 = vsel %vm5642, %v5652, %v5653
    %v5655 = vrot.slane %v5361, 2
    %v5656 = vrot.slane %v5365, 2
    %v5657 = vsel %vm5642, %v5655, %v5656
    %v5658 = vrot.slane %v5362, 2
    %v5659 = vrot.slane %v5366, 2
    %v5660 = vsel %vm5642, %v5658, %v5659
    %v5661 = vrot.slane %v5363, 2
    %v5662 = vrot.slane %v5367, 2
    %v5663 = vsel %vm5642, %v5661, %v5662
    %v5664 = vrot.slane %v5364, 2
    %v5665 = vrot.slane %v5368, 2
    %v5666 = vsel %vm5642, %v5664, %v5665
    %5675 = vmatpush.msra.mxu0 %v5430
    %5676 = vmatpush.msra.mxu0 %v5426
    %5677 = vmatpush.msra.mxu0 %v5422
    %5678 = vmatpush.msra.mxu0 %v5418
    %5679 = vmatpush.msra.mxu0 %v5414
    %5680 = vmatpush.msra.mxu0 %v5410
    %5681 = vmatpush.msra.mxu0 %v5406
    %5682 = vmatpush.msra.mxu0 %v5402
    %5683 = vmatpush.msra.mxu0 %v5398
    %5684 = vmatpush.msra.mxu0 %v5394
    %5685 = vmatpush.msra.mxu0 %v5390
    %5686 = vmatpush.msra.mxu0 %v5386
    %5687 = vmatpush.msra.mxu0 %v5382
    %5688 = vmatpush.msra.mxu0 %v5378
    %5689 = vmatpush.msra.mxu0 %v5374
    %5690 = vmatpush.msra.mxu0 %v5370
    %5691 = vmatmul.f32.gmra.mxu0 %v5645
    %v5692 = vpop.f32.mrf.mxu0
    %v5693 = vadd.f32 0.0, %v5692
    %5694 = vmatmul.f32.gmra.mxu0 %v5657
    %v5695 = vpop.f32.mrf.mxu0
    %v5696 = vadd.f32 0.0, %v5695
    %5697 = vdwg.mxu0
    %5698 = vmatpush.msra.mxu0 %v5494
    %5699 = vmatpush.msra.mxu0 %v5490
    %5700 = vmatpush.msra.mxu0 %v5486
    %5701 = vmatpush.msra.mxu0 %v5482
    %5702 = vmatpush.msra.mxu0 %v5478
    %5703 = vmatpush.msra.mxu0 %v5474
    %5704 = vmatpush.msra.mxu0 %v5470
    %5705 = vmatpush.msra.mxu0 %v5466
    %5706 = vmatpush.msra.mxu0 %v5462
    %5707 = vmatpush.msra.mxu0 %v5458
    %5708 = vmatpush.msra.mxu0 %v5454
    %5709 = vmatpush.msra.mxu0 %v5450
    %5710 = vmatpush.msra.mxu0 %v5446
    %5711 = vmatpush.msra.mxu0 %v5442
    %5712 = vmatpush.msra.mxu0 %v5438
    %5713 = vmatpush.msra.mxu0 %v5434
    %5714 = vmatmul.f32.gmra.mxu0 %v5648
    %v5715 = vpop.f32.mrf.mxu0
    %v5716 = vadd.f32 %v5693, %v5715
    %5717 = vmatmul.f32.gmra.mxu0 %v5660
    %v5718 = vpop.f32.mrf.mxu0
    %v5719 = vadd.f32 %v5696, %v5718
    %5720 = vdwg.mxu0
    %5721 = vmatpush.msra.mxu0 %v5558
    %5722 = vmatpush.msra.mxu0 %v5554
    %5723 = vmatpush.msra.mxu0 %v5550
    %5724 = vmatpush.msra.mxu0 %v5546
    %5725 = vmatpush.msra.mxu0 %v5542
    %5726 = vmatpush.msra.mxu0 %v5538
    %5727 = vmatpush.msra.mxu0 %v5534
    %5728 = vmatpush.msra.mxu0 %v5530
    %5729 = vmatpush.msra.mxu0 %v5526
    %5730 = vmatpush.msra.mxu0 %v5522
    %5731 = vmatpush.msra.mxu0 %v5518
    %5732 = vmatpush.msra.mxu0 %v5514
    %5733 = vmatpush.msra.mxu0 %v5510
    %5734 = vmatpush.msra.mxu0 %v5506
    %5735 = vmatpush.msra.mxu0 %v5502
    %5736 = vmatpush.msra.mxu0 %v5498
    %5737 = vmatmul.f32.gmra.mxu0 %v5651
    %v5738 = vpop.f32.mrf.mxu0
    %v5739 = vadd.f32 %v5716, %v5738
    %5740 = vmatmul.f32.gmra.mxu0 %v5663
    %v5741 = vpop.f32.mrf.mxu0
    %v5742 = vadd.f32 %v5719, %v5741
    %5743 = vdwg.mxu0
    %5744 = vmatpush.msra.mxu0 %v5622
    %5745 = vmatpush.msra.mxu0 %v5618
    %5746 = vmatpush.msra.mxu0 %v5614
    %5747 = vmatpush.msra.mxu0 %v5610
    %5748 = vmatpush.msra.mxu0 %v5606
    %5749 = vmatpush.msra.mxu0 %v5602
    %5750 = vmatpush.msra.mxu0 %v5598
    %5751 = vmatpush.msra.mxu0 %v5594
    %5752 = vmatpush.msra.mxu0 %v5590
    %5753 = vmatpush.msra.mxu0 %v5586
    %5754 = vmatpush.msra.mxu0 %v5582
    %5755 = vmatpush.msra.mxu0 %v5578
    %5756 = vmatpush.msra.mxu0 %v5574
    %5757 = vmatpush.msra.mxu0 %v5570
    %5758 = vmatpush.msra.mxu0 %v5566
    %5759 = vmatpush.msra.mxu0 %v5562
    %5760 = vmatmul.f32.gmra.mxu0 %v5654
    %v5761 = vpop.f32.mrf.mxu0
    %v5762 = vadd.f32 %v5739, %v5761
    %5763 = vmatmul.f32.gmra.mxu0 %v5666
    %v5764 = vpop.f32.mrf.mxu0
    %v5765 = vadd.f32 %v5742, %v5764
    %5766 = vdwg.mxu0
    %5767 = vmatpush.msra.mxu0 %v5431
    %5768 = vmatpush.msra.mxu0 %v5427
    %5769 = vmatpush.msra.mxu0 %v5423
    %5770 = vmatpush.msra.mxu0 %v5419
    %5771 = vmatpush.msra.mxu0 %v5415
    %5772 = vmatpush.msra.mxu0 %v5411
    %5773 = vmatpush.msra.mxu0 %v5407
    %5774 = vmatpush.msra.mxu0 %v5403
    %5775 = vmatpush.msra.mxu0 %v5399
    %5776 = vmatpush.msra.mxu0 %v5395
    %5777 = vmatpush.msra.mxu0 %v5391
    %5778 = vmatpush.msra.mxu0 %v5387
    %5779 = vmatpush.msra.mxu0 %v5383
    %5780 = vmatpush.msra.mxu0 %v5379
    %5781 = vmatpush.msra.mxu0 %v5375
    %5782 = vmatpush.msra.mxu0 %v5371
    %5783 = vmatmul.f32.gmra.mxu0 %v5645
    %v5784 = vpop.f32.mrf.mxu0
    %v5785 = vadd.f32 0.0, %v5784
    %5786 = vmatmul.f32.gmra.mxu0 %v5657
    %v5787 = vpop.f32.mrf.mxu0
    %v5788 = vadd.f32 0.0, %v5787
    %5789 = vdwg.mxu0
    %5790 = vmatpush.msra.mxu0 %v5495
    %5791 = vmatpush.msra.mxu0 %v5491
    %5792 = vmatpush.msra.mxu0 %v5487
    %5793 = vmatpush.msra.mxu0 %v5483
    %5794 = vmatpush.msra.mxu0 %v5479
    %5795 = vmatpush.msra.mxu0 %v5475
    %5796 = vmatpush.msra.mxu0 %v5471
    %5797 = vmatpush.msra.mxu0 %v5467
    %5798 = vmatpush.msra.mxu0 %v5463
    %5799 = vmatpush.msra.mxu0 %v5459
    %5800 = vmatpush.msra.mxu0 %v5455
    %5801 = vmatpush.msra.mxu0 %v5451
    %5802 = vmatpush.msra.mxu0 %v5447
    %5803 = vmatpush.msra.mxu0 %v5443
    %5804 = vmatpush.msra.mxu0 %v5439
    %5805 = vmatpush.msra.mxu0 %v5435
    %5806 = vmatmul.f32.gmra.mxu0 %v5648
    %v5807 = vpop.f32.mrf.mxu0
    %v5808 = vadd.f32 %v5785, %v5807
    %5809 = vmatmul.f32.gmra.mxu0 %v5660
    %v5810 = vpop.f32.mrf.mxu0
    %v5811 = vadd.f32 %v5788, %v5810
    %5812 = vdwg.mxu0
    %5813 = vmatpush.msra.mxu0 %v5559
    %5814 = vmatpush.msra.mxu0 %v5555
    %5815 = vmatpush.msra.mxu0 %v5551
    %5816 = vmatpush.msra.mxu0 %v5547
    %5817 = vmatpush.msra.mxu0 %v5543
    %5818 = vmatpush.msra.mxu0 %v5539
    %5819 = vmatpush.msra.mxu0 %v5535
    %5820 = vmatpush.msra.mxu0 %v5531
    %5821 = vmatpush.msra.mxu0 %v5527
    %5822 = vmatpush.msra.mxu0 %v5523
    %5823 = vmatpush.msra.mxu0 %v5519
    %5824 = vmatpush.msra.mxu0 %v5515
    %5825 = vmatpush.msra.mxu0 %v5511
    %5826 = vmatpush.msra.mxu0 %v5507
    %5827 = vmatpush.msra.mxu0 %v5503
    %5828 = vmatpush.msra.mxu0 %v5499
    %5829 = vmatmul.f32.gmra.mxu0 %v5651
    %v5830 = vpop.f32.mrf.mxu0
    %v5831 = vadd.f32 %v5808, %v5830
    %5832 = vmatmul.f32.gmra.mxu0 %v5663
    %v5833 = vpop.f32.mrf.mxu0
    %v5834 = vadd.f32 %v5811, %v5833
    %5835 = vdwg.mxu0
    %5836 = vmatpush.msra.mxu0 %v5623
    %5837 = vmatpush.msra.mxu0 %v5619
    %5838 = vmatpush.msra.mxu0 %v5615
    %5839 = vmatpush.msra.mxu0 %v5611
    %5840 = vmatpush.msra.mxu0 %v5607
    %5841 = vmatpush.msra.mxu0 %v5603
    %5842 = vmatpush.msra.mxu0 %v5599
    %5843 = vmatpush.msra.mxu0 %v5595
    %5844 = vmatpush.msra.mxu0 %v5591
    %5845 = vmatpush.msra.mxu0 %v5587
    %5846 = vmatpush.msra.mxu0 %v5583
    %5847 = vmatpush.msra.mxu0 %v5579
    %5848 = vmatpush.msra.mxu0 %v5575
    %5849 = vmatpush.msra.mxu0 %v5571
    %5850 = vmatpush.msra.mxu0 %v5567
    %5851 = vmatpush.msra.mxu0 %v5563
    %5852 = vmatmul.f32.gmra.mxu0 %v5654
    %v5853 = vpop.f32.mrf.mxu0
    %v5854 = vadd.f32 %v5831, %v5853
    %5855 = vmatmul.f32.gmra.mxu0 %v5666
    %v5856 = vpop.f32.mrf.mxu0
    %v5857 = vadd.f32 %v5834, %v5856
    %5858 = vdwg.mxu0
    %5859 = vmatpush.msra.mxu0 %v5432
    %5860 = vmatpush.msra.mxu0 %v5428
    %5861 = vmatpush.msra.mxu0 %v5424
    %5862 = vmatpush.msra.mxu0 %v5420
    %5863 = vmatpush.msra.mxu0 %v5416
    %5864 = vmatpush.msra.mxu0 %v5412
    %5865 = vmatpush.msra.mxu0 %v5408
    %5866 = vmatpush.msra.mxu0 %v5404
    %5867 = vmatpush.msra.mxu0 %v5400
    %5868 = vmatpush.msra.mxu0 %v5396
    %5869 = vmatpush.msra.mxu0 %v5392
    %5870 = vmatpush.msra.mxu0 %v5388
    %5871 = vmatpush.msra.mxu0 %v5384
    %5872 = vmatpush.msra.mxu0 %v5380
    %5873 = vmatpush.msra.mxu0 %v5376
    %5874 = vmatpush.msra.mxu0 %v5372
    %5875 = vmatmul.f32.gmra.mxu0 %v5645
    %v5876 = vpop.f32.mrf.mxu0
    %v5877 = vadd.f32 0.0, %v5876
    %5878 = vmatmul.f32.gmra.mxu0 %v5657
    %v5879 = vpop.f32.mrf.mxu0
    %v5880 = vadd.f32 0.0, %v5879
    %5881 = vdwg.mxu0
    %5882 = vmatpush.msra.mxu0 %v5496
    %5883 = vmatpush.msra.mxu0 %v5492
    %5884 = vmatpush.msra.mxu0 %v5488
    %5885 = vmatpush.msra.mxu0 %v5484
    %5886 = vmatpush.msra.mxu0 %v5480
    %5887 = vmatpush.msra.mxu0 %v5476
    %5888 = vmatpush.msra.mxu0 %v5472
    %5889 = vmatpush.msra.mxu0 %v5468
    %5890 = vmatpush.msra.mxu0 %v5464
    %5891 = vmatpush.msra.mxu0 %v5460
    %5892 = vmatpush.msra.mxu0 %v5456
    %5893 = vmatpush.msra.mxu0 %v5452
    %5894 = vmatpush.msra.mxu0 %v5448
    %5895 = vmatpush.msra.mxu0 %v5444
    %5896 = vmatpush.msra.mxu0 %v5440
    %5897 = vmatpush.msra.mxu0 %v5436
    %5898 = vmatmul.f32.gmra.mxu0 %v5648
    %v5899 = vpop.f32.mrf.mxu0
    %v5900 = vadd.f32 %v5877, %v5899
    %5901 = vmatmul.f32.gmra.mxu0 %v5660
    %v5902 = vpop.f32.mrf.mxu0
    %v5903 = vadd.f32 %v5880, %v5902
    %5904 = vdwg.mxu0
    %5905 = vmatpush.msra.mxu0 %v5560
    %5906 = vmatpush.msra.mxu0 %v5556
    %5907 = vmatpush.msra.mxu0 %v5552
    %5908 = vmatpush.msra.mxu0 %v5548
    %5909 = vmatpush.msra.mxu0 %v5544
    %5910 = vmatpush.msra.mxu0 %v5540
    %5911 = vmatpush.msra.mxu0 %v5536
    %5912 = vmatpush.msra.mxu0 %v5532
    %5913 = vmatpush.msra.mxu0 %v5528
    %5914 = vmatpush.msra.mxu0 %v5524
    %5915 = vmatpush.msra.mxu0 %v5520
    %5916 = vmatpush.msra.mxu0 %v5516
    %5917 = vmatpush.msra.mxu0 %v5512
    %5918 = vmatpush.msra.mxu0 %v5508
    %5919 = vmatpush.msra.mxu0 %v5504
    %5920 = vmatpush.msra.mxu0 %v5500
    %5921 = vmatmul.f32.gmra.mxu0 %v5651
    %v5922 = vpop.f32.mrf.mxu0
    %v5923 = vadd.f32 %v5900, %v5922
    %5924 = vmatmul.f32.gmra.mxu0 %v5663
    %v5925 = vpop.f32.mrf.mxu0
    %v5926 = vadd.f32 %v5903, %v5925
    %5927 = vdwg.mxu0
    %5928 = vmatpush.msra.mxu0 %v5624
    %5929 = vmatpush.msra.mxu0 %v5620
    %5930 = vmatpush.msra.mxu0 %v5616
    %5931 = vmatpush.msra.mxu0 %v5612
    %5932 = vmatpush.msra.mxu0 %v5608
    %5933 = vmatpush.msra.mxu0 %v5604
    %5934 = vmatpush.msra.mxu0 %v5600
    %5935 = vmatpush.msra.mxu0 %v5596
    %5936 = vmatpush.msra.mxu0 %v5592
    %5937 = vmatpush.msra.mxu0 %v5588
    %5938 = vmatpush.msra.mxu0 %v5584
    %5939 = vmatpush.msra.mxu0 %v5580
    %5940 = vmatpush.msra.mxu0 %v5576
    %5941 = vmatpush.msra.mxu0 %v5572
    %5942 = vmatpush.msra.mxu0 %v5568
    %5943 = vmatpush.msra.mxu0 %v5564
    %5944 = vmatmul.f32.gmra.mxu0 %v5654
    %v5945 = vpop.f32.mrf.mxu0
    %v5946 = vadd.f32 %v5923, %v5945
    %5947 = vmatmul.f32.gmra.mxu0 %v5666
    %v5948 = vpop.f32.mrf.mxu0
    %v5949 = vadd.f32 %v5926, %v5948
    %5950 = vdwg.mxu0
    %5951 = vmatpush.msra.mxu0 %v5433
    %5952 = vmatpush.msra.mxu0 %v5429
    %5953 = vmatpush.msra.mxu0 %v5425
    %5954 = vmatpush.msra.mxu0 %v5421
    %5955 = vmatpush.msra.mxu0 %v5417
    %5956 = vmatpush.msra.mxu0 %v5413
    %5957 = vmatpush.msra.mxu0 %v5409
    %5958 = vmatpush.msra.mxu0 %v5405
    %5959 = vmatpush.msra.mxu0 %v5401
    %5960 = vmatpush.msra.mxu0 %v5397
    %5961 = vmatpush.msra.mxu0 %v5393
    %5962 = vmatpush.msra.mxu0 %v5389
    %5963 = vmatpush.msra.mxu0 %v5385
    %5964 = vmatpush.msra.mxu0 %v5381
    %5965 = vmatpush.msra.mxu0 %v5377
    %5966 = vmatpush.msra.mxu0 %v5373
    %5967 = vmatmul.f32.gmra.mxu0 %v5645
    %v5968 = vpop.f32.mrf.mxu0
    %v5969 = vadd.f32 0.0, %v5968
    %5970 = vmatmul.f32.gmra.mxu0 %v5657
    %v5971 = vpop.f32.mrf.mxu0
    %v5972 = vadd.f32 0.0, %v5971
    %5973 = vdwg.mxu0
    %5974 = vmatpush.msra.mxu0 %v5497
    %5975 = vmatpush.msra.mxu0 %v5493
    %5976 = vmatpush.msra.mxu0 %v5489
    %5977 = vmatpush.msra.mxu0 %v5485
    %5978 = vmatpush.msra.mxu0 %v5481
    %5979 = vmatpush.msra.mxu0 %v5477
    %5980 = vmatpush.msra.mxu0 %v5473
    %5981 = vmatpush.msra.mxu0 %v5469
    %5982 = vmatpush.msra.mxu0 %v5465
    %5983 = vmatpush.msra.mxu0 %v5461
    %5984 = vmatpush.msra.mxu0 %v5457
    %5985 = vmatpush.msra.mxu0 %v5453
    %5986 = vmatpush.msra.mxu0 %v5449
    %5987 = vmatpush.msra.mxu0 %v5445
    %5988 = vmatpush.msra.mxu0 %v5441
    %5989 = vmatpush.msra.mxu0 %v5437
    %5990 = vmatmul.f32.gmra.mxu0 %v5648
    %v5991 = vpop.f32.mrf.mxu0
    %v5992 = vadd.f32 %v5969, %v5991
    %5993 = vmatmul.f32.gmra.mxu0 %v5660
    %v5994 = vpop.f32.mrf.mxu0
    %v5995 = vadd.f32 %v5972, %v5994
    %5996 = vdwg.mxu0
    %5997 = vmatpush.msra.mxu0 %v5561
    %5998 = vmatpush.msra.mxu0 %v5557
    %5999 = vmatpush.msra.mxu0 %v5553
    %6000 = vmatpush.msra.mxu0 %v5549
    %6001 = vmatpush.msra.mxu0 %v5545
    %6002 = vmatpush.msra.mxu0 %v5541
    %6003 = vmatpush.msra.mxu0 %v5537
    %6004 = vmatpush.msra.mxu0 %v5533
    %6005 = vmatpush.msra.mxu0 %v5529
    %6006 = vmatpush.msra.mxu0 %v5525
    %6007 = vmatpush.msra.mxu0 %v5521
    %6008 = vmatpush.msra.mxu0 %v5517
    %6009 = vmatpush.msra.mxu0 %v5513
    %6010 = vmatpush.msra.mxu0 %v5509
    %6011 = vmatpush.msra.mxu0 %v5505
    %6012 = vmatpush.msra.mxu0 %v5501
    %6013 = vmatmul.f32.gmra.mxu0 %v5651
    %v6014 = vpop.f32.mrf.mxu0
    %v6015 = vadd.f32 %v5992, %v6014
    %6016 = vmatmul.f32.gmra.mxu0 %v5663
    %v6017 = vpop.f32.mrf.mxu0
    %v6018 = vadd.f32 %v5995, %v6017
    %6019 = vdwg.mxu0
    %6020 = vmatpush.msra.mxu0 %v5625
    %6021 = vmatpush.msra.mxu0 %v5621
    %6022 = vmatpush.msra.mxu0 %v5617
    %6023 = vmatpush.msra.mxu0 %v5613
    %6024 = vmatpush.msra.mxu0 %v5609
    %6025 = vmatpush.msra.mxu0 %v5605
    %6026 = vmatpush.msra.mxu0 %v5601
    %6027 = vmatpush.msra.mxu0 %v5597
    %6028 = vmatpush.msra.mxu0 %v5593
    %6029 = vmatpush.msra.mxu0 %v5589
    %6030 = vmatpush.msra.mxu0 %v5585
    %6031 = vmatpush.msra.mxu0 %v5581
    %6032 = vmatpush.msra.mxu0 %v5577
    %6033 = vmatpush.msra.mxu0 %v5573
    %6034 = vmatpush.msra.mxu0 %v5569
    %6035 = vmatpush.msra.mxu0 %v5565
    %6036 = vmatmul.f32.gmra.mxu0 %v5654
    %v6037 = vpop.f32.mrf.mxu0
    %v6038 = vadd.f32 %v6015, %v6037
    %6039 = vmatmul.f32.gmra.mxu0 %v5666
    %v6040 = vpop.f32.mrf.mxu0
    %v6041 = vadd.f32 %v6018, %v6040
    %6042 = vdwg.mxu0
    %6043 = vmatpush.msra.mxu0 %v5157
    %6044 = vmatpush.msra.mxu0 %v5153
    %6045 = vmatpush.msra.mxu0 %v5149
    %6046 = vmatpush.msra.mxu0 %v5145
    %6047 = vmatpush.msra.mxu0 %v5141
    %6048 = vmatpush.msra.mxu0 %v5137
    %6049 = vmatpush.msra.mxu0 %v5133
    %6050 = vmatpush.msra.mxu0 %v5129
    %6051 = vmatpush.msra.mxu0 %v5125
    %6052 = vmatpush.msra.mxu0 %v5121
    %6053 = vmatpush.msra.mxu0 %v5117
    %6054 = vmatpush.msra.mxu0 %v5113
    %6055 = vmatpush.msra.mxu0 %v5109
    %6056 = vmatpush.msra.mxu0 %v5105
    %6057 = vmatpush.msra.mxu0 %v5101
    %6058 = vmatpush.msra.mxu0 %v5097
    %6059 = vmatmul.f32.gmra.mxu0 %v4304
    %v6060 = vpop.f32.mrf.mxu0
    %v6061 = vadd.f32 %v5762, %v6060
    %6062 = vmatmul.f32.gmra.mxu0 %v4316
    %v6063 = vpop.f32.mrf.mxu0
    %v6064 = vadd.f32 %v5765, %v6063
    %6065 = vdwg.mxu0
    %6066 = vmatpush.msra.mxu0 %v5221
    %6067 = vmatpush.msra.mxu0 %v5217
    %6068 = vmatpush.msra.mxu0 %v5213
    %6069 = vmatpush.msra.mxu0 %v5209
    %6070 = vmatpush.msra.mxu0 %v5205
    %6071 = vmatpush.msra.mxu0 %v5201
    %6072 = vmatpush.msra.mxu0 %v5197
    %6073 = vmatpush.msra.mxu0 %v5193
    %6074 = vmatpush.msra.mxu0 %v5189
    %6075 = vmatpush.msra.mxu0 %v5185
    %6076 = vmatpush.msra.mxu0 %v5181
    %6077 = vmatpush.msra.mxu0 %v5177
    %6078 = vmatpush.msra.mxu0 %v5173
    %6079 = vmatpush.msra.mxu0 %v5169
    %6080 = vmatpush.msra.mxu0 %v5165
    %6081 = vmatpush.msra.mxu0 %v5161
    %6082 = vmatmul.f32.gmra.mxu0 %v4307
    %v6083 = vpop.f32.mrf.mxu0
    %v6084 = vadd.f32 %v6061, %v6083
    %6085 = vmatmul.f32.gmra.mxu0 %v4319
    %v6086 = vpop.f32.mrf.mxu0
    %v6087 = vadd.f32 %v6064, %v6086
    %6088 = vdwg.mxu0
    %6089 = vmatpush.msra.mxu0 %v5285
    %6090 = vmatpush.msra.mxu0 %v5281
    %6091 = vmatpush.msra.mxu0 %v5277
    %6092 = vmatpush.msra.mxu0 %v5273
    %6093 = vmatpush.msra.mxu0 %v5269
    %6094 = vmatpush.msra.mxu0 %v5265
    %6095 = vmatpush.msra.mxu0 %v5261
    %6096 = vmatpush.msra.mxu0 %v5257
    %6097 = vmatpush.msra.mxu0 %v5253
    %6098 = vmatpush.msra.mxu0 %v5249
    %6099 = vmatpush.msra.mxu0 %v5245
    %6100 = vmatpush.msra.mxu0 %v5241
    %6101 = vmatpush.msra.mxu0 %v5237
    %6102 = vmatpush.msra.mxu0 %v5233
    %6103 = vmatpush.msra.mxu0 %v5229
    %6104 = vmatpush.msra.mxu0 %v5225
    %6105 = vmatmul.f32.gmra.mxu0 %v4310
    %v6106 = vpop.f32.mrf.mxu0
    %v6107 = vadd.f32 %v6084, %v6106
    %6108 = vmatmul.f32.gmra.mxu0 %v4322
    %v6109 = vpop.f32.mrf.mxu0
    %v6110 = vadd.f32 %v6087, %v6109
    %6111 = vdwg.mxu0
    %6112 = vmatpush.msra.mxu0 %v5349
    %6113 = vmatpush.msra.mxu0 %v5345
    %6114 = vmatpush.msra.mxu0 %v5341
    %6115 = vmatpush.msra.mxu0 %v5337
    %6116 = vmatpush.msra.mxu0 %v5333
    %6117 = vmatpush.msra.mxu0 %v5329
    %6118 = vmatpush.msra.mxu0 %v5325
    %6119 = vmatpush.msra.mxu0 %v5321
    %6120 = vmatpush.msra.mxu0 %v5317
    %6121 = vmatpush.msra.mxu0 %v5313
    %6122 = vmatpush.msra.mxu0 %v5309
    %6123 = vmatpush.msra.mxu0 %v5305
    %6124 = vmatpush.msra.mxu0 %v5301
    %6125 = vmatpush.msra.mxu0 %v5297
    %6126 = vmatpush.msra.mxu0 %v5293
    %6127 = vmatpush.msra.mxu0 %v5289
    %6128 = vmatmul.f32.gmra.mxu0 %v4313
    %v6129 = vpop.f32.mrf.mxu0
    %v6130 = vadd.f32 %v6107, %v6129
    %6131 = vmatmul.f32.gmra.mxu0 %v4325
    %v6132 = vpop.f32.mrf.mxu0
    %v6133 = vadd.f32 %v6110, %v6132
    %6134 = vdwg.mxu0
    %6135 = vmatpush.msra.mxu0 %v5158
    %6136 = vmatpush.msra.mxu0 %v5154
    %6137 = vmatpush.msra.mxu0 %v5150
    %6138 = vmatpush.msra.mxu0 %v5146
    %6139 = vmatpush.msra.mxu0 %v5142
    %6140 = vmatpush.msra.mxu0 %v5138
    %6141 = vmatpush.msra.mxu0 %v5134
    %6142 = vmatpush.msra.mxu0 %v5130
    %6143 = vmatpush.msra.mxu0 %v5126
    %6144 = vmatpush.msra.mxu0 %v5122
    %6145 = vmatpush.msra.mxu0 %v5118
    %6146 = vmatpush.msra.mxu0 %v5114
    %6147 = vmatpush.msra.mxu0 %v5110
    %6148 = vmatpush.msra.mxu0 %v5106
    %6149 = vmatpush.msra.mxu0 %v5102
    %6150 = vmatpush.msra.mxu0 %v5098
    %6151 = vmatmul.f32.gmra.mxu0 %v4304
    %v6152 = vpop.f32.mrf.mxu0
    %v6153 = vadd.f32 %v5854, %v6152
    %6154 = vmatmul.f32.gmra.mxu0 %v4316
    %v6155 = vpop.f32.mrf.mxu0
    %v6156 = vadd.f32 %v5857, %v6155
    %6157 = vdwg.mxu0
    %6158 = vmatpush.msra.mxu0 %v5222
    %6159 = vmatpush.msra.mxu0 %v5218
    %6160 = vmatpush.msra.mxu0 %v5214
    %6161 = vmatpush.msra.mxu0 %v5210
    %6162 = vmatpush.msra.mxu0 %v5206
    %6163 = vmatpush.msra.mxu0 %v5202
    %6164 = vmatpush.msra.mxu0 %v5198
    %6165 = vmatpush.msra.mxu0 %v5194
    %6166 = vmatpush.msra.mxu0 %v5190
    %6167 = vmatpush.msra.mxu0 %v5186
    %6168 = vmatpush.msra.mxu0 %v5182
    %6169 = vmatpush.msra.mxu0 %v5178
    %6170 = vmatpush.msra.mxu0 %v5174
    %6171 = vmatpush.msra.mxu0 %v5170
    %6172 = vmatpush.msra.mxu0 %v5166
    %6173 = vmatpush.msra.mxu0 %v5162
    %6174 = vmatmul.f32.gmra.mxu0 %v4307
    %v6175 = vpop.f32.mrf.mxu0
    %v6176 = vadd.f32 %v6153, %v6175
    %6177 = vmatmul.f32.gmra.mxu0 %v4319
    %v6178 = vpop.f32.mrf.mxu0
    %v6179 = vadd.f32 %v6156, %v6178
    %6180 = vdwg.mxu0
    %6181 = vmatpush.msra.mxu0 %v5286
    %6182 = vmatpush.msra.mxu0 %v5282
    %6183 = vmatpush.msra.mxu0 %v5278
    %6184 = vmatpush.msra.mxu0 %v5274
    %6185 = vmatpush.msra.mxu0 %v5270
    %6186 = vmatpush.msra.mxu0 %v5266
    %6187 = vmatpush.msra.mxu0 %v5262
    %6188 = vmatpush.msra.mxu0 %v5258
    %6189 = vmatpush.msra.mxu0 %v5254
    %6190 = vmatpush.msra.mxu0 %v5250
    %6191 = vmatpush.msra.mxu0 %v5246
    %6192 = vmatpush.msra.mxu0 %v5242
    %6193 = vmatpush.msra.mxu0 %v5238
    %6194 = vmatpush.msra.mxu0 %v5234
    %6195 = vmatpush.msra.mxu0 %v5230
    %6196 = vmatpush.msra.mxu0 %v5226
    %6197 = vmatmul.f32.gmra.mxu0 %v4310
    %v6198 = vpop.f32.mrf.mxu0
    %v6199 = vadd.f32 %v6176, %v6198
    %6200 = vmatmul.f32.gmra.mxu0 %v4322
    %v6201 = vpop.f32.mrf.mxu0
    %v6202 = vadd.f32 %v6179, %v6201
    %6203 = vdwg.mxu0
    %6204 = vmatpush.msra.mxu0 %v5350
    %6205 = vmatpush.msra.mxu0 %v5346
    %6206 = vmatpush.msra.mxu0 %v5342
    %6207 = vmatpush.msra.mxu0 %v5338
    %6208 = vmatpush.msra.mxu0 %v5334
    %6209 = vmatpush.msra.mxu0 %v5330
    %6210 = vmatpush.msra.mxu0 %v5326
    %6211 = vmatpush.msra.mxu0 %v5322
    %6212 = vmatpush.msra.mxu0 %v5318
    %6213 = vmatpush.msra.mxu0 %v5314
    %6214 = vmatpush.msra.mxu0 %v5310
    %6215 = vmatpush.msra.mxu0 %v5306
    %6216 = vmatpush.msra.mxu0 %v5302
    %6217 = vmatpush.msra.mxu0 %v5298
    %6218 = vmatpush.msra.mxu0 %v5294
    %6219 = vmatpush.msra.mxu0 %v5290
    %6220 = vmatmul.f32.gmra.mxu0 %v4313
    %v6221 = vpop.f32.mrf.mxu0
    %v6222 = vadd.f32 %v6199, %v6221
    %6223 = vmatmul.f32.gmra.mxu0 %v4325
    %v6224 = vpop.f32.mrf.mxu0
    %v6225 = vadd.f32 %v6202, %v6224
    %6226 = vdwg.mxu0
    %6227 = vmatpush.msra.mxu0 %v5159
    %6228 = vmatpush.msra.mxu0 %v5155
    %6229 = vmatpush.msra.mxu0 %v5151
    %6230 = vmatpush.msra.mxu0 %v5147
    %6231 = vmatpush.msra.mxu0 %v5143
    %6232 = vmatpush.msra.mxu0 %v5139
    %6233 = vmatpush.msra.mxu0 %v5135
    %6234 = vmatpush.msra.mxu0 %v5131
    %6235 = vmatpush.msra.mxu0 %v5127
    %6236 = vmatpush.msra.mxu0 %v5123
    %6237 = vmatpush.msra.mxu0 %v5119
    %6238 = vmatpush.msra.mxu0 %v5115
    %6239 = vmatpush.msra.mxu0 %v5111
    %6240 = vmatpush.msra.mxu0 %v5107
    %6241 = vmatpush.msra.mxu0 %v5103
    %6242 = vmatpush.msra.mxu0 %v5099
    %6243 = vmatmul.f32.gmra.mxu0 %v4304
    %v6244 = vpop.f32.mrf.mxu0
    %v6245 = vadd.f32 %v5946, %v6244
    %6246 = vmatmul.f32.gmra.mxu0 %v4316
    %v6247 = vpop.f32.mrf.mxu0
    %v6248 = vadd.f32 %v5949, %v6247
    %6249 = vdwg.mxu0
    %6250 = vmatpush.msra.mxu0 %v5223
    %6251 = vmatpush.msra.mxu0 %v5219
    %6252 = vmatpush.msra.mxu0 %v5215
    %6253 = vmatpush.msra.mxu0 %v5211
    %6254 = vmatpush.msra.mxu0 %v5207
    %6255 = vmatpush.msra.mxu0 %v5203
    %6256 = vmatpush.msra.mxu0 %v5199
    %6257 = vmatpush.msra.mxu0 %v5195
    %6258 = vmatpush.msra.mxu0 %v5191
    %6259 = vmatpush.msra.mxu0 %v5187
    %6260 = vmatpush.msra.mxu0 %v5183
    %6261 = vmatpush.msra.mxu0 %v5179
    %6262 = vmatpush.msra.mxu0 %v5175
    %6263 = vmatpush.msra.mxu0 %v5171
    %6264 = vmatpush.msra.mxu0 %v5167
    %6265 = vmatpush.msra.mxu0 %v5163
    %6266 = vmatmul.f32.gmra.mxu0 %v4307
    %v6267 = vpop.f32.mrf.mxu0
    %v6268 = vadd.f32 %v6245, %v6267
    %6269 = vmatmul.f32.gmra.mxu0 %v4319
    %v6270 = vpop.f32.mrf.mxu0
    %v6271 = vadd.f32 %v6248, %v6270
    %6272 = vdwg.mxu0
    %6273 = vmatpush.msra.mxu0 %v5287
    %6274 = vmatpush.msra.mxu0 %v5283
    %6275 = vmatpush.msra.mxu0 %v5279
    %6276 = vmatpush.msra.mxu0 %v5275
    %6277 = vmatpush.msra.mxu0 %v5271
    %6278 = vmatpush.msra.mxu0 %v5267
    %6279 = vmatpush.msra.mxu0 %v5263
    %6280 = vmatpush.msra.mxu0 %v5259
    %6281 = vmatpush.msra.mxu0 %v5255
    %6282 = vmatpush.msra.mxu0 %v5251
    %6283 = vmatpush.msra.mxu0 %v5247
    %6284 = vmatpush.msra.mxu0 %v5243
    %6285 = vmatpush.msra.mxu0 %v5239
    %6286 = vmatpush.msra.mxu0 %v5235
    %6287 = vmatpush.msra.mxu0 %v5231
    %6288 = vmatpush.msra.mxu0 %v5227
    %6289 = vmatmul.f32.gmra.mxu0 %v4310
    %v6290 = vpop.f32.mrf.mxu0
    %v6291 = vadd.f32 %v6268, %v6290
    %6292 = vmatmul.f32.gmra.mxu0 %v4322
    %v6293 = vpop.f32.mrf.mxu0
    %v6294 = vadd.f32 %v6271, %v6293
    %6295 = vdwg.mxu0
    %6296 = vmatpush.msra.mxu0 %v5351
    %6297 = vmatpush.msra.mxu0 %v5347
    %6298 = vmatpush.msra.mxu0 %v5343
    %6299 = vmatpush.msra.mxu0 %v5339
    %6300 = vmatpush.msra.mxu0 %v5335
    %6301 = vmatpush.msra.mxu0 %v5331
    %6302 = vmatpush.msra.mxu0 %v5327
    %6303 = vmatpush.msra.mxu0 %v5323
    %6304 = vmatpush.msra.mxu0 %v5319
    %6305 = vmatpush.msra.mxu0 %v5315
    %6306 = vmatpush.msra.mxu0 %v5311
    %6307 = vmatpush.msra.mxu0 %v5307
    %6308 = vmatpush.msra.mxu0 %v5303
    %6309 = vmatpush.msra.mxu0 %v5299
    %6310 = vmatpush.msra.mxu0 %v5295
    %6311 = vmatpush.msra.mxu0 %v5291
    %6312 = vmatmul.f32.gmra.mxu0 %v4313
    %v6313 = vpop.f32.mrf.mxu0
    %v6314 = vadd.f32 %v6291, %v6313
    %6315 = vmatmul.f32.gmra.mxu0 %v4325
    %v6316 = vpop.f32.mrf.mxu0
    %v6317 = vadd.f32 %v6294, %v6316
    %6318 = vdwg.mxu0
    %6319 = vmatpush.msra.mxu0 %v5160
    %6320 = vmatpush.msra.mxu0 %v5156
    %6321 = vmatpush.msra.mxu0 %v5152
    %6322 = vmatpush.msra.mxu0 %v5148
    %6323 = vmatpush.msra.mxu0 %v5144
    %6324 = vmatpush.msra.mxu0 %v5140
    %6325 = vmatpush.msra.mxu0 %v5136
    %6326 = vmatpush.msra.mxu0 %v5132
    %6327 = vmatpush.msra.mxu0 %v5128
    %6328 = vmatpush.msra.mxu0 %v5124
    %6329 = vmatpush.msra.mxu0 %v5120
    %6330 = vmatpush.msra.mxu0 %v5116
    %6331 = vmatpush.msra.mxu0 %v5112
    %6332 = vmatpush.msra.mxu0 %v5108
    %6333 = vmatpush.msra.mxu0 %v5104
    %6334 = vmatpush.msra.mxu0 %v5100
    %6335 = vmatmul.f32.gmra.mxu0 %v4304
    %v6336 = vpop.f32.mrf.mxu0
    %v6337 = vadd.f32 %v6038, %v6336
    %6338 = vmatmul.f32.gmra.mxu0 %v4316
    %v6339 = vpop.f32.mrf.mxu0
    %v6340 = vadd.f32 %v6041, %v6339
    %6341 = vdwg.mxu0
    %6342 = vmatpush.msra.mxu0 %v5224
    %6343 = vmatpush.msra.mxu0 %v5220
    %6344 = vmatpush.msra.mxu0 %v5216
    %6345 = vmatpush.msra.mxu0 %v5212
    %6346 = vmatpush.msra.mxu0 %v5208
    %6347 = vmatpush.msra.mxu0 %v5204
    %6348 = vmatpush.msra.mxu0 %v5200
    %6349 = vmatpush.msra.mxu0 %v5196
    %6350 = vmatpush.msra.mxu0 %v5192
    %6351 = vmatpush.msra.mxu0 %v5188
    %6352 = vmatpush.msra.mxu0 %v5184
    %6353 = vmatpush.msra.mxu0 %v5180
    %6354 = vmatpush.msra.mxu0 %v5176
    %6355 = vmatpush.msra.mxu0 %v5172
    %6356 = vmatpush.msra.mxu0 %v5168
    %6357 = vmatpush.msra.mxu0 %v5164
    %6358 = vmatmul.f32.gmra.mxu0 %v4307
    %v6359 = vpop.f32.mrf.mxu0
    %v6360 = vadd.f32 %v6337, %v6359
    %6361 = vmatmul.f32.gmra.mxu0 %v4319
    %v6362 = vpop.f32.mrf.mxu0
    %v6363 = vadd.f32 %v6340, %v6362
    %6364 = vdwg.mxu0
    %6365 = vmatpush.msra.mxu0 %v5288
    %6366 = vmatpush.msra.mxu0 %v5284
    %6367 = vmatpush.msra.mxu0 %v5280
    %6368 = vmatpush.msra.mxu0 %v5276
    %6369 = vmatpush.msra.mxu0 %v5272
    %6370 = vmatpush.msra.mxu0 %v5268
    %6371 = vmatpush.msra.mxu0 %v5264
    %6372 = vmatpush.msra.mxu0 %v5260
    %6373 = vmatpush.msra.mxu0 %v5256
    %6374 = vmatpush.msra.mxu0 %v5252
    %6375 = vmatpush.msra.mxu0 %v5248
    %6376 = vmatpush.msra.mxu0 %v5244
    %6377 = vmatpush.msra.mxu0 %v5240
    %6378 = vmatpush.msra.mxu0 %v5236
    %6379 = vmatpush.msra.mxu0 %v5232
    %6380 = vmatpush.msra.mxu0 %v5228
    %6381 = vmatmul.f32.gmra.mxu0 %v4310
    %v6382 = vpop.f32.mrf.mxu0
    %v6383 = vadd.f32 %v6360, %v6382
    %6384 = vmatmul.f32.gmra.mxu0 %v4322
    %v6385 = vpop.f32.mrf.mxu0
    %v6386 = vadd.f32 %v6363, %v6385
    %6387 = vdwg.mxu0
    %6388 = vmatpush.msra.mxu0 %v5352
    %6389 = vmatpush.msra.mxu0 %v5348
    %6390 = vmatpush.msra.mxu0 %v5344
    %6391 = vmatpush.msra.mxu0 %v5340
    %6392 = vmatpush.msra.mxu0 %v5336
    %6393 = vmatpush.msra.mxu0 %v5332
    %6394 = vmatpush.msra.mxu0 %v5328
    %6395 = vmatpush.msra.mxu0 %v5324
    %6396 = vmatpush.msra.mxu0 %v5320
    %6397 = vmatpush.msra.mxu0 %v5316
    %6398 = vmatpush.msra.mxu0 %v5312
    %6399 = vmatpush.msra.mxu0 %v5308
    %6400 = vmatpush.msra.mxu0 %v5304
    %6401 = vmatpush.msra.mxu0 %v5300
    %6402 = vmatpush.msra.mxu0 %v5296
    %6403 = vmatpush.msra.mxu0 %v5292
    %6404 = vmatmul.f32.gmra.mxu0 %v4313
    %v6405 = vpop.f32.mrf.mxu0
    %v6406 = vadd.f32 %v6383, %v6405
    %6407 = vmatmul.f32.gmra.mxu0 %v4325
    %v6408 = vpop.f32.mrf.mxu0
    %v6409 = vadd.f32 %v6386, %v6408
    %6410 = vdwg.mxu0
    %v6411 = vadd.f32 %v6130, %v5072
    %v6412 = vadd.f32 %v6222, %v5073
    %v6413 = vadd.f32 %v6314, %v5074
    %v6414 = vadd.f32 %v6406, %v5075
    %v6415 = vadd.f32 %v6133, %v5072
    %v6416 = vadd.f32 %v6225, %v5073
    %v6417 = vadd.f32 %v6317, %v5074
    %v6418 = vadd.f32 %v6409, %v5075
    %v6419 = vmax.f32 %v6411, 0.0
    %v6420 = vmax.f32 %v6412, 0.0
    %v6421 = vmax.f32 %v6413, 0.0
    %v6422 = vmax.f32 %v6414, 0.0
    %v6423 = vmax.f32 %v6415, 0.0
    %v6424 = vmax.f32 %v6416, 0.0
    %v6425 = vmax.f32 %v6417, 0.0
    %v6426 = vmax.f32 %v6418, 0.0
    %v6435 = vrot.slane %v5089, 7
    %v6436 = vrot.slane %v5090, 6
    %v6437 = vrot.slane %v5091, 5
    %v6438 = vrot.slane %v5093, 7
    %v6439 = vrot.slane %v5094, 6
    %v6440 = vrot.slane %v5095, 5
    %v6441 = vsel %vm730, %v5088, %v6435
    %v6442 = vsel %vm732, %v6436, %v6437
    %v6443 = vsel %vm338, %v6441, %v6442
    %v6444 = vsel %vm735, %v5088, %v6435
    %v6445 = vsel %vm737, %v6436, %v6437
    %v6446 = vsel %vm739, %v6444, %v6445
    %v6447 = vrot.slane %v6446, 1
    %v6448 = vsel %vm732, %v5088, %v6435
    %v6449 = vsel %vm3387, %v6436, %v6437
    %v6450 = vsel %vm3389, %v6448, %v6449
    %v6451 = vrot.slane %v6450, 2
    %v6452 = vsel %vm737, %v5088, %v6435
    %v6453 = vsel %vm3393, %v6436, %v6437
    %v6454 = vsel %vm3395, %v6452, %v6453
    %v6455 = vrot.slane %v6454, 3
    %v6456 = vsel %vm3387, %v5088, %v6435
    %vm6457 = vcmask 1046534
    %v6458 = vsel %vm6457, %v6436, %v6437
    %v6459 = vsel %vm2657, %v6456, %v6458
    %v6460 = vrot.slane %v6459, 4
    %v6461 = vsel %vm3393, %v5088, %v6435
    %v6462 = vsel %vm4301, %v6437, %v6436
    %vm6463 = vcmask 1046533
    %v6464 = vsel %vm6463, %v6461, %v6462
    %v6465 = vrot.slane %v6464, 5
    %v6466 = vsel %vm6457, %v5088, %v6435
    %v6467 = vsel %vm730, %v6436, %v6437
    %v6468 = vsel %vm5642, %v6467, %v6466
    %v6469 = vrot.slane %v6468, 6
    %v6470 = vsel %vm4301, %v6435, %v5088
    %v6471 = vsel %vm735, %v6436, %v6437
    %vm6472 = vcmask 1046529
    %v6473 = vsel %vm6472, %v6471, %v6470
    %v6474 = vrot.slane %v6473, 7
    %v6475 = vsel %vm730, %v5092, %v6438
    %v6476 = vsel %vm732, %v6439, %v6440
    %v6477 = vsel %vm338, %v6475, %v6476
    %v6478 = vsel %vm735, %v5092, %v6438
    %v6479 = vsel %vm737, %v6439, %v6440
    %v6480 = vsel %vm739, %v6478, %v6479
    %v6481 = vrot.slane %v6480, 1
    %v6482 = vsel %vm732, %v5092, %v6438
    %v6483 = vsel %vm3387, %v6439, %v6440
    %v6484 = vsel %vm3389, %v6482, %v6483
    %v6485 = vrot.slane %v6484, 2
    %v6486 = vsel %vm737, %v5092, %v6438
    %v6487 = vsel %vm3393, %v6439, %v6440
    %v6488 = vsel %vm3395, %v6486, %v6487
    %v6489 = vrot.slane %v6488, 3
    %v6490 = vsel %vm3387, %v5092, %v6438
    %v6491 = vsel %vm6457, %v6439, %v6440
    %v6492 = vsel %vm2657, %v6490, %v6491
    %v6493 = vrot.slane %v6492, 4
    %v6494 = vsel %vm3393, %v5092, %v6438
    %v6495 = vsel %vm4301, %v6440, %v6439
    %v6496 = vsel %vm6463, %v6494, %v6495
    %v6497 = vrot.slane %v6496, 5
    %v6498 = vsel %vm6457, %v5092, %v6438
    %v6499 = vsel %vm730, %v6439, %v6440
    %v6500 = vsel %vm5642, %v6499, %v6498
    %v6501 = vrot.slane %v6500, 6
    %v6502 = vsel %vm4301, %v6438, %v5092
    %v6503 = vsel %vm735, %v6439, %v6440
    %v6504 = vsel %vm6472, %v6503, %v6502
    %v6505 = vrot.slane %v6504, 7
    %v6514 = vrot.slane %v6420, 7
    %v6515 = vrot.slane %v6421, 6
    %v6516 = vrot.slane %v6422, 5
    %v6517 = vrot.slane %v6424, 7
    %v6518 = vrot.slane %v6425, 6
    %v6519 = vrot.slane %v6426, 5
    %v6520 = vsel %vm730, %v6419, %v6514
    %v6521 = vsel %vm732, %v6515, %v6516
    %v6522 = vsel %vm338, %v6520, %v6521
    %v6523 = vsel %vm735, %v6419, %v6514
    %v6524 = vsel %vm737, %v6515, %v6516
    %v6525 = vsel %vm739, %v6523, %v6524
    %v6526 = vrot.slane %v6525, 1
    %v6527 = vsel %vm732, %v6419, %v6514
    %v6528 = vsel %vm3387, %v6515, %v6516
    %v6529 = vsel %vm3389, %v6527, %v6528
    %v6530 = vrot.slane %v6529, 2
    %v6531 = vsel %vm737, %v6419, %v6514
    %v6532 = vsel %vm3393, %v6515, %v6516
    %v6533 = vsel %vm3395, %v6531, %v6532
    %v6534 = vrot.slane %v6533, 3
    %v6535 = vsel %vm3387, %v6419, %v6514
    %v6536 = vsel %vm6457, %v6515, %v6516
    %v6537 = vsel %vm2657, %v6535, %v6536
    %v6538 = vrot.slane %v6537, 4
    %v6539 = vsel %vm3393, %v6419, %v6514
    %v6540 = vsel %vm4301, %v6516, %v6515
    %v6541 = vsel %vm6463, %v6539, %v6540
    %v6542 = vrot.slane %v6541, 5
    %v6543 = vsel %vm6457, %v6419, %v6514
    %v6544 = vsel %vm730, %v6515, %v6516
    %v6545 = vsel %vm5642, %v6544, %v6543
    %v6546 = vrot.slane %v6545, 6
    %v6547 = vsel %vm4301, %v6514, %v6419
    %v6548 = vsel %vm735, %v6515, %v6516
    %v6549 = vsel %vm6472, %v6548, %v6547
    %v6550 = vrot.slane %v6549, 7
    %v6551 = vsel %vm730, %v6423, %v6517
    %v6552 = vsel %vm732, %v6518, %v6519
    %v6553 = vsel %vm338, %v6551, %v6552
    %v6554 = vsel %vm735, %v6423, %v6517
    %v6555 = vsel %vm737, %v6518, %v6519
    %v6556 = vsel %vm739, %v6554, %v6555
    %v6557 = vrot.slane %v6556, 1
    %v6558 = vsel %vm732, %v6423, %v6517
    %v6559 = vsel %vm3387, %v6518, %v6519
    %v6560 = vsel %vm3389, %v6558, %v6559
    %v6561 = vrot.slane %v6560, 2
    %v6562 = vsel %vm737, %v6423, %v6517
    %v6563 = vsel %vm3393, %v6518, %v6519
    %v6564 = vsel %vm3395, %v6562, %v6563
    %v6565 = vrot.slane %v6564, 3
    %v6566 = vsel %vm3387, %v6423, %v6517
    %v6567 = vsel %vm6457, %v6518, %v6519
    %v6568 = vsel %vm2657, %v6566, %v6567
    %v6569 = vrot.slane %v6568, 4
    %v6570 = vsel %vm3393, %v6423, %v6517
    %v6571 = vsel %vm4301, %v6519, %v6518
    %v6572 = vsel %vm6463, %v6570, %v6571
    %v6573 = vrot.slane %v6572, 5
    %v6574 = vsel %vm6457, %v6423, %v6517
    %v6575 = vsel %vm730, %v6518, %v6519
    %v6576 = vsel %vm5642, %v6575, %v6574
    %v6577 = vrot.slane %v6576, 6
    %v6578 = vsel %vm4301, %v6517, %v6423
    %v6579 = vsel %vm735, %v6518, %v6519
    %v6580 = vsel %vm6472, %v6579, %v6578
    %v6581 = vrot.slane %v6580, 7
    %v6582 = vperm.slane %v6443, 0
    %v6583 = vperm.slane %v6443, 1
    %v6584 = vperm.slane %v6443, 2
    %v6585 = vperm.slane %v6443, 3
    %v6586 = vperm.slane %v6447, 0
    %v6587 = vperm.slane %v6447, 1
    %v6588 = vperm.slane %v6447, 2
    %v6589 = vperm.slane %v6447, 3
    %v6590 = vperm.slane %v6451, 0
    %v6591 = vperm.slane %v6451, 1
    %v6592 = vperm.slane %v6451, 2
    %v6593 = vperm.slane %v6451, 3
    %v6594 = vperm.slane %v6455, 0
    %v6595 = vperm.slane %v6455, 1
    %v6596 = vperm.slane %v6455, 2
    %v6597 = vperm.slane %v6455, 3
    %v6598 = vperm.slane %v6460, 0
    %v6599 = vperm.slane %v6460, 1
    %v6600 = vperm.slane %v6460, 2
    %v6601 = vperm.slane %v6460, 3
    %v6602 = vperm.slane %v6465, 0
    %v6603 = vperm.slane %v6465, 1
    %v6604 = vperm.slane %v6465, 2
    %v6605 = vperm.slane %v6465, 3
    %v6606 = vperm.slane %v6469, 0
    %v6607 = vperm.slane %v6469, 1
    %v6608 = vperm.slane %v6469, 2
    %v6609 = vperm.slane %v6469, 3
    %v6610 = vperm.slane %v6474, 0
    %v6611 = vperm.slane %v6474, 1
    %v6612 = vperm.slane %v6474, 2
    %v6613 = vperm.slane %v6474, 3
    %v6614 = vperm.slane %v6477, 0
    %v6615 = vperm.slane %v6477, 1
    %v6616 = vperm.slane %v6477, 2
    %v6617 = vperm.slane %v6477, 3
    %v6618 = vperm.slane %v6481, 0
    %v6619 = vperm.slane %v6481, 1
    %v6620 = vperm.slane %v6481, 2
    %v6621 = vperm.slane %v6481, 3
    %v6622 = vperm.slane %v6485, 0
    %v6623 = vperm.slane %v6485, 1
    %v6624 = vperm.slane %v6485, 2
    %v6625 = vperm.slane %v6485, 3
    %v6626 = vperm.slane %v6489, 0
    %v6627 = vperm.slane %v6489, 1
    %v6628 = vperm.slane %v6489, 2
    %v6629 = vperm.slane %v6489, 3
    %v6630 = vperm.slane %v6493, 0
    %v6631 = vperm.slane %v6493, 1
    %v6632 = vperm.slane %v6493, 2
    %v6633 = vperm.slane %v6493, 3
    %v6634 = vperm.slane %v6497, 0
    %v6635 = vperm.slane %v6497, 1
    %v6636 = vperm.slane %v6497, 2
    %v6637 = vperm.slane %v6497, 3
    %v6638 = vperm.slane %v6501, 0
    %v6639 = vperm.slane %v6501, 1
    %v6640 = vperm.slane %v6501, 2
    %v6641 = vperm.slane %v6501, 3
    %v6642 = vperm.slane %v6505, 0
    %v6643 = vperm.slane %v6505, 1
    %v6644 = vperm.slane %v6505, 2
    %v6645 = vperm.slane %v6505, 3
    %v6710 = vperm.slane %v6522, 0
    %v6711 = vperm.slane %v6522, 1
    %v6712 = vperm.slane %v6522, 2
    %v6713 = vperm.slane %v6522, 3
    %v6714 = vperm.slane %v6526, 0
    %v6715 = vperm.slane %v6526, 1
    %v6716 = vperm.slane %v6526, 2
    %v6717 = vperm.slane %v6526, 3
    %v6718 = vperm.slane %v6530, 0
    %v6719 = vperm.slane %v6530, 1
    %v6720 = vperm.slane %v6530, 2
    %v6721 = vperm.slane %v6530, 3
    %v6722 = vperm.slane %v6534, 0
    %v6723 = vperm.slane %v6534, 1
    %v6724 = vperm.slane %v6534, 2
    %v6725 = vperm.slane %v6534, 3
    %v6726 = vperm.slane %v6538, 0
    %v6727 = vperm.slane %v6538, 1
    %v6728 = vperm.slane %v6538, 2
    %v6729 = vperm.slane %v6538, 3
    %v6730 = vperm.slane %v6542, 0
    %v6731 = vperm.slane %v6542, 1
    %v6732 = vperm.slane %v6542, 2
    %v6733 = vperm.slane %v6542, 3
    %v6734 = vperm.slane %v6546, 0
    %v6735 = vperm.slane %v6546, 1
    %v6736 = vperm.slane %v6546, 2
    %v6737 = vperm.slane %v6546, 3
    %v6738 = vperm.slane %v6550, 0
    %v6739 = vperm.slane %v6550, 1
    %v6740 = vperm.slane %v6550, 2
    %v6741 = vperm.slane %v6550, 3
    %v6742 = vperm.slane %v6553, 0
    %v6743 = vperm.slane %v6553, 1
    %v6744 = vperm.slane %v6553, 2
    %v6745 = vperm.slane %v6553, 3
    %v6746 = vperm.slane %v6557, 0
    %v6747 = vperm.slane %v6557, 1
    %v6748 = vperm.slane %v6557, 2
    %v6749 = vperm.slane %v6557, 3
    %v6750 = vperm.slane %v6561, 0
    %v6751 = vperm.slane %v6561, 1
    %v6752 = vperm.slane %v6561, 2
    %v6753 = vperm.slane %v6561, 3
    %v6754 = vperm.slane %v6565, 0
    %v6755 = vperm.slane %v6565, 1
    %v6756 = vperm.slane %v6565, 2
    %v6757 = vperm.slane %v6565, 3
    %v6758 = vperm.slane %v6569, 0
    %v6759 = vperm.slane %v6569, 1
    %v6760 = vperm.slane %v6569, 2
    %v6761 = vperm.slane %v6569, 3
    %v6762 = vperm.slane %v6573, 0
    %v6763 = vperm.slane %v6573, 1
    %v6764 = vperm.slane %v6573, 2
    %v6765 = vperm.slane %v6573, 3
    %v6766 = vperm.slane %v6577, 0
    %v6767 = vperm.slane %v6577, 1
    %v6768 = vperm.slane %v6577, 2
    %v6769 = vperm.slane %v6577, 3
    %v6770 = vperm.slane %v6581, 0
    %v6771 = vperm.slane %v6581, 1
    %v6772 = vperm.slane %v6581, 2
    %v6773 = vperm.slane %v6581, 3
    %v6838 = vsel %vm730, %v6582, %v6710
    %v6839 = vsel %vm730, %v6583, %v6711
    %v6840 = vsel %vm730, %v6584, %v6712
    %v6841 = vsel %vm730, %v6585, %v6713
    %v6842 = vsel %vm730, %v6586, %v6714
    %v6843 = vsel %vm730, %v6587, %v6715
    %v6844 = vsel %vm730, %v6588, %v6716
    %v6845 = vsel %vm730, %v6589, %v6717
    %v6846 = vsel %vm730, %v6590, %v6718
    %v6847 = vsel %vm730, %v6591, %v6719
    %v6848 = vsel %vm730, %v6592, %v6720
    %v6849 = vsel %vm730, %v6593, %v6721
    %v6850 = vsel %vm730, %v6594, %v6722
    %v6851 = vsel %vm730, %v6595, %v6723
    %v6852 = vsel %vm730, %v6596, %v6724
    %v6853 = vsel %vm730, %v6597, %v6725
    %v6854 = vsel %vm730, %v6598, %v6726
    %v6855 = vsel %vm730, %v6599, %v6727
    %v6856 = vsel %vm730, %v6600, %v6728
    %v6857 = vsel %vm730, %v6601, %v6729
    %v6858 = vsel %vm730, %v6602, %v6730
    %v6859 = vsel %vm730, %v6603, %v6731
    %v6860 = vsel %vm730, %v6604, %v6732
    %v6861 = vsel %vm730, %v6605, %v6733
    %v6862 = vsel %vm730, %v6606, %v6734
    %v6863 = vsel %vm730, %v6607, %v6735
    %v6864 = vsel %vm730, %v6608, %v6736
    %v6865 = vsel %vm730, %v6609, %v6737
    %v6866 = vsel %vm730, %v6610, %v6738
    %v6867 = vsel %vm730, %v6611, %v6739
    %v6868 = vsel %vm730, %v6612, %v6740
    %v6869 = vsel %vm730, %v6613, %v6741
    %v6870 = vsel %vm730, %v6614, %v6742
    %v6871 = vsel %vm730, %v6615, %v6743
    %v6872 = vsel %vm730, %v6616, %v6744
    %v6873 = vsel %vm730, %v6617, %v6745
    %v6874 = vsel %vm730, %v6618, %v6746
    %v6875 = vsel %vm730, %v6619, %v6747
    %v6876 = vsel %vm730, %v6620, %v6748
    %v6877 = vsel %vm730, %v6621, %v6749
    %v6878 = vsel %vm730, %v6622, %v6750
    %v6879 = vsel %vm730, %v6623, %v6751
    %v6880 = vsel %vm730, %v6624, %v6752
    %v6881 = vsel %vm730, %v6625, %v6753
    %v6882 = vsel %vm730, %v6626, %v6754
    %v6883 = vsel %vm730, %v6627, %v6755
    %v6884 = vsel %vm730, %v6628, %v6756
    %v6885 = vsel %vm730, %v6629, %v6757
    %v6886 = vsel %vm730, %v6630, %v6758
    %v6887 = vsel %vm730, %v6631, %v6759
    %v6888 = vsel %vm730, %v6632, %v6760
    %v6889 = vsel %vm730, %v6633, %v6761
    %v6890 = vsel %vm730, %v6634, %v6762
    %v6891 = vsel %vm730, %v6635, %v6763
    %v6892 = vsel %vm730, %v6636, %v6764
    %v6893 = vsel %vm730, %v6637, %v6765
    %v6894 = vsel %vm730, %v6638, %v6766
    %v6895 = vsel %vm730, %v6639, %v6767
    %v6896 = vsel %vm730, %v6640, %v6768
    %v6897 = vsel %vm730, %v6641, %v6769
    %v6898 = vsel %vm730, %v6642, %v6770
    %v6899 = vsel %vm730, %v6643, %v6771
    %v6900 = vsel %vm730, %v6644, %v6772
    %v6901 = vsel %vm730, %v6645, %v6773
    %v6966 = vrot.slane %v6839, 6
    %v6967 = vrot.slane %v6840, 4
    %v6968 = vrot.slane %v6841, 2
    %v6969 = vrot.slane %v6843, 6
    %v6970 = vrot.slane %v6844, 4
    %v6971 = vrot.slane %v6845, 2
    %v6972 = vrot.slane %v6847, 6
    %v6973 = vrot.slane %v6848, 4
    %v6974 = vrot.slane %v6849, 2
    %v6975 = vrot.slane %v6851, 6
    %v6976 = vrot.slane %v6852, 4
    %v6977 = vrot.slane %v6853, 2
    %v6978 = vrot.slane %v6855, 6
    %v6979 = vrot.slane %v6856, 4
    %v6980 = vrot.slane %v6857, 2
    %v6981 = vrot.slane %v6859, 6
    %v6982 = vrot.slane %v6860, 4
    %v6983 = vrot.slane %v6861, 2
    %v6984 = vrot.slane %v6863, 6
    %v6985 = vrot.slane %v6864, 4
    %v6986 = vrot.slane %v6865, 2
    %v6987 = vrot.slane %v6867, 6
    %v6988 = vrot.slane %v6868, 4
    %v6989 = vrot.slane %v6869, 2
    %v6990 = vrot.slane %v6871, 6
    %v6991 = vrot.slane %v6872, 4
    %v6992 = vrot.slane %v6873, 2
    %v6993 = vrot.slane %v6875, 6
    %v6994 = vrot.slane %v6876, 4
    %v6995 = vrot.slane %v6877, 2
    %v6996 = vrot.slane %v6879, 6
    %v6997 = vrot.slane %v6880, 4
    %v6998 = vrot.slane %v6881, 2
    %v6999 = vrot.slane %v6883, 6
    %v7000 = vrot.slane %v6884, 4
    %v7001 = vrot.slane %v6885, 2
    %v7002 = vrot.slane %v6887, 6
    %v7003 = vrot.slane %v6888, 4
    %v7004 = vrot.slane %v6889, 2
    %v7005 = vrot.slane %v6891, 6
    %v7006 = vrot.slane %v6892, 4
    %v7007 = vrot.slane %v6893, 2
    %v7008 = vrot.slane %v6895, 6
    %v7009 = vrot.slane %v6896, 4
    %v7010 = vrot.slane %v6897, 2
    %v7011 = vrot.slane %v6899, 6
    %v7012 = vrot.slane %v6900, 4
    %v7013 = vrot.slane %v6901, 2
    %v7014 = vsel %vm338, %v6838, %v6966
    %v7015 = vsel %vm2657, %v6967, %v6968
    %v7016 = vsel %vm1357, %v7014, %v7015
    %v7017 = vsel %vm338, %v6842, %v6969
    %v7018 = vsel %vm2657, %v6970, %v6971
    %v7019 = vsel %vm1357, %v7017, %v7018
    %v7020 = vsel %vm338, %v6846, %v6972
    %v7021 = vsel %vm2657, %v6973, %v6974
    %v7022 = vsel %vm1357, %v7020, %v7021
    %v7023 = vsel %vm338, %v6850, %v6975
    %v7024 = vsel %vm2657, %v6976, %v6977
    %v7025 = vsel %vm1357, %v7023, %v7024
    %v7026 = vsel %vm338, %v6854, %v6978
    %v7027 = vsel %vm2657, %v6979, %v6980
    %v7028 = vsel %vm1357, %v7026, %v7027
    %v7029 = vsel %vm338, %v6858, %v6981
    %v7030 = vsel %vm2657, %v6982, %v6983
    %v7031 = vsel %vm1357, %v7029, %v7030
    %v7032 = vsel %vm338, %v6862, %v6984
    %v7033 = vsel %vm2657, %v6985, %v6986
    %v7034 = vsel %vm1357, %v7032, %v7033
    %v7035 = vsel %vm338, %v6866, %v6987
    %v7036 = vsel %vm2657, %v6988, %v6989
    %v7037 = vsel %vm1357, %v7035, %v7036
    %v7038 = vsel %vm338, %v6870, %v6990
    %v7039 = vsel %vm2657, %v6991, %v6992
    %v7040 = vsel %vm1357, %v7038, %v7039
    %v7041 = vsel %vm338, %v6874, %v6993
    %v7042 = vsel %vm2657, %v6994, %v6995
    %v7043 = vsel %vm1357, %v7041, %v7042
    %v7044 = vsel %vm338, %v6878, %v6996
    %v7045 = vsel %vm2657, %v6997, %v6998
    %v7046 = vsel %vm1357, %v7044, %v7045
    %v7047 = vsel %vm338, %v6882, %v6999
    %v7048 = vsel %vm2657, %v7000, %v7001
    %v7049 = vsel %vm1357, %v7047, %v7048
    %v7050 = vsel %vm338, %v6886, %v7002
    %v7051 = vsel %vm2657, %v7003, %v7004
    %v7052 = vsel %vm1357, %v7050, %v7051
    %v7053 = vsel %vm338, %v6890, %v7005
    %v7054 = vsel %vm2657, %v7006, %v7007
    %v7055 = vsel %vm1357, %v7053, %v7054
    %v7056 = vsel %vm338, %v6894, %v7008
    %v7057 = vsel %vm2657, %v7009, %v7010
    %v7058 = vsel %vm1357, %v7056, %v7057
    %v7059 = vsel %vm338, %v6898, %v7011
    %v7060 = vsel %vm2657, %v7012, %v7013
    %v7061 = vsel %vm1357, %v7059, %v7060
    %7062 = vst [vmem:[#allocation1] ss:$4 sm:$0xff] %v7016
    %s7063 = scalar_lea.vmem [#allocation1], 1
    %7064 = vst [vmem:[%s7063] ss:$4 sm:$0xff] %v7019
    %s7065 = scalar_lea.vmem [#allocation1], 2
    %7066 = vst [vmem:[%s7065] ss:$4 sm:$0xff] %v7022
    %s7067 = scalar_lea.vmem [#allocation1], 3
    %7068 = vst [vmem:[%s7067] ss:$4 sm:$0xff] %v7025
    %s7069 = scalar_lea.vmem [#allocation1], 32
    %7070 = vst [vmem:[%s7069] ss:$4 sm:$0xff] %v7028
    %s7071 = scalar_lea.vmem [#allocation1], 33
    %7072 = vst [vmem:[%s7071] ss:$4 sm:$0xff] %v7031
    %s7073 = scalar_lea.vmem [#allocation1], 34
    %7074 = vst [vmem:[%s7073] ss:$4 sm:$0xff] %v7034
    %s7075 = scalar_lea.vmem [#allocation1], 35
    %7076 = vst [vmem:[%s7075] ss:$4 sm:$0xff] %v7037
    %v7077 = vld.sshfl [vmem:[#allocation1] sm:$0xff pattern:$0x73625140]
    %v7078 = vld.sshfl [vmem:[#allocation1 + $0x8] sm:$0xff pattern:$0x73625140]
    %v7079 = vld.sshfl [vmem:[#allocation1 + $0x10] sm:$0xff pattern:$0x73625140]
    %v7080 = vld.sshfl [vmem:[#allocation1 + $0x18] sm:$0xff pattern:$0x73625140]
    %v7081 = vld.sshfl [vmem:[#allocation1 + $0x20] sm:$0xff pattern:$0x73625140]
    %v7082 = vld.sshfl [vmem:[#allocation1 + $0x28] sm:$0xff pattern:$0x73625140]
    %v7083 = vld.sshfl [vmem:[#allocation1 + $0x30] sm:$0xff pattern:$0x73625140]
    %v7084 = vld.sshfl [vmem:[#allocation1 + $0x38] sm:$0xff pattern:$0x73625140]
    %7085 = vst [vmem:[#allocation1] ss:$4 sm:$0xff] %v7040
    %7086 = vst [vmem:[%s7063] ss:$4 sm:$0xff] %v7043
    %7087 = vst [vmem:[%s7065] ss:$4 sm:$0xff] %v7046
    %7088 = vst [vmem:[%s7067] ss:$4 sm:$0xff] %v7049
    %7089 = vst [vmem:[%s7069] ss:$4 sm:$0xff] %v7052
    %7090 = vst [vmem:[%s7071] ss:$4 sm:$0xff] %v7055
    %7091 = vst [vmem:[%s7073] ss:$4 sm:$0xff] %v7058
    %7092 = vst [vmem:[%s7075] ss:$4 sm:$0xff] %v7061
    %v7093 = vld.sshfl [vmem:[#allocation1] sm:$0xff pattern:$0x73625140]
    %v7094 = vld.sshfl [vmem:[#allocation1 + $0x8] sm:$0xff pattern:$0x73625140]
    %v7095 = vld.sshfl [vmem:[#allocation1 + $0x10] sm:$0xff pattern:$0x73625140]
    %v7096 = vld.sshfl [vmem:[#allocation1 + $0x18] sm:$0xff pattern:$0x73625140]
    %v7097 = vld.sshfl [vmem:[#allocation1 + $0x20] sm:$0xff pattern:$0x73625140]
    %v7098 = vld.sshfl [vmem:[#allocation1 + $0x28] sm:$0xff pattern:$0x73625140]
    %v7099 = vld.sshfl [vmem:[#allocation1 + $0x30] sm:$0xff pattern:$0x73625140]
    %v7100 = vld.sshfl [vmem:[#allocation1 + $0x38] sm:$0xff pattern:$0x73625140]
    %v7101 = vrot.slane %v7077, 7
    %v7102 = vrot.slane %v7078, 7
    %v7103 = vrot.slane %v7079, 7
    %v7104 = vrot.slane %v7080, 7
    %v7105 = vrot.slane %v7081, 7
    %v7106 = vsel %vm730, %v7101, %v7105
    %v7107 = vrot.slane %v7082, 7
    %v7108 = vsel %vm730, %v7102, %v7107
    %v7109 = vrot.slane %v7083, 7
    %v7110 = vsel %vm730, %v7103, %v7109
    %v7111 = vrot.slane %v7084, 7
    %v7112 = vsel %vm730, %v7104, %v7111
    %v7113 = vrot.slane %v7093, 7
    %v7114 = vrot.slane %v7094, 7
    %v7115 = vrot.slane %v7095, 7
    %v7116 = vrot.slane %v7096, 7
    %v7117 = vrot.slane %v7097, 7
    %v7118 = vsel %vm730, %v7113, %v7117
    %v7119 = vrot.slane %v7098, 7
    %v7120 = vsel %vm730, %v7114, %v7119
    %v7121 = vrot.slane %v7099, 7
    %v7122 = vsel %vm730, %v7115, %v7121
    %v7123 = vrot.slane %v7100, 7
    %v7124 = vsel %vm730, %v7116, %v7123
    %7149 = vst [vmem:[#allocation4] sm:$0xfe] %v7101
    %7150 = vst [vmem:[#allocation4 + $0x8] sm:$0xfe] %v7102
    %7151 = vst [vmem:[#allocation4 + $0x10] sm:$0xfe] %v7103
    %7152 = vst [vmem:[#allocation4 + $0x18] sm:$0xfe] %v7104
    %7153 = vst [vmem:[#allocation4 + $0x20] sm:$0xff] %v7106
    %7154 = vst [vmem:[#allocation4 + $0x28] sm:$0xff] %v7108
    %7155 = vst [vmem:[#allocation4 + $0x30] sm:$0xff] %v7110
    %7156 = vst [vmem:[#allocation4 + $0x38] sm:$0xff] %v7112
    %7157 = vst [vmem:[#allocation4 + $0x40] sm:$0x1] %v7105
    %7158 = vst [vmem:[#allocation4 + $0x48] sm:$0x1] %v7107
    %7159 = vst [vmem:[#allocation4 + $0x50] sm:$0x1] %v7109
    %7160 = vst [vmem:[#allocation4 + $0x58] sm:$0x1] %v7111
    %7161 = vst [vmem:[#allocation4 + $0x60] sm:$0xfe] %v7113
    %7162 = vst [vmem:[#allocation4 + $0x68] sm:$0xfe] %v7114
    %7163 = vst [vmem:[#allocation4 + $0x70] sm:$0xfe] %v7115
    %7164 = vst [vmem:[#allocation4 + $0x78] sm:$0xfe] %v7116
    %7165 = vst [vmem:[#allocation4 + $0x80] sm:$0xff] %v7118
    %7166 = vst [vmem:[#allocation4 + $0x88] sm:$0xff] %v7120
    %7167 = vst [vmem:[#allocation4 + $0x90] sm:$0xff] %v7122
    %7168 = vst [vmem:[#allocation4 + $0x98] sm:$0xff] %v7124
    %7169 = vst [vmem:[#allocation4 + $0xa0] sm:$0x1] %v7117
    %7170 = vst [vmem:[#allocation4 + $0xa8] sm:$0x1] %v7119
    %7171 = vst [vmem:[#allocation4 + $0xb0] sm:$0x1] %v7121
    %7172 = vst [vmem:[#allocation4 + $0xb8] sm:$0x1] %v7123
    %v7173 = vld [vmem:[#allocation4] sm:$0xff]
    %v7174 = vld [vmem:[#allocation4 + $0x8] sm:$0xff]
    %v7175 = vld [vmem:[#allocation4 + $0x10] sm:$0xff]
    %v7176 = vld [vmem:[#allocation4 + $0x18] sm:$0xff]
    %v7177 = vld [vmem:[#allocation4 + $0x20] sm:$0xff]
    %v7178 = vld [vmem:[#allocation4 + $0x28] sm:$0xff]
    %v7179 = vld [vmem:[#allocation4 + $0x30] sm:$0xff]
    %v7180 = vld [vmem:[#allocation4 + $0x38] sm:$0xff]
    %v7181 = vld [vmem:[#allocation4 + $0x60] sm:$0xff]
    %v7182 = vld [vmem:[#allocation4 + $0x68] sm:$0xff]
    %v7183 = vld [vmem:[#allocation4 + $0x70] sm:$0xff]
    %v7184 = vld [vmem:[#allocation4 + $0x78] sm:$0xff]
    %v7185 = vld [vmem:[#allocation4 + $0x80] sm:$0xff]
    %v7186 = vld [vmem:[#allocation4 + $0x88] sm:$0xff]
    %v7187 = vld [vmem:[#allocation4 + $0x90] sm:$0xff]
    %v7188 = vld [vmem:[#allocation4 + $0x98] sm:$0xff]
    %v7189 = vld [vmem:[%s7] sm:$0xff]
    %v7190 = vld [vmem:[%s7 + $0x8] sm:$0xff]
    %v7191 = vld [vmem:[%s7 + $0x10] sm:$0xff]
    %v7192 = vld [vmem:[%s7 + $0x18] sm:$0xff]
    %v7193 = vld [vmem:[%s7 + $0x20] sm:$0xff]
    %v7194 = vld [vmem:[%s7 + $0x28] sm:$0xff]
    %v7195 = vld [vmem:[%s7 + $0x30] sm:$0xff]
    %v7196 = vld [vmem:[%s7 + $0x38] sm:$0xff]
    %v7197 = vld [vmem:[%s7 + $0x40] sm:$0xff]
    %v7198 = vld [vmem:[%s7 + $0x48] sm:$0xff]
    %v7199 = vld [vmem:[%s7 + $0x50] sm:$0xff]
    %v7200 = vld [vmem:[%s7 + $0x58] sm:$0xff]
    %v7201 = vld [vmem:[%s7 + $0x60] sm:$0xff]
    %v7202 = vld [vmem:[%s7 + $0x68] sm:$0xff]
    %v7203 = vld [vmem:[%s7 + $0x70] sm:$0xff]
    %v7204 = vld [vmem:[%s7 + $0x78] sm:$0xff]
    %v7205 = vld [vmem:[%s7 + $0x80] sm:$0xff]
    %v7206 = vld [vmem:[%s7 + $0x88] sm:$0xff]
    %v7207 = vld [vmem:[%s7 + $0x90] sm:$0xff]
    %v7208 = vld [vmem:[%s7 + $0x98] sm:$0xff]
    %v7209 = vld [vmem:[%s7 + $0xa0] sm:$0xff]
    %v7210 = vld [vmem:[%s7 + $0xa8] sm:$0xff]
    %v7211 = vld [vmem:[%s7 + $0xb0] sm:$0xff]
    %v7212 = vld [vmem:[%s7 + $0xb8] sm:$0xff]
    %v7213 = vld [vmem:[%s7 + $0xc0] sm:$0xff]
    %v7214 = vld [vmem:[%s7 + $0xc8] sm:$0xff]
    %v7215 = vld [vmem:[%s7 + $0xd0] sm:$0xff]
    %v7216 = vld [vmem:[%s7 + $0xd8] sm:$0xff]
    %v7217 = vld [vmem:[%s7 + $0xe0] sm:$0xff]
    %v7218 = vld [vmem:[%s7 + $0xe8] sm:$0xff]
    %v7219 = vld [vmem:[%s7 + $0xf0] sm:$0xff]
    %v7220 = vld [vmem:[%s7 + $0xf8] sm:$0xff]
    %v7221 = vld [vmem:[%s7 + $0x100] sm:$0xff]
    %v7222 = vld [vmem:[%s7 + $0x108] sm:$0xff]
    %v7223 = vld [vmem:[%s7 + $0x110] sm:$0xff]
    %v7224 = vld [vmem:[%s7 + $0x118] sm:$0xff]
    %v7225 = vld [vmem:[%s7 + $0x120] sm:$0xff]
    %v7226 = vld [vmem:[%s7 + $0x128] sm:$0xff]
    %v7227 = vld [vmem:[%s7 + $0x130] sm:$0xff]
    %v7228 = vld [vmem:[%s7 + $0x138] sm:$0xff]
    %v7229 = vld [vmem:[%s7 + $0x140] sm:$0xff]
    %v7230 = vld [vmem:[%s7 + $0x148] sm:$0xff]
    %v7231 = vld [vmem:[%s7 + $0x150] sm:$0xff]
    %v7232 = vld [vmem:[%s7 + $0x158] sm:$0xff]
    %v7233 = vld [vmem:[%s7 + $0x160] sm:$0xff]
    %v7234 = vld [vmem:[%s7 + $0x168] sm:$0xff]
    %v7235 = vld [vmem:[%s7 + $0x170] sm:$0xff]
    %v7236 = vld [vmem:[%s7 + $0x178] sm:$0xff]
    %v7237 = vld [vmem:[%s7 + $0x180] sm:$0xff]
    %v7238 = vld [vmem:[%s7 + $0x188] sm:$0xff]
    %v7239 = vld [vmem:[%s7 + $0x190] sm:$0xff]
    %v7240 = vld [vmem:[%s7 + $0x198] sm:$0xff]
    %v7241 = vld [vmem:[%s7 + $0x1a0] sm:$0xff]
    %v7242 = vld [vmem:[%s7 + $0x1a8] sm:$0xff]
    %v7243 = vld [vmem:[%s7 + $0x1b0] sm:$0xff]
    %v7244 = vld [vmem:[%s7 + $0x1b8] sm:$0xff]
    %v7245 = vld [vmem:[%s7 + $0x1c0] sm:$0xff]
    %v7246 = vld [vmem:[%s7 + $0x1c8] sm:$0xff]
    %v7247 = vld [vmem:[%s7 + $0x1d0] sm:$0xff]
    %v7248 = vld [vmem:[%s7 + $0x1d8] sm:$0xff]
    %v7249 = vld [vmem:[%s7 + $0x1e0] sm:$0xff]
    %v7250 = vld [vmem:[%s7 + $0x1e8] sm:$0xff]
    %v7251 = vld [vmem:[%s7 + $0x1f0] sm:$0xff]
    %v7252 = vld [vmem:[%s7 + $0x1f8] sm:$0xff]
    %v7253 = vld [vmem:[#allocation4] sm:$0xfe]
    %v7254 = vld [vmem:[#allocation4 + $0x8] sm:$0xfe]
    %v7255 = vld [vmem:[#allocation4 + $0x10] sm:$0xfe]
    %v7256 = vld [vmem:[#allocation4 + $0x18] sm:$0xfe]
    %v7257 = vld [vmem:[#allocation4 + $0x40] sm:$0x1]
    %v7258 = vld [vmem:[#allocation4 + $0x48] sm:$0x1]
    %v7259 = vld [vmem:[#allocation4 + $0x50] sm:$0x1]
    %v7260 = vld [vmem:[#allocation4 + $0x58] sm:$0x1]
    %v7261 = vld [vmem:[#allocation4 + $0x60] sm:$0xfe]
    %v7262 = vld [vmem:[#allocation4 + $0x68] sm:$0xfe]
    %v7263 = vld [vmem:[#allocation4 + $0x70] sm:$0xfe]
    %v7264 = vld [vmem:[#allocation4 + $0x78] sm:$0xfe]
    %v7265 = vld [vmem:[#allocation4 + $0xa0] sm:$0x1]
    %v7266 = vld [vmem:[#allocation4 + $0xa8] sm:$0x1]
    %v7267 = vld [vmem:[#allocation4 + $0xb0] sm:$0x1]
    %v7268 = vld [vmem:[#allocation4 + $0xb8] sm:$0x1]
    %s7269 = scalar_lea.vmem %s7, 512
    %v7270 = vld [vmem:[%s7269] sm:$0xff]
    %v7271 = vld [vmem:[%s7269 + $0x8] sm:$0xff]
    %v7272 = vld [vmem:[%s7269 + $0x10] sm:$0xff]
    %v7273 = vld [vmem:[%s7269 + $0x18] sm:$0xff]
    %v7274 = vld [vmem:[%s7269 + $0x20] sm:$0xff]
    %v7275 = vld [vmem:[%s7269 + $0x28] sm:$0xff]
    %v7276 = vld [vmem:[%s7269 + $0x30] sm:$0xff]
    %v7277 = vld [vmem:[%s7269 + $0x38] sm:$0xff]
    %v7278 = vld [vmem:[%s7269 + $0x40] sm:$0xff]
    %v7279 = vld [vmem:[%s7269 + $0x48] sm:$0xff]
    %v7280 = vld [vmem:[%s7269 + $0x50] sm:$0xff]
    %v7281 = vld [vmem:[%s7269 + $0x58] sm:$0xff]
    %v7282 = vld [vmem:[%s7269 + $0x60] sm:$0xff]
    %v7283 = vld [vmem:[%s7269 + $0x68] sm:$0xff]
    %v7284 = vld [vmem:[%s7269 + $0x70] sm:$0xff]
    %v7285 = vld [vmem:[%s7269 + $0x78] sm:$0xff]
    %v7286 = vld [vmem:[%s7269 + $0x80] sm:$0xff]
    %v7287 = vld [vmem:[%s7269 + $0x88] sm:$0xff]
    %v7288 = vld [vmem:[%s7269 + $0x90] sm:$0xff]
    %v7289 = vld [vmem:[%s7269 + $0x98] sm:$0xff]
    %v7290 = vld [vmem:[%s7269 + $0xa0] sm:$0xff]
    %v7291 = vld [vmem:[%s7269 + $0xa8] sm:$0xff]
    %v7292 = vld [vmem:[%s7269 + $0xb0] sm:$0xff]
    %v7293 = vld [vmem:[%s7269 + $0xb8] sm:$0xff]
    %v7294 = vld [vmem:[%s7269 + $0xc0] sm:$0xff]
    %v7295 = vld [vmem:[%s7269 + $0xc8] sm:$0xff]
    %v7296 = vld [vmem:[%s7269 + $0xd0] sm:$0xff]
    %v7297 = vld [vmem:[%s7269 + $0xd8] sm:$0xff]
    %v7298 = vld [vmem:[%s7269 + $0xe0] sm:$0xff]
    %v7299 = vld [vmem:[%s7269 + $0xe8] sm:$0xff]
    %v7300 = vld [vmem:[%s7269 + $0xf0] sm:$0xff]
    %v7301 = vld [vmem:[%s7269 + $0xf8] sm:$0xff]
    %v7302 = vld [vmem:[%s7269 + $0x100] sm:$0xff]
    %v7303 = vld [vmem:[%s7269 + $0x108] sm:$0xff]
    %v7304 = vld [vmem:[%s7269 + $0x110] sm:$0xff]
    %v7305 = vld [vmem:[%s7269 + $0x118] sm:$0xff]
    %v7306 = vld [vmem:[%s7269 + $0x120] sm:$0xff]
    %v7307 = vld [vmem:[%s7269 + $0x128] sm:$0xff]
    %v7308 = vld [vmem:[%s7269 + $0x130] sm:$0xff]
    %v7309 = vld [vmem:[%s7269 + $0x138] sm:$0xff]
    %v7310 = vld [vmem:[%s7269 + $0x140] sm:$0xff]
    %v7311 = vld [vmem:[%s7269 + $0x148] sm:$0xff]
    %v7312 = vld [vmem:[%s7269 + $0x150] sm:$0xff]
    %v7313 = vld [vmem:[%s7269 + $0x158] sm:$0xff]
    %v7314 = vld [vmem:[%s7269 + $0x160] sm:$0xff]
    %v7315 = vld [vmem:[%s7269 + $0x168] sm:$0xff]
    %v7316 = vld [vmem:[%s7269 + $0x170] sm:$0xff]
    %v7317 = vld [vmem:[%s7269 + $0x178] sm:$0xff]
    %v7318 = vld [vmem:[%s7269 + $0x180] sm:$0xff]
    %v7319 = vld [vmem:[%s7269 + $0x188] sm:$0xff]
    %v7320 = vld [vmem:[%s7269 + $0x190] sm:$0xff]
    %v7321 = vld [vmem:[%s7269 + $0x198] sm:$0xff]
    %v7322 = vld [vmem:[%s7269 + $0x1a0] sm:$0xff]
    %v7323 = vld [vmem:[%s7269 + $0x1a8] sm:$0xff]
    %v7324 = vld [vmem:[%s7269 + $0x1b0] sm:$0xff]
    %v7325 = vld [vmem:[%s7269 + $0x1b8] sm:$0xff]
    %v7326 = vld [vmem:[%s7269 + $0x1c0] sm:$0xff]
    %v7327 = vld [vmem:[%s7269 + $0x1c8] sm:$0xff]
    %v7328 = vld [vmem:[%s7269 + $0x1d0] sm:$0xff]
    %v7329 = vld [vmem:[%s7269 + $0x1d8] sm:$0xff]
    %v7330 = vld [vmem:[%s7269 + $0x1e0] sm:$0xff]
    %v7331 = vld [vmem:[%s7269 + $0x1e8] sm:$0xff]
    %v7332 = vld [vmem:[%s7269 + $0x1f0] sm:$0xff]
    %v7333 = vld [vmem:[%s7269 + $0x1f8] sm:$0xff]
    %v7358 = vrot.slane %v7253, 1
    %v7359 = vrot.slane %v7177, 1
    %v7360 = vsel %vm4301, %v7358, %v7359
    %v7361 = vrot.slane %v7254, 1
    %v7362 = vrot.slane %v7178, 1
    %v7363 = vsel %vm4301, %v7361, %v7362
    %v7364 = vrot.slane %v7255, 1
    %v7365 = vrot.slane %v7179, 1
    %v7366 = vsel %vm4301, %v7364, %v7365
    %v7367 = vrot.slane %v7256, 1
    %v7368 = vrot.slane %v7180, 1
    %v7369 = vsel %vm4301, %v7367, %v7368
    %v7370 = vrot.slane %v7257, 1
    %v7371 = vsel %vm4301, %v7359, %v7370
    %v7372 = vrot.slane %v7258, 1
    %v7373 = vsel %vm4301, %v7362, %v7372
    %v7374 = vrot.slane %v7259, 1
    %v7375 = vsel %vm4301, %v7365, %v7374
    %v7376 = vrot.slane %v7260, 1
    %v7377 = vsel %vm4301, %v7368, %v7376
    %v7378 = vrot.slane %v7261, 1
    %v7379 = vrot.slane %v7185, 1
    %v7380 = vsel %vm4301, %v7378, %v7379
    %v7381 = vrot.slane %v7262, 1
    %v7382 = vrot.slane %v7186, 1
    %v7383 = vsel %vm4301, %v7381, %v7382
    %v7384 = vrot.slane %v7263, 1
    %v7385 = vrot.slane %v7187, 1
    %v7386 = vsel %vm4301, %v7384, %v7385
    %v7387 = vrot.slane %v7264, 1
    %v7388 = vrot.slane %v7188, 1
    %v7389 = vsel %vm4301, %v7387, %v7388
    %v7390 = vrot.slane %v7265, 1
    %v7391 = vsel %vm4301, %v7379, %v7390
    %v7392 = vrot.slane %v7266, 1
    %v7393 = vsel %vm4301, %v7382, %v7392
    %v7394 = vrot.slane %v7267, 1
    %v7395 = vsel %vm4301, %v7385, %v7394
    %v7396 = vrot.slane %v7268, 1
    %v7397 = vsel %vm4301, %v7388, %v7396
    %7414 = vmatpush.msra.mxu0 %v7285
    %7415 = vmatpush.msra.mxu0 %v7284
    %7416 = vmatpush.msra.mxu0 %v7283
    %7417 = vmatpush.msra.mxu0 %v7282
    %7418 = vmatpush.msra.mxu0 %v7281
    %7419 = vmatpush.msra.mxu0 %v7280
    %7420 = vmatpush.msra.mxu0 %v7279
    %7421 = vmatpush.msra.mxu0 %v7278
    %7422 = vmatpush.msra.mxu0 %v7277
    %7423 = vmatpush.msra.mxu0 %v7276
    %7424 = vmatpush.msra.mxu0 %v7275
    %7425 = vmatpush.msra.mxu0 %v7274
    %7426 = vmatpush.msra.mxu0 %v7273
    %7427 = vmatpush.msra.mxu0 %v7272
    %7428 = vmatpush.msra.mxu0 %v7271
    %7429 = vmatpush.msra.mxu0 %v7270
    %7430 = vmatmul.f32.gmra.mxu0 %v7360
    %v7431 = vpop.f32.mrf.mxu0
    %v7432 = vadd.f32 0.0, %v7431
    %7433 = vmatmul.f32.gmra.mxu0 %v7371
    %v7434 = vpop.f32.mrf.mxu0
    %v7435 = vadd.f32 0.0, %v7434
    %7436 = vmatmul.f32.gmra.mxu0 %v7380
    %v7437 = vpop.f32.mrf.mxu0
    %v7438 = vadd.f32 0.0, %v7437
    %7439 = vmatmul.f32.gmra.mxu0 %v7391
    %v7440 = vpop.f32.mrf.mxu0
    %v7441 = vadd.f32 0.0, %v7440
    %7442 = vdwg.mxu0
    %7443 = vmatpush.msra.mxu0 %v7301
    %7444 = vmatpush.msra.mxu0 %v7300
    %7445 = vmatpush.msra.mxu0 %v7299
    %7446 = vmatpush.msra.mxu0 %v7298
    %7447 = vmatpush.msra.mxu0 %v7297
    %7448 = vmatpush.msra.mxu0 %v7296
    %7449 = vmatpush.msra.mxu0 %v7295
    %7450 = vmatpush.msra.mxu0 %v7294
    %7451 = vmatpush.msra.mxu0 %v7293
    %7452 = vmatpush.msra.mxu0 %v7292
    %7453 = vmatpush.msra.mxu0 %v7291
    %7454 = vmatpush.msra.mxu0 %v7290
    %7455 = vmatpush.msra.mxu0 %v7289
    %7456 = vmatpush.msra.mxu0 %v7288
    %7457 = vmatpush.msra.mxu0 %v7287
    %7458 = vmatpush.msra.mxu0 %v7286
    %7459 = vmatmul.f32.gmra.mxu0 %v7363
    %v7460 = vpop.f32.mrf.mxu0
    %v7461 = vadd.f32 %v7432, %v7460
    %7462 = vmatmul.f32.gmra.mxu0 %v7373
    %v7463 = vpop.f32.mrf.mxu0
    %v7464 = vadd.f32 %v7435, %v7463
    %7465 = vmatmul.f32.gmra.mxu0 %v7383
    %v7466 = vpop.f32.mrf.mxu0
    %v7467 = vadd.f32 %v7438, %v7466
    %7468 = vmatmul.f32.gmra.mxu0 %v7393
    %v7469 = vpop.f32.mrf.mxu0
    %v7470 = vadd.f32 %v7441, %v7469
    %7471 = vdwg.mxu0
    %7472 = vmatpush.msra.mxu0 %v7317
    %7473 = vmatpush.msra.mxu0 %v7316
    %7474 = vmatpush.msra.mxu0 %v7315
    %7475 = vmatpush.msra.mxu0 %v7314
    %7476 = vmatpush.msra.mxu0 %v7313
    %7477 = vmatpush.msra.mxu0 %v7312
    %7478 = vmatpush.msra.mxu0 %v7311
    %7479 = vmatpush.msra.mxu0 %v7310
    %7480 = vmatpush.msra.mxu0 %v7309
    %7481 = vmatpush.msra.mxu0 %v7308
    %7482 = vmatpush.msra.mxu0 %v7307
    %7483 = vmatpush.msra.mxu0 %v7306
    %7484 = vmatpush.msra.mxu0 %v7305
    %7485 = vmatpush.msra.mxu0 %v7304
    %7486 = vmatpush.msra.mxu0 %v7303
    %7487 = vmatpush.msra.mxu0 %v7302
    %7488 = vmatmul.f32.gmra.mxu0 %v7366
    %v7489 = vpop.f32.mrf.mxu0
    %v7490 = vadd.f32 %v7461, %v7489
    %7491 = vmatmul.f32.gmra.mxu0 %v7375
    %v7492 = vpop.f32.mrf.mxu0
    %v7493 = vadd.f32 %v7464, %v7492
    %7494 = vmatmul.f32.gmra.mxu0 %v7386
    %v7495 = vpop.f32.mrf.mxu0
    %v7496 = vadd.f32 %v7467, %v7495
    %7497 = vmatmul.f32.gmra.mxu0 %v7395
    %v7498 = vpop.f32.mrf.mxu0
    %v7499 = vadd.f32 %v7470, %v7498
    %7500 = vdwg.mxu0
    %7501 = vmatpush.msra.mxu0 %v7333
    %7502 = vmatpush.msra.mxu0 %v7332
    %7503 = vmatpush.msra.mxu0 %v7331
    %7504 = vmatpush.msra.mxu0 %v7330
    %7505 = vmatpush.msra.mxu0 %v7329
    %7506 = vmatpush.msra.mxu0 %v7328
    %7507 = vmatpush.msra.mxu0 %v7327
    %7508 = vmatpush.msra.mxu0 %v7326
    %7509 = vmatpush.msra.mxu0 %v7325
    %7510 = vmatpush.msra.mxu0 %v7324
    %7511 = vmatpush.msra.mxu0 %v7323
    %7512 = vmatpush.msra.mxu0 %v7322
    %7513 = vmatpush.msra.mxu0 %v7321
    %7514 = vmatpush.msra.mxu0 %v7320
    %7515 = vmatpush.msra.mxu0 %v7319
    %7516 = vmatpush.msra.mxu0 %v7318
    %7517 = vmatmul.f32.gmra.mxu0 %v7369
    %v7518 = vpop.f32.mrf.mxu0
    %v7519 = vadd.f32 %v7490, %v7518
    %7520 = vmatmul.f32.gmra.mxu0 %v7377
    %v7521 = vpop.f32.mrf.mxu0
    %v7522 = vadd.f32 %v7493, %v7521
    %7523 = vmatmul.f32.gmra.mxu0 %v7389
    %v7524 = vpop.f32.mrf.mxu0
    %v7525 = vadd.f32 %v7496, %v7524
    %7526 = vmatmul.f32.gmra.mxu0 %v7397
    %v7527 = vpop.f32.mrf.mxu0
    %v7528 = vadd.f32 %v7499, %v7527
    %7529 = vdwg.mxu0
    %7530 = vmatpush.msra.mxu0 %v7204
    %7531 = vmatpush.msra.mxu0 %v7203
    %7532 = vmatpush.msra.mxu0 %v7202
    %7533 = vmatpush.msra.mxu0 %v7201
    %7534 = vmatpush.msra.mxu0 %v7200
    %7535 = vmatpush.msra.mxu0 %v7199
    %7536 = vmatpush.msra.mxu0 %v7198
    %7537 = vmatpush.msra.mxu0 %v7197
    %7538 = vmatpush.msra.mxu0 %v7196
    %7539 = vmatpush.msra.mxu0 %v7195
    %7540 = vmatpush.msra.mxu0 %v7194
    %7541 = vmatpush.msra.mxu0 %v7193
    %7542 = vmatpush.msra.mxu0 %v7192
    %7543 = vmatpush.msra.mxu0 %v7191
    %7544 = vmatpush.msra.mxu0 %v7190
    %7545 = vmatpush.msra.mxu0 %v7189
    %7546 = vmatmul.f32.gmra.mxu0 %v7173
    %v7547 = vpop.f32.mrf.mxu0
    %v7548 = vadd.f32 %v7519, %v7547
    %7549 = vmatmul.f32.gmra.mxu0 %v7177
    %v7550 = vpop.f32.mrf.mxu0
    %v7551 = vadd.f32 %v7522, %v7550
    %7552 = vmatmul.f32.gmra.mxu0 %v7181
    %v7553 = vpop.f32.mrf.mxu0
    %v7554 = vadd.f32 %v7525, %v7553
    %7555 = vmatmul.f32.gmra.mxu0 %v7185
    %v7556 = vpop.f32.mrf.mxu0
    %v7557 = vadd.f32 %v7528, %v7556
    %7558 = vdwg.mxu0
    %7559 = vmatpush.msra.mxu0 %v7220
    %7560 = vmatpush.msra.mxu0 %v7219
    %7561 = vmatpush.msra.mxu0 %v7218
    %7562 = vmatpush.msra.mxu0 %v7217
    %7563 = vmatpush.msra.mxu0 %v7216
    %7564 = vmatpush.msra.mxu0 %v7215
    %7565 = vmatpush.msra.mxu0 %v7214
    %7566 = vmatpush.msra.mxu0 %v7213
    %7567 = vmatpush.msra.mxu0 %v7212
    %7568 = vmatpush.msra.mxu0 %v7211
    %7569 = vmatpush.msra.mxu0 %v7210
    %7570 = vmatpush.msra.mxu0 %v7209
    %7571 = vmatpush.msra.mxu0 %v7208
    %7572 = vmatpush.msra.mxu0 %v7207
    %7573 = vmatpush.msra.mxu0 %v7206
    %7574 = vmatpush.msra.mxu0 %v7205
    %7575 = vmatmul.f32.gmra.mxu0 %v7174
    %v7576 = vpop.f32.mrf.mxu0
    %v7577 = vadd.f32 %v7548, %v7576
    %7578 = vmatmul.f32.gmra.mxu0 %v7178
    %v7579 = vpop.f32.mrf.mxu0
    %v7580 = vadd.f32 %v7551, %v7579
    %7581 = vmatmul.f32.gmra.mxu0 %v7182
    %v7582 = vpop.f32.mrf.mxu0
    %v7583 = vadd.f32 %v7554, %v7582
    %7584 = vmatmul.f32.gmra.mxu0 %v7186
    %v7585 = vpop.f32.mrf.mxu0
    %v7586 = vadd.f32 %v7557, %v7585
    %7587 = vdwg.mxu0
    %7588 = vmatpush.msra.mxu0 %v7236
    %7589 = vmatpush.msra.mxu0 %v7235
    %7590 = vmatpush.msra.mxu0 %v7234
    %7591 = vmatpush.msra.mxu0 %v7233
    %7592 = vmatpush.msra.mxu0 %v7232
    %7593 = vmatpush.msra.mxu0 %v7231
    %7594 = vmatpush.msra.mxu0 %v7230
    %7595 = vmatpush.msra.mxu0 %v7229
    %7596 = vmatpush.msra.mxu0 %v7228
    %7597 = vmatpush.msra.mxu0 %v7227
    %7598 = vmatpush.msra.mxu0 %v7226
    %7599 = vmatpush.msra.mxu0 %v7225
    %7600 = vmatpush.msra.mxu0 %v7224
    %7601 = vmatpush.msra.mxu0 %v7223
    %7602 = vmatpush.msra.mxu0 %v7222
    %7603 = vmatpush.msra.mxu0 %v7221
    %7604 = vmatmul.f32.gmra.mxu0 %v7175
    %v7605 = vpop.f32.mrf.mxu0
    %v7606 = vadd.f32 %v7577, %v7605
    %7607 = vmatmul.f32.gmra.mxu0 %v7179
    %v7608 = vpop.f32.mrf.mxu0
    %v7609 = vadd.f32 %v7580, %v7608
    %7610 = vmatmul.f32.gmra.mxu0 %v7183
    %v7611 = vpop.f32.mrf.mxu0
    %v7612 = vadd.f32 %v7583, %v7611
    %7613 = vmatmul.f32.gmra.mxu0 %v7187
    %v7614 = vpop.f32.mrf.mxu0
    %v7615 = vadd.f32 %v7586, %v7614
    %7616 = vdwg.mxu0
    %7617 = vmatpush.msra.mxu0 %v7252
    %7618 = vmatpush.msra.mxu0 %v7251
    %7619 = vmatpush.msra.mxu0 %v7250
    %7620 = vmatpush.msra.mxu0 %v7249
    %7621 = vmatpush.msra.mxu0 %v7248
    %7622 = vmatpush.msra.mxu0 %v7247
    %7623 = vmatpush.msra.mxu0 %v7246
    %7624 = vmatpush.msra.mxu0 %v7245
    %7625 = vmatpush.msra.mxu0 %v7244
    %7626 = vmatpush.msra.mxu0 %v7243
    %7627 = vmatpush.msra.mxu0 %v7242
    %7628 = vmatpush.msra.mxu0 %v7241
    %7629 = vmatpush.msra.mxu0 %v7240
    %7630 = vmatpush.msra.mxu0 %v7239
    %7631 = vmatpush.msra.mxu0 %v7238
    %7632 = vmatpush.msra.mxu0 %v7237
    %7633 = vmatmul.f32.gmra.mxu0 %v7176
    %v7634 = vpop.f32.mrf.mxu0
    %v7635 = vadd.f32 %v7606, %v7634
    %7636 = vmatmul.f32.gmra.mxu0 %v7180
    %v7637 = vpop.f32.mrf.mxu0
    %v7638 = vadd.f32 %v7609, %v7637
    %7639 = vmatmul.f32.gmra.mxu0 %v7184
    %v7640 = vpop.f32.mrf.mxu0
    %v7641 = vadd.f32 %v7612, %v7640
    %7642 = vmatmul.f32.gmra.mxu0 %v7188
    %v7643 = vpop.f32.mrf.mxu0
    %v7644 = vadd.f32 %v7615, %v7643
    %7645 = vdwg.mxu0
    %v7646 = vld [vmem:[#allocation18] sm:$0x1]
    %v7648 = vperm.slane %v7646, 0
    %v7650 = vadd.f32 %v7635, %v7648
    %v7651 = vadd.f32 %v7638, %v7648
    %v7652 = vadd.f32 %v7641, %v7648
    %v7653 = vadd.f32 %v7644, %v7648
    %v7654 = vmax.f32 %v7650, 0.0
    %v7655 = vmax.f32 %v7651, 0.0
    %v7656 = vmax.f32 %v7652, 0.0
    %v7657 = vmax.f32 %v7653, 0.0
    %s7658 = scalar_lea.vmem %s7, 1024
    %v7659 = vld [vmem:[%s7658] sm:$0xff]
    %v7660 = vld [vmem:[%s7658 + $0x8] sm:$0xff]
    %v7661 = vld [vmem:[%s7658 + $0x10] sm:$0xff]
    %v7662 = vld [vmem:[%s7658 + $0x18] sm:$0xff]
    %v7663 = vld [vmem:[%s7658 + $0x20] sm:$0xff]
    %v7664 = vld [vmem:[%s7658 + $0x28] sm:$0xff]
    %v7665 = vld [vmem:[%s7658 + $0x30] sm:$0xff]
    %v7666 = vld [vmem:[%s7658 + $0x38] sm:$0xff]
    %v7667 = vld [vmem:[%s7658 + $0x40] sm:$0xff]
    %v7668 = vld [vmem:[%s7658 + $0x48] sm:$0xff]
    %v7669 = vld [vmem:[%s7658 + $0x50] sm:$0xff]
    %v7670 = vld [vmem:[%s7658 + $0x58] sm:$0xff]
    %v7671 = vld [vmem:[%s7658 + $0x60] sm:$0xff]
    %v7672 = vld [vmem:[%s7658 + $0x68] sm:$0xff]
    %v7673 = vld [vmem:[%s7658 + $0x70] sm:$0xff]
    %v7674 = vld [vmem:[%s7658 + $0x78] sm:$0xff]
    %v7675 = vld [vmem:[%s7658 + $0x80] sm:$0xff]
    %v7676 = vld [vmem:[%s7658 + $0x88] sm:$0xff]
    %v7677 = vld [vmem:[%s7658 + $0x90] sm:$0xff]
    %v7678 = vld [vmem:[%s7658 + $0x98] sm:$0xff]
    %v7679 = vld [vmem:[%s7658 + $0xa0] sm:$0xff]
    %v7680 = vld [vmem:[%s7658 + $0xa8] sm:$0xff]
    %v7681 = vld [vmem:[%s7658 + $0xb0] sm:$0xff]
    %v7682 = vld [vmem:[%s7658 + $0xb8] sm:$0xff]
    %v7683 = vld [vmem:[%s7658 + $0xc0] sm:$0xff]
    %v7684 = vld [vmem:[%s7658 + $0xc8] sm:$0xff]
    %v7685 = vld [vmem:[%s7658 + $0xd0] sm:$0xff]
    %v7686 = vld [vmem:[%s7658 + $0xd8] sm:$0xff]
    %v7687 = vld [vmem:[%s7658 + $0xe0] sm:$0xff]
    %v7688 = vld [vmem:[%s7658 + $0xe8] sm:$0xff]
    %v7689 = vld [vmem:[%s7658 + $0xf0] sm:$0xff]
    %v7690 = vld [vmem:[%s7658 + $0xf8] sm:$0xff]
    %v7691 = vld [vmem:[%s7658 + $0x100] sm:$0xff]
    %v7692 = vld [vmem:[%s7658 + $0x108] sm:$0xff]
    %v7693 = vld [vmem:[%s7658 + $0x110] sm:$0xff]
    %v7694 = vld [vmem:[%s7658 + $0x118] sm:$0xff]
    %v7695 = vld [vmem:[%s7658 + $0x120] sm:$0xff]
    %v7696 = vld [vmem:[%s7658 + $0x128] sm:$0xff]
    %v7697 = vld [vmem:[%s7658 + $0x130] sm:$0xff]
    %v7698 = vld [vmem:[%s7658 + $0x138] sm:$0xff]
    %v7699 = vld [vmem:[%s7658 + $0x140] sm:$0xff]
    %v7700 = vld [vmem:[%s7658 + $0x148] sm:$0xff]
    %v7701 = vld [vmem:[%s7658 + $0x150] sm:$0xff]
    %v7702 = vld [vmem:[%s7658 + $0x158] sm:$0xff]
    %v7703 = vld [vmem:[%s7658 + $0x160] sm:$0xff]
    %v7704 = vld [vmem:[%s7658 + $0x168] sm:$0xff]
    %v7705 = vld [vmem:[%s7658 + $0x170] sm:$0xff]
    %v7706 = vld [vmem:[%s7658 + $0x178] sm:$0xff]
    %v7707 = vld [vmem:[%s7658 + $0x180] sm:$0xff]
    %v7708 = vld [vmem:[%s7658 + $0x188] sm:$0xff]
    %v7709 = vld [vmem:[%s7658 + $0x190] sm:$0xff]
    %v7710 = vld [vmem:[%s7658 + $0x198] sm:$0xff]
    %v7711 = vld [vmem:[%s7658 + $0x1a0] sm:$0xff]
    %v7712 = vld [vmem:[%s7658 + $0x1a8] sm:$0xff]
    %v7713 = vld [vmem:[%s7658 + $0x1b0] sm:$0xff]
    %v7714 = vld [vmem:[%s7658 + $0x1b8] sm:$0xff]
    %v7715 = vld [vmem:[%s7658 + $0x1c0] sm:$0xff]
    %v7716 = vld [vmem:[%s7658 + $0x1c8] sm:$0xff]
    %v7717 = vld [vmem:[%s7658 + $0x1d0] sm:$0xff]
    %v7718 = vld [vmem:[%s7658 + $0x1d8] sm:$0xff]
    %v7719 = vld [vmem:[%s7658 + $0x1e0] sm:$0xff]
    %v7720 = vld [vmem:[%s7658 + $0x1e8] sm:$0xff]
    %v7721 = vld [vmem:[%s7658 + $0x1f0] sm:$0xff]
    %v7722 = vld [vmem:[%s7658 + $0x1f8] sm:$0xff]
    %v7723 = vld [vmem:[#allocation4] sm:$0xfc]
    %v7724 = vld [vmem:[#allocation4 + $0x8] sm:$0xfc]
    %v7725 = vld [vmem:[#allocation4 + $0x10] sm:$0xfc]
    %v7726 = vld [vmem:[#allocation4 + $0x18] sm:$0xfc]
    %v7727 = vld [vmem:[#allocation4 + $0x40] sm:$0x3]
    %v7728 = vld [vmem:[#allocation4 + $0x48] sm:$0x3]
    %v7729 = vld [vmem:[#allocation4 + $0x50] sm:$0x3]
    %v7730 = vld [vmem:[#allocation4 + $0x58] sm:$0x3]
    %v7731 = vld [vmem:[#allocation4 + $0x60] sm:$0xfc]
    %v7732 = vld [vmem:[#allocation4 + $0x68] sm:$0xfc]
    %v7733 = vld [vmem:[#allocation4 + $0x70] sm:$0xfc]
    %v7734 = vld [vmem:[#allocation4 + $0x78] sm:$0xfc]
    %v7735 = vld [vmem:[#allocation4 + $0xa0] sm:$0x3]
    %v7736 = vld [vmem:[#allocation4 + $0xa8] sm:$0x3]
    %v7737 = vld [vmem:[#allocation4 + $0xb0] sm:$0x3]
    %v7738 = vld [vmem:[#allocation4 + $0xb8] sm:$0x3]
    %s7739 = scalar_lea.vmem %s7, 1536
    %v7740 = vld [vmem:[%s7739] sm:$0xff]
    %v7741 = vld [vmem:[%s7739 + $0x8] sm:$0xff]
    %v7742 = vld [vmem:[%s7739 + $0x10] sm:$0xff]
    %v7743 = vld [vmem:[%s7739 + $0x18] sm:$0xff]
    %v7744 = vld [vmem:[%s7739 + $0x20] sm:$0xff]
    %v7745 = vld [vmem:[%s7739 + $0x28] sm:$0xff]
    %v7746 = vld [vmem:[%s7739 + $0x30] sm:$0xff]
    %v7747 = vld [vmem:[%s7739 + $0x38] sm:$0xff]
    %v7748 = vld [vmem:[%s7739 + $0x40] sm:$0xff]
    %v7749 = vld [vmem:[%s7739 + $0x48] sm:$0xff]
    %v7750 = vld [vmem:[%s7739 + $0x50] sm:$0xff]
    %v7751 = vld [vmem:[%s7739 + $0x58] sm:$0xff]
    %v7752 = vld [vmem:[%s7739 + $0x60] sm:$0xff]
    %v7753 = vld [vmem:[%s7739 + $0x68] sm:$0xff]
    %v7754 = vld [vmem:[%s7739 + $0x70] sm:$0xff]
    %v7755 = vld [vmem:[%s7739 + $0x78] sm:$0xff]
    %v7756 = vld [vmem:[%s7739 + $0x80] sm:$0xff]
    %v7757 = vld [vmem:[%s7739 + $0x88] sm:$0xff]
    %v7758 = vld [vmem:[%s7739 + $0x90] sm:$0xff]
    %v7759 = vld [vmem:[%s7739 + $0x98] sm:$0xff]
    %v7760 = vld [vmem:[%s7739 + $0xa0] sm:$0xff]
    %v7761 = vld [vmem:[%s7739 + $0xa8] sm:$0xff]
    %v7762 = vld [vmem:[%s7739 + $0xb0] sm:$0xff]
    %v7763 = vld [vmem:[%s7739 + $0xb8] sm:$0xff]
    %v7764 = vld [vmem:[%s7739 + $0xc0] sm:$0xff]
    %v7765 = vld [vmem:[%s7739 + $0xc8] sm:$0xff]
    %v7766 = vld [vmem:[%s7739 + $0xd0] sm:$0xff]
    %v7767 = vld [vmem:[%s7739 + $0xd8] sm:$0xff]
    %v7768 = vld [vmem:[%s7739 + $0xe0] sm:$0xff]
    %v7769 = vld [vmem:[%s7739 + $0xe8] sm:$0xff]
    %v7770 = vld [vmem:[%s7739 + $0xf0] sm:$0xff]
    %v7771 = vld [vmem:[%s7739 + $0xf8] sm:$0xff]
    %v7772 = vld [vmem:[%s7739 + $0x100] sm:$0xff]
    %v7773 = vld [vmem:[%s7739 + $0x108] sm:$0xff]
    %v7774 = vld [vmem:[%s7739 + $0x110] sm:$0xff]
    %v7775 = vld [vmem:[%s7739 + $0x118] sm:$0xff]
    %v7776 = vld [vmem:[%s7739 + $0x120] sm:$0xff]
    %v7777 = vld [vmem:[%s7739 + $0x128] sm:$0xff]
    %v7778 = vld [vmem:[%s7739 + $0x130] sm:$0xff]
    %v7779 = vld [vmem:[%s7739 + $0x138] sm:$0xff]
    %v7780 = vld [vmem:[%s7739 + $0x140] sm:$0xff]
    %v7781 = vld [vmem:[%s7739 + $0x148] sm:$0xff]
    %v7782 = vld [vmem:[%s7739 + $0x150] sm:$0xff]
    %v7783 = vld [vmem:[%s7739 + $0x158] sm:$0xff]
    %v7784 = vld [vmem:[%s7739 + $0x160] sm:$0xff]
    %v7785 = vld [vmem:[%s7739 + $0x168] sm:$0xff]
    %v7786 = vld [vmem:[%s7739 + $0x170] sm:$0xff]
    %v7787 = vld [vmem:[%s7739 + $0x178] sm:$0xff]
    %v7788 = vld [vmem:[%s7739 + $0x180] sm:$0xff]
    %v7789 = vld [vmem:[%s7739 + $0x188] sm:$0xff]
    %v7790 = vld [vmem:[%s7739 + $0x190] sm:$0xff]
    %v7791 = vld [vmem:[%s7739 + $0x198] sm:$0xff]
    %v7792 = vld [vmem:[%s7739 + $0x1a0] sm:$0xff]
    %v7793 = vld [vmem:[%s7739 + $0x1a8] sm:$0xff]
    %v7794 = vld [vmem:[%s7739 + $0x1b0] sm:$0xff]
    %v7795 = vld [vmem:[%s7739 + $0x1b8] sm:$0xff]
    %v7796 = vld [vmem:[%s7739 + $0x1c0] sm:$0xff]
    %v7797 = vld [vmem:[%s7739 + $0x1c8] sm:$0xff]
    %v7798 = vld [vmem:[%s7739 + $0x1d0] sm:$0xff]
    %v7799 = vld [vmem:[%s7739 + $0x1d8] sm:$0xff]
    %v7800 = vld [vmem:[%s7739 + $0x1e0] sm:$0xff]
    %v7801 = vld [vmem:[%s7739 + $0x1e8] sm:$0xff]
    %v7802 = vld [vmem:[%s7739 + $0x1f0] sm:$0xff]
    %v7803 = vld [vmem:[%s7739 + $0x1f8] sm:$0xff]
    %v7820 = vrot.slane %v7723, 2
    %v7821 = vrot.slane %v7177, 2
    %v7822 = vsel %vm5642, %v7820, %v7821
    %v7823 = vrot.slane %v7724, 2
    %v7824 = vrot.slane %v7178, 2
    %v7825 = vsel %vm5642, %v7823, %v7824
    %v7826 = vrot.slane %v7725, 2
    %v7827 = vrot.slane %v7179, 2
    %v7828 = vsel %vm5642, %v7826, %v7827
    %v7829 = vrot.slane %v7726, 2
    %v7830 = vrot.slane %v7180, 2
    %v7831 = vsel %vm5642, %v7829, %v7830
    %v7832 = vrot.slane %v7727, 2
    %v7833 = vsel %vm5642, %v7821, %v7832
    %v7834 = vrot.slane %v7728, 2
    %v7835 = vsel %vm5642, %v7824, %v7834
    %v7836 = vrot.slane %v7729, 2
    %v7837 = vsel %vm5642, %v7827, %v7836
    %v7838 = vrot.slane %v7730, 2
    %v7839 = vsel %vm5642, %v7830, %v7838
    %v7840 = vrot.slane %v7731, 2
    %v7841 = vrot.slane %v7185, 2
    %v7842 = vsel %vm5642, %v7840, %v7841
    %v7843 = vrot.slane %v7732, 2
    %v7844 = vrot.slane %v7186, 2
    %v7845 = vsel %vm5642, %v7843, %v7844
    %v7846 = vrot.slane %v7733, 2
    %v7847 = vrot.slane %v7187, 2
    %v7848 = vsel %vm5642, %v7846, %v7847
    %v7849 = vrot.slane %v7734, 2
    %v7850 = vrot.slane %v7188, 2
    %v7851 = vsel %vm5642, %v7849, %v7850
    %v7852 = vrot.slane %v7735, 2
    %v7853 = vsel %vm5642, %v7841, %v7852
    %v7854 = vrot.slane %v7736, 2
    %v7855 = vsel %vm5642, %v7844, %v7854
    %v7856 = vrot.slane %v7737, 2
    %v7857 = vsel %vm5642, %v7847, %v7856
    %v7858 = vrot.slane %v7738, 2
    %v7859 = vsel %vm5642, %v7850, %v7858
    %7876 = vmatpush.msra.mxu0 %v7755
    %7877 = vmatpush.msra.mxu0 %v7754
    %7878 = vmatpush.msra.mxu0 %v7753
    %7879 = vmatpush.msra.mxu0 %v7752
    %7880 = vmatpush.msra.mxu0 %v7751
    %7881 = vmatpush.msra.mxu0 %v7750
    %7882 = vmatpush.msra.mxu0 %v7749
    %7883 = vmatpush.msra.mxu0 %v7748
    %7884 = vmatpush.msra.mxu0 %v7747
    %7885 = vmatpush.msra.mxu0 %v7746
    %7886 = vmatpush.msra.mxu0 %v7745
    %7887 = vmatpush.msra.mxu0 %v7744
    %7888 = vmatpush.msra.mxu0 %v7743
    %7889 = vmatpush.msra.mxu0 %v7742
    %7890 = vmatpush.msra.mxu0 %v7741
    %7891 = vmatpush.msra.mxu0 %v7740
    %7892 = vmatmul.f32.gmra.mxu0 %v7822
    %v7893 = vpop.f32.mrf.mxu0
    %v7894 = vadd.f32 0.0, %v7893
    %7895 = vmatmul.f32.gmra.mxu0 %v7833
    %v7896 = vpop.f32.mrf.mxu0
    %v7897 = vadd.f32 0.0, %v7896
    %7898 = vmatmul.f32.gmra.mxu0 %v7842
    %v7899 = vpop.f32.mrf.mxu0
    %v7900 = vadd.f32 0.0, %v7899
    %7901 = vmatmul.f32.gmra.mxu0 %v7853
    %v7902 = vpop.f32.mrf.mxu0
    %v7903 = vadd.f32 0.0, %v7902
    %7904 = vdwg.mxu0
    %7905 = vmatpush.msra.mxu0 %v7771
    %7906 = vmatpush.msra.mxu0 %v7770
    %7907 = vmatpush.msra.mxu0 %v7769
    %7908 = vmatpush.msra.mxu0 %v7768
    %7909 = vmatpush.msra.mxu0 %v7767
    %7910 = vmatpush.msra.mxu0 %v7766
    %7911 = vmatpush.msra.mxu0 %v7765
    %7912 = vmatpush.msra.mxu0 %v7764
    %7913 = vmatpush.msra.mxu0 %v7763
    %7914 = vmatpush.msra.mxu0 %v7762
    %7915 = vmatpush.msra.mxu0 %v7761
    %7916 = vmatpush.msra.mxu0 %v7760
    %7917 = vmatpush.msra.mxu0 %v7759
    %7918 = vmatpush.msra.mxu0 %v7758
    %7919 = vmatpush.msra.mxu0 %v7757
    %7920 = vmatpush.msra.mxu0 %v7756
    %7921 = vmatmul.f32.gmra.mxu0 %v7825
    %v7922 = vpop.f32.mrf.mxu0
    %v7923 = vadd.f32 %v7894, %v7922
    %7924 = vmatmul.f32.gmra.mxu0 %v7835
    %v7925 = vpop.f32.mrf.mxu0
    %v7926 = vadd.f32 %v7897, %v7925
    %7927 = vmatmul.f32.gmra.mxu0 %v7845
    %v7928 = vpop.f32.mrf.mxu0
    %v7929 = vadd.f32 %v7900, %v7928
    %7930 = vmatmul.f32.gmra.mxu0 %v7855
    %v7931 = vpop.f32.mrf.mxu0
    %v7932 = vadd.f32 %v7903, %v7931
    %7933 = vdwg.mxu0
    %7934 = vmatpush.msra.mxu0 %v7787
    %7935 = vmatpush.msra.mxu0 %v7786
    %7936 = vmatpush.msra.mxu0 %v7785
    %7937 = vmatpush.msra.mxu0 %v7784
    %7938 = vmatpush.msra.mxu0 %v7783
    %7939 = vmatpush.msra.mxu0 %v7782
    %7940 = vmatpush.msra.mxu0 %v7781
    %7941 = vmatpush.msra.mxu0 %v7780
    %7942 = vmatpush.msra.mxu0 %v7779
    %7943 = vmatpush.msra.mxu0 %v7778
    %7944 = vmatpush.msra.mxu0 %v7777
    %7945 = vmatpush.msra.mxu0 %v7776
    %7946 = vmatpush.msra.mxu0 %v7775
    %7947 = vmatpush.msra.mxu0 %v7774
    %7948 = vmatpush.msra.mxu0 %v7773
    %7949 = vmatpush.msra.mxu0 %v7772
    %7950 = vmatmul.f32.gmra.mxu0 %v7828
    %v7951 = vpop.f32.mrf.mxu0
    %v7952 = vadd.f32 %v7923, %v7951
    %7953 = vmatmul.f32.gmra.mxu0 %v7837
    %v7954 = vpop.f32.mrf.mxu0
    %v7955 = vadd.f32 %v7926, %v7954
    %7956 = vmatmul.f32.gmra.mxu0 %v7848
    %v7957 = vpop.f32.mrf.mxu0
    %v7958 = vadd.f32 %v7929, %v7957
    %7959 = vmatmul.f32.gmra.mxu0 %v7857
    %v7960 = vpop.f32.mrf.mxu0
    %v7961 = vadd.f32 %v7932, %v7960
    %7962 = vdwg.mxu0
    %7963 = vmatpush.msra.mxu0 %v7803
    %7964 = vmatpush.msra.mxu0 %v7802
    %7965 = vmatpush.msra.mxu0 %v7801
    %7966 = vmatpush.msra.mxu0 %v7800
    %7967 = vmatpush.msra.mxu0 %v7799
    %7968 = vmatpush.msra.mxu0 %v7798
    %7969 = vmatpush.msra.mxu0 %v7797
    %7970 = vmatpush.msra.mxu0 %v7796
    %7971 = vmatpush.msra.mxu0 %v7795
    %7972 = vmatpush.msra.mxu0 %v7794
    %7973 = vmatpush.msra.mxu0 %v7793
    %7974 = vmatpush.msra.mxu0 %v7792
    %7975 = vmatpush.msra.mxu0 %v7791
    %7976 = vmatpush.msra.mxu0 %v7790
    %7977 = vmatpush.msra.mxu0 %v7789
    %7978 = vmatpush.msra.mxu0 %v7788
    %7979 = vmatmul.f32.gmra.mxu0 %v7831
    %v7980 = vpop.f32.mrf.mxu0
    %v7981 = vadd.f32 %v7952, %v7980
    %7982 = vmatmul.f32.gmra.mxu0 %v7839
    %v7983 = vpop.f32.mrf.mxu0
    %v7984 = vadd.f32 %v7955, %v7983
    %7985 = vmatmul.f32.gmra.mxu0 %v7851
    %v7986 = vpop.f32.mrf.mxu0
    %v7987 = vadd.f32 %v7958, %v7986
    %7988 = vmatmul.f32.gmra.mxu0 %v7859
    %v7989 = vpop.f32.mrf.mxu0
    %v7990 = vadd.f32 %v7961, %v7989
    %7991 = vdwg.mxu0
    %7992 = vmatpush.msra.mxu0 %v7674
    %7993 = vmatpush.msra.mxu0 %v7673
    %7994 = vmatpush.msra.mxu0 %v7672
    %7995 = vmatpush.msra.mxu0 %v7671
    %7996 = vmatpush.msra.mxu0 %v7670
    %7997 = vmatpush.msra.mxu0 %v7669
    %7998 = vmatpush.msra.mxu0 %v7668
    %7999 = vmatpush.msra.mxu0 %v7667
    %8000 = vmatpush.msra.mxu0 %v7666
    %8001 = vmatpush.msra.mxu0 %v7665
    %8002 = vmatpush.msra.mxu0 %v7664
    %8003 = vmatpush.msra.mxu0 %v7663
    %8004 = vmatpush.msra.mxu0 %v7662
    %8005 = vmatpush.msra.mxu0 %v7661
    %8006 = vmatpush.msra.mxu0 %v7660
    %8007 = vmatpush.msra.mxu0 %v7659
    %8008 = vmatmul.f32.gmra.mxu0 %v7360
    %v8009 = vpop.f32.mrf.mxu0
    %v8010 = vadd.f32 %v7981, %v8009
    %8011 = vmatmul.f32.gmra.mxu0 %v7371
    %v8012 = vpop.f32.mrf.mxu0
    %v8013 = vadd.f32 %v7984, %v8012
    %8014 = vmatmul.f32.gmra.mxu0 %v7380
    %v8015 = vpop.f32.mrf.mxu0
    %v8016 = vadd.f32 %v7987, %v8015
    %8017 = vmatmul.f32.gmra.mxu0 %v7391
    %v8018 = vpop.f32.mrf.mxu0
    %v8019 = vadd.f32 %v7990, %v8018
    %8020 = vdwg.mxu0
    %8021 = vmatpush.msra.mxu0 %v7690
    %8022 = vmatpush.msra.mxu0 %v7689
    %8023 = vmatpush.msra.mxu0 %v7688
    %8024 = vmatpush.msra.mxu0 %v7687
    %8025 = vmatpush.msra.mxu0 %v7686
    %8026 = vmatpush.msra.mxu0 %v7685
    %8027 = vmatpush.msra.mxu0 %v7684
    %8028 = vmatpush.msra.mxu0 %v7683
    %8029 = vmatpush.msra.mxu0 %v7682
    %8030 = vmatpush.msra.mxu0 %v7681
    %8031 = vmatpush.msra.mxu0 %v7680
    %8032 = vmatpush.msra.mxu0 %v7679
    %8033 = vmatpush.msra.mxu0 %v7678
    %8034 = vmatpush.msra.mxu0 %v7677
    %8035 = vmatpush.msra.mxu0 %v7676
    %8036 = vmatpush.msra.mxu0 %v7675
    %8037 = vmatmul.f32.gmra.mxu0 %v7363
    %v8038 = vpop.f32.mrf.mxu0
    %v8039 = vadd.f32 %v8010, %v8038
    %8040 = vmatmul.f32.gmra.mxu0 %v7373
    %v8041 = vpop.f32.mrf.mxu0
    %v8042 = vadd.f32 %v8013, %v8041
    %8043 = vmatmul.f32.gmra.mxu0 %v7383
    %v8044 = vpop.f32.mrf.mxu0
    %v8045 = vadd.f32 %v8016, %v8044
    %8046 = vmatmul.f32.gmra.mxu0 %v7393
    %v8047 = vpop.f32.mrf.mxu0
    %v8048 = vadd.f32 %v8019, %v8047
    %8049 = vdwg.mxu0
    %8050 = vmatpush.msra.mxu0 %v7706
    %8051 = vmatpush.msra.mxu0 %v7705
    %8052 = vmatpush.msra.mxu0 %v7704
    %8053 = vmatpush.msra.mxu0 %v7703
    %8054 = vmatpush.msra.mxu0 %v7702
    %8055 = vmatpush.msra.mxu0 %v7701
    %8056 = vmatpush.msra.mxu0 %v7700
    %8057 = vmatpush.msra.mxu0 %v7699
    %8058 = vmatpush.msra.mxu0 %v7698
    %8059 = vmatpush.msra.mxu0 %v7697
    %8060 = vmatpush.msra.mxu0 %v7696
    %8061 = vmatpush.msra.mxu0 %v7695
    %8062 = vmatpush.msra.mxu0 %v7694
    %8063 = vmatpush.msra.mxu0 %v7693
    %8064 = vmatpush.msra.mxu0 %v7692
    %8065 = vmatpush.msra.mxu0 %v7691
    %8066 = vmatmul.f32.gmra.mxu0 %v7366
    %v8067 = vpop.f32.mrf.mxu0
    %v8068 = vadd.f32 %v8039, %v8067
    %8069 = vmatmul.f32.gmra.mxu0 %v7375
    %v8070 = vpop.f32.mrf.mxu0
    %v8071 = vadd.f32 %v8042, %v8070
    %8072 = vmatmul.f32.gmra.mxu0 %v7386
    %v8073 = vpop.f32.mrf.mxu0
    %v8074 = vadd.f32 %v8045, %v8073
    %8075 = vmatmul.f32.gmra.mxu0 %v7395
    %v8076 = vpop.f32.mrf.mxu0
    %v8077 = vadd.f32 %v8048, %v8076
    %8078 = vdwg.mxu0
    %8079 = vmatpush.msra.mxu0 %v7722
    %8080 = vmatpush.msra.mxu0 %v7721
    %8081 = vmatpush.msra.mxu0 %v7720
    %8082 = vmatpush.msra.mxu0 %v7719
    %8083 = vmatpush.msra.mxu0 %v7718
    %8084 = vmatpush.msra.mxu0 %v7717
    %8085 = vmatpush.msra.mxu0 %v7716
    %8086 = vmatpush.msra.mxu0 %v7715
    %8087 = vmatpush.msra.mxu0 %v7714
    %8088 = vmatpush.msra.mxu0 %v7713
    %8089 = vmatpush.msra.mxu0 %v7712
    %8090 = vmatpush.msra.mxu0 %v7711
    %8091 = vmatpush.msra.mxu0 %v7710
    %8092 = vmatpush.msra.mxu0 %v7709
    %8093 = vmatpush.msra.mxu0 %v7708
    %8094 = vmatpush.msra.mxu0 %v7707
    %8095 = vmatmul.f32.gmra.mxu0 %v7369
    %v8096 = vpop.f32.mrf.mxu0
    %v8097 = vadd.f32 %v8068, %v8096
    %8098 = vmatmul.f32.gmra.mxu0 %v7377
    %v8099 = vpop.f32.mrf.mxu0
    %v8100 = vadd.f32 %v8071, %v8099
    %8101 = vmatmul.f32.gmra.mxu0 %v7389
    %v8102 = vpop.f32.mrf.mxu0
    %v8103 = vadd.f32 %v8074, %v8102
    %8104 = vmatmul.f32.gmra.mxu0 %v7397
    %v8105 = vpop.f32.mrf.mxu0
    %v8106 = vadd.f32 %v8077, %v8105
    %8107 = vdwg.mxu0
    %v8108 = vadd.f32 %v8097, %v7648
    %v8109 = vadd.f32 %v8100, %v7648
    %v8110 = vadd.f32 %v8103, %v7648
    %v8111 = vadd.f32 %v8106, %v7648
    %v8112 = vmax.f32 %v8108, 0.0
    %v8113 = vmax.f32 %v8109, 0.0
    %v8114 = vmax.f32 %v8110, 0.0
    %v8115 = vmax.f32 %v8111, 0.0
    %v8120 = vrot.slane %v7654, 1
    %v8121 = vrot.slane %v7654, 2
    %v8122 = vrot.slane %v7654, 3
    %v8123 = vrot.slane %v7654, 4
    %v8124 = vrot.slane %v7654, 5
    %v8125 = vrot.slane %v7654, 6
    %v8126 = vrot.slane %v7654, 7
    %v8127 = vrot.slane %v7655, 1
    %v8128 = vrot.slane %v7655, 2
    %v8129 = vrot.slane %v7655, 3
    %v8130 = vrot.slane %v7655, 4
    %v8131 = vrot.slane %v7655, 5
    %v8132 = vrot.slane %v7655, 6
    %v8133 = vrot.slane %v7655, 7
    %v8134 = vrot.slane %v7656, 1
    %v8135 = vrot.slane %v7656, 2
    %v8136 = vrot.slane %v7656, 3
    %v8137 = vrot.slane %v7656, 4
    %v8138 = vrot.slane %v7656, 5
    %v8139 = vrot.slane %v7656, 6
    %v8140 = vrot.slane %v7656, 7
    %v8141 = vrot.slane %v7657, 1
    %v8142 = vrot.slane %v7657, 2
    %v8143 = vrot.slane %v7657, 3
    %v8144 = vrot.slane %v7657, 4
    %v8145 = vrot.slane %v7657, 5
    %v8146 = vrot.slane %v7657, 6
    %v8147 = vrot.slane %v7657, 7
    %v8180 = vrot.slane %v8112, 1
    %v8181 = vrot.slane %v8112, 2
    %v8182 = vrot.slane %v8112, 3
    %v8183 = vrot.slane %v8112, 4
    %v8184 = vrot.slane %v8112, 5
    %v8185 = vrot.slane %v8112, 6
    %v8186 = vrot.slane %v8112, 7
    %v8187 = vrot.slane %v8113, 1
    %v8188 = vrot.slane %v8113, 2
    %v8189 = vrot.slane %v8113, 3
    %v8190 = vrot.slane %v8113, 4
    %v8191 = vrot.slane %v8113, 5
    %v8192 = vrot.slane %v8113, 6
    %v8193 = vrot.slane %v8113, 7
    %v8194 = vrot.slane %v8114, 1
    %v8195 = vrot.slane %v8114, 2
    %v8196 = vrot.slane %v8114, 3
    %v8197 = vrot.slane %v8114, 4
    %v8198 = vrot.slane %v8114, 5
    %v8199 = vrot.slane %v8114, 6
    %v8200 = vrot.slane %v8114, 7
    %v8201 = vrot.slane %v8115, 1
    %v8202 = vrot.slane %v8115, 2
    %v8203 = vrot.slane %v8115, 3
    %v8204 = vrot.slane %v8115, 4
    %v8205 = vrot.slane %v8115, 5
    %v8206 = vrot.slane %v8115, 6
    %v8207 = vrot.slane %v8115, 7
    %v8208 = vperm.slane %v8112, 0
    %v8209 = vperm.slane %v8180, 0
    %v8210 = vperm.slane %v8181, 0
    %v8211 = vperm.slane %v8182, 0
    %v8212 = vperm.slane %v8183, 0
    %v8213 = vperm.slane %v8184, 0
    %v8214 = vperm.slane %v8185, 0
    %v8215 = vperm.slane %v8186, 0
    %v8216 = vperm.slane %v8113, 0
    %v8217 = vperm.slane %v8187, 0
    %v8218 = vperm.slane %v8188, 0
    %v8219 = vperm.slane %v8189, 0
    %v8220 = vperm.slane %v8190, 0
    %v8221 = vperm.slane %v8191, 0
    %v8222 = vperm.slane %v8192, 0
    %v8223 = vperm.slane %v8193, 0
    %v8224 = vperm.slane %v8114, 0
    %v8225 = vperm.slane %v8194, 0
    %v8226 = vperm.slane %v8195, 0
    %v8227 = vperm.slane %v8196, 0
    %v8228 = vperm.slane %v8197, 0
    %v8229 = vperm.slane %v8198, 0
    %v8230 = vperm.slane %v8199, 0
    %v8231 = vperm.slane %v8200, 0
    %v8232 = vperm.slane %v8115, 0
    %v8233 = vperm.slane %v8201, 0
    %v8234 = vperm.slane %v8202, 0
    %v8235 = vperm.slane %v8203, 0
    %v8236 = vperm.slane %v8204, 0
    %v8237 = vperm.slane %v8205, 0
    %v8238 = vperm.slane %v8206, 0
    %v8239 = vperm.slane %v8207, 0
    %v8272 = vsel %vm730, %v7654, %v8208
    %v8273 = vsel %vm730, %v8120, %v8209
    %v8274 = vsel %vm730, %v8121, %v8210
    %v8275 = vsel %vm730, %v8122, %v8211
    %v8276 = vsel %vm730, %v8123, %v8212
    %v8277 = vsel %vm730, %v8124, %v8213
    %v8278 = vsel %vm730, %v8125, %v8214
    %v8279 = vsel %vm730, %v8126, %v8215
    %v8280 = vsel %vm730, %v7655, %v8216
    %v8281 = vsel %vm730, %v8127, %v8217
    %v8282 = vsel %vm730, %v8128, %v8218
    %v8283 = vsel %vm730, %v8129, %v8219
    %v8284 = vsel %vm730, %v8130, %v8220
    %v8285 = vsel %vm730, %v8131, %v8221
    %v8286 = vsel %vm730, %v8132, %v8222
    %v8287 = vsel %vm730, %v8133, %v8223
    %v8288 = vsel %vm730, %v7656, %v8224
    %v8289 = vsel %vm730, %v8134, %v8225
    %v8290 = vsel %vm730, %v8135, %v8226
    %v8291 = vsel %vm730, %v8136, %v8227
    %v8292 = vsel %vm730, %v8137, %v8228
    %v8293 = vsel %vm730, %v8138, %v8229
    %v8294 = vsel %vm730, %v8139, %v8230
    %v8295 = vsel %vm730, %v8140, %v8231
    %v8296 = vsel %vm730, %v7657, %v8232
    %v8297 = vsel %vm730, %v8141, %v8233
    %v8298 = vsel %vm730, %v8142, %v8234
    %v8299 = vsel %vm730, %v8143, %v8235
    %v8300 = vsel %vm730, %v8144, %v8236
    %v8301 = vsel %vm730, %v8145, %v8237
    %v8302 = vsel %vm730, %v8146, %v8238
    %v8303 = vsel %vm730, %v8147, %v8239
    %8336 = vst [vmem:[#allocation1] ss:$4 sm:$0xff] %v8272
    %s8337 = scalar_lea.vmem [#allocation1], 1
    %8338 = vst [vmem:[%s8337] ss:$4 sm:$0xff] %v8273
    %s8339 = scalar_lea.vmem [#allocation1], 2
    %8340 = vst [vmem:[%s8339] ss:$4 sm:$0xff] %v8274
    %s8341 = scalar_lea.vmem [#allocation1], 3
    %8342 = vst [vmem:[%s8341] ss:$4 sm:$0xff] %v8275
    %s8343 = scalar_lea.vmem [#allocation1], 32
    %8344 = vst [vmem:[%s8343] ss:$4 sm:$0xff] %v8276
    %s8345 = scalar_lea.vmem [#allocation1], 33
    %8346 = vst [vmem:[%s8345] ss:$4 sm:$0xff] %v8277
    %s8347 = scalar_lea.vmem [#allocation1], 34
    %8348 = vst [vmem:[%s8347] ss:$4 sm:$0xff] %v8278
    %s8349 = scalar_lea.vmem [#allocation1], 35
    %8350 = vst [vmem:[%s8349] ss:$4 sm:$0xff] %v8279
    %v8351 = vld.sshfl [vmem:[#allocation1] sm:$0xff pattern:$0x73625140]
    %v8352 = vld.sshfl [vmem:[#allocation1 + $0x20] sm:$0xff pattern:$0x73625140]
    %8353 = vst [vmem:[#allocation1] ss:$4 sm:$0xff] %v8280
    %8354 = vst [vmem:[%s8337] ss:$4 sm:$0xff] %v8281
    %8355 = vst [vmem:[%s8339] ss:$4 sm:$0xff] %v8282
    %8356 = vst [vmem:[%s8341] ss:$4 sm:$0xff] %v8283
    %8357 = vst [vmem:[%s8343] ss:$4 sm:$0xff] %v8284
    %8358 = vst [vmem:[%s8345] ss:$4 sm:$0xff] %v8285
    %8359 = vst [vmem:[%s8347] ss:$4 sm:$0xff] %v8286
    %8360 = vst [vmem:[%s8349] ss:$4 sm:$0xff] %v8287
    %v8361 = vld.sshfl [vmem:[#allocation1] sm:$0xff pattern:$0x73625140]
    %v8362 = vld.sshfl [vmem:[#allocation1 + $0x20] sm:$0xff pattern:$0x73625140]
    %8363 = vst [vmem:[#allocation1] ss:$4 sm:$0xff] %v8288
    %8364 = vst [vmem:[%s8337] ss:$4 sm:$0xff] %v8289
    %8365 = vst [vmem:[%s8339] ss:$4 sm:$0xff] %v8290
    %8366 = vst [vmem:[%s8341] ss:$4 sm:$0xff] %v8291
    %8367 = vst [vmem:[%s8343] ss:$4 sm:$0xff] %v8292
    %8368 = vst [vmem:[%s8345] ss:$4 sm:$0xff] %v8293
    %8369 = vst [vmem:[%s8347] ss:$4 sm:$0xff] %v8294
    %8370 = vst [vmem:[%s8349] ss:$4 sm:$0xff] %v8295
    %v8371 = vld.sshfl [vmem:[#allocation1] sm:$0xff pattern:$0x73625140]
    %v8372 = vld.sshfl [vmem:[#allocation1 + $0x20] sm:$0xff pattern:$0x73625140]
    %8373 = vst [vmem:[#allocation1] ss:$4 sm:$0xff] %v8296
    %8374 = vst [vmem:[%s8337] ss:$4 sm:$0xff] %v8297
    %8375 = vst [vmem:[%s8339] ss:$4 sm:$0xff] %v8298
    %8376 = vst [vmem:[%s8341] ss:$4 sm:$0xff] %v8299
    %8377 = vst [vmem:[%s8343] ss:$4 sm:$0xff] %v8300
    %8378 = vst [vmem:[%s8345] ss:$4 sm:$0xff] %v8301
    %8379 = vst [vmem:[%s8347] ss:$4 sm:$0xff] %v8302
    %8380 = vst [vmem:[%s8349] ss:$4 sm:$0xff] %v8303
    %v8381 = vld.sshfl [vmem:[#allocation1] sm:$0xff pattern:$0x73625140]
    %v8382 = vld.sshfl [vmem:[#allocation1 + $0x20] sm:$0xff pattern:$0x73625140]
    %vm8391 = vcmask 785408
    %8392 = vst.msk [vmem:[#allocation5 + $0x1] sm:$0xff] %vm8391, %v8351
    %8393 = vst.msk [vmem:[#allocation5 + $0x9] sm:$0xff] %vm8391, %v8352
    %8394 = vst.msk [vmem:[#allocation5 + $0x11] sm:$0xff] %vm8391, %v8361
    %8395 = vst.msk [vmem:[#allocation5 + $0x19] sm:$0xff] %vm8391, %v8362
    %8396 = vst.msk [vmem:[#allocation5 + $0x29] sm:$0xff] %vm8391, %v8371
    %8397 = vst.msk [vmem:[#allocation5 + $0x31] sm:$0xff] %vm8391, %v8372
    %8398 = vst.msk [vmem:[#allocation5 + $0x39] sm:$0xff] %vm8391, %v8381
    %8399 = vst.msk [vmem:[#allocation5 + $0x41] sm:$0xff] %vm8391, %v8382
    %v8400 = vld [vmem:[#allocation5] sm:$0xff]
    %v8401 = vld [vmem:[#allocation5 + $0x8] sm:$0xff]
    %v8402 = vld [vmem:[#allocation5 + $0x10] sm:$0xff]
    %v8403 = vld [vmem:[#allocation5 + $0x18] sm:$0xff]
    %v8404 = vld [vmem:[#allocation5 + $0x28] sm:$0xff]
    %v8405 = vld [vmem:[#allocation5 + $0x30] sm:$0xff]
    %v8406 = vld [vmem:[#allocation5 + $0x38] sm:$0xff]
    %v8407 = vld [vmem:[#allocation5 + $0x40] sm:$0xff]
    %v8408 = vld [vmem:[#allocation20] sm:$0xff]
    %v8409 = vld [vmem:[#allocation20 + $0x8] sm:$0xff]
    %v8410 = vld [vmem:[#allocation20 + $0x10] sm:$0xff]
    %v8411 = vld [vmem:[#allocation20 + $0x18] sm:$0xff]
    %v8412 = vld [vmem:[#allocation20 + $0x20] sm:$0xff]
    %v8413 = vld [vmem:[#allocation20 + $0x28] sm:$0xff]
    %v8414 = vld [vmem:[#allocation20 + $0x30] sm:$0xff]
    %v8415 = vld [vmem:[#allocation20 + $0x38] sm:$0xff]
    %v8416 = vld [vmem:[#allocation20 + $0x40] sm:$0xff]
    %v8417 = vld [vmem:[#allocation20 + $0x48] sm:$0xff]
    %v8418 = vld [vmem:[#allocation20 + $0x50] sm:$0xff]
    %v8419 = vld [vmem:[#allocation20 + $0x58] sm:$0xff]
    %v8420 = vld [vmem:[#allocation20 + $0x60] sm:$0xff]
    %v8421 = vld [vmem:[#allocation20 + $0x68] sm:$0xff]
    %v8422 = vld [vmem:[#allocation20 + $0x70] sm:$0xff]
    %v8423 = vld [vmem:[#allocation20 + $0x78] sm:$0xff]
    %v8424 = vld [vmem:[#allocation20 + $0x80] sm:$0xff]
    %v8425 = vld [vmem:[#allocation20 + $0x88] sm:$0xff]
    %v8426 = vld [vmem:[#allocation20 + $0x90] sm:$0xff]
    %v8427 = vld [vmem:[#allocation20 + $0x98] sm:$0xff]
    %v8428 = vld [vmem:[#allocation20 + $0xa0] sm:$0xff]
    %v8429 = vld [vmem:[#allocation20 + $0xa8] sm:$0xff]
    %v8430 = vld [vmem:[#allocation20 + $0xb0] sm:$0xff]
    %v8431 = vld [vmem:[#allocation20 + $0xb8] sm:$0xff]
    %v8432 = vld [vmem:[#allocation5 + $0x1] sm:$0xff]
    %v8433 = vld [vmem:[#allocation5 + $0x9] sm:$0xff]
    %v8434 = vld [vmem:[#allocation5 + $0x11] sm:$0xff]
    %v8435 = vld [vmem:[#allocation5 + $0x19] sm:$0xff]
    %v8436 = vld [vmem:[#allocation5 + $0x29] sm:$0xff]
    %v8437 = vld [vmem:[#allocation5 + $0x31] sm:$0xff]
    %v8438 = vld [vmem:[#allocation5 + $0x39] sm:$0xff]
    %v8439 = vld [vmem:[#allocation5 + $0x41] sm:$0xff]
    %s8440 = scalar_lea.vmem [#allocation20], 192
    %v8441 = vld [vmem:[%s8440] sm:$0xff]
    %v8442 = vld [vmem:[%s8440 + $0x8] sm:$0xff]
    %v8443 = vld [vmem:[%s8440 + $0x10] sm:$0xff]
    %v8444 = vld [vmem:[%s8440 + $0x18] sm:$0xff]
    %v8445 = vld [vmem:[%s8440 + $0x20] sm:$0xff]
    %v8446 = vld [vmem:[%s8440 + $0x28] sm:$0xff]
    %v8447 = vld [vmem:[%s8440 + $0x30] sm:$0xff]
    %v8448 = vld [vmem:[%s8440 + $0x38] sm:$0xff]
    %v8449 = vld [vmem:[%s8440 + $0x40] sm:$0xff]
    %v8450 = vld [vmem:[%s8440 + $0x48] sm:$0xff]
    %v8451 = vld [vmem:[%s8440 + $0x50] sm:$0xff]
    %v8452 = vld [vmem:[%s8440 + $0x58] sm:$0xff]
    %v8453 = vld [vmem:[%s8440 + $0x60] sm:$0xff]
    %v8454 = vld [vmem:[%s8440 + $0x68] sm:$0xff]
    %v8455 = vld [vmem:[%s8440 + $0x70] sm:$0xff]
    %v8456 = vld [vmem:[%s8440 + $0x78] sm:$0xff]
    %v8457 = vld [vmem:[%s8440 + $0x80] sm:$0xff]
    %v8458 = vld [vmem:[%s8440 + $0x88] sm:$0xff]
    %v8459 = vld [vmem:[%s8440 + $0x90] sm:$0xff]
    %v8460 = vld [vmem:[%s8440 + $0x98] sm:$0xff]
    %v8461 = vld [vmem:[%s8440 + $0xa0] sm:$0xff]
    %v8462 = vld [vmem:[%s8440 + $0xa8] sm:$0xff]
    %v8463 = vld [vmem:[%s8440 + $0xb0] sm:$0xff]
    %v8464 = vld [vmem:[%s8440 + $0xb8] sm:$0xff]
    %v8466 = vsel %vm8391, %v8432, 0
    %v8469 = vsel %vm8391, %v8433, 0
    %v8472 = vsel %vm8391, %v8434, 0
    %v8475 = vsel %vm8391, %v8435, 0
    %v8478 = vsel %vm8391, %v8436, 0
    %v8481 = vsel %vm8391, %v8437, 0
    %v8484 = vsel %vm8391, %v8438, 0
    %v8487 = vsel %vm8391, %v8439, 0
    %8489 = vmatpush.msra.mxu0 0.0
    %8490 = vmatpush.msra.mxu0 0.0
    %8491 = vmatpush.msra.mxu0 0.0
    %8492 = vmatpush.msra.mxu0 0.0
    %8493 = vmatpush.msra.mxu0 %v8463
    %8494 = vmatpush.msra.mxu0 %v8461
    %8495 = vmatpush.msra.mxu0 %v8459
    %8496 = vmatpush.msra.mxu0 %v8457
    %8497 = vmatpush.msra.mxu0 %v8455
    %8498 = vmatpush.msra.mxu0 %v8453
    %8499 = vmatpush.msra.mxu0 %v8451
    %8500 = vmatpush.msra.mxu0 %v8449
    %8501 = vmatpush.msra.mxu0 %v8447
    %8502 = vmatpush.msra.mxu0 %v8445
    %8503 = vmatpush.msra.mxu0 %v8443
    %8504 = vmatpush.msra.mxu0 %v8441
    %8505 = vmatmul.f32.gmra.mxu0 %v8466
    %v8506 = vpop.f32.mrf.mxu0
    %v8507 = vadd.f32 0.0, %v8506
    %8508 = vmatmul.f32.gmra.mxu0 %v8469
    %v8509 = vpop.f32.mrf.mxu0
    %v8510 = vadd.f32 0.0, %v8509
    %8511 = vmatmul.f32.gmra.mxu0 %v8472
    %v8512 = vpop.f32.mrf.mxu0
    %v8513 = vadd.f32 0.0, %v8512
    %8514 = vmatmul.f32.gmra.mxu0 %v8475
    %v8515 = vpop.f32.mrf.mxu0
    %v8516 = vadd.f32 0.0, %v8515
    %8517 = vmatmul.f32.gmra.mxu0 %v8478
    %v8518 = vpop.f32.mrf.mxu0
    %v8519 = vadd.f32 0.0, %v8518
    %8520 = vmatmul.f32.gmra.mxu0 %v8481
    %v8521 = vpop.f32.mrf.mxu0
    %v8522 = vadd.f32 0.0, %v8521
    %8523 = vmatmul.f32.gmra.mxu0 %v8484
    %v8524 = vpop.f32.mrf.mxu0
    %v8525 = vadd.f32 0.0, %v8524
    %8526 = vmatmul.f32.gmra.mxu0 %v8487
    %v8527 = vpop.f32.mrf.mxu0
    %v8528 = vadd.f32 0.0, %v8527
    %8529 = vdwg.mxu0
    %8530 = vmatpush.msra.mxu0 0.0
    %8531 = vmatpush.msra.mxu0 0.0
    %8532 = vmatpush.msra.mxu0 0.0
    %8533 = vmatpush.msra.mxu0 0.0
    %8534 = vmatpush.msra.mxu0 %v8464
    %8535 = vmatpush.msra.mxu0 %v8462
    %8536 = vmatpush.msra.mxu0 %v8460
    %8537 = vmatpush.msra.mxu0 %v8458
    %8538 = vmatpush.msra.mxu0 %v8456
    %8539 = vmatpush.msra.mxu0 %v8454
    %8540 = vmatpush.msra.mxu0 %v8452
    %8541 = vmatpush.msra.mxu0 %v8450
    %8542 = vmatpush.msra.mxu0 %v8448
    %8543 = vmatpush.msra.mxu0 %v8446
    %8544 = vmatpush.msra.mxu0 %v8444
    %8545 = vmatpush.msra.mxu0 %v8442
    %8546 = vmatmul.f32.gmra.mxu0 %v8466
    %v8547 = vpop.f32.mrf.mxu0
    %v8548 = vadd.f32 0.0, %v8547
    %8549 = vmatmul.f32.gmra.mxu0 %v8469
    %v8550 = vpop.f32.mrf.mxu0
    %v8551 = vadd.f32 0.0, %v8550
    %8552 = vmatmul.f32.gmra.mxu0 %v8472
    %v8553 = vpop.f32.mrf.mxu0
    %v8554 = vadd.f32 0.0, %v8553
    %8555 = vmatmul.f32.gmra.mxu0 %v8475
    %v8556 = vpop.f32.mrf.mxu0
    %v8557 = vadd.f32 0.0, %v8556
    %8558 = vmatmul.f32.gmra.mxu0 %v8478
    %v8559 = vpop.f32.mrf.mxu0
    %v8560 = vadd.f32 0.0, %v8559
    %8561 = vmatmul.f32.gmra.mxu0 %v8481
    %v8562 = vpop.f32.mrf.mxu0
    %v8563 = vadd.f32 0.0, %v8562
    %8564 = vmatmul.f32.gmra.mxu0 %v8484
    %v8565 = vpop.f32.mrf.mxu0
    %v8566 = vadd.f32 0.0, %v8565
    %8567 = vmatmul.f32.gmra.mxu0 %v8487
    %v8568 = vpop.f32.mrf.mxu0
    %v8569 = vadd.f32 0.0, %v8568
    %8570 = vdwg.mxu0
    %v8572 = vsel %vm8391, %v8400, 0
    %v8575 = vsel %vm8391, %v8401, 0
    %v8578 = vsel %vm8391, %v8402, 0
    %v8581 = vsel %vm8391, %v8403, 0
    %v8584 = vsel %vm8391, %v8404, 0
    %v8587 = vsel %vm8391, %v8405, 0
    %v8590 = vsel %vm8391, %v8406, 0
    %v8593 = vsel %vm8391, %v8407, 0
    %8595 = vmatpush.msra.mxu0 0.0
    %8596 = vmatpush.msra.mxu0 0.0
    %8597 = vmatpush.msra.mxu0 0.0
    %8598 = vmatpush.msra.mxu0 0.0
    %8599 = vmatpush.msra.mxu0 %v8430
    %8600 = vmatpush.msra.mxu0 %v8428
    %8601 = vmatpush.msra.mxu0 %v8426
    %8602 = vmatpush.msra.mxu0 %v8424
    %8603 = vmatpush.msra.mxu0 %v8422
    %8604 = vmatpush.msra.mxu0 %v8420
    %8605 = vmatpush.msra.mxu0 %v8418
    %8606 = vmatpush.msra.mxu0 %v8416
    %8607 = vmatpush.msra.mxu0 %v8414
    %8608 = vmatpush.msra.mxu0 %v8412
    %8609 = vmatpush.msra.mxu0 %v8410
    %8610 = vmatpush.msra.mxu0 %v8408
    %8611 = vmatmul.f32.gmra.mxu0 %v8572
    %v8612 = vpop.f32.mrf.mxu0
    %v8613 = vadd.f32 %v8507, %v8612
    %8614 = vmatmul.f32.gmra.mxu0 %v8575
    %v8615 = vpop.f32.mrf.mxu0
    %v8616 = vadd.f32 %v8510, %v8615
    %8617 = vmatmul.f32.gmra.mxu0 %v8578
    %v8618 = vpop.f32.mrf.mxu0
    %v8619 = vadd.f32 %v8513, %v8618
    %8620 = vmatmul.f32.gmra.mxu0 %v8581
    %v8621 = vpop.f32.mrf.mxu0
    %v8622 = vadd.f32 %v8516, %v8621
    %8623 = vmatmul.f32.gmra.mxu0 %v8584
    %v8624 = vpop.f32.mrf.mxu0
    %v8625 = vadd.f32 %v8519, %v8624
    %8626 = vmatmul.f32.gmra.mxu0 %v8587
    %v8627 = vpop.f32.mrf.mxu0
    %v8628 = vadd.f32 %v8522, %v8627
    %8629 = vmatmul.f32.gmra.mxu0 %v8590
    %v8630 = vpop.f32.mrf.mxu0
    %v8631 = vadd.f32 %v8525, %v8630
    %8632 = vmatmul.f32.gmra.mxu0 %v8593
    %v8633 = vpop.f32.mrf.mxu0
    %v8634 = vadd.f32 %v8528, %v8633
    %8635 = vdwg.mxu0
    %8636 = vmatpush.msra.mxu0 0.0
    %8637 = vmatpush.msra.mxu0 0.0
    %8638 = vmatpush.msra.mxu0 0.0
    %8639 = vmatpush.msra.mxu0 0.0
    %8640 = vmatpush.msra.mxu0 %v8431
    %8641 = vmatpush.msra.mxu0 %v8429
    %8642 = vmatpush.msra.mxu0 %v8427
    %8643 = vmatpush.msra.mxu0 %v8425
    %8644 = vmatpush.msra.mxu0 %v8423
    %8645 = vmatpush.msra.mxu0 %v8421
    %8646 = vmatpush.msra.mxu0 %v8419
    %8647 = vmatpush.msra.mxu0 %v8417
    %8648 = vmatpush.msra.mxu0 %v8415
    %8649 = vmatpush.msra.mxu0 %v8413
    %8650 = vmatpush.msra.mxu0 %v8411
    %8651 = vmatpush.msra.mxu0 %v8409
    %8652 = vmatmul.f32.gmra.mxu0 %v8572
    %v8653 = vpop.f32.mrf.mxu0
    %v8654 = vadd.f32 %v8548, %v8653
    %8655 = vmatmul.f32.gmra.mxu0 %v8575
    %v8656 = vpop.f32.mrf.mxu0
    %v8657 = vadd.f32 %v8551, %v8656
    %8658 = vmatmul.f32.gmra.mxu0 %v8578
    %v8659 = vpop.f32.mrf.mxu0
    %v8660 = vadd.f32 %v8554, %v8659
    %8661 = vmatmul.f32.gmra.mxu0 %v8581
    %v8662 = vpop.f32.mrf.mxu0
    %v8663 = vadd.f32 %v8557, %v8662
    %8664 = vmatmul.f32.gmra.mxu0 %v8584
    %v8665 = vpop.f32.mrf.mxu0
    %v8666 = vadd.f32 %v8560, %v8665
    %8667 = vmatmul.f32.gmra.mxu0 %v8587
    %v8668 = vpop.f32.mrf.mxu0
    %v8669 = vadd.f32 %v8563, %v8668
    %8670 = vmatmul.f32.gmra.mxu0 %v8590
    %v8671 = vpop.f32.mrf.mxu0
    %v8672 = vadd.f32 %v8566, %v8671
    %8673 = vmatmul.f32.gmra.mxu0 %v8593
    %v8674 = vpop.f32.mrf.mxu0
    %v8675 = vadd.f32 %v8569, %v8674
    %8676 = vdwg.mxu0
    %v8677 = vld [vmem:[#allocation21] sm:$0x3]
    %v8679 = vperm.slane %v8677, 0
    %v8680 = vperm.slane %v8677, 1
    %v8683 = vadd.f32 %v8613, %v8679
    %v8684 = vadd.f32 %v8654, %v8680
    %v8685 = vadd.f32 %v8616, %v8679
    %v8686 = vadd.f32 %v8657, %v8680
    %v8687 = vadd.f32 %v8619, %v8679
    %v8688 = vadd.f32 %v8660, %v8680
    %v8689 = vadd.f32 %v8622, %v8679
    %v8690 = vadd.f32 %v8663, %v8680
    %v8691 = vadd.f32 %v8625, %v8679
    %v8692 = vadd.f32 %v8666, %v8680
    %v8693 = vadd.f32 %v8628, %v8679
    %v8694 = vadd.f32 %v8669, %v8680
    %v8695 = vadd.f32 %v8631, %v8679
    %v8696 = vadd.f32 %v8672, %v8680
    %v8697 = vadd.f32 %v8634, %v8679
    %v8698 = vadd.f32 %v8675, %v8680
    %v8699 = vtanh.pop %v8683
    %v8700 = vtanh.pop %v8684
    %v8701 = vtanh.pop %v8685
    %v8702 = vtanh.pop %v8686
    %v8703 = vtanh.pop %v8687
    %v8704 = vtanh.pop %v8688
    %v8705 = vtanh.pop %v8689
    %v8706 = vtanh.pop %v8690
    %v8707 = vtanh.pop %v8691
    %v8708 = vtanh.pop %v8692
    %v8709 = vtanh.pop %v8693
    %v8710 = vtanh.pop %v8694
    %v8711 = vtanh.pop %v8695
    %v8712 = vtanh.pop %v8696
    %v8713 = vtanh.pop %v8697
    %v8714 = vtanh.pop %v8698
    %s8715 = scalar_lea.vmem [#allocation20], 384
    %v8716 = vld [vmem:[%s8715] sm:$0xff]
    %v8717 = vld [vmem:[%s8715 + $0x8] sm:$0xff]
    %v8718 = vld [vmem:[%s8715 + $0x10] sm:$0xff]
    %v8719 = vld [vmem:[%s8715 + $0x18] sm:$0xff]
    %v8720 = vld [vmem:[%s8715 + $0x20] sm:$0xff]
    %v8721 = vld [vmem:[%s8715 + $0x28] sm:$0xff]
    %v8722 = vld [vmem:[%s8715 + $0x30] sm:$0xff]
    %v8723 = vld [vmem:[%s8715 + $0x38] sm:$0xff]
    %v8724 = vld [vmem:[%s8715 + $0x40] sm:$0xff]
    %v8725 = vld [vmem:[%s8715 + $0x48] sm:$0xff]
    %v8726 = vld [vmem:[%s8715 + $0x50] sm:$0xff]
    %v8727 = vld [vmem:[%s8715 + $0x58] sm:$0xff]
    %v8728 = vld [vmem:[%s8715 + $0x60] sm:$0xff]
    %v8729 = vld [vmem:[%s8715 + $0x68] sm:$0xff]
    %v8730 = vld [vmem:[%s8715 + $0x70] sm:$0xff]
    %v8731 = vld [vmem:[%s8715 + $0x78] sm:$0xff]
    %v8732 = vld [vmem:[%s8715 + $0x80] sm:$0xff]
    %v8733 = vld [vmem:[%s8715 + $0x88] sm:$0xff]
    %v8734 = vld [vmem:[%s8715 + $0x90] sm:$0xff]
    %v8735 = vld [vmem:[%s8715 + $0x98] sm:$0xff]
    %v8736 = vld [vmem:[%s8715 + $0xa0] sm:$0xff]
    %v8737 = vld [vmem:[%s8715 + $0xa8] sm:$0xff]
    %v8738 = vld [vmem:[%s8715 + $0xb0] sm:$0xff]
    %v8739 = vld [vmem:[%s8715 + $0xb8] sm:$0xff]
    %v8740 = vld [vmem:[#allocation5 + $0x2] sm:$0xff]
    %v8741 = vld [vmem:[#allocation5 + $0xa] sm:$0xff]
    %v8742 = vld [vmem:[#allocation5 + $0x12] sm:$0xff]
    %v8743 = vld [vmem:[#allocation5 + $0x1a] sm:$0xff]
    %v8744 = vld [vmem:[#allocation5 + $0x2a] sm:$0xff]
    %v8745 = vld [vmem:[#allocation5 + $0x32] sm:$0xff]
    %v8746 = vld [vmem:[#allocation5 + $0x3a] sm:$0xff]
    %v8747 = vld [vmem:[#allocation5 + $0x42] sm:$0xff]
    %s8748 = scalar_lea.vmem [#allocation20], 576
    %v8749 = vld [vmem:[%s8748] sm:$0xff]
    %v8750 = vld [vmem:[%s8748 + $0x8] sm:$0xff]
    %v8751 = vld [vmem:[%s8748 + $0x10] sm:$0xff]
    %v8752 = vld [vmem:[%s8748 + $0x18] sm:$0xff]
    %v8753 = vld [vmem:[%s8748 + $0x20] sm:$0xff]
    %v8754 = vld [vmem:[%s8748 + $0x28] sm:$0xff]
    %v8755 = vld [vmem:[%s8748 + $0x30] sm:$0xff]
    %v8756 = vld [vmem:[%s8748 + $0x38] sm:$0xff]
    %v8757 = vld [vmem:[%s8748 + $0x40] sm:$0xff]
    %v8758 = vld [vmem:[%s8748 + $0x48] sm:$0xff]
    %v8759 = vld [vmem:[%s8748 + $0x50] sm:$0xff]
    %v8760 = vld [vmem:[%s8748 + $0x58] sm:$0xff]
    %v8761 = vld [vmem:[%s8748 + $0x60] sm:$0xff]
    %v8762 = vld [vmem:[%s8748 + $0x68] sm:$0xff]
    %v8763 = vld [vmem:[%s8748 + $0x70] sm:$0xff]
    %v8764 = vld [vmem:[%s8748 + $0x78] sm:$0xff]
    %v8765 = vld [vmem:[%s8748 + $0x80] sm:$0xff]
    %v8766 = vld [vmem:[%s8748 + $0x88] sm:$0xff]
    %v8767 = vld [vmem:[%s8748 + $0x90] sm:$0xff]
    %v8768 = vld [vmem:[%s8748 + $0x98] sm:$0xff]
    %v8769 = vld [vmem:[%s8748 + $0xa0] sm:$0xff]
    %v8770 = vld [vmem:[%s8748 + $0xa8] sm:$0xff]
    %v8771 = vld [vmem:[%s8748 + $0xb0] sm:$0xff]
    %v8772 = vld [vmem:[%s8748 + $0xb8] sm:$0xff]
    %v8774 = vsel %vm8391, %v8740, 0
    %v8777 = vsel %vm8391, %v8741, 0
    %v8780 = vsel %vm8391, %v8742, 0
    %v8783 = vsel %vm8391, %v8743, 0
    %v8786 = vsel %vm8391, %v8744, 0
    %v8789 = vsel %vm8391, %v8745, 0
    %v8792 = vsel %vm8391, %v8746, 0
    %v8795 = vsel %vm8391, %v8747, 0
    %8797 = vmatpush.msra.mxu0 0.0
    %8798 = vmatpush.msra.mxu0 0.0
    %8799 = vmatpush.msra.mxu0 0.0
    %8800 = vmatpush.msra.mxu0 0.0
    %8801 = vmatpush.msra.mxu0 %v8771
    %8802 = vmatpush.msra.mxu0 %v8769
    %8803 = vmatpush.msra.mxu0 %v8767
    %8804 = vmatpush.msra.mxu0 %v8765
    %8805 = vmatpush.msra.mxu0 %v8763
    %8806 = vmatpush.msra.mxu0 %v8761
    %8807 = vmatpush.msra.mxu0 %v8759
    %8808 = vmatpush.msra.mxu0 %v8757
    %8809 = vmatpush.msra.mxu0 %v8755
    %8810 = vmatpush.msra.mxu0 %v8753
    %8811 = vmatpush.msra.mxu0 %v8751
    %8812 = vmatpush.msra.mxu0 %v8749
    %8813 = vmatmul.f32.gmra.mxu0 %v8774
    %v8814 = vpop.f32.mrf.mxu0
    %v8815 = vadd.f32 0.0, %v8814
    %8816 = vmatmul.f32.gmra.mxu0 %v8777
    %v8817 = vpop.f32.mrf.mxu0
    %v8818 = vadd.f32 0.0, %v8817
    %8819 = vmatmul.f32.gmra.mxu0 %v8780
    %v8820 = vpop.f32.mrf.mxu0
    %v8821 = vadd.f32 0.0, %v8820
    %8822 = vmatmul.f32.gmra.mxu0 %v8783
    %v8823 = vpop.f32.mrf.mxu0
    %v8824 = vadd.f32 0.0, %v8823
    %8825 = vmatmul.f32.gmra.mxu0 %v8786
    %v8826 = vpop.f32.mrf.mxu0
    %v8827 = vadd.f32 0.0, %v8826
    %8828 = vmatmul.f32.gmra.mxu0 %v8789
    %v8829 = vpop.f32.mrf.mxu0
    %v8830 = vadd.f32 0.0, %v8829
    %8831 = vmatmul.f32.gmra.mxu0 %v8792
    %v8832 = vpop.f32.mrf.mxu0
    %v8833 = vadd.f32 0.0, %v8832
    %8834 = vmatmul.f32.gmra.mxu0 %v8795
    %v8835 = vpop.f32.mrf.mxu0
    %v8836 = vadd.f32 0.0, %v8835
    %8837 = vdwg.mxu0
    %8838 = vmatpush.msra.mxu0 0.0
    %8839 = vmatpush.msra.mxu0 0.0
    %8840 = vmatpush.msra.mxu0 0.0
    %8841 = vmatpush.msra.mxu0 0.0
    %8842 = vmatpush.msra.mxu0 %v8772
    %8843 = vmatpush.msra.mxu0 %v8770
    %8844 = vmatpush.msra.mxu0 %v8768
    %8845 = vmatpush.msra.mxu0 %v8766
    %8846 = vmatpush.msra.mxu0 %v8764
    %8847 = vmatpush.msra.mxu0 %v8762
    %8848 = vmatpush.msra.mxu0 %v8760
    %8849 = vmatpush.msra.mxu0 %v8758
    %8850 = vmatpush.msra.mxu0 %v8756
    %8851 = vmatpush.msra.mxu0 %v8754
    %8852 = vmatpush.msra.mxu0 %v8752
    %8853 = vmatpush.msra.mxu0 %v8750
    %8854 = vmatmul.f32.gmra.mxu0 %v8774
    %v8855 = vpop.f32.mrf.mxu0
    %v8856 = vadd.f32 0.0, %v8855
    %8857 = vmatmul.f32.gmra.mxu0 %v8777
    %v8858 = vpop.f32.mrf.mxu0
    %v8859 = vadd.f32 0.0, %v8858
    %8860 = vmatmul.f32.gmra.mxu0 %v8780
    %v8861 = vpop.f32.mrf.mxu0
    %v8862 = vadd.f32 0.0, %v8861
    %8863 = vmatmul.f32.gmra.mxu0 %v8783
    %v8864 = vpop.f32.mrf.mxu0
    %v8865 = vadd.f32 0.0, %v8864
    %8866 = vmatmul.f32.gmra.mxu0 %v8786
    %v8867 = vpop.f32.mrf.mxu0
    %v8868 = vadd.f32 0.0, %v8867
    %8869 = vmatmul.f32.gmra.mxu0 %v8789
    %v8870 = vpop.f32.mrf.mxu0
    %v8871 = vadd.f32 0.0, %v8870
    %8872 = vmatmul.f32.gmra.mxu0 %v8792
    %v8873 = vpop.f32.mrf.mxu0
    %v8874 = vadd.f32 0.0, %v8873
    %8875 = vmatmul.f32.gmra.mxu0 %v8795
    %v8876 = vpop.f32.mrf.mxu0
    %v8877 = vadd.f32 0.0, %v8876
    %8878 = vdwg.mxu0
    %8879 = vmatpush.msra.mxu0 0.0
    %8880 = vmatpush.msra.mxu0 0.0
    %8881 = vmatpush.msra.mxu0 0.0
    %8882 = vmatpush.msra.mxu0 0.0
    %8883 = vmatpush.msra.mxu0 %v8738
    %8884 = vmatpush.msra.mxu0 %v8736
    %8885 = vmatpush.msra.mxu0 %v8734
    %8886 = vmatpush.msra.mxu0 %v8732
    %8887 = vmatpush.msra.mxu0 %v8730
    %8888 = vmatpush.msra.mxu0 %v8728
    %8889 = vmatpush.msra.mxu0 %v8726
    %8890 = vmatpush.msra.mxu0 %v8724
    %8891 = vmatpush.msra.mxu0 %v8722
    %8892 = vmatpush.msra.mxu0 %v8720
    %8893 = vmatpush.msra.mxu0 %v8718
    %8894 = vmatpush.msra.mxu0 %v8716
    %8895 = vmatmul.f32.gmra.mxu0 %v8466
    %v8896 = vpop.f32.mrf.mxu0
    %v8897 = vadd.f32 %v8815, %v8896
    %8898 = vmatmul.f32.gmra.mxu0 %v8469
    %v8899 = vpop.f32.mrf.mxu0
    %v8900 = vadd.f32 %v8818, %v8899
    %8901 = vmatmul.f32.gmra.mxu0 %v8472
    %v8902 = vpop.f32.mrf.mxu0
    %v8903 = vadd.f32 %v8821, %v8902
    %8904 = vmatmul.f32.gmra.mxu0 %v8475
    %v8905 = vpop.f32.mrf.mxu0
    %v8906 = vadd.f32 %v8824, %v8905
    %8907 = vmatmul.f32.gmra.mxu0 %v8478
    %v8908 = vpop.f32.mrf.mxu0
    %v8909 = vadd.f32 %v8827, %v8908
    %8910 = vmatmul.f32.gmra.mxu0 %v8481
    %v8911 = vpop.f32.mrf.mxu0
    %v8912 = vadd.f32 %v8830, %v8911
    %8913 = vmatmul.f32.gmra.mxu0 %v8484
    %v8914 = vpop.f32.mrf.mxu0
    %v8915 = vadd.f32 %v8833, %v8914
    %8916 = vmatmul.f32.gmra.mxu0 %v8487
    %v8917 = vpop.f32.mrf.mxu0
    %v8918 = vadd.f32 %v8836, %v8917
    %8919 = vdwg.mxu0
    %8920 = vmatpush.msra.mxu0 0.0
    %8921 = vmatpush.msra.mxu0 0.0
    %8922 = vmatpush.msra.mxu0 0.0
    %8923 = vmatpush.msra.mxu0 0.0
    %8924 = vmatpush.msra.mxu0 %v8739
    %8925 = vmatpush.msra.mxu0 %v8737
    %8926 = vmatpush.msra.mxu0 %v8735
    %8927 = vmatpush.msra.mxu0 %v8733
    %8928 = vmatpush.msra.mxu0 %v8731
    %8929 = vmatpush.msra.mxu0 %v8729
    %8930 = vmatpush.msra.mxu0 %v8727
    %8931 = vmatpush.msra.mxu0 %v8725
    %8932 = vmatpush.msra.mxu0 %v8723
    %8933 = vmatpush.msra.mxu0 %v8721
    %8934 = vmatpush.msra.mxu0 %v8719
    %8935 = vmatpush.msra.mxu0 %v8717
    %8936 = vmatmul.f32.gmra.mxu0 %v8466
    %v8937 = vpop.f32.mrf.mxu0
    %v8938 = vadd.f32 %v8856, %v8937
    %8939 = vmatmul.f32.gmra.mxu0 %v8469
    %v8940 = vpop.f32.mrf.mxu0
    %v8941 = vadd.f32 %v8859, %v8940
    %8942 = vmatmul.f32.gmra.mxu0 %v8472
    %v8943 = vpop.f32.mrf.mxu0
    %v8944 = vadd.f32 %v8862, %v8943
    %8945 = vmatmul.f32.gmra.mxu0 %v8475
    %v8946 = vpop.f32.mrf.mxu0
    %v8947 = vadd.f32 %v8865, %v8946
    %8948 = vmatmul.f32.gmra.mxu0 %v8478
    %v8949 = vpop.f32.mrf.mxu0
    %v8950 = vadd.f32 %v8868, %v8949
    %8951 = vmatmul.f32.gmra.mxu0 %v8481
    %v8952 = vpop.f32.mrf.mxu0
    %v8953 = vadd.f32 %v8871, %v8952
    %8954 = vmatmul.f32.gmra.mxu0 %v8484
    %v8955 = vpop.f32.mrf.mxu0
    %v8956 = vadd.f32 %v8874, %v8955
    %8957 = vmatmul.f32.gmra.mxu0 %v8487
    %v8958 = vpop.f32.mrf.mxu0
    %v8959 = vadd.f32 %v8877, %v8958
    %8960 = vdwg.mxu0
    %v8961 = vadd.f32 %v8897, %v8679
    %v8962 = vadd.f32 %v8938, %v8680
    %v8963 = vadd.f32 %v8900, %v8679
    %v8964 = vadd.f32 %v8941, %v8680
    %v8965 = vadd.f32 %v8903, %v8679
    %v8966 = vadd.f32 %v8944, %v8680
    %v8967 = vadd.f32 %v8906, %v8679
    %v8968 = vadd.f32 %v8947, %v8680
    %v8969 = vadd.f32 %v8909, %v8679
    %v8970 = vadd.f32 %v8950, %v8680
    %v8971 = vadd.f32 %v8912, %v8679
    %v8972 = vadd.f32 %v8953, %v8680
    %v8973 = vadd.f32 %v8915, %v8679
    %v8974 = vadd.f32 %v8956, %v8680
    %v8975 = vadd.f32 %v8918, %v8679
    %v8976 = vadd.f32 %v8959, %v8680
    %v8977 = vtanh.pop %v8961
    %v8978 = vtanh.pop %v8962
    %v8979 = vtanh.pop %v8963
    %v8980 = vtanh.pop %v8964
    %v8981 = vtanh.pop %v8965
    %v8982 = vtanh.pop %v8966
    %v8983 = vtanh.pop %v8967
    %v8984 = vtanh.pop %v8968
    %v8985 = vtanh.pop %v8969
    %v8986 = vtanh.pop %v8970
    %v8987 = vtanh.pop %v8971
    %v8988 = vtanh.pop %v8972
    %v8989 = vtanh.pop %v8973
    %v8990 = vtanh.pop %v8974
    %v8991 = vtanh.pop %v8975
    %v8992 = vtanh.pop %v8976
    %v9009 = vrot.slane %v8700, 7
    %v9010 = vrot.slane %v8702, 7
    %v9011 = vrot.slane %v8704, 7
    %v9012 = vrot.slane %v8706, 7
    %v9013 = vrot.slane %v8708, 7
    %v9014 = vrot.slane %v8710, 7
    %v9015 = vrot.slane %v8712, 7
    %v9016 = vrot.slane %v8714, 7
    %v9017 = vsel %vm730, %v8699, %v9009
    %v9018 = vsel %vm735, %v8699, %v9009
    %v9019 = vrot.slane %v9018, 1
    %v9020 = vsel %vm732, %v8699, %v9009
    %v9021 = vrot.slane %v9020, 2
    %v9022 = vsel %vm737, %v8699, %v9009
    %v9023 = vrot.slane %v9022, 3
    %v9024 = vsel %vm3387, %v8699, %v9009
    %v9025 = vrot.slane %v9024, 4
    %v9026 = vsel %vm3393, %v8699, %v9009
    %v9027 = vrot.slane %v9026, 5
    %v9028 = vsel %vm6457, %v8699, %v9009
    %v9029 = vrot.slane %v9028, 6
    %v9030 = vsel %vm4301, %v9009, %v8699
    %v9031 = vrot.slane %v9030, 7
    %v9032 = vsel %vm730, %v8701, %v9010
    %v9033 = vsel %vm735, %v8701, %v9010
    %v9034 = vrot.slane %v9033, 1
    %v9035 = vsel %vm732, %v8701, %v9010
    %v9036 = vrot.slane %v9035, 2
    %v9037 = vsel %vm737, %v8701, %v9010
    %v9038 = vrot.slane %v9037, 3
    %v9039 = vsel %vm3387, %v8701, %v9010
    %v9040 = vrot.slane %v9039, 4
    %v9041 = vsel %vm3393, %v8701, %v9010
    %v9042 = vrot.slane %v9041, 5
    %v9043 = vsel %vm6457, %v8701, %v9010
    %v9044 = vrot.slane %v9043, 6
    %v9045 = vsel %vm4301, %v9010, %v8701
    %v9046 = vrot.slane %v9045, 7
    %v9047 = vsel %vm730, %v8703, %v9011
    %v9048 = vsel %vm735, %v8703, %v9011
    %v9049 = vrot.slane %v9048, 1
    %v9050 = vsel %vm732, %v8703, %v9011
    %v9051 = vrot.slane %v9050, 2
    %v9052 = vsel %vm737, %v8703, %v9011
    %v9053 = vrot.slane %v9052, 3
    %v9054 = vsel %vm3387, %v8703, %v9011
    %v9055 = vrot.slane %v9054, 4
    %v9056 = vsel %vm3393, %v8703, %v9011
    %v9057 = vrot.slane %v9056, 5
    %v9058 = vsel %vm6457, %v8703, %v9011
    %v9059 = vrot.slane %v9058, 6
    %v9060 = vsel %vm4301, %v9011, %v8703
    %v9061 = vrot.slane %v9060, 7
    %v9062 = vsel %vm730, %v8705, %v9012
    %v9063 = vsel %vm735, %v8705, %v9012
    %v9064 = vrot.slane %v9063, 1
    %v9065 = vsel %vm732, %v8705, %v9012
    %v9066 = vrot.slane %v9065, 2
    %v9067 = vsel %vm737, %v8705, %v9012
    %v9068 = vrot.slane %v9067, 3
    %v9069 = vsel %vm3387, %v8705, %v9012
    %v9070 = vrot.slane %v9069, 4
    %v9071 = vsel %vm3393, %v8705, %v9012
    %v9072 = vrot.slane %v9071, 5
    %v9073 = vsel %vm6457, %v8705, %v9012
    %v9074 = vrot.slane %v9073, 6
    %v9075 = vsel %vm4301, %v9012, %v8705
    %v9076 = vrot.slane %v9075, 7
    %v9077 = vsel %vm730, %v8707, %v9013
    %v9078 = vsel %vm735, %v8707, %v9013
    %v9079 = vrot.slane %v9078, 1
    %v9080 = vsel %vm732, %v8707, %v9013
    %v9081 = vrot.slane %v9080, 2
    %v9082 = vsel %vm737, %v8707, %v9013
    %v9083 = vrot.slane %v9082, 3
    %v9084 = vsel %vm3387, %v8707, %v9013
    %v9085 = vrot.slane %v9084, 4
    %v9086 = vsel %vm3393, %v8707, %v9013
    %v9087 = vrot.slane %v9086, 5
    %v9088 = vsel %vm6457, %v8707, %v9013
    %v9089 = vrot.slane %v9088, 6
    %v9090 = vsel %vm4301, %v9013, %v8707
    %v9091 = vrot.slane %v9090, 7
    %v9092 = vsel %vm730, %v8709, %v9014
    %v9093 = vsel %vm735, %v8709, %v9014
    %v9094 = vrot.slane %v9093, 1
    %v9095 = vsel %vm732, %v8709, %v9014
    %v9096 = vrot.slane %v9095, 2
    %v9097 = vsel %vm737, %v8709, %v9014
    %v9098 = vrot.slane %v9097, 3
    %v9099 = vsel %vm3387, %v8709, %v9014
    %v9100 = vrot.slane %v9099, 4
    %v9101 = vsel %vm3393, %v8709, %v9014
    %v9102 = vrot.slane %v9101, 5
    %v9103 = vsel %vm6457, %v8709, %v9014
    %v9104 = vrot.slane %v9103, 6
    %v9105 = vsel %vm4301, %v9014, %v8709
    %v9106 = vrot.slane %v9105, 7
    %v9107 = vsel %vm730, %v8711, %v9015
    %v9108 = vsel %vm735, %v8711, %v9015
    %v9109 = vrot.slane %v9108, 1
    %v9110 = vsel %vm732, %v8711, %v9015
    %v9111 = vrot.slane %v9110, 2
    %v9112 = vsel %vm737, %v8711, %v9015
    %v9113 = vrot.slane %v9112, 3
    %v9114 = vsel %vm3387, %v8711, %v9015
    %v9115 = vrot.slane %v9114, 4
    %v9116 = vsel %vm3393, %v8711, %v9015
    %v9117 = vrot.slane %v9116, 5
    %v9118 = vsel %vm6457, %v8711, %v9015
    %v9119 = vrot.slane %v9118, 6
    %v9120 = vsel %vm4301, %v9015, %v8711
    %v9121 = vrot.slane %v9120, 7
    %v9122 = vsel %vm730, %v8713, %v9016
    %v9123 = vsel %vm735, %v8713, %v9016
    %v9124 = vrot.slane %v9123, 1
    %v9125 = vsel %vm732, %v8713, %v9016
    %v9126 = vrot.slane %v9125, 2
    %v9127 = vsel %vm737, %v8713, %v9016
    %v9128 = vrot.slane %v9127, 3
    %v9129 = vsel %vm3387, %v8713, %v9016
    %v9130 = vrot.slane %v9129, 4
    %v9131 = vsel %vm3393, %v8713, %v9016
    %v9132 = vrot.slane %v9131, 5
    %v9133 = vsel %vm6457, %v8713, %v9016
    %v9134 = vrot.slane %v9133, 6
    %v9135 = vsel %vm4301, %v9016, %v8713
    %v9136 = vrot.slane %v9135, 7
    %v9153 = vrot.slane %v8978, 7
    %v9154 = vrot.slane %v8980, 7
    %v9155 = vrot.slane %v8982, 7
    %v9156 = vrot.slane %v8984, 7
    %v9157 = vrot.slane %v8986, 7
    %v9158 = vrot.slane %v8988, 7
    %v9159 = vrot.slane %v8990, 7
    %v9160 = vrot.slane %v8992, 7
    %v9161 = vsel %vm730, %v8977, %v9153
    %v9162 = vsel %vm735, %v8977, %v9153
    %v9163 = vrot.slane %v9162, 1
    %v9164 = vsel %vm732, %v8977, %v9153
    %v9165 = vrot.slane %v9164, 2
    %v9166 = vsel %vm737, %v8977, %v9153
    %v9167 = vrot.slane %v9166, 3
    %v9168 = vsel %vm3387, %v8977, %v9153
    %v9169 = vrot.slane %v9168, 4
    %v9170 = vsel %vm3393, %v8977, %v9153
    %v9171 = vrot.slane %v9170, 5
    %v9172 = vsel %vm6457, %v8977, %v9153
    %v9173 = vrot.slane %v9172, 6
    %v9174 = vsel %vm4301, %v9153, %v8977
    %v9175 = vrot.slane %v9174, 7
    %v9176 = vsel %vm730, %v8979, %v9154
    %v9177 = vsel %vm735, %v8979, %v9154
    %v9178 = vrot.slane %v9177, 1
    %v9179 = vsel %vm732, %v8979, %v9154
    %v9180 = vrot.slane %v9179, 2
    %v9181 = vsel %vm737, %v8979, %v9154
    %v9182 = vrot.slane %v9181, 3
    %v9183 = vsel %vm3387, %v8979, %v9154
    %v9184 = vrot.slane %v9183, 4
    %v9185 = vsel %vm3393, %v8979, %v9154
    %v9186 = vrot.slane %v9185, 5
    %v9187 = vsel %vm6457, %v8979, %v9154
    %v9188 = vrot.slane %v9187, 6
    %v9189 = vsel %vm4301, %v9154, %v8979
    %v9190 = vrot.slane %v9189, 7
    %v9191 = vsel %vm730, %v8981, %v9155
    %v9192 = vsel %vm735, %v8981, %v9155
    %v9193 = vrot.slane %v9192, 1
    %v9194 = vsel %vm732, %v8981, %v9155
    %v9195 = vrot.slane %v9194, 2
    %v9196 = vsel %vm737, %v8981, %v9155
    %v9197 = vrot.slane %v9196, 3
    %v9198 = vsel %vm3387, %v8981, %v9155
    %v9199 = vrot.slane %v9198, 4
    %v9200 = vsel %vm3393, %v8981, %v9155
    %v9201 = vrot.slane %v9200, 5
    %v9202 = vsel %vm6457, %v8981, %v9155
    %v9203 = vrot.slane %v9202, 6
    %v9204 = vsel %vm4301, %v9155, %v8981
    %v9205 = vrot.slane %v9204, 7
    %v9206 = vsel %vm730, %v8983, %v9156
    %v9207 = vsel %vm735, %v8983, %v9156
    %v9208 = vrot.slane %v9207, 1
    %v9209 = vsel %vm732, %v8983, %v9156
    %v9210 = vrot.slane %v9209, 2
    %v9211 = vsel %vm737, %v8983, %v9156
    %v9212 = vrot.slane %v9211, 3
    %v9213 = vsel %vm3387, %v8983, %v9156
    %v9214 = vrot.slane %v9213, 4
    %v9215 = vsel %vm3393, %v8983, %v9156
    %v9216 = vrot.slane %v9215, 5
    %v9217 = vsel %vm6457, %v8983, %v9156
    %v9218 = vrot.slane %v9217, 6
    %v9219 = vsel %vm4301, %v9156, %v8983
    %v9220 = vrot.slane %v9219, 7
    %v9221 = vsel %vm730, %v8985, %v9157
    %v9222 = vsel %vm735, %v8985, %v9157
    %v9223 = vrot.slane %v9222, 1
    %v9224 = vsel %vm732, %v8985, %v9157
    %v9225 = vrot.slane %v9224, 2
    %v9226 = vsel %vm737, %v8985, %v9157
    %v9227 = vrot.slane %v9226, 3
    %v9228 = vsel %vm3387, %v8985, %v9157
    %v9229 = vrot.slane %v9228, 4
    %v9230 = vsel %vm3393, %v8985, %v9157
    %v9231 = vrot.slane %v9230, 5
    %v9232 = vsel %vm6457, %v8985, %v9157
    %v9233 = vrot.slane %v9232, 6
    %v9234 = vsel %vm4301, %v9157, %v8985
    %v9235 = vrot.slane %v9234, 7
    %v9236 = vsel %vm730, %v8987, %v9158
    %v9237 = vsel %vm735, %v8987, %v9158
    %v9238 = vrot.slane %v9237, 1
    %v9239 = vsel %vm732, %v8987, %v9158
    %v9240 = vrot.slane %v9239, 2
    %v9241 = vsel %vm737, %v8987, %v9158
    %v9242 = vrot.slane %v9241, 3
    %v9243 = vsel %vm3387, %v8987, %v9158
    %v9244 = vrot.slane %v9243, 4
    %v9245 = vsel %vm3393, %v8987, %v9158
    %v9246 = vrot.slane %v9245, 5
    %v9247 = vsel %vm6457, %v8987, %v9158
    %v9248 = vrot.slane %v9247, 6
    %v9249 = vsel %vm4301, %v9158, %v8987
    %v9250 = vrot.slane %v9249, 7
    %v9251 = vsel %vm730, %v8989, %v9159
    %v9252 = vsel %vm735, %v8989, %v9159
    %v9253 = vrot.slane %v9252, 1
    %v9254 = vsel %vm732, %v8989, %v9159
    %v9255 = vrot.slane %v9254, 2
    %v9256 = vsel %vm737, %v8989, %v9159
    %v9257 = vrot.slane %v9256, 3
    %v9258 = vsel %vm3387, %v8989, %v9159
    %v9259 = vrot.slane %v9258, 4
    %v9260 = vsel %vm3393, %v8989, %v9159
    %v9261 = vrot.slane %v9260, 5
    %v9262 = vsel %vm6457, %v8989, %v9159
    %v9263 = vrot.slane %v9262, 6
    %v9264 = vsel %vm4301, %v9159, %v8989
    %v9265 = vrot.slane %v9264, 7
    %v9266 = vsel %vm730, %v8991, %v9160
    %v9267 = vsel %vm735, %v8991, %v9160
    %v9268 = vrot.slane %v9267, 1
    %v9269 = vsel %vm732, %v8991, %v9160
    %v9270 = vrot.slane %v9269, 2
    %v9271 = vsel %vm737, %v8991, %v9160
    %v9272 = vrot.slane %v9271, 3
    %v9273 = vsel %vm3387, %v8991, %v9160
    %v9274 = vrot.slane %v9273, 4
    %v9275 = vsel %vm3393, %v8991, %v9160
    %v9276 = vrot.slane %v9275, 5
    %v9277 = vsel %vm6457, %v8991, %v9160
    %v9278 = vrot.slane %v9277, 6
    %v9279 = vsel %vm4301, %v9160, %v8991
    %v9280 = vrot.slane %v9279, 7
    %v9281 = vperm.slane %v9017, 0
    %v9282 = vperm.slane %v9017, 1
    %v9283 = vperm.slane %v9019, 0
    %v9284 = vperm.slane %v9019, 1
    %v9285 = vperm.slane %v9021, 0
    %v9286 = vperm.slane %v9021, 1
    %v9287 = vperm.slane %v9023, 0
    %v9288 = vperm.slane %v9023, 1
    %v9289 = vperm.slane %v9025, 0
    %v9290 = vperm.slane %v9025, 1
    %v9291 = vperm.slane %v9027, 0
    %v9292 = vperm.slane %v9027, 1
    %v9293 = vperm.slane %v9029, 0
    %v9294 = vperm.slane %v9029, 1
    %v9295 = vperm.slane %v9031, 0
    %v9296 = vperm.slane %v9031, 1
    %v9297 = vperm.slane %v9032, 0
    %v9298 = vperm.slane %v9032, 1
    %v9299 = vperm.slane %v9034, 0
    %v9300 = vperm.slane %v9034, 1
    %v9301 = vperm.slane %v9036, 0
    %v9302 = vperm.slane %v9036, 1
    %v9303 = vperm.slane %v9038, 0
    %v9304 = vperm.slane %v9038, 1
    %v9305 = vperm.slane %v9040, 0
    %v9306 = vperm.slane %v9040, 1
    %v9307 = vperm.slane %v9042, 0
    %v9308 = vperm.slane %v9042, 1
    %v9309 = vperm.slane %v9044, 0
    %v9310 = vperm.slane %v9044, 1
    %v9311 = vperm.slane %v9046, 0
    %v9312 = vperm.slane %v9046, 1
    %v9313 = vperm.slane %v9047, 0
    %v9314 = vperm.slane %v9047, 1
    %v9315 = vperm.slane %v9049, 0
    %v9316 = vperm.slane %v9049, 1
    %v9317 = vperm.slane %v9051, 0
    %v9318 = vperm.slane %v9051, 1
    %v9319 = vperm.slane %v9053, 0
    %v9320 = vperm.slane %v9053, 1
    %v9321 = vperm.slane %v9055, 0
    %v9322 = vperm.slane %v9055, 1
    %v9323 = vperm.slane %v9057, 0
    %v9324 = vperm.slane %v9057, 1
    %v9325 = vperm.slane %v9059, 0
    %v9326 = vperm.slane %v9059, 1
    %v9327 = vperm.slane %v9061, 0
    %v9328 = vperm.slane %v9061, 1
    %v9329 = vperm.slane %v9062, 0
    %v9330 = vperm.slane %v9062, 1
    %v9331 = vperm.slane %v9064, 0
    %v9332 = vperm.slane %v9064, 1
    %v9333 = vperm.slane %v9066, 0
    %v9334 = vperm.slane %v9066, 1
    %v9335 = vperm.slane %v9068, 0
    %v9336 = vperm.slane %v9068, 1
    %v9337 = vperm.slane %v9070, 0
    %v9338 = vperm.slane %v9070, 1
    %v9339 = vperm.slane %v9072, 0
    %v9340 = vperm.slane %v9072, 1
    %v9341 = vperm.slane %v9074, 0
    %v9342 = vperm.slane %v9074, 1
    %v9343 = vperm.slane %v9076, 0
    %v9344 = vperm.slane %v9076, 1
    %v9345 = vperm.slane %v9077, 0
    %v9346 = vperm.slane %v9077, 1
    %v9347 = vperm.slane %v9079, 0
    %v9348 = vperm.slane %v9079, 1
    %v9349 = vperm.slane %v9081, 0
    %v9350 = vperm.slane %v9081, 1
    %v9351 = vperm.slane %v9083, 0
    %v9352 = vperm.slane %v9083, 1
    %v9353 = vperm.slane %v9085, 0
    %v9354 = vperm.slane %v9085, 1
    %v9355 = vperm.slane %v9087, 0
    %v9356 = vperm.slane %v9087, 1
    %v9357 = vperm.slane %v9089, 0
    %v9358 = vperm.slane %v9089, 1
    %v9359 = vperm.slane %v9091, 0
    %v9360 = vperm.slane %v9091, 1
    %v9361 = vperm.slane %v9092, 0
    %v9362 = vperm.slane %v9092, 1
    %v9363 = vperm.slane %v9094, 0
    %v9364 = vperm.slane %v9094, 1
    %v9365 = vperm.slane %v9096, 0
    %v9366 = vperm.slane %v9096, 1
    %v9367 = vperm.slane %v9098, 0
    %v9368 = vperm.slane %v9098, 1
    %v9369 = vperm.slane %v9100, 0
    %v9370 = vperm.slane %v9100, 1
    %v9371 = vperm.slane %v9102, 0
    %v9372 = vperm.slane %v9102, 1
    %v9373 = vperm.slane %v9104, 0
    %v9374 = vperm.slane %v9104, 1
    %v9375 = vperm.slane %v9106, 0
    %v9376 = vperm.slane %v9106, 1
    %v9377 = vperm.slane %v9107, 0
    %v9378 = vperm.slane %v9107, 1
    %v9379 = vperm.slane %v9109, 0
    %v9380 = vperm.slane %v9109, 1
    %v9381 = vperm.slane %v9111, 0
    %v9382 = vperm.slane %v9111, 1
    %v9383 = vperm.slane %v9113, 0
    %v9384 = vperm.slane %v9113, 1
    %v9385 = vperm.slane %v9115, 0
    %v9386 = vperm.slane %v9115, 1
    %v9387 = vperm.slane %v9117, 0
    %v9388 = vperm.slane %v9117, 1
    %v9389 = vperm.slane %v9119, 0
    %v9390 = vperm.slane %v9119, 1
    %v9391 = vperm.slane %v9121, 0
    %v9392 = vperm.slane %v9121, 1
    %v9393 = vperm.slane %v9122, 0
    %v9394 = vperm.slane %v9122, 1
    %v9395 = vperm.slane %v9124, 0
    %v9396 = vperm.slane %v9124, 1
    %v9397 = vperm.slane %v9126, 0
    %v9398 = vperm.slane %v9126, 1
    %v9399 = vperm.slane %v9128, 0
    %v9400 = vperm.slane %v9128, 1
    %v9401 = vperm.slane %v9130, 0
    %v9402 = vperm.slane %v9130, 1
    %v9403 = vperm.slane %v9132, 0
    %v9404 = vperm.slane %v9132, 1
    %v9405 = vperm.slane %v9134, 0
    %v9406 = vperm.slane %v9134, 1
    %v9407 = vperm.slane %v9136, 0
    %v9408 = vperm.slane %v9136, 1
    %v9537 = vperm.slane %v9161, 0
    %v9538 = vperm.slane %v9161, 1
    %v9539 = vperm.slane %v9163, 0
    %v9540 = vperm.slane %v9163, 1
    %v9541 = vperm.slane %v9165, 0
    %v9542 = vperm.slane %v9165, 1
    %v9543 = vperm.slane %v9167, 0
    %v9544 = vperm.slane %v9167, 1
    %v9545 = vperm.slane %v9169, 0
    %v9546 = vperm.slane %v9169, 1
    %v9547 = vperm.slane %v9171, 0
    %v9548 = vperm.slane %v9171, 1
    %v9549 = vperm.slane %v9173, 0
    %v9550 = vperm.slane %v9173, 1
    %v9551 = vperm.slane %v9175, 0
    %v9552 = vperm.slane %v9175, 1
    %v9553 = vperm.slane %v9176, 0
    %v9554 = vperm.slane %v9176, 1
    %v9555 = vperm.slane %v9178, 0
    %v9556 = vperm.slane %v9178, 1
    %v9557 = vperm.slane %v9180, 0
    %v9558 = vperm.slane %v9180, 1
    %v9559 = vperm.slane %v9182, 0
    %v9560 = vperm.slane %v9182, 1
    %v9561 = vperm.slane %v9184, 0
    %v9562 = vperm.slane %v9184, 1
    %v9563 = vperm.slane %v9186, 0
    %v9564 = vperm.slane %v9186, 1
    %v9565 = vperm.slane %v9188, 0
    %v9566 = vperm.slane %v9188, 1
    %v9567 = vperm.slane %v9190, 0
    %v9568 = vperm.slane %v9190, 1
    %v9569 = vperm.slane %v9191, 0
    %v9570 = vperm.slane %v9191, 1
    %v9571 = vperm.slane %v9193, 0
    %v9572 = vperm.slane %v9193, 1
    %v9573 = vperm.slane %v9195, 0
    %v9574 = vperm.slane %v9195, 1
    %v9575 = vperm.slane %v9197, 0
    %v9576 = vperm.slane %v9197, 1
    %v9577 = vperm.slane %v9199, 0
    %v9578 = vperm.slane %v9199, 1
    %v9579 = vperm.slane %v9201, 0
    %v9580 = vperm.slane %v9201, 1
    %v9581 = vperm.slane %v9203, 0
    %v9582 = vperm.slane %v9203, 1
    %v9583 = vperm.slane %v9205, 0
    %v9584 = vperm.slane %v9205, 1
    %v9585 = vperm.slane %v9206, 0
    %v9586 = vperm.slane %v9206, 1
    %v9587 = vperm.slane %v9208, 0
    %v9588 = vperm.slane %v9208, 1
    %v9589 = vperm.slane %v9210, 0
    %v9590 = vperm.slane %v9210, 1
    %v9591 = vperm.slane %v9212, 0
    %v9592 = vperm.slane %v9212, 1
    %v9593 = vperm.slane %v9214, 0
    %v9594 = vperm.slane %v9214, 1
    %v9595 = vperm.slane %v9216, 0
    %v9596 = vperm.slane %v9216, 1
    %v9597 = vperm.slane %v9218, 0
    %v9598 = vperm.slane %v9218, 1
    %v9599 = vperm.slane %v9220, 0
    %v9600 = vperm.slane %v9220, 1
    %v9601 = vperm.slane %v9221, 0
    %v9602 = vperm.slane %v9221, 1
    %v9603 = vperm.slane %v9223, 0
    %v9604 = vperm.slane %v9223, 1
    %v9605 = vperm.slane %v9225, 0
    %v9606 = vperm.slane %v9225, 1
    %v9607 = vperm.slane %v9227, 0
    %v9608 = vperm.slane %v9227, 1
    %v9609 = vperm.slane %v9229, 0
    %v9610 = vperm.slane %v9229, 1
    %v9611 = vperm.slane %v9231, 0
    %v9612 = vperm.slane %v9231, 1
    %v9613 = vperm.slane %v9233, 0
    %v9614 = vperm.slane %v9233, 1
    %v9615 = vperm.slane %v9235, 0
    %v9616 = vperm.slane %v9235, 1
    %v9617 = vperm.slane %v9236, 0
    %v9618 = vperm.slane %v9236, 1
    %v9619 = vperm.slane %v9238, 0
    %v9620 = vperm.slane %v9238, 1
    %v9621 = vperm.slane %v9240, 0
    %v9622 = vperm.slane %v9240, 1
    %v9623 = vperm.slane %v9242, 0
    %v9624 = vperm.slane %v9242, 1
    %v9625 = vperm.slane %v9244, 0
    %v9626 = vperm.slane %v9244, 1
    %v9627 = vperm.slane %v9246, 0
    %v9628 = vperm.slane %v9246, 1
    %v9629 = vperm.slane %v9248, 0
    %v9630 = vperm.slane %v9248, 1
    %v9631 = vperm.slane %v9250, 0
    %v9632 = vperm.slane %v9250, 1
    %v9633 = vperm.slane %v9251, 0
    %v9634 = vperm.slane %v9251, 1
    %v9635 = vperm.slane %v9253, 0
    %v9636 = vperm.slane %v9253, 1
    %v9637 = vperm.slane %v9255, 0
    %v9638 = vperm.slane %v9255, 1
    %v9639 = vperm.slane %v9257, 0
    %v9640 = vperm.slane %v9257, 1
    %v9641 = vperm.slane %v9259, 0
    %v9642 = vperm.slane %v9259, 1
    %v9643 = vperm.slane %v9261, 0
    %v9644 = vperm.slane %v9261, 1
    %v9645 = vperm.slane %v9263, 0
    %v9646 = vperm.slane %v9263, 1
    %v9647 = vperm.slane %v9265, 0
    %v9648 = vperm.slane %v9265, 1
    %v9649 = vperm.slane %v9266, 0
    %v9650 = vperm.slane %v9266, 1
    %v9651 = vperm.slane %v9268, 0
    %v9652 = vperm.slane %v9268, 1
    %v9653 = vperm.slane %v9270, 0
    %v9654 = vperm.slane %v9270, 1
    %v9655 = vperm.slane %v9272, 0
    %v9656 = vperm.slane %v9272, 1
    %v9657 = vperm.slane %v9274, 0
    %v9658 = vperm.slane %v9274, 1
    %v9659 = vperm.slane %v9276, 0
    %v9660 = vperm.slane %v9276, 1
    %v9661 = vperm.slane %v9278, 0
    %v9662 = vperm.slane %v9278, 1
    %v9663 = vperm.slane %v9280, 0
    %v9664 = vperm.slane %v9280, 1
    %v9793 = vsel %vm730, %v9281, %v9537
    %v9794 = vsel %vm730, %v9282, %v9538
    %v9795 = vsel %vm730, %v9283, %v9539
    %v9796 = vsel %vm730, %v9284, %v9540
    %v9797 = vsel %vm730, %v9285, %v9541
    %v9798 = vsel %vm730, %v9286, %v9542
    %v9799 = vsel %vm730, %v9287, %v9543
    %v9800 = vsel %vm730, %v9288, %v9544
    %v9801 = vsel %vm730, %v9289, %v9545
    %v9802 = vsel %vm730, %v9290, %v9546
    %v9803 = vsel %vm730, %v9291, %v9547
    %v9804 = vsel %vm730, %v9292, %v9548
    %v9805 = vsel %vm730, %v9293, %v9549
    %v9806 = vsel %vm730, %v9294, %v9550
    %v9807 = vsel %vm730, %v9295, %v9551
    %v9808 = vsel %vm730, %v9296, %v9552
    %v9809 = vsel %vm730, %v9297, %v9553
    %v9810 = vsel %vm730, %v9298, %v9554
    %v9811 = vsel %vm730, %v9299, %v9555
    %v9812 = vsel %vm730, %v9300, %v9556
    %v9813 = vsel %vm730, %v9301, %v9557
    %v9814 = vsel %vm730, %v9302, %v9558
    %v9815 = vsel %vm730, %v9303, %v9559
    %v9816 = vsel %vm730, %v9304, %v9560
    %v9817 = vsel %vm730, %v9305, %v9561
    %v9818 = vsel %vm730, %v9306, %v9562
    %v9819 = vsel %vm730, %v9307, %v9563
    %v9820 = vsel %vm730, %v9308, %v9564
    %v9821 = vsel %vm730, %v9309, %v9565
    %v9822 = vsel %vm730, %v9310, %v9566
    %v9823 = vsel %vm730, %v9311, %v9567
    %v9824 = vsel %vm730, %v9312, %v9568
    %v9825 = vsel %vm730, %v9313, %v9569
    %v9826 = vsel %vm730, %v9314, %v9570
    %v9827 = vsel %vm730, %v9315, %v9571
    %v9828 = vsel %vm730, %v9316, %v9572
    %v9829 = vsel %vm730, %v9317, %v9573
    %v9830 = vsel %vm730, %v9318, %v9574
    %v9831 = vsel %vm730, %v9319, %v9575
    %v9832 = vsel %vm730, %v9320, %v9576
    %v9833 = vsel %vm730, %v9321, %v9577
    %v9834 = vsel %vm730, %v9322, %v9578
    %v9835 = vsel %vm730, %v9323, %v9579
    %v9836 = vsel %vm730, %v9324, %v9580
    %v9837 = vsel %vm730, %v9325, %v9581
    %v9838 = vsel %vm730, %v9326, %v9582
    %v9839 = vsel %vm730, %v9327, %v9583
    %v9840 = vsel %vm730, %v9328, %v9584
    %v9841 = vsel %vm730, %v9329, %v9585
    %v9842 = vsel %vm730, %v9330, %v9586
    %v9843 = vsel %vm730, %v9331, %v9587
    %v9844 = vsel %vm730, %v9332, %v9588
    %v9845 = vsel %vm730, %v9333, %v9589
    %v9846 = vsel %vm730, %v9334, %v9590
    %v9847 = vsel %vm730, %v9335, %v9591
    %v9848 = vsel %vm730, %v9336, %v9592
    %v9849 = vsel %vm730, %v9337, %v9593
    %v9850 = vsel %vm730, %v9338, %v9594
    %v9851 = vsel %vm730, %v9339, %v9595
    %v9852 = vsel %vm730, %v9340, %v9596
    %v9853 = vsel %vm730, %v9341, %v9597
    %v9854 = vsel %vm730, %v9342, %v9598
    %v9855 = vsel %vm730, %v9343, %v9599
    %v9856 = vsel %vm730, %v9344, %v9600
    %v9857 = vsel %vm730, %v9345, %v9601
    %v9858 = vsel %vm730, %v9346, %v9602
    %v9859 = vsel %vm730, %v9347, %v9603
    %v9860 = vsel %vm730, %v9348, %v9604
    %v9861 = vsel %vm730, %v9349, %v9605
    %v9862 = vsel %vm730, %v9350, %v9606
    %v9863 = vsel %vm730, %v9351, %v9607
    %v9864 = vsel %vm730, %v9352, %v9608
    %v9865 = vsel %vm730, %v9353, %v9609
    %v9866 = vsel %vm730, %v9354, %v9610
    %v9867 = vsel %vm730, %v9355, %v9611
    %v9868 = vsel %vm730, %v9356, %v9612
    %v9869 = vsel %vm730, %v9357, %v9613
    %v9870 = vsel %vm730, %v9358, %v9614
    %v9871 = vsel %vm730, %v9359, %v9615
    %v9872 = vsel %vm730, %v9360, %v9616
    %v9873 = vsel %vm730, %v9361, %v9617
    %v9874 = vsel %vm730, %v9362, %v9618
    %v9875 = vsel %vm730, %v9363, %v9619
    %v9876 = vsel %vm730, %v9364, %v9620
    %v9877 = vsel %vm730, %v9365, %v9621
    %v9878 = vsel %vm730, %v9366, %v9622
    %v9879 = vsel %vm730, %v9367, %v9623
    %v9880 = vsel %vm730, %v9368, %v9624
    %v9881 = vsel %vm730, %v9369, %v9625
    %v9882 = vsel %vm730, %v9370, %v9626
    %v9883 = vsel %vm730, %v9371, %v9627
    %v9884 = vsel %vm730, %v9372, %v9628
    %v9885 = vsel %vm730, %v9373, %v9629
    %v9886 = vsel %vm730, %v9374, %v9630
    %v9887 = vsel %vm730, %v9375, %v9631
    %v9888 = vsel %vm730, %v9376, %v9632
    %v9889 = vsel %vm730, %v9377, %v9633
    %v9890 = vsel %vm730, %v9378, %v9634
    %v9891 = vsel %vm730, %v9379, %v9635
    %v9892 = vsel %vm730, %v9380, %v9636
    %v9893 = vsel %vm730, %v9381, %v9637
    %v9894 = vsel %vm730, %v9382, %v9638
    %v9895 = vsel %vm730, %v9383, %v9639
    %v9896 = vsel %vm730, %v9384, %v9640
    %v9897 = vsel %vm730, %v9385, %v9641
    %v9898 = vsel %vm730, %v9386, %v9642
    %v9899 = vsel %vm730, %v9387, %v9643
    %v9900 = vsel %vm730, %v9388, %v9644
    %v9901 = vsel %vm730, %v9389, %v9645
    %v9902 = vsel %vm730, %v9390, %v9646
    %v9903 = vsel %vm730, %v9391, %v9647
    %v9904 = vsel %vm730, %v9392, %v9648
    %v9905 = vsel %vm730, %v9393, %v9649
    %v9906 = vsel %vm730, %v9394, %v9650
    %v9907 = vsel %vm730, %v9395, %v9651
    %v9908 = vsel %vm730, %v9396, %v9652
    %v9909 = vsel %vm730, %v9397, %v9653
    %v9910 = vsel %vm730, %v9398, %v9654
    %v9911 = vsel %vm730, %v9399, %v9655
    %v9912 = vsel %vm730, %v9400, %v9656
    %v9913 = vsel %vm730, %v9401, %v9657
    %v9914 = vsel %vm730, %v9402, %v9658
    %v9915 = vsel %vm730, %v9403, %v9659
    %v9916 = vsel %vm730, %v9404, %v9660
    %v9917 = vsel %vm730, %v9405, %v9661
    %v9918 = vsel %vm730, %v9406, %v9662
    %v9919 = vsel %vm730, %v9407, %v9663
    %v9920 = vsel %vm730, %v9408, %v9664
    %v10049 = vrot.slane %v9794, 6
    %v10050 = vrot.slane %v9796, 6
    %v10051 = vrot.slane %v9798, 6
    %v10052 = vrot.slane %v9800, 6
    %v10053 = vrot.slane %v9802, 6
    %v10054 = vrot.slane %v9804, 6
    %v10055 = vrot.slane %v9806, 6
    %v10056 = vrot.slane %v9808, 6
    %v10057 = vrot.slane %v9810, 6
    %v10058 = vrot.slane %v9812, 6
    %v10059 = vrot.slane %v9814, 6
    %v10060 = vrot.slane %v9816, 6
    %v10061 = vrot.slane %v9818, 6
    %v10062 = vrot.slane %v9820, 6
    %v10063 = vrot.slane %v9822, 6
    %v10064 = vrot.slane %v9824, 6
    %v10065 = vrot.slane %v9826, 6
    %v10066 = vrot.slane %v9828, 6
    %v10067 = vrot.slane %v9830, 6
    %v10068 = vrot.slane %v9832, 6
    %v10069 = vrot.slane %v9834, 6
    %v10070 = vrot.slane %v9836, 6
    %v10071 = vrot.slane %v9838, 6
    %v10072 = vrot.slane %v9840, 6
    %v10073 = vrot.slane %v9842, 6
    %v10074 = vrot.slane %v9844, 6
    %v10075 = vrot.slane %v9846, 6
    %v10076 = vrot.slane %v9848, 6
    %v10077 = vrot.slane %v9850, 6
    %v10078 = vrot.slane %v9852, 6
    %v10079 = vrot.slane %v9854, 6
    %v10080 = vrot.slane %v9856, 6
    %v10081 = vrot.slane %v9858, 6
    %v10082 = vrot.slane %v9860, 6
    %v10083 = vrot.slane %v9862, 6
    %v10084 = vrot.slane %v9864, 6
    %v10085 = vrot.slane %v9866, 6
    %v10086 = vrot.slane %v9868, 6
    %v10087 = vrot.slane %v9870, 6
    %v10088 = vrot.slane %v9872, 6
    %v10089 = vrot.slane %v9874, 6
    %v10090 = vrot.slane %v9876, 6
    %v10091 = vrot.slane %v9878, 6
    %v10092 = vrot.slane %v9880, 6
    %v10093 = vrot.slane %v9882, 6
    %v10094 = vrot.slane %v9884, 6
    %v10095 = vrot.slane %v9886, 6
    %v10096 = vrot.slane %v9888, 6
    %v10097 = vrot.slane %v9890, 6
    %v10098 = vrot.slane %v9892, 6
    %v10099 = vrot.slane %v9894, 6
    %v10100 = vrot.slane %v9896, 6
    %v10101 = vrot.slane %v9898, 6
    %v10102 = vrot.slane %v9900, 6
    %v10103 = vrot.slane %v9902, 6
    %v10104 = vrot.slane %v9904, 6
    %v10105 = vrot.slane %v9906, 6
    %v10106 = vrot.slane %v9908, 6
    %v10107 = vrot.slane %v9910, 6
    %v10108 = vrot.slane %v9912, 6
    %v10109 = vrot.slane %v9914, 6
    %v10110 = vrot.slane %v9916, 6
    %v10111 = vrot.slane %v9918, 6
    %v10112 = vrot.slane %v9920, 6
    %v10113 = vsel %vm338, %v9793, %v10049
    %v10114 = vsel %vm338, %v9795, %v10050
    %v10115 = vsel %vm338, %v9797, %v10051
    %v10116 = vsel %vm338, %v9799, %v10052
    %v10117 = vsel %vm338, %v9801, %v10053
    %v10118 = vsel %vm338, %v9803, %v10054
    %v10119 = vsel %vm338, %v9805, %v10055
    %v10120 = vsel %vm338, %v9807, %v10056
    %v10121 = vsel %vm338, %v9809, %v10057
    %v10122 = vsel %vm338, %v9811, %v10058
    %v10123 = vsel %vm338, %v9813, %v10059
    %v10124 = vsel %vm338, %v9815, %v10060
    %v10125 = vsel %vm338, %v9817, %v10061
    %v10126 = vsel %vm338, %v9819, %v10062
    %v10127 = vsel %vm338, %v9821, %v10063
    %v10128 = vsel %vm338, %v9823, %v10064
    %v10129 = vsel %vm338, %v9825, %v10065
    %v10130 = vsel %vm338, %v9827, %v10066
    %v10131 = vsel %vm338, %v9829, %v10067
    %v10132 = vsel %vm338, %v9831, %v10068
    %v10133 = vsel %vm338, %v9833, %v10069
    %v10134 = vsel %vm338, %v9835, %v10070
    %v10135 = vsel %vm338, %v9837, %v10071
    %v10136 = vsel %vm338, %v9839, %v10072
    %v10137 = vsel %vm338, %v9841, %v10073
    %v10138 = vsel %vm338, %v9843, %v10074
    %v10139 = vsel %vm338, %v9845, %v10075
    %v10140 = vsel %vm338, %v9847, %v10076
    %v10141 = vsel %vm338, %v9849, %v10077
    %v10142 = vsel %vm338, %v9851, %v10078
    %v10143 = vsel %vm338, %v9853, %v10079
    %v10144 = vsel %vm338, %v9855, %v10080
    %v10145 = vsel %vm338, %v9857, %v10081
    %v10146 = vsel %vm338, %v9859, %v10082
    %v10147 = vsel %vm338, %v9861, %v10083
    %v10148 = vsel %vm338, %v9863, %v10084
    %v10149 = vsel %vm338, %v9865, %v10085
    %v10150 = vsel %vm338, %v9867, %v10086
    %v10151 = vsel %vm338, %v9869, %v10087
    %v10152 = vsel %vm338, %v9871, %v10088
    %v10153 = vsel %vm338, %v9873, %v10089
    %v10154 = vsel %vm338, %v9875, %v10090
    %v10155 = vsel %vm338, %v9877, %v10091
    %v10156 = vsel %vm338, %v9879, %v10092
    %v10157 = vsel %vm338, %v9881, %v10093
    %v10158 = vsel %vm338, %v9883, %v10094
    %v10159 = vsel %vm338, %v9885, %v10095
    %v10160 = vsel %vm338, %v9887, %v10096
    %v10161 = vsel %vm338, %v9889, %v10097
    %v10162 = vsel %vm338, %v9891, %v10098
    %v10163 = vsel %vm338, %v9893, %v10099
    %v10164 = vsel %vm338, %v9895, %v10100
    %v10165 = vsel %vm338, %v9897, %v10101
    %v10166 = vsel %vm338, %v9899, %v10102
    %v10167 = vsel %vm338, %v9901, %v10103
    %v10168 = vsel %vm338, %v9903, %v10104
    %v10169 = vsel %vm338, %v9905, %v10105
    %v10170 = vsel %vm338, %v9907, %v10106
    %v10171 = vsel %vm338, %v9909, %v10107
    %v10172 = vsel %vm338, %v9911, %v10108
    %v10173 = vsel %vm338, %v9913, %v10109
    %v10174 = vsel %vm338, %v9915, %v10110
    %v10175 = vsel %vm338, %v9917, %v10111
    %v10176 = vsel %vm338, %v9919, %v10112
    %10177 = vst [vmem:[#allocation1] ss:$4 sm:$0xff] %v10113
    %s10178 = scalar_lea.vmem [#allocation1], 1
    %10179 = vst [vmem:[%s10178] ss:$4 sm:$0xff] %v10114
    %s10180 = scalar_lea.vmem [#allocation1], 2
    %10181 = vst [vmem:[%s10180] ss:$4 sm:$0xff] %v10115
    %s10182 = scalar_lea.vmem [#allocation1], 3
    %10183 = vst [vmem:[%s10182] ss:$4 sm:$0xff] %v10116
    %s10184 = scalar_lea.vmem [#allocation1], 32
    %10185 = vst [vmem:[%s10184] ss:$4 sm:$0xff] %v10117
    %s10186 = scalar_lea.vmem [#allocation1], 33
    %10187 = vst [vmem:[%s10186] ss:$4 sm:$0xff] %v10118
    %s10188 = scalar_lea.vmem [#allocation1], 34
    %10189 = vst [vmem:[%s10188] ss:$4 sm:$0xff] %v10119
    %s10190 = scalar_lea.vmem [#allocation1], 35
    %10191 = vst [vmem:[%s10190] ss:$4 sm:$0xff] %v10120
    %v10192 = vld.sshfl [vmem:[#allocation1] sm:$0xff pattern:$0x73625140]
    %v10193 = vld.sshfl [vmem:[#allocation1 + $0x20] sm:$0xff pattern:$0x73625140]
    %10194 = vst [vmem:[#allocation1] ss:$4 sm:$0xff] %v10121
    %10195 = vst [vmem:[%s10178] ss:$4 sm:$0xff] %v10122
    %10196 = vst [vmem:[%s10180] ss:$4 sm:$0xff] %v10123
    %10197 = vst [vmem:[%s10182] ss:$4 sm:$0xff] %v10124
    %10198 = vst [vmem:[%s10184] ss:$4 sm:$0xff] %v10125
    %10199 = vst [vmem:[%s10186] ss:$4 sm:$0xff] %v10126
    %10200 = vst [vmem:[%s10188] ss:$4 sm:$0xff] %v10127
    %10201 = vst [vmem:[%s10190] ss:$4 sm:$0xff] %v10128
    %v10202 = vld.sshfl [vmem:[#allocation1] sm:$0xff pattern:$0x73625140]
    %v10203 = vld.sshfl [vmem:[#allocation1 + $0x20] sm:$0xff pattern:$0x73625140]
    %10204 = vst [vmem:[#allocation1] ss:$4 sm:$0xff] %v10129
    %10205 = vst [vmem:[%s10178] ss:$4 sm:$0xff] %v10130
    %10206 = vst [vmem:[%s10180] ss:$4 sm:$0xff] %v10131
    %10207 = vst [vmem:[%s10182] ss:$4 sm:$0xff] %v10132
    %10208 = vst [vmem:[%s10184] ss:$4 sm:$0xff] %v10133
    %10209 = vst [vmem:[%s10186] ss:$4 sm:$0xff] %v10134
    %10210 = vst [vmem:[%s10188] ss:$4 sm:$0xff] %v10135
    %10211 = vst [vmem:[%s10190] ss:$4 sm:$0xff] %v10136
    %v10212 = vld.sshfl [vmem:[#allocation1] sm:$0xff pattern:$0x73625140]
    %v10213 = vld.sshfl [vmem:[#allocation1 + $0x20] sm:$0xff pattern:$0x73625140]
    %10214 = vst [vmem:[#allocation1] ss:$4 sm:$0xff] %v10137
    %10215 = vst [vmem:[%s10178] ss:$4 sm:$0xff] %v10138
    %10216 = vst [vmem:[%s10180] ss:$4 sm:$0xff] %v10139
    %10217 = vst [vmem:[%s10182] ss:$4 sm:$0xff] %v10140
    %10218 = vst [vmem:[%s10184] ss:$4 sm:$0xff] %v10141
    %10219 = vst [vmem:[%s10186] ss:$4 sm:$0xff] %v10142
    %10220 = vst [vmem:[%s10188] ss:$4 sm:$0xff] %v10143
    %10221 = vst [vmem:[%s10190] ss:$4 sm:$0xff] %v10144
    %v10222 = vld.sshfl [vmem:[#allocation1] sm:$0xff pattern:$0x73625140]
    %v10223 = vld.sshfl [vmem:[#allocation1 + $0x20] sm:$0xff pattern:$0x73625140]
    %10224 = vst [vmem:[#allocation1] ss:$4 sm:$0xff] %v10145
    %10225 = vst [vmem:[%s10178] ss:$4 sm:$0xff] %v10146
    %10226 = vst [vmem:[%s10180] ss:$4 sm:$0xff] %v10147
    %10227 = vst [vmem:[%s10182] ss:$4 sm:$0xff] %v10148
    %10228 = vst [vmem:[%s10184] ss:$4 sm:$0xff] %v10149
    %10229 = vst [vmem:[%s10186] ss:$4 sm:$0xff] %v10150
    %10230 = vst [vmem:[%s10188] ss:$4 sm:$0xff] %v10151
    %10231 = vst [vmem:[%s10190] ss:$4 sm:$0xff] %v10152
    %v10232 = vld.sshfl [vmem:[#allocation1] sm:$0xff pattern:$0x73625140]
    %v10233 = vld.sshfl [vmem:[#allocation1 + $0x20] sm:$0xff pattern:$0x73625140]
    %10234 = vst [vmem:[#allocation1] ss:$4 sm:$0xff] %v10153
    %10235 = vst [vmem:[%s10178] ss:$4 sm:$0xff] %v10154
    %10236 = vst [vmem:[%s10180] ss:$4 sm:$0xff] %v10155
    %10237 = vst [vmem:[%s10182] ss:$4 sm:$0xff] %v10156
    %10238 = vst [vmem:[%s10184] ss:$4 sm:$0xff] %v10157
    %10239 = vst [vmem:[%s10186] ss:$4 sm:$0xff] %v10158
    %10240 = vst [vmem:[%s10188] ss:$4 sm:$0xff] %v10159
    %10241 = vst [vmem:[%s10190] ss:$4 sm:$0xff] %v10160
    %v10242 = vld.sshfl [vmem:[#allocation1] sm:$0xff pattern:$0x73625140]
    %v10243 = vld.sshfl [vmem:[#allocation1 + $0x20] sm:$0xff pattern:$0x73625140]
    %10244 = vst [vmem:[#allocation1] ss:$4 sm:$0xff] %v10161
    %10245 = vst [vmem:[%s10178] ss:$4 sm:$0xff] %v10162
    %10246 = vst [vmem:[%s10180] ss:$4 sm:$0xff] %v10163
    %10247 = vst [vmem:[%s10182] ss:$4 sm:$0xff] %v10164
    %10248 = vst [vmem:[%s10184] ss:$4 sm:$0xff] %v10165
    %10249 = vst [vmem:[%s10186] ss:$4 sm:$0xff] %v10166
    %10250 = vst [vmem:[%s10188] ss:$4 sm:$0xff] %v10167
    %10251 = vst [vmem:[%s10190] ss:$4 sm:$0xff] %v10168
    %v10252 = vld.sshfl [vmem:[#allocation1] sm:$0xff pattern:$0x73625140]
    %v10253 = vld.sshfl [vmem:[#allocation1 + $0x20] sm:$0xff pattern:$0x73625140]
    %10254 = vst [vmem:[#allocation1] ss:$4 sm:$0xff] %v10169
    %10255 = vst [vmem:[%s10178] ss:$4 sm:$0xff] %v10170
    %10256 = vst [vmem:[%s10180] ss:$4 sm:$0xff] %v10171
    %10257 = vst [vmem:[%s10182] ss:$4 sm:$0xff] %v10172
    %10258 = vst [vmem:[%s10184] ss:$4 sm:$0xff] %v10173
    %10259 = vst [vmem:[%s10186] ss:$4 sm:$0xff] %v10174
    %10260 = vst [vmem:[%s10188] ss:$4 sm:$0xff] %v10175
    %10261 = vst [vmem:[%s10190] ss:$4 sm:$0xff] %v10176
    %v10262 = vld.sshfl [vmem:[#allocation1] sm:$0xff pattern:$0x73625140]
    %v10263 = vld.sshfl [vmem:[#allocation1 + $0x20] sm:$0xff pattern:$0x73625140]
    %vm10280 = vcmask 523264
    %10281 = vst.msk [vmem:[#allocation23] sm:$0xff] %vm10280, %v10192
    %10282 = vst.msk [vmem:[#allocation23 + $0x8] sm:$0xff] %vm10280, %v10193
    %10283 = vst.msk [vmem:[#allocation23 + $0x10] sm:$0xff] %vm10280, %v10202
    %10284 = vst.msk [vmem:[#allocation23 + $0x18] sm:$0xff] %vm10280, %v10203
    %10285 = vst.msk [vmem:[#allocation23 + $0x20] sm:$0xff] %vm10280, %v10212
    %10286 = vst.msk [vmem:[#allocation23 + $0x28] sm:$0xff] %vm10280, %v10213
    %10287 = vst.msk [vmem:[#allocation23 + $0x30] sm:$0xff] %vm10280, %v10222
    %10288 = vst.msk [vmem:[#allocation23 + $0x38] sm:$0xff] %vm10280, %v10223
    %10289 = vst.msk [vmem:[#allocation23 + $0xc0] sm:$0xff] %vm10280, %v10232
    %10290 = vst.msk [vmem:[#allocation23 + $0xc8] sm:$0xff] %vm10280, %v10233
    %10291 = vst.msk [vmem:[#allocation23 + $0xd0] sm:$0xff] %vm10280, %v10242
    %10292 = vst.msk [vmem:[#allocation23 + $0xd8] sm:$0xff] %vm10280, %v10243
    %10293 = vst.msk [vmem:[#allocation23 + $0xe0] sm:$0xff] %vm10280, %v10252
    %10294 = vst.msk [vmem:[#allocation23 + $0xe8] sm:$0xff] %vm10280, %v10253
    %10295 = vst.msk [vmem:[#allocation23 + $0xf0] sm:$0xff] %vm10280, %v10262
    %10296 = vst.msk [vmem:[#allocation23 + $0xf8] sm:$0xff] %vm10280, %v10263
    %10297 = vst [vmem:[#allocation1] ss:$4 sm:$0xff] %v10113
    %s10298 = scalar_lea.vmem [#allocation1], 1
    %10299 = vst [vmem:[%s10298] ss:$4 sm:$0xff] %v10114
    %s10300 = scalar_lea.vmem [#allocation1], 2
    %10301 = vst [vmem:[%s10300] ss:$4 sm:$0xff] %v10115
    %s10302 = scalar_lea.vmem [#allocation1], 3
    %10303 = vst [vmem:[%s10302] ss:$4 sm:$0xff] %v10116
    %s10304 = scalar_lea.vmem [#allocation1], 32
    %10305 = vst [vmem:[%s10304] ss:$4 sm:$0xff] %v10117
    %s10306 = scalar_lea.vmem [#allocation1], 33
    %10307 = vst [vmem:[%s10306] ss:$4 sm:$0xff] %v10118
    %s10308 = scalar_lea.vmem [#allocation1], 34
    %10309 = vst [vmem:[%s10308] ss:$4 sm:$0xff] %v10119
    %s10310 = scalar_lea.vmem [#allocation1], 35
    %10311 = vst [vmem:[%s10310] ss:$4 sm:$0xff] %v10120
    %v10312 = vld.sshfl [vmem:[#allocation1] sm:$0xff pattern:$0x73625140]
    %v10313 = vld.sshfl [vmem:[#allocation1 + $0x20] sm:$0xff pattern:$0x73625140]
    %10314 = vst [vmem:[#allocation1] ss:$4 sm:$0xff] %v10121
    %10315 = vst [vmem:[%s10298] ss:$4 sm:$0xff] %v10122
    %10316 = vst [vmem:[%s10300] ss:$4 sm:$0xff] %v10123
    %10317 = vst [vmem:[%s10302] ss:$4 sm:$0xff] %v10124
    %10318 = vst [vmem:[%s10304] ss:$4 sm:$0xff] %v10125
    %10319 = vst [vmem:[%s10306] ss:$4 sm:$0xff] %v10126
    %10320 = vst [vmem:[%s10308] ss:$4 sm:$0xff] %v10127
    %10321 = vst [vmem:[%s10310] ss:$4 sm:$0xff] %v10128
    %v10322 = vld.sshfl [vmem:[#allocation1] sm:$0xff pattern:$0x73625140]
    %v10323 = vld.sshfl [vmem:[#allocation1 + $0x20] sm:$0xff pattern:$0x73625140]
    %10324 = vst [vmem:[#allocation1] ss:$4 sm:$0xff] %v10129
    %10325 = vst [vmem:[%s10298] ss:$4 sm:$0xff] %v10130
    %10326 = vst [vmem:[%s10300] ss:$4 sm:$0xff] %v10131
    %10327 = vst [vmem:[%s10302] ss:$4 sm:$0xff] %v10132
    %10328 = vst [vmem:[%s10304] ss:$4 sm:$0xff] %v10133
    %10329 = vst [vmem:[%s10306] ss:$4 sm:$0xff] %v10134
    %10330 = vst [vmem:[%s10308] ss:$4 sm:$0xff] %v10135
    %10331 = vst [vmem:[%s10310] ss:$4 sm:$0xff] %v10136
    %v10332 = vld.sshfl [vmem:[#allocation1] sm:$0xff pattern:$0x73625140]
    %v10333 = vld.sshfl [vmem:[#allocation1 + $0x20] sm:$0xff pattern:$0x73625140]
    %10334 = vst [vmem:[#allocation1] ss:$4 sm:$0xff] %v10137
    %10335 = vst [vmem:[%s10298] ss:$4 sm:$0xff] %v10138
    %10336 = vst [vmem:[%s10300] ss:$4 sm:$0xff] %v10139
    %10337 = vst [vmem:[%s10302] ss:$4 sm:$0xff] %v10140
    %10338 = vst [vmem:[%s10304] ss:$4 sm:$0xff] %v10141
    %10339 = vst [vmem:[%s10306] ss:$4 sm:$0xff] %v10142
    %10340 = vst [vmem:[%s10308] ss:$4 sm:$0xff] %v10143
    %10341 = vst [vmem:[%s10310] ss:$4 sm:$0xff] %v10144
    %v10342 = vld.sshfl [vmem:[#allocation1] sm:$0xff pattern:$0x73625140]
    %v10343 = vld.sshfl [vmem:[#allocation1 + $0x20] sm:$0xff pattern:$0x73625140]
    %10344 = vst [vmem:[#allocation1] ss:$4 sm:$0xff] %v10145
    %10345 = vst [vmem:[%s10298] ss:$4 sm:$0xff] %v10146
    %10346 = vst [vmem:[%s10300] ss:$4 sm:$0xff] %v10147
    %10347 = vst [vmem:[%s10302] ss:$4 sm:$0xff] %v10148
    %10348 = vst [vmem:[%s10304] ss:$4 sm:$0xff] %v10149
    %10349 = vst [vmem:[%s10306] ss:$4 sm:$0xff] %v10150
    %10350 = vst [vmem:[%s10308] ss:$4 sm:$0xff] %v10151
    %10351 = vst [vmem:[%s10310] ss:$4 sm:$0xff] %v10152
    %v10352 = vld.sshfl [vmem:[#allocation1] sm:$0xff pattern:$0x73625140]
    %v10353 = vld.sshfl [vmem:[#allocation1 + $0x20] sm:$0xff pattern:$0x73625140]
    %10354 = vst [vmem:[#allocation1] ss:$4 sm:$0xff] %v10153
    %10355 = vst [vmem:[%s10298] ss:$4 sm:$0xff] %v10154
    %10356 = vst [vmem:[%s10300] ss:$4 sm:$0xff] %v10155
    %10357 = vst [vmem:[%s10302] ss:$4 sm:$0xff] %v10156
    %10358 = vst [vmem:[%s10304] ss:$4 sm:$0xff] %v10157
    %10359 = vst [vmem:[%s10306] ss:$4 sm:$0xff] %v10158
    %10360 = vst [vmem:[%s10308] ss:$4 sm:$0xff] %v10159
    %10361 = vst [vmem:[%s10310] ss:$4 sm:$0xff] %v10160
    %v10362 = vld.sshfl [vmem:[#allocation1] sm:$0xff pattern:$0x73625140]
    %v10363 = vld.sshfl [vmem:[#allocation1 + $0x20] sm:$0xff pattern:$0x73625140]
    %10364 = vst [vmem:[#allocation1] ss:$4 sm:$0xff] %v10161
    %10365 = vst [vmem:[%s10298] ss:$4 sm:$0xff] %v10162
    %10366 = vst [vmem:[%s10300] ss:$4 sm:$0xff] %v10163
    %10367 = vst [vmem:[%s10302] ss:$4 sm:$0xff] %v10164
    %10368 = vst [vmem:[%s10304] ss:$4 sm:$0xff] %v10165
    %10369 = vst [vmem:[%s10306] ss:$4 sm:$0xff] %v10166
    %10370 = vst [vmem:[%s10308] ss:$4 sm:$0xff] %v10167
    %10371 = vst [vmem:[%s10310] ss:$4 sm:$0xff] %v10168
    %v10372 = vld.sshfl [vmem:[#allocation1] sm:$0xff pattern:$0x73625140]
    %v10373 = vld.sshfl [vmem:[#allocation1 + $0x20] sm:$0xff pattern:$0x73625140]
    %10374 = vst [vmem:[#allocation1] ss:$4 sm:$0xff] %v10169
    %10375 = vst [vmem:[%s10298] ss:$4 sm:$0xff] %v10170
    %10376 = vst [vmem:[%s10300] ss:$4 sm:$0xff] %v10171
    %10377 = vst [vmem:[%s10302] ss:$4 sm:$0xff] %v10172
    %10378 = vst [vmem:[%s10304] ss:$4 sm:$0xff] %v10173
    %10379 = vst [vmem:[%s10306] ss:$4 sm:$0xff] %v10174
    %10380 = vst [vmem:[%s10308] ss:$4 sm:$0xff] %v10175
    %10381 = vst [vmem:[%s10310] ss:$4 sm:$0xff] %v10176
    %v10382 = vld.sshfl [vmem:[#allocation1] sm:$0xff pattern:$0x73625140]
    %v10383 = vld.sshfl [vmem:[#allocation1 + $0x20] sm:$0xff pattern:$0x73625140]
    %10384 = vrot.lane.b32.xlu0 %v10312, 64
    %v10385 = vpop.permute.xlu0 %10384
    %10386 = vrot.lane.b32.xlu0 %v10313, 64
    %v10387 = vpop.permute.xlu0 %10386
    %10388 = vrot.lane.b32.xlu0 %v10322, 64
    %v10389 = vpop.permute.xlu0 %10388
    %10390 = vrot.lane.b32.xlu0 %v10323, 64
    %v10391 = vpop.permute.xlu0 %10390
    %10392 = vrot.lane.b32.xlu0 %v10332, 64
    %v10393 = vpop.permute.xlu0 %10392
    %10394 = vrot.lane.b32.xlu0 %v10333, 64
    %v10395 = vpop.permute.xlu0 %10394
    %10396 = vrot.lane.b32.xlu0 %v10342, 64
    %v10397 = vpop.permute.xlu0 %10396
    %10398 = vrot.lane.b32.xlu0 %v10343, 64
    %v10399 = vpop.permute.xlu0 %10398
    %10400 = vrot.lane.b32.xlu0 %v10352, 64
    %v10401 = vpop.permute.xlu0 %10400
    %10402 = vrot.lane.b32.xlu0 %v10353, 64
    %v10403 = vpop.permute.xlu0 %10402
    %10404 = vrot.lane.b32.xlu0 %v10362, 64
    %v10405 = vpop.permute.xlu0 %10404
    %10406 = vrot.lane.b32.xlu0 %v10363, 64
    %v10407 = vpop.permute.xlu0 %10406
    %10408 = vrot.lane.b32.xlu0 %v10372, 64
    %v10409 = vpop.permute.xlu0 %10408
    %10410 = vrot.lane.b32.xlu0 %v10373, 64
    %v10411 = vpop.permute.xlu0 %10410
    %10412 = vrot.lane.b32.xlu0 %v10382, 64
    %v10413 = vpop.permute.xlu0 %10412
    %10414 = vrot.lane.b32.xlu0 %v10383, 64
    %v10415 = vpop.permute.xlu0 %10414
    %s10432 = scalar_lea.vmem [#allocation23], 64
    %10433 = vst.msk [vmem:[%s10432] sm:$0xff] %vm10280, %v10385
    %10434 = vst.msk [vmem:[%s10432 + $0x8] sm:$0xff] %vm10280, %v10387
    %10435 = vst.msk [vmem:[%s10432 + $0x10] sm:$0xff] %vm10280, %v10389
    %10436 = vst.msk [vmem:[%s10432 + $0x18] sm:$0xff] %vm10280, %v10391
    %10437 = vst.msk [vmem:[%s10432 + $0x20] sm:$0xff] %vm10280, %v10393
    %10438 = vst.msk [vmem:[%s10432 + $0x28] sm:$0xff] %vm10280, %v10395
    %10439 = vst.msk [vmem:[%s10432 + $0x30] sm:$0xff] %vm10280, %v10397
    %10440 = vst.msk [vmem:[%s10432 + $0x38] sm:$0xff] %vm10280, %v10399
    %10441 = vst.msk [vmem:[%s10432 + $0xc0] sm:$0xff] %vm10280, %v10401
    %10442 = vst.msk [vmem:[%s10432 + $0xc8] sm:$0xff] %vm10280, %v10403
    %10443 = vst.msk [vmem:[%s10432 + $0xd0] sm:$0xff] %vm10280, %v10405
    %10444 = vst.msk [vmem:[%s10432 + $0xd8] sm:$0xff] %vm10280, %v10407
    %10445 = vst.msk [vmem:[%s10432 + $0xe0] sm:$0xff] %vm10280, %v10409
    %10446 = vst.msk [vmem:[%s10432 + $0xe8] sm:$0xff] %vm10280, %v10411
    %10447 = vst.msk [vmem:[%s10432 + $0xf0] sm:$0xff] %vm10280, %v10413
    %10448 = vst.msk [vmem:[%s10432 + $0xf8] sm:$0xff] %vm10280, %v10415
    %v10449 = vrot.slane %v10113, 2
    %v10450 = vrot.slane %v10114, 2
    %v10451 = vrot.slane %v10115, 2
    %v10452 = vrot.slane %v10116, 2
    %v10453 = vrot.slane %v10117, 2
    %v10454 = vrot.slane %v10118, 2
    %v10455 = vrot.slane %v10119, 2
    %v10456 = vrot.slane %v10120, 2
    %v10457 = vrot.slane %v10121, 2
    %v10458 = vrot.slane %v10122, 2
    %v10459 = vrot.slane %v10123, 2
    %v10460 = vrot.slane %v10124, 2
    %v10461 = vrot.slane %v10125, 2
    %v10462 = vrot.slane %v10126, 2
    %v10463 = vrot.slane %v10127, 2
    %v10464 = vrot.slane %v10128, 2
    %v10465 = vrot.slane %v10129, 2
    %v10466 = vrot.slane %v10130, 2
    %v10467 = vrot.slane %v10131, 2
    %v10468 = vrot.slane %v10132, 2
    %v10469 = vrot.slane %v10133, 2
    %v10470 = vrot.slane %v10134, 2
    %v10471 = vrot.slane %v10135, 2
    %v10472 = vrot.slane %v10136, 2
    %v10473 = vrot.slane %v10137, 2
    %v10474 = vrot.slane %v10138, 2
    %v10475 = vrot.slane %v10139, 2
    %v10476 = vrot.slane %v10140, 2
    %v10477 = vrot.slane %v10141, 2
    %v10478 = vrot.slane %v10142, 2
    %v10479 = vrot.slane %v10143, 2
    %v10480 = vrot.slane %v10144, 2
    %v10481 = vrot.slane %v10145, 2
    %v10482 = vrot.slane %v10146, 2
    %v10483 = vrot.slane %v10147, 2
    %v10484 = vrot.slane %v10148, 2
    %v10485 = vrot.slane %v10149, 2
    %v10486 = vrot.slane %v10150, 2
    %v10487 = vrot.slane %v10151, 2
    %v10488 = vrot.slane %v10152, 2
    %v10489 = vrot.slane %v10153, 2
    %v10490 = vrot.slane %v10154, 2
    %v10491 = vrot.slane %v10155, 2
    %v10492 = vrot.slane %v10156, 2
    %v10493 = vrot.slane %v10157, 2
    %v10494 = vrot.slane %v10158, 2
    %v10495 = vrot.slane %v10159, 2
    %v10496 = vrot.slane %v10160, 2
    %v10497 = vrot.slane %v10161, 2
    %v10498 = vrot.slane %v10162, 2
    %v10499 = vrot.slane %v10163, 2
    %v10500 = vrot.slane %v10164, 2
    %v10501 = vrot.slane %v10165, 2
    %v10502 = vrot.slane %v10166, 2
    %v10503 = vrot.slane %v10167, 2
    %v10504 = vrot.slane %v10168, 2
    %v10505 = vrot.slane %v10169, 2
    %v10506 = vrot.slane %v10170, 2
    %v10507 = vrot.slane %v10171, 2
    %v10508 = vrot.slane %v10172, 2
    %v10509 = vrot.slane %v10173, 2
    %v10510 = vrot.slane %v10174, 2
    %v10511 = vrot.slane %v10175, 2
    %v10512 = vrot.slane %v10176, 2
    %10513 = vst [vmem:[#allocation1] ss:$4 sm:$0xff] %v10449
    %s10514 = scalar_lea.vmem [#allocation1], 1
    %10515 = vst [vmem:[%s10514] ss:$4 sm:$0xff] %v10450
    %s10516 = scalar_lea.vmem [#allocation1], 2
    %10517 = vst [vmem:[%s10516] ss:$4 sm:$0xff] %v10451
    %s10518 = scalar_lea.vmem [#allocation1], 3
    %10519 = vst [vmem:[%s10518] ss:$4 sm:$0xff] %v10452
    %s10520 = scalar_lea.vmem [#allocation1], 32
    %10521 = vst [vmem:[%s10520] ss:$4 sm:$0xff] %v10453
    %s10522 = scalar_lea.vmem [#allocation1], 33
    %10523 = vst [vmem:[%s10522] ss:$4 sm:$0xff] %v10454
    %s10524 = scalar_lea.vmem [#allocation1], 34
    %10525 = vst [vmem:[%s10524] ss:$4 sm:$0xff] %v10455
    %s10526 = scalar_lea.vmem [#allocation1], 35
    %10527 = vst [vmem:[%s10526] ss:$4 sm:$0xff] %v10456
    %v10528 = vld.sshfl [vmem:[#allocation1] sm:$0xff pattern:$0x73625140]
    %v10529 = vld.sshfl [vmem:[#allocation1 + $0x20] sm:$0xff pattern:$0x73625140]
    %10530 = vst [vmem:[#allocation1] ss:$4 sm:$0xff] %v10457
    %10531 = vst [vmem:[%s10514] ss:$4 sm:$0xff] %v10458
    %10532 = vst [vmem:[%s10516] ss:$4 sm:$0xff] %v10459
    %10533 = vst [vmem:[%s10518] ss:$4 sm:$0xff] %v10460
    %10534 = vst [vmem:[%s10520] ss:$4 sm:$0xff] %v10461
    %10535 = vst [vmem:[%s10522] ss:$4 sm:$0xff] %v10462
    %10536 = vst [vmem:[%s10524] ss:$4 sm:$0xff] %v10463
    %10537 = vst [vmem:[%s10526] ss:$4 sm:$0xff] %v10464
    %v10538 = vld.sshfl [vmem:[#allocation1] sm:$0xff pattern:$0x73625140]
    %v10539 = vld.sshfl [vmem:[#allocation1 + $0x20] sm:$0xff pattern:$0x73625140]
    %10540 = vst [vmem:[#allocation1] ss:$4 sm:$0xff] %v10465
    %10541 = vst [vmem:[%s10514] ss:$4 sm:$0xff] %v10466
    %10542 = vst [vmem:[%s10516] ss:$4 sm:$0xff] %v10467
    %10543 = vst [vmem:[%s10518] ss:$4 sm:$0xff] %v10468
    %10544 = vst [vmem:[%s10520] ss:$4 sm:$0xff] %v10469
    %10545 = vst [vmem:[%s10522] ss:$4 sm:$0xff] %v10470
    %10546 = vst [vmem:[%s10524] ss:$4 sm:$0xff] %v10471
    %10547 = vst [vmem:[%s10526] ss:$4 sm:$0xff] %v10472
    %v10548 = vld.sshfl [vmem:[#allocation1] sm:$0xff pattern:$0x73625140]
    %v10549 = vld.sshfl [vmem:[#allocation1 + $0x20] sm:$0xff pattern:$0x73625140]
    %10550 = vst [vmem:[#allocation1] ss:$4 sm:$0xff] %v10473
    %10551 = vst [vmem:[%s10514] ss:$4 sm:$0xff] %v10474
    %10552 = vst [vmem:[%s10516] ss:$4 sm:$0xff] %v10475
    %10553 = vst [vmem:[%s10518] ss:$4 sm:$0xff] %v10476
    %10554 = vst [vmem:[%s10520] ss:$4 sm:$0xff] %v10477
    %10555 = vst [vmem:[%s10522] ss:$4 sm:$0xff] %v10478
    %10556 = vst [vmem:[%s10524] ss:$4 sm:$0xff] %v10479
    %10557 = vst [vmem:[%s10526] ss:$4 sm:$0xff] %v10480
    %v10558 = vld.sshfl [vmem:[#allocation1] sm:$0xff pattern:$0x73625140]
    %v10559 = vld.sshfl [vmem:[#allocation1 + $0x20] sm:$0xff pattern:$0x73625140]
    %10560 = vst [vmem:[#allocation1] ss:$4 sm:$0xff] %v10481
    %10561 = vst [vmem:[%s10514] ss:$4 sm:$0xff] %v10482
    %10562 = vst [vmem:[%s10516] ss:$4 sm:$0xff] %v10483
    %10563 = vst [vmem:[%s10518] ss:$4 sm:$0xff] %v10484
    %10564 = vst [vmem:[%s10520] ss:$4 sm:$0xff] %v10485
    %10565 = vst [vmem:[%s10522] ss:$4 sm:$0xff] %v10486
    %10566 = vst [vmem:[%s10524] ss:$4 sm:$0xff] %v10487
    %10567 = vst [vmem:[%s10526] ss:$4 sm:$0xff] %v10488
    %v10568 = vld.sshfl [vmem:[#allocation1] sm:$0xff pattern:$0x73625140]
    %v10569 = vld.sshfl [vmem:[#allocation1 + $0x20] sm:$0xff pattern:$0x73625140]
    %10570 = vst [vmem:[#allocation1] ss:$4 sm:$0xff] %v10489
    %10571 = vst [vmem:[%s10514] ss:$4 sm:$0xff] %v10490
    %10572 = vst [vmem:[%s10516] ss:$4 sm:$0xff] %v10491
    %10573 = vst [vmem:[%s10518] ss:$4 sm:$0xff] %v10492
    %10574 = vst [vmem:[%s10520] ss:$4 sm:$0xff] %v10493
    %10575 = vst [vmem:[%s10522] ss:$4 sm:$0xff] %v10494
    %10576 = vst [vmem:[%s10524] ss:$4 sm:$0xff] %v10495
    %10577 = vst [vmem:[%s10526] ss:$4 sm:$0xff] %v10496
    %v10578 = vld.sshfl [vmem:[#allocation1] sm:$0xff pattern:$0x73625140]
    %v10579 = vld.sshfl [vmem:[#allocation1 + $0x20] sm:$0xff pattern:$0x73625140]
    %10580 = vst [vmem:[#allocation1] ss:$4 sm:$0xff] %v10497
    %10581 = vst [vmem:[%s10514] ss:$4 sm:$0xff] %v10498
    %10582 = vst [vmem:[%s10516] ss:$4 sm:$0xff] %v10499
    %10583 = vst [vmem:[%s10518] ss:$4 sm:$0xff] %v10500
    %10584 = vst [vmem:[%s10520] ss:$4 sm:$0xff] %v10501
    %10585 = vst [vmem:[%s10522] ss:$4 sm:$0xff] %v10502
    %10586 = vst [vmem:[%s10524] ss:$4 sm:$0xff] %v10503
    %10587 = vst [vmem:[%s10526] ss:$4 sm:$0xff] %v10504
    %v10588 = vld.sshfl [vmem:[#allocation1] sm:$0xff pattern:$0x73625140]
    %v10589 = vld.sshfl [vmem:[#allocation1 + $0x20] sm:$0xff pattern:$0x73625140]
    %10590 = vst [vmem:[#allocation1] ss:$4 sm:$0xff] %v10505
    %10591 = vst [vmem:[%s10514] ss:$4 sm:$0xff] %v10506
    %10592 = vst [vmem:[%s10516] ss:$4 sm:$0xff] %v10507
    %10593 = vst [vmem:[%s10518] ss:$4 sm:$0xff] %v10508
    %10594 = vst [vmem:[%s10520] ss:$4 sm:$0xff] %v10509
    %10595 = vst [vmem:[%s10522] ss:$4 sm:$0xff] %v10510
    %10596 = vst [vmem:[%s10524] ss:$4 sm:$0xff] %v10511
    %10597 = vst [vmem:[%s10526] ss:$4 sm:$0xff] %v10512
    %v10598 = vld.sshfl [vmem:[#allocation1] sm:$0xff pattern:$0x73625140]
    %v10599 = vld.sshfl [vmem:[#allocation1 + $0x20] sm:$0xff pattern:$0x73625140]
    %s10616 = scalar_lea.vmem [#allocation23], 128
    %10617 = vst.msk [vmem:[%s10616] sm:$0xff] %vm10280, %v10528
    %10618 = vst.msk [vmem:[%s10616 + $0x8] sm:$0xff] %vm10280, %v10529
    %10619 = vst.msk [vmem:[%s10616 + $0x10] sm:$0xff] %vm10280, %v10538
    %10620 = vst.msk [vmem:[%s10616 + $0x18] sm:$0xff] %vm10280, %v10539
    %10621 = vst.msk [vmem:[%s10616 + $0x20] sm:$0xff] %vm10280, %v10548
    %10622 = vst.msk [vmem:[%s10616 + $0x28] sm:$0xff] %vm10280, %v10549
    %10623 = vst.msk [vmem:[%s10616 + $0x30] sm:$0xff] %vm10280, %v10558
    %10624 = vst.msk [vmem:[%s10616 + $0x38] sm:$0xff] %vm10280, %v10559
    %10625 = vst.msk [vmem:[%s10616 + $0xc0] sm:$0xff] %vm10280, %v10568
    %10626 = vst.msk [vmem:[%s10616 + $0xc8] sm:$0xff] %vm10280, %v10569
    %10627 = vst.msk [vmem:[%s10616 + $0xd0] sm:$0xff] %vm10280, %v10578
    %10628 = vst.msk [vmem:[%s10616 + $0xd8] sm:$0xff] %vm10280, %v10579
    %10629 = vst.msk [vmem:[%s10616 + $0xe0] sm:$0xff] %vm10280, %v10588
    %10630 = vst.msk [vmem:[%s10616 + $0xe8] sm:$0xff] %vm10280, %v10589
    %10631 = vst.msk [vmem:[%s10616 + $0xf0] sm:$0xff] %vm10280, %v10598
    %10632 = vst.msk [vmem:[%s10616 + $0xf8] sm:$0xff] %vm10280, %v10599
    // Predicated region
    $region86: #{gen_nn_ske_to_image.1} parent=1 // pred_check
      _
    $region87: #{gen_nn_ske_to_image.1} parent=1 // pred_check_branch
      %10634 = sbr.rel (0) target = $region89
    $region88: #{gen_nn_ske_to_image.1} parent=1 // pred_region
      %10636 = vsyncadd [#allocation8], 0
      %s10637 = sshll.u32 [#allocation23], 4
      %s10638 = int_to_ptr.vmem [resolvable:$true] %s10637
      %s10639 = sshll.u32 %s11, 4
      %s10640 = int_to_ptr.hbm [resolvable:$true] %s10639
      %10645 = dma.vmem_to_hbm [thread:$0]  %s10638, 6144, %s10640, [#allocation8], 128, 128, 8
    $region89: #{gen_nn_ske_to_image.1} parent=1 // pred_fallthru
      _
    // Predicated region
    $region90: #{gen_nn_ske_to_image.1} parent=1 // pred_check
      _
    $region91: #{gen_nn_ske_to_image.1} parent=1 // pred_check_branch
      %10647 = sbr.rel (0) target = $region93
    $region92: #{gen_nn_ske_to_image.1} parent=1 // pred_region
      %10649 = dma.done [#allocation8], 6144
    $region93: #{gen_nn_ske_to_image.1} parent=1 // pred_fallthru
      _
    %10650 = vsyncpa [#allocation7], 1
    %10651 = vsyncpa [#allocation10], 1
    %10652 = vsyncpa [#allocation13], 1
    %10653 = vsyncpa [#allocation16], 1
    %10654 = vsyncpa [#allocation19], 1
    %10655 = vsyncpa [#allocation22], 1
    %10656 = vsyncpa [#allocation8], 1

</llo_original>
